<compile_context>
chip_gen: v5e
topology: v5e:2x2
jax: 0.10.0
libtpu: 0.0.40
codegen_flags: <defaults>
</compile_context>

<pallas_src>
import jax
import jax.numpy as jnp
import numpy as np
from jax import lax
from jax.experimental import pallas as pl
from jax.experimental.pallas import tpu as pltpu

LANES = 128
LRELU_SLOPE = 0.2


# ----------------------------- in-kernel helpers (traced) -----------------------------

def _geom(H):
    """Padded-layout geometry for an HxH feature map."""
    Wp = H + 2
    r0 = Wp + 1                      # flat row of interior pixel (0, 0)
    nrows = (H - 1) * Wp + H         # rows spanned by the interior slab
    return Wp, r0, nrows


def _zero_border(ref, H):
    """Zero every non-interior row of an HxH padded-layout activation (all 128 lanes)."""
    Wp, r0, nrows = _geom(H)
    ref[0:r0, :] = jnp.zeros((r0, LANES), jnp.float32)
    ref[r0 + nrows:(H + 2) * Wp, :] = jnp.zeros((H + 3, LANES), jnp.float32)
    for i in range(H - 1):           # the two pad cells between interior rows i and i+1
        a = (i + 1) * Wp + H + 1
        ref[a:a + 2, :] = jnp.zeros((2, LANES), jnp.float32)


def _conv3x3_lrelu(src, dst, H, w_ref, b_ref):
    """3x3/pad-1 WSConv + LeakyReLU: 9 contiguous-slab MXU dots, no im2col.

    src/dst are padded-layout f32 refs; src must have a zero border.  dst's interior slab
    is written (seam rows get garbage — caller zeroes them iff another 3x3 conv follows).
    """
    Wp, r0, nrows = _geom(H)
    acc = jnp.zeros((nrows, LANES), jnp.float32)
    for t in range(9):
        dh, dw = t // 3, t % 3
        off = r0 + (dh - 1) * Wp + (dw - 1)
        acc = acc + jnp.dot(src[off:off + nrows, :].astype(jnp.bfloat16),
                            w_ref[t * LANES:(t + 1) * LANES, :],
                            preferred_element_type=jnp.float32)
    acc = acc + b_ref[...]
    acc = jnp.maximum(acc, LRELU_SLOPE * acc)
    dst[r0:r0 + nrows, :] = acc


def _conv1x1(src, dst, H, w_ref, b_ref):
    """1x1 WSConv (fromRGB, no activation): a single dot straight from the source ref."""
    _, r0, nrows = _geom(H)
    acc = jnp.dot(src[r0:r0 + nrows, :].astype(jnp.bfloat16), w_ref[...],
                  preferred_element_type=jnp.float32) + b_ref[...]
    dst[r0:r0 + nrows, :] = acc


def _avg_pool2(src, dst, H):
    """2x2 / stride-2 average pool, padded layout at H -> padded layout at H//2.

    Per output row: four strided (Ho,128) loads + one dense (Ho,128) store."""
    Wp, _, _ = _geom(H)
    Ho = H // 2
    Wpo = Ho + 2
    for i in range(Ho):
        r = (2 * i + 1) * Wp + 1
        s = (src[pl.ds(r, Ho, stride=2), :]
             + src[pl.ds(r + 1, Ho, stride=2), :]
             + src[pl.ds(r + Wp, Ho, stride=2), :]
             + src[pl.ds(r + Wp + 1, Ho, stride=2), :]) * 0.25
        d = (i + 1) * Wpo + 1
        dst[d:d + Ho, :] = s


# ------------------------------- fused kernels ---------------------------------------

def _make_trunk_kernel(steps, S, n_conv):
    """Per-sample trunk: fromRGB -> ProgressiveBlocks -> avgpool (-> fade-in)."""

    def kernel(alpha_ref, x_ref, *args):
        wbs = args[:2 * n_conv]
        o_ref = args[2 * n_conv]

        if steps == 0:
            # fromRGB[0] (1x1) straight from the padded image to the (16, 128) output.
            Wp, r0, nrows = _geom(S)                        # S == 4 here
            y = jnp.dot(x_ref[r0:r0 + nrows, :].astype(jnp.bfloat16), wbs[0][...],
                        preferred_element_type=jnp.float32) + wbs[1][...]
            for i in range(S):
                o_ref[i * S:(i + 1) * S, :] = y[i * Wp:i * Wp + S, :]
            return

        actA, actB, actC = args[2 * n_conv + 1:]
        H2 = S // 2

        # ---- progressed path: fromRGB[steps] -> main[steps-1] -> avgpool ----
        _conv1x1(x_ref, actA, S, wbs[0], wbs[1])
        _zero_border(actA, S)
        _conv3x3_lrelu(actA, actB, S, wbs[2], wbs[3])
        _zero_border(actB, S)
        _conv3x3_lrelu(actB, actA, S, wbs[4], wbs[5])       # pool reads interior only
        _avg_pool2(actA, actB, S)                           # progressed @ H2 (actB)

        # ---- downsampled path: avgpool(x) -> fromRGB[steps-1] ----
        _avg_pool2(x_ref, actC, S)                          # pooled image @ H2 (actC)
        _conv1x1(actC, actA, H2, wbs[6], wbs[7])            # downsampled @ H2 (actA)

        # ---- fade-in: tanh(alpha*progressed + (1-alpha)*downsampled), in place ----
        _, r0, nrows = _geom(H2)
        a = alpha_ref[0]
        actA[r0:r0 + nrows, :] = jnp.tanh(a * actB[r0:r0 + nrows, :]
                                          + (1.0 - a) * actA[r0:r0 + nrows, :])
        _zero_border(actA, H2)

        # ---- remaining ProgressiveBlocks ----
        cur, other = actA, actB
        Scur = H2
        wi = 8
        for step in range(steps - 2, -1, -1):
            _conv3x3_lrelu(cur, other, Scur, wbs[wi], wbs[wi + 1])
            _zero_border(other, Scur)
            _conv3x3_lrelu(other, cur, Scur, wbs[wi + 2], wbs[wi + 3])
            _avg_pool2(cur, other, Scur)
            wi += 4
            cur, other = other, cur
            Scur //= 2
            if step > 0:
                _zero_border(cur, Scur)      # next conv1 needs a clean zero border

        # ---- final 4x4 activation (padded 6x6 layout) -> dense (16, 128) output ----
        for i in range(4):
            o_ref[i * 4:(i + 1) * 4, :] = cur[(i + 1) * 6 + 1:(i + 1) * 6 + 5, :]

    return kernel


def _make_tail_kernel(N, C):
    """minibatch-std + final conv1(3x3)/conv2(4x4)/conv3(1x1), fused for the whole batch."""
    HW = 16                                  # the final stage is always 4x4
    SB = 36                                  # per-sample padded 6x6 block
    Wp, r0 = 6, 7
    nrows = (N - 1) * SB + 22                # interior span across the whole batch
    denom = (N - 1) if N > 1 else 1          # TODO(synk): torch.std(dim=0) is NaN for batch==1; guarded here.

    def kernel(act_ref, w1, b1, w2, b2, w3, b3, o_ref, fbuf, gbuf):
        # ---- minibatch std over the batch (padded lanes are exactly 0 -> sum is exact) ----
        x = act_ref[...]                                          # (N, 16, 128) f32
        mu = jnp.mean(x, axis=0, keepdims=True)
        var = jnp.sum((x - mu) ** 2, axis=0) / denom
        mb = jnp.sum(jnp.sqrt(var), keepdims=True) * (1.0 / (HW * C))   # (1, 1)
        lane = lax.broadcasted_iota(jnp.int32, (HW, LANES), 1)
        xm = x + jnp.where(lane == C, mb, 0.0)[None, :, :]        # mbstd channel at lane C

        # ---- stage each sample into a zero-padded 6x6 block (conv1's 3x3 padding) ----
        fbuf[...] = jnp.zeros((N * SB, LANES), jnp.float32)
        for n in range(N):
            for i in range(4):
                d = n * SB + (i + 1) * Wp + 1
                fbuf[d:d + 4, :] = xm[n, i * 4:(i + 1) * 4, :]

        # ---- final conv1: 3x3/pad1 + LeakyReLU — 9 contiguous tap dots over the batch ----
        acc = jnp.zeros((nrows, LANES), jnp.float32)
        for t in range(9):
            dh, dw = t // 3, t % 3
            off = r0 + (dh - 1) * Wp + (dw - 1)
            acc = acc + jnp.dot(fbuf[off:off + nrows, :].astype(jnp.bfloat16),
                                w1[t * LANES:(t + 1) * LANES, :],
                                preferred_element_type=jnp.float32)
        acc = acc + b1[...]
        gbuf[r0:r0 + nrows, :] = jnp.maximum(acc, LRELU_SLOPE * acc)

        # ---- final conv2: 4x4/pad0 -> 1x1 + LeakyReLU — 16 tap dots, strided gather ----
        acc2 = jnp.zeros((N, LANES), jnp.float32)
        for t in range(16):
            i, j = t // 4, t % 4
            slab = gbuf[pl.ds(r0 + i * Wp + j, N, stride=SB), :]
            acc2 = acc2 + jnp.dot(slab.astype(jnp.bfloat16),
                                  w2[t * LANES:(t + 1) * LANES, :],
                                  preferred_element_type=jnp.float32)
        acc2 = acc2 + b2[...]
        acc2 = jnp.maximum(acc2, LRELU_SLOPE * acc2)

        # ---- final conv3: 1x1, no activation — straight from the register value ----
        o_ref[...] = jnp.dot(acc2.astype(jnp.bfloat16), w3[...],
                             preferred_element_type=jnp.float32) + b3[...]

    return kernel


# --------------------------------- wrappers -------------------------------------------

def _prep_conv_taps(p):
    """(Cout,Cin,kh,kw) torch weight -> per-tap (128,128) matrices stacked to
    (kh*kw*128, 128) bf16 with the WSConv scale folded in; bias -> (1,128) f32.
    Zero-padding of both K (Cin) and N (Cout) keeps unused lanes exactly 0 downstream."""
    cout, cin, kh, kw = p["w"].shape
    assert cout <= LANES and cin <= LANES
    w = jnp.transpose(p["w"], (2, 3, 1, 0)).astype(jnp.float32) * p["scale"]  # (kh,kw,cin,cout)
    w = jnp.pad(w, ((0, 0), (0, 0), (0, LANES - cin), (0, LANES - cout)))
    w = w.reshape(kh * kw * LANES, LANES).astype(jnp.bfloat16)
    b = jnp.pad(p["b"].reshape(1, cout).astype(jnp.float32), ((0, 0), (0, LANES - cout)))
    return w, b


def _pad_image(x_nchw):
    """NCHW image -> spatially padded, 128-lane, row-major (N, (H+2)*(W+2), 128) f32."""
    n, c, h, w = x_nchw.shape
    xi = jnp.transpose(x_nchw, (0, 2, 3, 1)).astype(jnp.float32)
    xi = jnp.pad(xi, ((0, 0), (1, 1), (1, 1), (0, LANES - c)))
    return xi.reshape(n, (h + 2) * (w + 2), LANES)


def _trunk_forward(params, x_pad, steps, alpha, S):
    N = x_pad.shape[0]
    if steps == 0:
        convs = [params["fromRGB"][0]]
    else:
        convs = [params["fromRGB"][steps],
                 params["main"][steps - 1]["conv1"],
                 params["main"][steps - 1]["conv2"],
                 params["fromRGB"][steps - 1]]
        for step in range(steps - 2, -1, -1):
            convs += [params["main"][step]["conv1"], params["main"][step]["conv2"]]
    wb = []
    for p in convs:
        wb.extend(_prep_conv_taps(p))
    n_conv = len(convs)

    HpWp = (S + 2) * (S + 2)
    kernel = _make_trunk_kernel(steps, S, n_conv)

    in_specs = [pl.BlockSpec(memory_space=pltpu.MemorySpace.SMEM),          # alpha
                pl.BlockSpec((None, HpWp, LANES), lambda n: (n, 0, 0))]     # padded image
    for a in wb:
        in_specs.append(pl.BlockSpec(a.shape, lambda n: (0, 0)))            # weights / biases

    scratch = []
    if steps > 0:
        scratch = [pltpu.VMEM((HpWp, LANES), jnp.float32),                  # actA
                   pltpu.VMEM((HpWp, LANES), jnp.float32),                  # actB
                   pltpu.VMEM(((S // 2 + 2) ** 2, LANES), jnp.float32)]     # actC (down path)

    # VMEM budget: per-sample scratch + double-buffered image block + weights + output.
    # TODO(synk): for steps >= 5 on v7x (64 MiB VMEM) switch to bf16 activation scratch
    # and/or row-band spatial tiling with a 1-row halo instead of whole-image-in-VMEM.
    wbytes = sum(int(a.size) * a.dtype.itemsize for a in wb)
    sbytes = (2 * HpWp + (S // 2 + 2) ** 2) * LANES * 4 if steps > 0 else 0
    est = sbytes + 2 * (HpWp * LANES * 4 + 16 * LANES * 4) + 2 * wbytes
    vmem_limit = int(min(96 * 2 ** 20, max(32 * 2 ** 20, int(est * 1.5))))

    return pl.pallas_call(
        kernel,
        out_shape=jax.ShapeDtypeStruct((N, 16, LANES), jnp.float32),
        grid=(N,),
        in_specs=in_specs,
        out_specs=pl.BlockSpec((None, 16, LANES), lambda n: (n, 0, 0)),
        scratch_shapes=scratch,
        compiler_params=pltpu.CompilerParams(
            # batch axis -> both TensorCores on v7x; a serial loop on v5e/v6e.
            # TODO(synk): on 1-TC chips, processing 2-4 samples per grid step (and fusing
            # the tail into the last step) would amortize the ~0.35us/step overhead.
            dimension_semantics=("parallel",),
            vmem_limit_bytes=vmem_limit),
    )(jnp.asarray([alpha], jnp.float32), x_pad, *wb)


def _tail_forward(params, trunk_out, C):
    N = trunk_out.shape[0]
    wb = []
    for key in ("conv1", "conv2", "conv3"):
        wb.extend(_prep_conv_taps(params["final"][key]))
    kernel = _make_tail_kernel(N, C)

    in_specs = [pl.BlockSpec((N, 16, LANES), lambda i: (0, 0, 0))]
    for a in wb:
        in_specs.append(pl.BlockSpec(a.shape, lambda i: (0, 0)))

    scratch = [pltpu.VMEM((N * 36, LANES), jnp.float32),    # fbuf: mbstd-augmented, padded 6x6/sample
               pltpu.VMEM((N * 36, LANES), jnp.float32)]    # gbuf: conv1 output, padded 6x6/sample

    out = pl.pallas_call(
        kernel,
        out_shape=jax.ShapeDtypeStruct((N, LANES), jnp.float32),
        grid=(1,),
        in_specs=in_specs,
        out_specs=pl.BlockSpec((N, LANES), lambda i: (0, 0)),
        scratch_shapes=scratch,
        compiler_params=pltpu.CompilerParams(
            dimension_semantics=("arbitrary",),
            vmem_limit_bytes=32 * 1024 * 1024),
    )(trunk_out, *wb)
    return out[:, :1]                         # lane-dense store in-kernel; slice real channel here


def discriminator_forward(params, x_nchw, steps, alpha):
    n, img_c, h, w = x_nchw.shape
    assert h == w == 4 * (2 ** steps)
    channels = [int(p["w"].shape[0]) for p in params["fromRGB"]]
    x_pad = _pad_image(x_nchw)
    trunk = _trunk_forward(params, x_pad, steps, alpha, h)
    return _tail_forward(params, trunk, channels[0])        # (N, 1)


# --------------------------- parameters / pure-JAX reference ---------------------------

def init_discriminator(key, img_channels=3, in_channels=16, factors=(1, 2)):
    keys = iter(jax.random.split(key, 8 * (len(factors) + 2)))

    def ws(cin, cout, k, pad):
        w = jax.random.normal(next(keys), (cout, cin, k, k), jnp.float32)   # normal_(weight)
        b = jnp.zeros((cout,), jnp.float32)                                 # zeros_(bias)
        scale = float((2.0 / (cin * k * k)) ** 0.5)                         # gain=2
        return dict(w=w, b=b, scale=scale, pad=pad)

    from_rgb = [ws(img_channels, in_channels, 1, 0)]
    main = []
    c = in_channels
    for f in factors:
        to = int(c / f)
        from_rgb.append(ws(img_channels, to, 1, 0))
        main.append(dict(conv1=ws(to, to, 3, 1), conv2=ws(to, c, 3, 1)))    # inversed=True, no PN
        c = to
    final = dict(conv1=ws(in_channels + 1, in_channels, 3, 1),
                 conv2=ws(in_channels, in_channels, 4, 0),
                 conv3=ws(in_channels, 1, 1, 0))
    return dict(fromRGB=from_rgb, main=main, final=final)


def ref_forward(params, x, steps, alpha):
    def conv(t, p):
        y = lax.conv_general_dilated(
            t * p["scale"], p["w"], window_strides=(1, 1),
            padding=[(p["pad"], p["pad"])] * 2,
            dimension_numbers=("NCHW", "OIHW", "NCHW"))
        return y + p["b"].reshape(1, -1, 1, 1)

    lrelu = lambda t: jnp.where(t >= 0, t, 0.2 * t)

    def block(t, bp):
        return lrelu(conv(lrelu(conv(t, bp["conv1"])), bp["conv2"]))

    def down(t):
        n_, c_, h_, w_ = t.shape
        return t.reshape(n_, c_, h_ // 2, 2, w_ // 2, 2).mean(axis=(3, 5))

    def mbstd(t):
        s = jnp.mean(jnp.std(t, axis=0, ddof=1))
        smap = jnp.full((t.shape[0], 1, t.shape[2], t.shape[3]), s, t.dtype)
        return jnp.concatenate([t, smap], axis=1)

    if steps == 0:
        t = conv(x, params["fromRGB"][0])
    else:
        prog = down(block(conv(x, params["fromRGB"][steps]), params["main"][steps - 1]))
        dsmp = conv(down(x), params["fromRGB"][steps - 1])
        t = jnp.tanh(alpha * prog + (1 - alpha) * dsmp)
        for step in range(steps - 2, -1, -1):
            t = down(block(t, params["main"][step]))
    t = mbstd(t)
    t = lrelu(conv(t, params["final"]["conv1"]))
    t = lrelu(conv(t, params["final"]["conv2"]))
    t = conv(t, params["final"]["conv3"])
    return t.reshape(t.shape[0], -1)


# ------------------------------------- main --------------------------------------------

if __name__ == "__main__":
    key = jax.random.PRNGKey(0)
    pkey, xkey = jax.random.split(key)

    # small config: img_channels=3, base channels=16, two progressive stages
    params = init_discriminator(pkey, img_channels=3, in_channels=16, factors=(1, 2))

    steps, alpha = 2, 0.5
    spatial = 4 * (2 ** steps)                     # 16x16 input for steps=2
    x = jax.random.normal(xkey, (2, 3, spatial, spatial), jnp.float32)

    out = jax.block_until_ready(discriminator_forward(params, x, steps, alpha))
    ref = ref_forward(params, x, steps, alpha)
    # bf16 MXU operands (f32 accumulation) -> slightly looser tolerance than pure f32
    np.testing.assert_allclose(np.asarray(out), np.asarray(ref), rtol=5e-2, atol=5e-2)

    # also exercise the steps == 0 path (input must already be 4x4)
    x0 = jax.random.normal(jax.random.PRNGKey(1), (2, 3, 4, 4), jnp.float32)
    out0 = jax.block_until_ready(discriminator_forward(params, x0, 0, 1.0))
    ref0 = ref_forward(params, x0, 0, 1.0)
    np.testing.assert_allclose(np.asarray(out0), np.asarray(ref0), rtol=5e-2, atol=5e-2)

    print("KERNEL_OK")
</pallas_src>

<mosaic_0001>
module attributes {stable_mosaic.version = 11 : i64} {
  func.func @kernel(%arg0: i32, %arg1: memref<1xf32, #tpu.memory_space<smem>>, %arg2: memref<1x324x128xf32, #tpu.memory_space<vmem>>, %arg3: memref<128x128xbf16, #tpu.memory_space<vmem>>, %arg4: memref<1x128xf32, #tpu.memory_space<vmem>>, %arg5: memref<1152x128xbf16, #tpu.memory_space<vmem>>, %arg6: memref<1x128xf32, #tpu.memory_space<vmem>>, %arg7: memref<1152x128xbf16, #tpu.memory_space<vmem>>, %arg8: memref<1x128xf32, #tpu.memory_space<vmem>>, %arg9: memref<128x128xbf16, #tpu.memory_space<vmem>>, %arg10: memref<1x128xf32, #tpu.memory_space<vmem>>, %arg11: memref<1152x128xbf16, #tpu.memory_space<vmem>>, %arg12: memref<1x128xf32, #tpu.memory_space<vmem>>, %arg13: memref<1152x128xbf16, #tpu.memory_space<vmem>>, %arg14: memref<1x128xf32, #tpu.memory_space<vmem>>, %arg15: memref<1x16x128xf32, #tpu.memory_space<vmem>>, %arg16: memref<324x128xf32, #tpu.memory_space<vmem>>, %arg17: memref<324x128xf32, #tpu.memory_space<vmem>>, %arg18: memref<100x128xf32, #tpu.memory_space<vmem>>) attributes {dimension_semantics = [#tpu.dimension_semantics<parallel>], iteration_bounds = array<i64: 2>, scalar_prefetch = 0 : i64, scratch_operands = 3 : i64, tpu.core_type = #tpu.core_type<tc>, window_params = [{transform_indices = @transform_0, window_bounds = array<i64: 1>}, {transform_indices = @transform_1, window_bounds = array<i64: 1, 324, 128>}, {pipeline_mode = #tpu.pipeline_mode<synchronous>, transform_indices = @transform_2, window_bounds = array<i64: 128, 128>}, {pipeline_mode = #tpu.pipeline_mode<synchronous>, transform_indices = @transform_3, window_bounds = array<i64: 1, 128>}, {pipeline_mode = #tpu.pipeline_mode<synchronous>, transform_indices = @transform_4, window_bounds = array<i64: 1152, 128>}, {pipeline_mode = #tpu.pipeline_mode<synchronous>, transform_indices = @transform_5, window_bounds = array<i64: 1, 128>}, {pipeline_mode = #tpu.pipeline_mode<synchronous>, transform_indices = @transform_6, window_bounds = array<i64: 1152, 128>}, {pipeline_mode = #tpu.pipeline_mode<synchronous>, transform_indices = @transform_7, window_bounds = array<i64: 1, 128>}, {pipeline_mode = #tpu.pipeline_mode<synchronous>, transform_indices = @transform_8, window_bounds = array<i64: 128, 128>}, {pipeline_mode = #tpu.pipeline_mode<synchronous>, transform_indices = @transform_9, window_bounds = array<i64: 1, 128>}, {pipeline_mode = #tpu.pipeline_mode<synchronous>, transform_indices = @transform_10, window_bounds = array<i64: 1152, 128>}, {pipeline_mode = #tpu.pipeline_mode<synchronous>, transform_indices = @transform_11, window_bounds = array<i64: 1, 128>}, {pipeline_mode = #tpu.pipeline_mode<synchronous>, transform_indices = @transform_12, window_bounds = array<i64: 1152, 128>}, {pipeline_mode = #tpu.pipeline_mode<synchronous>, transform_indices = @transform_13, window_bounds = array<i64: 1, 128>}, {transform_indices = @transform_14, window_bounds = array<i64: 1, 16, 128>}]} {
    %c0 = arith.constant 0 : index
    %c19 = arith.constant 19 : index
    %c0_0 = arith.constant 0 : index
    %0 = vector.load %arg2[%c0, %c19, %c0_0] : memref<1x324x128xf32, #tpu.memory_space<vmem>>, vector<1x286x128xf32>
    %1 = vector.shape_cast %0 : vector<1x286x128xf32> to vector<286x128xf32>
    %2 = arith.truncf %1 : vector<286x128xf32> to vector<286x128xbf16>
    %c0_1 = arith.constant 0 : index
    %c0_2 = arith.constant 0 : index
    %3 = vector.load %arg3[%c0_1, %c0_2] : memref<128x128xbf16, #tpu.memory_space<vmem>>, vector<128x128xbf16>
    %cst = arith.constant dense<0.000000e+00> : vector<286x128xf32>
    %4 = tpu.matmul %2, %3, %cst {dimension_numbers = #tpu.dot_dimension_numbers<[1], [0], [0], [1], [0, 0, 1, 1], [], []>} : vector<286x128xbf16>, vector<128x128xbf16>, vector<286x128xf32> -> vector<286x128xf32>
    %c0_3 = arith.constant 0 : index
    %c0_4 = arith.constant 0 : index
    %5 = vector.load %arg4[%c0_3, %c0_4] : memref<1x128xf32, #tpu.memory_space<vmem>>, vector<1x128xf32>
    %6 = vector.broadcast %5 : vector<1x128xf32> to vector<286x128xf32>
    %7 = arith.addf %4, %6 : vector<286x128xf32>
    %c19_5 = arith.constant 19 : index
    %c0_6 = arith.constant 0 : index
    %8 = vector.load %arg16[%c19_5, %c0_6] : memref<324x128xf32, #tpu.memory_space<vmem>>, vector<286x128xf32>
    tpu.vector_store %arg16[%c19_5, %c0_6], %7 {strides = array<i32>} : memref<324x128xf32, #tpu.memory_space<vmem>>, vector<286x128xf32>,
    %cst_7 = arith.constant 0.000000e+00 : f32
    %9 = vector.broadcast %cst_7 : f32 to vector<19x128xf32>
    %c0_8 = arith.constant 0 : index
    %c0_9 = arith.constant 0 : index
    %10 = vector.load %arg16[%c0_8, %c0_9] : memref<324x128xf32, #tpu.memory_space<vmem>>, vector<19x128xf32>
    tpu.vector_store %arg16[%c0_8, %c0_9], %9 {strides = array<i32>} : memref<324x128xf32, #tpu.memory_space<vmem>>, vector<19x128xf32>,
    %cst_10 = arith.constant 0.000000e+00 : f32
    %11 = vector.broadcast %cst_10 : f32 to vector<19x128xf32>
    %c305 = arith.constant 305 : index
    %c0_11 = arith.constant 0 : index
    %12 = vector.load %arg16[%c305, %c0_11] : memref<324x128xf32, #tpu.memory_space<vmem>>, vector<19x128xf32>
    tpu.vector_store %arg16[%c305, %c0_11], %11 {strides = array<i32>} : memref<324x128xf32, #tpu.memory_space<vmem>>, vector<19x128xf32>,
    %cst_12 = arith.constant 0.000000e+00 : f32
    %13 = vector.broadcast %cst_12 : f32 to vector<2x128xf32>
    %c35 = arith.constant 35 : index
    %c0_13 = arith.constant 0 : index
    %14 = vector.load %arg16[%c35, %c0_13] : memref<324x128xf32, #tpu.memory_space<vmem>>, vector<2x128xf32>
    tpu.vector_store %arg16[%c35, %c0_13], %13 {strides = array<i32>} : memref<324x128xf32, #tpu.memory_space<vmem>>, vector<2x128xf32>,
    %cst_14 = arith.constant 0.000000e+00 : f32
    %15 = vector.broadcast %cst_14 : f32 to vector<2x128xf32>
    %c53 = arith.constant 53 : index
    %c0_15 = arith.constant 0 : index
    %16 = vector.load %arg16[%c53, %c0_15] : memref<324x128xf32, #tpu.memory_space<vmem>>, vector<2x128xf32>
    tpu.vector_store %arg16[%c53, %c0_15], %15 {strides = array<i32>} : memref<324x128xf32, #tpu.memory_space<vmem>>, vector<2x128xf32>,
    %cst_16 = arith.constant 0.000000e+00 : f32
    %17 = vector.broadcast %cst_16 : f32 to vector<2x128xf32>
    %c71 = arith.constant 71 : index
    %c0_17 = arith.constant 0 : index
    %18 = vector.load %arg16[%c71, %c0_17] : memref<324x128xf32, #tpu.memory_space<vmem>>, vector<2x128xf32>
    tpu.vector_store %arg16[%c71, %c0_17], %17 {strides = array<i32>} : memref<324x128xf32, #tpu.memory_space<vmem>>, vector<2x128xf32>,
    %cst_18 = arith.constant 0.000000e+00 : f32
    %19 = vector.broadcast %cst_18 : f32 to vector<2x128xf32>
    %c89 = arith.constant 89 : index
    %c0_19 = arith.constant 0 : index
    %20 = vector.load %arg16[%c89, %c0_19] : memref<324x128xf32, #tpu.memory_space<vmem>>, vector<2x128xf32>
    tpu.vector_store %arg16[%c89, %c0_19], %19 {strides = array<i32>} : memref<324x128xf32, #tpu.memory_space<vmem>>, vector<2x128xf32>,
    %cst_20 = arith.constant 0.000000e+00 : f32
    %21 = vector.broadcast %cst_20 : f32 to vector<2x128xf32>
    %c107 = arith.constant 107 : index
    %c0_21 = arith.constant 0 : index
    %22 = vector.load %arg16[%c107, %c0_21] : memref<324x128xf32, #tpu.memory_space<vmem>>, vector<2x128xf32>
    tpu.vector_store %arg16[%c107, %c0_21], %21 {strides = array<i32>} : memref<324x128xf32, #tpu.memory_space<vmem>>, vector<2x128xf32>,
    %cst_22 = arith.constant 0.000000e+00 : f32
    %23 = vector.broadcast %cst_22 : f32 to vector<2x128xf32>
    %c125 = arith.constant 125 : index
    %c0_23 = arith.constant 0 : index
    %24 = vector.load %arg16[%c125, %c0_23] : memref<324x128xf32, #tpu.memory_space<vmem>>, vector<2x128xf32>
    tpu.vector_store %arg16[%c125, %c0_23], %23 {strides = array<i32>} : memref<324x128xf32, #tpu.memory_space<vmem>>, vector<2x128xf32>,
    %cst_24 = arith.constant 0.000000e+00 : f32
    %25 = vector.broadcast %cst_24 : f32 to vector<2x128xf32>
    %c143 = arith.constant 143 : index
    %c0_25 = arith.constant 0 : index
    %26 = vector.load %arg16[%c143, %c0_25] : memref<324x128xf32, #tpu.memory_space<vmem>>, vector<2x128xf32>
    tpu.vector_store %arg16[%c143, %c0_25], %25 {strides = array<i32>} : memref<324x128xf32, #tpu.memory_space<vmem>>, vector<2x128xf32>,
    %cst_26 = arith.constant 0.000000e+00 : f32
    %27 = vector.broadcast %cst_26 : f32 to vector<2x128xf32>
    %c161 = arith.constant 161 : index
    %c0_27 = arith.constant 0 : index
    %28 = vector.load %arg16[%c161, %c0_27] : memref<324x128xf32, #tpu.memory_space<vmem>>, vector<2x128xf32>
    tpu.vector_store %arg16[%c161, %c0_27], %27 {strides = array<i32>} : memref<324x128xf32, #tpu.memory_space<vmem>>, vector<2x128xf32>,
    %cst_28 = arith.constant 0.000000e+00 : f32
    %29 = vector.broadcast %cst_28 : f32 to vector<2x128xf32>
    %c179 = arith.constant 179 : index
    %c0_29 = arith.constant 0 : index
    %30 = vector.load %arg16[%c179, %c0_29] : memref<324x128xf32, #tpu.memory_space<vmem>>, vector<2x128xf32>
    tpu.vector_store %arg16[%c179, %c0_29], %29 {strides = array<i32>} : memref<324x128xf32, #tpu.memory_space<vmem>>, vector<2x128xf32>,
    %cst_30 = arith.constant 0.000000e+00 : f32
    %31 = vector.broadcast %cst_30 : f32 to vector<2x128xf32>
    %c197 = arith.constant 197 : index
    %c0_31 = arith.constant 0 : index
    %32 = vector.load %arg16[%c197, %c0_31] : memref<324x128xf32, #tpu.memory_space<vmem>>, vector<2x128xf32>
    tpu.vector_store %arg16[%c197, %c0_31], %31 {strides = array<i32>} : memref<324x128xf32, #tpu.memory_space<vmem>>, vector<2x128xf32>,
    %cst_32 = arith.constant 0.000000e+00 : f32
    %33 = vector.broadcast %cst_32 : f32 to vector<2x128xf32>
    %c215 = arith.constant 215 : index
    %c0_33 = arith.constant 0 : index
    %34 = vector.load %arg16[%c215, %c0_33] : memref<324x128xf32, #tpu.memory_space<vmem>>, vector<2x128xf32>
    tpu.vector_store %arg16[%c215, %c0_33], %33 {strides = array<i32>} : memref<324x128xf32, #tpu.memory_space<vmem>>, vector<2x128xf32>,
    %cst_34 = arith.constant 0.000000e+00 : f32
    %35 = vector.broadcast %cst_34 : f32 to vector<2x128xf32>
    %c233 = arith.constant 233 : index
    %c0_35 = arith.constant 0 : index
    %36 = vector.load %arg16[%c233, %c0_35] : memref<324x128xf32, #tpu.memory_space<vmem>>, vector<2x128xf32>
    tpu.vector_store %arg16[%c233, %c0_35], %35 {strides = array<i32>} : memref<324x128xf32, #tpu.memory_space<vmem>>, vector<2x128xf32>,
    %cst_36 = arith.constant 0.000000e+00 : f32
    %37 = vector.broadcast %cst_36 : f32 to vector<2x128xf32>
    %c251 = arith.constant 251 : index
    %c0_37 = arith.constant 0 : index
    %38 = vector.load %arg16[%c251, %c0_37] : memref<324x128xf32, #tpu.memory_space<vmem>>, vector<2x128xf32>
    tpu.vector_store %arg16[%c251, %c0_37], %37 {strides = array<i32>} : memref<324x128xf32, #tpu.memory_space<vmem>>, vector<2x128xf32>,
    %cst_38 = arith.constant 0.000000e+00 : f32
    %39 = vector.broadcast %cst_38 : f32 to vector<2x128xf32>
    %c269 = arith.constant 269 : index
    %c0_39 = arith.constant 0 : index
    %40 = vector.load %arg16[%c269, %c0_39] : memref<324x128xf32, #tpu.memory_space<vmem>>, vector<2x128xf32>
    tpu.vector_store %arg16[%c269, %c0_39], %39 {strides = array<i32>} : memref<324x128xf32, #tpu.memory_space<vmem>>, vector<2x128xf32>,
    %cst_40 = arith.constant 0.000000e+00 : f32
    %41 = vector.broadcast %cst_40 : f32 to vector<2x128xf32>
    %c287 = arith.constant 287 : index
    %c0_41 = arith.constant 0 : index
    %42 = vector.load %arg16[%c287, %c0_41] : memref<324x128xf32, #tpu.memory_space<vmem>>, vector<2x128xf32>
    tpu.vector_store %arg16[%c287, %c0_41], %41 {strides = array<i32>} : memref<324x128xf32, #tpu.memory_space<vmem>>, vector<2x128xf32>,
    %cst_42 = arith.constant 0.000000e+00 : f32
    %43 = vector.broadcast %cst_42 : f32 to vector<286x128xf32>
    %c0_43 = arith.constant 0 : index
    %c0_44 = arith.constant 0 : index
    %44 = vector.load %arg16[%c0_43, %c0_44] : memref<324x128xf32, #tpu.memory_space<vmem>>, vector<286x128xf32>
    %45 = arith.truncf %44 : vector<286x128xf32> to vector<286x128xbf16>
    %c0_45 = arith.constant 0 : index
    %c0_46 = arith.constant 0 : index
    %46 = vector.load %arg5[%c0_45, %c0_46] : memref<1152x128xbf16, #tpu.memory_space<vmem>>, vector<128x128xbf16>
    %cst_47 = arith.constant dense<0.000000e+00> : vector<286x128xf32>
    %47 = tpu.matmul %45, %46, %cst_47 {dimension_numbers = #tpu.dot_dimension_numbers<[1], [0], [0], [1], [0, 0, 1, 1], [], []>} : vector<286x128xbf16>, vector<128x128xbf16>, vector<286x128xf32> -> vector<286x128xf32>
    %48 = arith.addf %43, %47 : vector<286x128xf32>
    %c1 = arith.constant 1 : index
    %c0_48 = arith.constant 0 : index
    %49 = vector.load %arg16[%c1, %c0_48] : memref<324x128xf32, #tpu.memory_space<vmem>>, vector<286x128xf32>
    %50 = arith.truncf %49 : vector<286x128xf32> to vector<286x128xbf16>
    %c128 = arith.constant 128 : index
    %c0_49 = arith.constant 0 : index
    %51 = vector.load %arg5[%c128, %c0_49] : memref<1152x128xbf16, #tpu.memory_space<vmem>>, vector<128x128xbf16>
    %cst_50 = arith.constant dense<0.000000e+00> : vector<286x128xf32>
    %52 = tpu.matmul %50, %51, %cst_50 {dimension_numbers = #tpu.dot_dimension_numbers<[1], [0], [0], [1], [0, 0, 1, 1], [], []>} : vector<286x128xbf16>, vector<128x128xbf16>, vector<286x128xf32> -> vector<286x128xf32>
    %53 = arith.addf %48, %52 : vector<286x128xf32>
    %c2 = arith.constant 2 : index
    %c0_51 = arith.constant 0 : index
    %54 = vector.load %arg16[%c2, %c0_51] : memref<324x128xf32, #tpu.memory_space<vmem>>, vector<286x128xf32>
    %55 = arith.truncf %54 : vector<286x128xf32> to vector<286x128xbf16>
    %c256 = arith.constant 256 : index
    %c0_52 = arith.constant 0 : index
    %56 = vector.load %arg5[%c256, %c0_52] : memref<1152x128xbf16, #tpu.memory_space<vmem>>, vector<128x128xbf16>
    %cst_53 = arith.constant dense<0.000000e+00> : vector<286x128xf32>
    %57 = tpu.matmul %55, %56, %cst_53 {dimension_numbers = #tpu.dot_dimension_numbers<[1], [0], [0], [1], [0, 0, 1, 1], [], []>} : vector<286x128xbf16>, vector<128x128xbf16>, vector<286x128xf32> -> vector<286x128xf32>
    %58 = arith.addf %53, %57 : vector<286x128xf32>
    %c18 = arith.constant 18 : index
    %c0_54 = arith.constant 0 : index
    %59 = vector.load %arg16[%c18, %c0_54] : memref<324x128xf32, #tpu.memory_space<vmem>>, vector<286x128xf32>
    %60 = arith.truncf %59 : vector<286x128xf32> to vector<286x128xbf16>
    %c384 = arith.constant 384 : index
    %c0_55 = arith.constant 0 : index
    %61 = vector.load %arg5[%c384, %c0_55] : memref<1152x128xbf16, #tpu.memory_space<vmem>>, vector<128x128xbf16>
    %cst_56 = arith.constant dense<0.000000e+00> : vector<286x128xf32>
    %62 = tpu.matmul %60, %61, %cst_56 {dimension_numbers = #tpu.dot_dimension_numbers<[1], [0], [0], [1], [0, 0, 1, 1], [], []>} : vector<286x128xbf16>, vector<128x128xbf16>, vector<286x128xf32> -> vector<286x128xf32>
    %63 = arith.addf %58, %62 : vector<286x128xf32>
    %c19_57 = arith.constant 19 : index
    %c0_58 = arith.constant 0 : index
    %64 = vector.load %arg16[%c19_57, %c0_58] : memref<324x128xf32, #tpu.memory_space<vmem>>, vector<286x128xf32>
    %65 = arith.truncf %64 : vector<286x128xf32> to vector<286x128xbf16>
    %c512 = arith.constant 512 : index
    %c0_59 = arith.constant 0 : index
    %66 = vector.load %arg5[%c512, %c0_59] : memref<1152x128xbf16, #tpu.memory_space<vmem>>, vector<128x128xbf16>
    %cst_60 = arith.constant dense<0.000000e+00> : vector<286x128xf32>
    %67 = tpu.matmul %65, %66, %cst_60 {dimension_numbers = #tpu.dot_dimension_numbers<[1], [0], [0], [1], [0, 0, 1, 1], [], []>} : vector<286x128xbf16>, vector<128x128xbf16>, vector<286x128xf32> -> vector<286x128xf32>
    %68 = arith.addf %63, %67 : vector<286x128xf32>
    %c20 = arith.constant 20 : index
    %c0_61 = arith.constant 0 : index
    %69 = vector.load %arg16[%c20, %c0_61] : memref<324x128xf32, #tpu.memory_space<vmem>>, vector<286x128xf32>
    %70 = arith.truncf %69 : vector<286x128xf32> to vector<286x128xbf16>
    %c640 = arith.constant 640 : index
    %c0_62 = arith.constant 0 : index
    %71 = vector.load %arg5[%c640, %c0_62] : memref<1152x128xbf16, #tpu.memory_space<vmem>>, vector<128x128xbf16>
    %cst_63 = arith.constant dense<0.000000e+00> : vector<286x128xf32>
    %72 = tpu.matmul %70, %71, %cst_63 {dimension_numbers = #tpu.dot_dimension_numbers<[1], [0], [0], [1], [0, 0, 1, 1], [], []>} : vector<286x128xbf16>, vector<128x128xbf16>, vector<286x128xf32> -> vector<286x128xf32>
    %73 = arith.addf %68, %72 : vector<286x128xf32>
    %c36 = arith.constant 36 : index
    %c0_64 = arith.constant 0 : index
    %74 = vector.load %arg16[%c36, %c0_64] : memref<324x128xf32, #tpu.memory_space<vmem>>, vector<286x128xf32>
    %75 = arith.truncf %74 : vector<286x128xf32> to vector<286x128xbf16>
    %c768 = arith.constant 768 : index
    %c0_65 = arith.constant 0 : index
    %76 = vector.load %arg5[%c768, %c0_65] : memref<1152x128xbf16, #tpu.memory_space<vmem>>, vector<128x128xbf16>
    %cst_66 = arith.constant dense<0.000000e+00> : vector<286x128xf32>
    %77 = tpu.matmul %75, %76, %cst_66 {dimension_numbers = #tpu.dot_dimension_numbers<[1], [0], [0], [1], [0, 0, 1, 1], [], []>} : vector<286x128xbf16>, vector<128x128xbf16>, vector<286x128xf32> -> vector<286x128xf32>
    %78 = arith.addf %73, %77 : vector<286x128xf32>
    %c37 = arith.constant 37 : index
    %c0_67 = arith.constant 0 : index
    %79 = vector.load %arg16[%c37, %c0_67] : memref<324x128xf32, #tpu.memory_space<vmem>>, vector<286x128xf32>
    %80 = arith.truncf %79 : vector<286x128xf32> to vector<286x128xbf16>
    %c896 = arith.constant 896 : index
    %c0_68 = arith.constant 0 : index
    %81 = vector.load %arg5[%c896, %c0_68] : memref<1152x128xbf16, #tpu.memory_space<vmem>>, vector<128x128xbf16>
    %cst_69 = arith.constant dense<0.000000e+00> : vector<286x128xf32>
    %82 = tpu.matmul %80, %81, %cst_69 {dimension_numbers = #tpu.dot_dimension_numbers<[1], [0], [0], [1], [0, 0, 1, 1], [], []>} : vector<286x128xbf16>, vector<128x128xbf16>, vector<286x128xf32> -> vector<286x128xf32>
    %83 = arith.addf %78, %82 : vector<286x128xf32>
    %c38 = arith.constant 38 : index
    %c0_70 = arith.constant 0 : index
    %84 = vector.load %arg16[%c38, %c0_70] : memref<324x128xf32, #tpu.memory_space<vmem>>, vector<286x128xf32>
    %85 = arith.truncf %84 : vector<286x128xf32> to vector<286x128xbf16>
    %c1024 = arith.constant 1024 : index
    %c0_71 = arith.constant 0 : index
    %86 = vector.load %arg5[%c1024, %c0_71] : memref<1152x128xbf16, #tpu.memory_space<vmem>>, vector<128x128xbf16>
    %cst_72 = arith.constant dense<0.000000e+00> : vector<286x128xf32>
    %87 = tpu.matmul %85, %86, %cst_72 {dimension_numbers = #tpu.dot_dimension_numbers<[1], [0], [0], [1], [0, 0, 1, 1], [], []>} : vector<286x128xbf16>, vector<128x128xbf16>, vector<286x128xf32> -> vector<286x128xf32>
    %88 = arith.addf %83, %87 : vector<286x128xf32>
    %c0_73 = arith.constant 0 : index
    %c0_74 = arith.constant 0 : index
    %89 = vector.load %arg6[%c0_73, %c0_74] : memref<1x128xf32, #tpu.memory_space<vmem>>, vector<1x128xf32>
    %90 = vector.broadcast %89 : vector<1x128xf32> to vector<286x128xf32>
    %91 = arith.addf %88, %90 : vector<286x128xf32>
    %cst_75 = arith.constant 2.000000e-01 : f32
    %92 = vector.broadcast %cst_75 : f32 to vector<286x128xf32>
    %93 = arith.mulf %92, %91 : vector<286x128xf32>
    %94 = arith.maximumf %91, %93 : vector<286x128xf32>
    %c19_76 = arith.constant 19 : index
    %c0_77 = arith.constant 0 : index
    %95 = vector.load %arg17[%c19_76, %c0_77] : memref<324x128xf32, #tpu.memory_space<vmem>>, vector<286x128xf32>
    tpu.vector_store %arg17[%c19_76, %c0_77], %94 {strides = array<i32>} : memref<324x128xf32, #tpu.memory_space<vmem>>, vector<286x128xf32>,
    %cst_78 = arith.constant 0.000000e+00 : f32
    %96 = vector.broadcast %cst_78 : f32 to vector<19x128xf32>
    %c0_79 = arith.constant 0 : index
    %c0_80 = arith.constant 0 : index
    %97 = vector.load %arg17[%c0_79, %c0_80] : memref<324x128xf32, #tpu.memory_space<vmem>>, vector<19x128xf32>
    tpu.vector_store %arg17[%c0_79, %c0_80], %96 {strides = array<i32>} : memref<324x128xf32, #tpu.memory_space<vmem>>, vector<19x128xf32>,
    %cst_81 = arith.constant 0.000000e+00 : f32
    %98 = vector.broadcast %cst_81 : f32 to vector<19x128xf32>
    %c305_82 = arith.constant 305 : index
    %c0_83 = arith.constant 0 : index
    %99 = vector.load %arg17[%c305_82, %c0_83] : memref<324x128xf32, #tpu.memory_space<vmem>>, vector<19x128xf32>
    tpu.vector_store %arg17[%c305_82, %c0_83], %98 {strides = array<i32>} : memref<324x128xf32, #tpu.memory_space<vmem>>, vector<19x128xf32>,
    %cst_84 = arith.constant 0.000000e+00 : f32
    %100 = vector.broadcast %cst_84 : f32 to vector<2x128xf32>
    %c35_85 = arith.constant 35 : index
    %c0_86 = arith.constant 0 : index
    %101 = vector.load %arg17[%c35_85, %c0_86] : memref<324x128xf32, #tpu.memory_space<vmem>>, vector<2x128xf32>
    tpu.vector_store %arg17[%c35_85, %c0_86], %100 {strides = array<i32>} : memref<324x128xf32, #tpu.memory_space<vmem>>, vector<2x128xf32>,
    %cst_87 = arith.constant 0.000000e+00 : f32
    %102 = vector.broadcast %cst_87 : f32 to vector<2x128xf32>
    %c53_88 = arith.constant 53 : index
    %c0_89 = arith.constant 0 : index
    %103 = vector.load %arg17[%c53_88, %c0_89] : memref<324x128xf32, #tpu.memory_space<vmem>>, vector<2x128xf32>
    tpu.vector_store %arg17[%c53_88, %c0_89], %102 {strides = array<i32>} : memref<324x128xf32, #tpu.memory_space<vmem>>, vector<2x128xf32>,
    %cst_90 = arith.constant 0.000000e+00 : f32
    %104 = vector.broadcast %cst_90 : f32 to vector<2x128xf32>
    %c71_91 = arith.constant 71 : index
    %c0_92 = arith.constant 0 : index
    %105 = vector.load %arg17[%c71_91, %c0_92] : memref<324x128xf32, #tpu.memory_space<vmem>>, vector<2x128xf32>
    tpu.vector_store %arg17[%c71_91, %c0_92], %104 {strides = array<i32>} : memref<324x128xf32, #tpu.memory_space<vmem>>, vector<2x128xf32>,
    %cst_93 = arith.constant 0.000000e+00 : f32
    %106 = vector.broadcast %cst_93 : f32 to vector<2x128xf32>
    %c89_94 = arith.constant 89 : index
    %c0_95 = arith.constant 0 : index
    %107 = vector.load %arg17[%c89_94, %c0_95] : memref<324x128xf32, #tpu.memory_space<vmem>>, vector<2x128xf32>
    tpu.vector_store %arg17[%c89_94, %c0_95], %106 {strides = array<i32>} : memref<324x128xf32, #tpu.memory_space<vmem>>, vector<2x128xf32>,
    %cst_96 = arith.constant 0.000000e+00 : f32
    %108 = vector.broadcast %cst_96 : f32 to vector<2x128xf32>
    %c107_97 = arith.constant 107 : index
    %c0_98 = arith.constant 0 : index
    %109 = vector.load %arg17[%c107_97, %c0_98] : memref<324x128xf32, #tpu.memory_space<vmem>>, vector<2x128xf32>
    tpu.vector_store %arg17[%c107_97, %c0_98], %108 {strides = array<i32>} : memref<324x128xf32, #tpu.memory_space<vmem>>, vector<2x128xf32>,
    %cst_99 = arith.constant 0.000000e+00 : f32
    %110 = vector.broadcast %cst_99 : f32 to vector<2x128xf32>
    %c125_100 = arith.constant 125 : index
    %c0_101 = arith.constant 0 : index
    %111 = vector.load %arg17[%c125_100, %c0_101] : memref<324x128xf32, #tpu.memory_space<vmem>>, vector<2x128xf32>
    tpu.vector_store %arg17[%c125_100, %c0_101], %110 {strides = array<i32>} : memref<324x128xf32, #tpu.memory_space<vmem>>, vector<2x128xf32>,
    %cst_102 = arith.constant 0.000000e+00 : f32
    %112 = vector.broadcast %cst_102 : f32 to vector<2x128xf32>
    %c143_103 = arith.constant 143 : index
    %c0_104 = arith.constant 0 : index
    %113 = vector.load %arg17[%c143_103, %c0_104] : memref<324x128xf32, #tpu.memory_space<vmem>>, vector<2x128xf32>
    tpu.vector_store %arg17[%c143_103, %c0_104], %112 {strides = array<i32>} : memref<324x128xf32, #tpu.memory_space<vmem>>, vector<2x128xf32>,
    %cst_105 = arith.constant 0.000000e+00 : f32
    %114 = vector.broadcast %cst_105 : f32 to vector<2x128xf32>
    %c161_106 = arith.constant 161 : index
    %c0_107 = arith.constant 0 : index
    %115 = vector.load %arg17[%c161_106, %c0_107] : memref<324x128xf32, #tpu.memory_space<vmem>>, vector<2x128xf32>
    tpu.vector_store %arg17[%c161_106, %c0_107], %114 {strides = array<i32>} : memref<324x128xf32, #tpu.memory_space<vmem>>, vector<2x128xf32>,
    %cst_108 = arith.constant 0.000000e+00 : f32
    %116 = vector.broadcast %cst_108 : f32 to vector<2x128xf32>
    %c179_109 = arith.constant 179 : index
    %c0_110 = arith.constant 0 : index
    %117 = vector.load %arg17[%c179_109, %c0_110] : memref<324x128xf32, #tpu.memory_space<vmem>>, vector<2x128xf32>
    tpu.vector_store %arg17[%c179_109, %c0_110], %116 {strides = array<i32>} : memref<324x128xf32, #tpu.memory_space<vmem>>, vector<2x128xf32>,
    %cst_111 = arith.constant 0.000000e+00 : f32
    %118 = vector.broadcast %cst_111 : f32 to vector<2x128xf32>
    %c197_112 = arith.constant 197 : index
    %c0_113 = arith.constant 0 : index
    %119 = vector.load %arg17[%c197_112, %c0_113] : memref<324x128xf32, #tpu.memory_space<vmem>>, vector<2x128xf32>
    tpu.vector_store %arg17[%c197_112, %c0_113], %118 {strides = array<i32>} : memref<324x128xf32, #tpu.memory_space<vmem>>, vector<2x128xf32>,
    %cst_114 = arith.constant 0.000000e+00 : f32
    %120 = vector.broadcast %cst_114 : f32 to vector<2x128xf32>
    %c215_115 = arith.constant 215 : index
    %c0_116 = arith.constant 0 : index
    %121 = vector.load %arg17[%c215_115, %c0_116] : memref<324x128xf32, #tpu.memory_space<vmem>>, vector<2x128xf32>
    tpu.vector_store %arg17[%c215_115, %c0_116], %120 {strides = array<i32>} : memref<324x128xf32, #tpu.memory_space<vmem>>, vector<2x128xf32>,
    %cst_117 = arith.constant 0.000000e+00 : f32
    %122 = vector.broadcast %cst_117 : f32 to vector<2x128xf32>
    %c233_118 = arith.constant 233 : index
    %c0_119 = arith.constant 0 : index
    %123 = vector.load %arg17[%c233_118, %c0_119] : memref<324x128xf32, #tpu.memory_space<vmem>>, vector<2x128xf32>
    tpu.vector_store %arg17[%c233_118, %c0_119], %122 {strides = array<i32>} : memref<324x128xf32, #tpu.memory_space<vmem>>, vector<2x128xf32>,
    %cst_120 = arith.constant 0.000000e+00 : f32
    %124 = vector.broadcast %cst_120 : f32 to vector<2x128xf32>
    %c251_121 = arith.constant 251 : index
    %c0_122 = arith.constant 0 : index
    %125 = vector.load %arg17[%c251_121, %c0_122] : memref<324x128xf32, #tpu.memory_space<vmem>>, vector<2x128xf32>
    tpu.vector_store %arg17[%c251_121, %c0_122], %124 {strides = array<i32>} : memref<324x128xf32, #tpu.memory_space<vmem>>, vector<2x128xf32>,
    %cst_123 = arith.constant 0.000000e+00 : f32
    %126 = vector.broadcast %cst_123 : f32 to vector<2x128xf32>
    %c269_124 = arith.constant 269 : index
    %c0_125 = arith.constant 0 : index
    %127 = vector.load %arg17[%c269_124, %c0_125] : memref<324x128xf32, #tpu.memory_space<vmem>>, vector<2x128xf32>
    tpu.vector_store %arg17[%c269_124, %c0_125], %126 {strides = array<i32>} : memref<324x128xf32, #tpu.memory_space<vmem>>, vector<2x128xf32>,
    %cst_126 = arith.constant 0.000000e+00 : f32
    %128 = vector.broadcast %cst_126 : f32 to vector<2x128xf32>
    %c287_127 = arith.constant 287 : index
    %c0_128 = arith.constant 0 : index
    %129 = vector.load %arg17[%c287_127, %c0_128] : memref<324x128xf32, #tpu.memory_space<vmem>>, vector<2x128xf32>
    tpu.vector_store %arg17[%c287_127, %c0_128], %128 {strides = array<i32>} : memref<324x128xf32, #tpu.memory_space<vmem>>, vector<2x128xf32>,
    %cst_129 = arith.constant 0.000000e+00 : f32
    %130 = vector.broadcast %cst_129 : f32 to vector<286x128xf32>
    %c0_130 = arith.constant 0 : index
    %c0_131 = arith.constant 0 : index
    %131 = vector.load %arg17[%c0_130, %c0_131] : memref<324x128xf32, #tpu.memory_space<vmem>>, vector<286x128xf32>
    %132 = arith.truncf %131 : vector<286x128xf32> to vector<286x128xbf16>
    %c0_132 = arith.constant 0 : index
    %c0_133 = arith.constant 0 : index
    %133 = vector.load %arg7[%c0_132, %c0_133] : memref<1152x128xbf16, #tpu.memory_space<vmem>>, vector<128x128xbf16>
    %cst_134 = arith.constant dense<0.000000e+00> : vector<286x128xf32>
    %134 = tpu.matmul %132, %133, %cst_134 {dimension_numbers = #tpu.dot_dimension_numbers<[1], [0], [0], [1], [0, 0, 1, 1], [], []>} : vector<286x128xbf16>, vector<128x128xbf16>, vector<286x128xf32> -> vector<286x128xf32>
    %135 = arith.addf %130, %134 : vector<286x128xf32>
    %c1_135 = arith.constant 1 : index
    %c0_136 = arith.constant 0 : index
    %136 = vector.load %arg17[%c1_135, %c0_136] : memref<324x128xf32, #tpu.memory_space<vmem>>, vector<286x128xf32>
    %137 = arith.truncf %136 : vector<286x128xf32> to vector<286x128xbf16>
    %c128_137 = arith.constant 128 : index
    %c0_138 = arith.constant 0 : index
    %138 = vector.load %arg7[%c128_137, %c0_138] : memref<1152x128xbf16, #tpu.memory_space<vmem>>, vector<128x128xbf16>
    %cst_139 = arith.constant dense<0.000000e+00> : vector<286x128xf32>
    %139 = tpu.matmul %137, %138, %cst_139 {dimension_numbers = #tpu.dot_dimension_numbers<[1], [0], [0], [1], [0, 0, 1, 1], [], []>} : vector<286x128xbf16>, vector<128x128xbf16>, vector<286x128xf32> -> vector<286x128xf32>
    %140 = arith.addf %135, %139 : vector<286x128xf32>
    %c2_140 = arith.constant 2 : index
    %c0_141 = arith.constant 0 : index
    %141 = vector.load %arg17[%c2_140, %c0_141] : memref<324x128xf32, #tpu.memory_space<vmem>>, vector<286x128xf32>
    %142 = arith.truncf %141 : vector<286x128xf32> to vector<286x128xbf16>
    %c256_142 = arith.constant 256 : index
    %c0_143 = arith.constant 0 : index
    %143 = vector.load %arg7[%c256_142, %c0_143] : memref<1152x128xbf16, #tpu.memory_space<vmem>>, vector<128x128xbf16>
    %cst_144 = arith.constant dense<0.000000e+00> : vector<286x128xf32>
    %144 = tpu.matmul %142, %143, %cst_144 {dimension_numbers = #tpu.dot_dimension_numbers<[1], [0], [0], [1], [0, 0, 1, 1], [], []>} : vector<286x128xbf16>, vector<128x128xbf16>, vector<286x128xf32> -> vector<286x128xf32>
    %145 = arith.addf %140, %144 : vector<286x128xf32>
    %c18_145 = arith.constant 18 : index
    %c0_146 = arith.constant 0 : index
    %146 = vector.load %arg17[%c18_145, %c0_146] : memref<324x128xf32, #tpu.memory_space<vmem>>, vector<286x128xf32>
    %147 = arith.truncf %146 : vector<286x128xf32> to vector<286x128xbf16>
    %c384_147 = arith.constant 384 : index
    %c0_148 = arith.constant 0 : index
    %148 = vector.load %arg7[%c384_147, %c0_148] : memref<1152x128xbf16, #tpu.memory_space<vmem>>, vector<128x128xbf16>
    %cst_149 = arith.constant dense<0.000000e+00> : vector<286x128xf32>
    %149 = tpu.matmul %147, %148, %cst_149 {dimension_numbers = #tpu.dot_dimension_numbers<[1], [0], [0], [1], [0, 0, 1, 1], [], []>} : vector<286x128xbf16>, vector<128x128xbf16>, vector<286x128xf32> -> vector<286x128xf32>
    %150 = arith.addf %145, %149 : vector<286x128xf32>
    %c19_150 = arith.constant 19 : index
    %c0_151 = arith.constant 0 : index
    %151 = vector.load %arg17[%c19_150, %c0_151] : memref<324x128xf32, #tpu.memory_space<vmem>>, vector<286x128xf32>
    %152 = arith.truncf %151 : vector<286x128xf32> to vector<286x128xbf16>
    %c512_152 = arith.constant 512 : index
    %c0_153 = arith.constant 0 : index
    %153 = vector.load %arg7[%c512_152, %c0_153] : memref<1152x128xbf16, #tpu.memory_space<vmem>>, vector<128x128xbf16>
    %cst_154 = arith.constant dense<0.000000e+00> : vector<286x128xf32>
    %154 = tpu.matmul %152, %153, %cst_154 {dimension_numbers = #tpu.dot_dimension_numbers<[1], [0], [0], [1], [0, 0, 1, 1], [], []>} : vector<286x128xbf16>, vector<128x128xbf16>, vector<286x128xf32> -> vector<286x128xf32>
    %155 = arith.addf %150, %154 : vector<286x128xf32>
    %c20_155 = arith.constant 20 : index
    %c0_156 = arith.constant 0 : index
    %156 = vector.load %arg17[%c20_155, %c0_156] : memref<324x128xf32, #tpu.memory_space<vmem>>, vector<286x128xf32>
    %157 = arith.truncf %156 : vector<286x128xf32> to vector<286x128xbf16>
    %c640_157 = arith.constant 640 : index
    %c0_158 = arith.constant 0 : index
    %158 = vector.load %arg7[%c640_157, %c0_158] : memref<1152x128xbf16, #tpu.memory_space<vmem>>, vector<128x128xbf16>
    %cst_159 = arith.constant dense<0.000000e+00> : vector<286x128xf32>
    %159 = tpu.matmul %157, %158, %cst_159 {dimension_numbers = #tpu.dot_dimension_numbers<[1], [0], [0], [1], [0, 0, 1, 1], [], []>} : vector<286x128xbf16>, vector<128x128xbf16>, vector<286x128xf32> -> vector<286x128xf32>
    %160 = arith.addf %155, %159 : vector<286x128xf32>
    %c36_160 = arith.constant 36 : index
    %c0_161 = arith.constant 0 : index
    %161 = vector.load %arg17[%c36_160, %c0_161] : memref<324x128xf32, #tpu.memory_space<vmem>>, vector<286x128xf32>
    %162 = arith.truncf %161 : vector<286x128xf32> to vector<286x128xbf16>
    %c768_162 = arith.constant 768 : index
    %c0_163 = arith.constant 0 : index
    %163 = vector.load %arg7[%c768_162, %c0_163] : memref<1152x128xbf16, #tpu.memory_space<vmem>>, vector<128x128xbf16>
    %cst_164 = arith.constant dense<0.000000e+00> : vector<286x128xf32>
    %164 = tpu.matmul %162, %163, %cst_164 {dimension_numbers = #tpu.dot_dimension_numbers<[1], [0], [0], [1], [0, 0, 1, 1], [], []>} : vector<286x128xbf16>, vector<128x128xbf16>, vector<286x128xf32> -> vector<286x128xf32>
    %165 = arith.addf %160, %164 : vector<286x128xf32>
    %c37_165 = arith.constant 37 : index
    %c0_166 = arith.constant 0 : index
    %166 = vector.load %arg17[%c37_165, %c0_166] : memref<324x128xf32, #tpu.memory_space<vmem>>, vector<286x128xf32>
    %167 = arith.truncf %166 : vector<286x128xf32> to vector<286x128xbf16>
    %c896_167 = arith.constant 896 : index
    %c0_168 = arith.constant 0 : index
    %168 = vector.load %arg7[%c896_167, %c0_168] : memref<1152x128xbf16, #tpu.memory_space<vmem>>, vector<128x128xbf16>
    %cst_169 = arith.constant dense<0.000000e+00> : vector<286x128xf32>
    %169 = tpu.matmul %167, %168, %cst_169 {dimension_numbers = #tpu.dot_dimension_numbers<[1], [0], [0], [1], [0, 0, 1, 1], [], []>} : vector<286x128xbf16>, vector<128x128xbf16>, vector<286x128xf32> -> vector<286x128xf32>
    %170 = arith.addf %165, %169 : vector<286x128xf32>
    %c38_170 = arith.constant 38 : index
    %c0_171 = arith.constant 0 : index
    %171 = vector.load %arg17[%c38_170, %c0_171] : memref<324x128xf32, #tpu.memory_space<vmem>>, vector<286x128xf32>
    %172 = arith.truncf %171 : vector<286x128xf32> to vector<286x128xbf16>
    %c1024_172 = arith.constant 1024 : index
    %c0_173 = arith.constant 0 : index
    %173 = vector.load %arg7[%c1024_172, %c0_173] : memref<1152x128xbf16, #tpu.memory_space<vmem>>, vector<128x128xbf16>
    %cst_174 = arith.constant dense<0.000000e+00> : vector<286x128xf32>
    %174 = tpu.matmul %172, %173, %cst_174 {dimension_numbers = #tpu.dot_dimension_numbers<[1], [0], [0], [1], [0, 0, 1, 1], [], []>} : vector<286x128xbf16>, vector<128x128xbf16>, vector<286x128xf32> -> vector<286x128xf32>
    %175 = arith.addf %170, %174 : vector<286x128xf32>
    %c0_175 = arith.constant 0 : index
    %c0_176 = arith.constant 0 : index
    %176 = vector.load %arg8[%c0_175, %c0_176] : memref<1x128xf32, #tpu.memory_space<vmem>>, vector<1x128xf32>
    %177 = vector.broadcast %176 : vector<1x128xf32> to vector<286x128xf32>
    %178 = arith.addf %175, %177 : vector<286x128xf32>
    %cst_177 = arith.constant 2.000000e-01 : f32
    %179 = vector.broadcast %cst_177 : f32 to vector<286x128xf32>
    %180 = arith.mulf %179, %178 : vector<286x128xf32>
    %181 = arith.maximumf %178, %180 : vector<286x128xf32>
    %c19_178 = arith.constant 19 : index
    %c0_179 = arith.constant 0 : index
    %182 = vector.load %arg16[%c19_178, %c0_179] : memref<324x128xf32, #tpu.memory_space<vmem>>, vector<286x128xf32>
    tpu.vector_store %arg16[%c19_178, %c0_179], %181 {strides = array<i32>} : memref<324x128xf32, #tpu.memory_space<vmem>>, vector<286x128xf32>,
    %c19_180 = arith.constant 19 : index
    %c0_181 = arith.constant 0 : index
    %183 = tpu.strided_load %arg16[%c19_180, %c0_181] {strides = array<i32: 2, 1>} : memref<324x128xf32, #tpu.memory_space<vmem>>, vector<8x128xf32>
    %c20_182 = arith.constant 20 : index
    %c0_183 = arith.constant 0 : index
    %184 = tpu.strided_load %arg16[%c20_182, %c0_183] {strides = array<i32: 2, 1>} : memref<324x128xf32, #tpu.memory_space<vmem>>, vector<8x128xf32>
    %185 = arith.addf %183, %184 : vector<8x128xf32>
    %c37_184 = arith.constant 37 : index
    %c0_185 = arith.constant 0 : index
    %186 = tpu.strided_load %arg16[%c37_184, %c0_185] {strides = array<i32: 2, 1>} : memref<324x128xf32, #tpu.memory_space<vmem>>, vector<8x128xf32>
    %187 = arith.addf %185, %186 : vector<8x128xf32>
    %c38_186 = arith.constant 38 : index
    %c0_187 = arith.constant 0 : index
    %188 = tpu.strided_load %arg16[%c38_186, %c0_187] {strides = array<i32: 2, 1>} : memref<324x128xf32, #tpu.memory_space<vmem>>, vector<8x128xf32>
    %189 = arith.addf %187, %188 : vector<8x128xf32>
    %cst_188 = arith.constant 2.500000e-01 : f32
    %190 = vector.broadcast %cst_188 : f32 to vector<8x128xf32>
    %191 = arith.mulf %189, %190 : vector<8x128xf32>
    %c11 = arith.constant 11 : index
    %c0_189 = arith.constant 0 : index
    %192 = vector.load %arg17[%c11, %c0_189] : memref<324x128xf32, #tpu.memory_space<vmem>>, vector<8x128xf32>
    tpu.vector_store %arg17[%c11, %c0_189], %191 {strides = array<i32>} : memref<324x128xf32, #tpu.memory_space<vmem>>, vector<8x128xf32>,
    %c55 = arith.constant 55 : index
    %c0_190 = arith.constant 0 : index
    %193 = tpu.strided_load %arg16[%c55, %c0_190] {strides = array<i32: 2, 1>} : memref<324x128xf32, #tpu.memory_space<vmem>>, vector<8x128xf32>
    %c56 = arith.constant 56 : index
    %c0_191 = arith.constant 0 : index
    %194 = tpu.strided_load %arg16[%c56, %c0_191] {strides = array<i32: 2, 1>} : memref<324x128xf32, #tpu.memory_space<vmem>>, vector<8x128xf32>
    %195 = arith.addf %193, %194 : vector<8x128xf32>
    %c73 = arith.constant 73 : index
    %c0_192 = arith.constant 0 : index
    %196 = tpu.strided_load %arg16[%c73, %c0_192] {strides = array<i32: 2, 1>} : memref<324x128xf32, #tpu.memory_space<vmem>>, vector<8x128xf32>
    %197 = arith.addf %195, %196 : vector<8x128xf32>
    %c74 = arith.constant 74 : index
    %c0_193 = arith.constant 0 : index
    %198 = tpu.strided_load %arg16[%c74, %c0_193] {strides = array<i32: 2, 1>} : memref<324x128xf32, #tpu.memory_space<vmem>>, vector<8x128xf32>
    %199 = arith.addf %197, %198 : vector<8x128xf32>
    %cst_194 = arith.constant 2.500000e-01 : f32
    %200 = vector.broadcast %cst_194 : f32 to vector<8x128xf32>
    %201 = arith.mulf %199, %200 : vector<8x128xf32>
    %c21 = arith.constant 21 : index
    %c0_195 = arith.constant 0 : index
    %202 = vector.load %arg17[%c21, %c0_195] : memref<324x128xf32, #tpu.memory_space<vmem>>, vector<8x128xf32>
    tpu.vector_store %arg17[%c21, %c0_195], %201 {strides = array<i32>} : memref<324x128xf32, #tpu.memory_space<vmem>>, vector<8x128xf32>,
    %c91 = arith.constant 91 : index
    %c0_196 = arith.constant 0 : index
    %203 = tpu.strided_load %arg16[%c91, %c0_196] {strides = array<i32: 2, 1>} : memref<324x128xf32, #tpu.memory_space<vmem>>, vector<8x128xf32>
    %c92 = arith.constant 92 : index
    %c0_197 = arith.constant 0 : index
    %204 = tpu.strided_load %arg16[%c92, %c0_197] {strides = array<i32: 2, 1>} : memref<324x128xf32, #tpu.memory_space<vmem>>, vector<8x128xf32>
    %205 = arith.addf %203, %204 : vector<8x128xf32>
    %c109 = arith.constant 109 : index
    %c0_198 = arith.constant 0 : index
    %206 = tpu.strided_load %arg16[%c109, %c0_198] {strides = array<i32: 2, 1>} : memref<324x128xf32, #tpu.memory_space<vmem>>, vector<8x128xf32>
    %207 = arith.addf %205, %206 : vector<8x128xf32>
    %c110 = arith.constant 110 : index
    %c0_199 = arith.constant 0 : index
    %208 = tpu.strided_load %arg16[%c110, %c0_199] {strides = array<i32: 2, 1>} : memref<324x128xf32, #tpu.memory_space<vmem>>, vector<8x128xf32>
    %209 = arith.addf %207, %208 : vector<8x128xf32>
    %cst_200 = arith.constant 2.500000e-01 : f32
    %210 = vector.broadcast %cst_200 : f32 to vector<8x128xf32>
    %211 = arith.mulf %209, %210 : vector<8x128xf32>
    %c31 = arith.constant 31 : index
    %c0_201 = arith.constant 0 : index
    %212 = vector.load %arg17[%c31, %c0_201] : memref<324x128xf32, #tpu.memory_space<vmem>>, vector<8x128xf32>
    tpu.vector_store %arg17[%c31, %c0_201], %211 {strides = array<i32>} : memref<324x128xf32, #tpu.memory_space<vmem>>, vector<8x128xf32>,
    %c127 = arith.constant 127 : index
    %c0_202 = arith.constant 0 : index
    %213 = tpu.strided_load %arg16[%c127, %c0_202] {strides = array<i32: 2, 1>} : memref<324x128xf32, #tpu.memory_space<vmem>>, vector<8x128xf32>
    %c128_203 = arith.constant 128 : index
    %c0_204 = arith.constant 0 : index
    %214 = tpu.strided_load %arg16[%c128_203, %c0_204] {strides = array<i32: 2, 1>} : memref<324x128xf32, #tpu.memory_space<vmem>>, vector<8x128xf32>
    %215 = arith.addf %213, %214 : vector<8x128xf32>
    %c145 = arith.constant 145 : index
    %c0_205 = arith.constant 0 : index
    %216 = tpu.strided_load %arg16[%c145, %c0_205] {strides = array<i32: 2, 1>} : memref<324x128xf32, #tpu.memory_space<vmem>>, vector<8x128xf32>
    %217 = arith.addf %215, %216 : vector<8x128xf32>
    %c146 = arith.constant 146 : index
    %c0_206 = arith.constant 0 : index
    %218 = tpu.strided_load %arg16[%c146, %c0_206] {strides = array<i32: 2, 1>} : memref<324x128xf32, #tpu.memory_space<vmem>>, vector<8x128xf32>
    %219 = arith.addf %217, %218 : vector<8x128xf32>
    %cst_207 = arith.constant 2.500000e-01 : f32
    %220 = vector.broadcast %cst_207 : f32 to vector<8x128xf32>
    %221 = arith.mulf %219, %220 : vector<8x128xf32>
    %c41 = arith.constant 41 : index
    %c0_208 = arith.constant 0 : index
    %222 = vector.load %arg17[%c41, %c0_208] : memref<324x128xf32, #tpu.memory_space<vmem>>, vector<8x128xf32>
    tpu.vector_store %arg17[%c41, %c0_208], %221 {strides = array<i32>} : memref<324x128xf32, #tpu.memory_space<vmem>>, vector<8x128xf32>,
    %c163 = arith.constant 163 : index
    %c0_209 = arith.constant 0 : index
    %223 = tpu.strided_load %arg16[%c163, %c0_209] {strides = array<i32: 2, 1>} : memref<324x128xf32, #tpu.memory_space<vmem>>, vector<8x128xf32>
    %c164 = arith.constant 164 : index
    %c0_210 = arith.constant 0 : index
    %224 = tpu.strided_load %arg16[%c164, %c0_210] {strides = array<i32: 2, 1>} : memref<324x128xf32, #tpu.memory_space<vmem>>, vector<8x128xf32>
    %225 = arith.addf %223, %224 : vector<8x128xf32>
    %c181 = arith.constant 181 : index
    %c0_211 = arith.constant 0 : index
    %226 = tpu.strided_load %arg16[%c181, %c0_211] {strides = array<i32: 2, 1>} : memref<324x128xf32, #tpu.memory_space<vmem>>, vector<8x128xf32>
    %227 = arith.addf %225, %226 : vector<8x128xf32>
    %c182 = arith.constant 182 : index
    %c0_212 = arith.constant 0 : index
    %228 = tpu.strided_load %arg16[%c182, %c0_212] {strides = array<i32: 2, 1>} : memref<324x128xf32, #tpu.memory_space<vmem>>, vector<8x128xf32>
    %229 = arith.addf %227, %228 : vector<8x128xf32>
    %cst_213 = arith.constant 2.500000e-01 : f32
    %230 = vector.broadcast %cst_213 : f32 to vector<8x128xf32>
    %231 = arith.mulf %229, %230 : vector<8x128xf32>
    %c51 = arith.constant 51 : index
    %c0_214 = arith.constant 0 : index
    %232 = vector.load %arg17[%c51, %c0_214] : memref<324x128xf32, #tpu.memory_space<vmem>>, vector<8x128xf32>
    tpu.vector_store %arg17[%c51, %c0_214], %231 {strides = array<i32>} : memref<324x128xf32, #tpu.memory_space<vmem>>, vector<8x128xf32>,
    %c199 = arith.constant 199 : index
    %c0_215 = arith.constant 0 : index
    %233 = tpu.strided_load %arg16[%c199, %c0_215] {strides = array<i32: 2, 1>} : memref<324x128xf32, #tpu.memory_space<vmem>>, vector<8x128xf32>
    %c200 = arith.constant 200 : index
    %c0_216 = arith.constant 0 : index
    %234 = tpu.strided_load %arg16[%c200, %c0_216] {strides = array<i32: 2, 1>} : memref<324x128xf32, #tpu.memory_space<vmem>>, vector<8x128xf32>
    %235 = arith.addf %233, %234 : vector<8x128xf32>
    %c217 = arith.constant 217 : index
    %c0_217 = arith.constant 0 : index
    %236 = tpu.strided_load %arg16[%c217, %c0_217] {strides = array<i32: 2, 1>} : memref<324x128xf32, #tpu.memory_space<vmem>>, vector<8x128xf32>
    %237 = arith.addf %235, %236 : vector<8x128xf32>
    %c218 = arith.constant 218 : index
    %c0_218 = arith.constant 0 : index
    %238 = tpu.strided_load %arg16[%c218, %c0_218] {strides = array<i32: 2, 1>} : memref<324x128xf32, #tpu.memory_space<vmem>>, vector<8x128xf32>
    %239 = arith.addf %237, %238 : vector<8x128xf32>
    %cst_219 = arith.constant 2.500000e-01 : f32
    %240 = vector.broadcast %cst_219 : f32 to vector<8x128xf32>
    %241 = arith.mulf %239, %240 : vector<8x128xf32>
    %c61 = arith.constant 61 : index
    %c0_220 = arith.constant 0 : index
    %242 = vector.load %arg17[%c61, %c0_220] : memref<324x128xf32, #tpu.memory_space<vmem>>, vector<8x128xf32>
    tpu.vector_store %arg17[%c61, %c0_220], %241 {strides = array<i32>} : memref<324x128xf32, #tpu.memory_space<vmem>>, vector<8x128xf32>,
    %c235 = arith.constant 235 : index
    %c0_221 = arith.constant 0 : index
    %243 = tpu.strided_load %arg16[%c235, %c0_221] {strides = array<i32: 2, 1>} : memref<324x128xf32, #tpu.memory_space<vmem>>, vector<8x128xf32>
    %c236 = arith.constant 236 : index
    %c0_222 = arith.constant 0 : index
    %244 = tpu.strided_load %arg16[%c236, %c0_222] {strides = array<i32: 2, 1>} : memref<324x128xf32, #tpu.memory_space<vmem>>, vector<8x128xf32>
    %245 = arith.addf %243, %244 : vector<8x128xf32>
    %c253 = arith.constant 253 : index
    %c0_223 = arith.constant 0 : index
    %246 = tpu.strided_load %arg16[%c253, %c0_223] {strides = array<i32: 2, 1>} : memref<324x128xf32, #tpu.memory_space<vmem>>, vector<8x128xf32>
    %247 = arith.addf %245, %246 : vector<8x128xf32>
    %c254 = arith.constant 254 : index
    %c0_224 = arith.constant 0 : index
    %248 = tpu.strided_load %arg16[%c254, %c0_224] {strides = array<i32: 2, 1>} : memref<324x128xf32, #tpu.memory_space<vmem>>, vector<8x128xf32>
    %249 = arith.addf %247, %248 : vector<8x128xf32>
    %cst_225 = arith.constant 2.500000e-01 : f32
    %250 = vector.broadcast %cst_225 : f32 to vector<8x128xf32>
    %251 = arith.mulf %249, %250 : vector<8x128xf32>
    %c71_226 = arith.constant 71 : index
    %c0_227 = arith.constant 0 : index
    %252 = vector.load %arg17[%c71_226, %c0_227] : memref<324x128xf32, #tpu.memory_space<vmem>>, vector<8x128xf32>
    tpu.vector_store %arg17[%c71_226, %c0_227], %251 {strides = array<i32>} : memref<324x128xf32, #tpu.memory_space<vmem>>, vector<8x128xf32>,
    %c271 = arith.constant 271 : index
    %c0_228 = arith.constant 0 : index
    %253 = tpu.strided_load %arg16[%c271, %c0_228] {strides = array<i32: 2, 1>} : memref<324x128xf32, #tpu.memory_space<vmem>>, vector<8x128xf32>
    %c272 = arith.constant 272 : index
    %c0_229 = arith.constant 0 : index
    %254 = tpu.strided_load %arg16[%c272, %c0_229] {strides = array<i32: 2, 1>} : memref<324x128xf32, #tpu.memory_space<vmem>>, vector<8x128xf32>
    %255 = arith.addf %253, %254 : vector<8x128xf32>
    %c289 = arith.constant 289 : index
    %c0_230 = arith.constant 0 : index
    %256 = tpu.strided_load %arg16[%c289, %c0_230] {strides = array<i32: 2, 1>} : memref<324x128xf32, #tpu.memory_space<vmem>>, vector<8x128xf32>
    %257 = arith.addf %255, %256 : vector<8x128xf32>
    %c290 = arith.constant 290 : index
    %c0_231 = arith.constant 0 : index
    %258 = tpu.strided_load %arg16[%c290, %c0_231] {strides = array<i32: 2, 1>} : memref<324x128xf32, #tpu.memory_space<vmem>>, vector<8x128xf32>
    %259 = arith.addf %257, %258 : vector<8x128xf32>
    %cst_232 = arith.constant 2.500000e-01 : f32
    %260 = vector.broadcast %cst_232 : f32 to vector<8x128xf32>
    %261 = arith.mulf %259, %260 : vector<8x128xf32>
    %c81 = arith.constant 81 : index
    %c0_233 = arith.constant 0 : index
    %262 = vector.load %arg17[%c81, %c0_233] : memref<324x128xf32, #tpu.memory_space<vmem>>, vector<8x128xf32>
    tpu.vector_store %arg17[%c81, %c0_233], %261 {strides = array<i32>} : memref<324x128xf32, #tpu.memory_space<vmem>>, vector<8x128xf32>,
    %c0_234 = arith.constant 0 : index
    %c19_235 = arith.constant 19 : index
    %c0_236 = arith.constant 0 : index
    %263 = tpu.strided_load %arg2[%c0_234, %c19_235, %c0_236] {strides = array<i32: 1, 2, 1>} : memref<1x324x128xf32, #tpu.memory_space<vmem>>, vector<1x8x128xf32>
    %264 = vector.shape_cast %263 : vector<1x8x128xf32> to vector<8x128xf32>
    %c0_237 = arith.constant 0 : index
    %c20_238 = arith.constant 20 : index
    %c0_239 = arith.constant 0 : index
    %265 = tpu.strided_load %arg2[%c0_237, %c20_238, %c0_239] {strides = array<i32: 1, 2, 1>} : memref<1x324x128xf32, #tpu.memory_space<vmem>>, vector<1x8x128xf32>
    %266 = vector.shape_cast %265 : vector<1x8x128xf32> to vector<8x128xf32>
    %267 = arith.addf %264, %266 : vector<8x128xf32>
    %c0_240 = arith.constant 0 : index
    %c37_241 = arith.constant 37 : index
    %c0_242 = arith.constant 0 : index
    %268 = tpu.strided_load %arg2[%c0_240, %c37_241, %c0_242] {strides = array<i32: 1, 2, 1>} : memref<1x324x128xf32, #tpu.memory_space<vmem>>, vector<1x8x128xf32>
    %269 = vector.shape_cast %268 : vector<1x8x128xf32> to vector<8x128xf32>
    %270 = arith.addf %267, %269 : vector<8x128xf32>
    %c0_243 = arith.constant 0 : index
    %c38_244 = arith.constant 38 : index
    %c0_245 = arith.constant 0 : index
    %271 = tpu.strided_load %arg2[%c0_243, %c38_244, %c0_245] {strides = array<i32: 1, 2, 1>} : memref<1x324x128xf32, #tpu.memory_space<vmem>>, vector<1x8x128xf32>
    %272 = vector.shape_cast %271 : vector<1x8x128xf32> to vector<8x128xf32>
    %273 = arith.addf %270, %272 : vector<8x128xf32>
    %cst_246 = arith.constant 2.500000e-01 : f32
    %274 = vector.broadcast %cst_246 : f32 to vector<8x128xf32>
    %275 = arith.mulf %273, %274 : vector<8x128xf32>
    %c11_247 = arith.constant 11 : index
    %c0_248 = arith.constant 0 : index
    %276 = vector.load %arg18[%c11_247, %c0_248] : memref<100x128xf32, #tpu.memory_space<vmem>>, vector<8x128xf32>
    tpu.vector_store %arg18[%c11_247, %c0_248], %275 {strides = array<i32>} : memref<100x128xf32, #tpu.memory_space<vmem>>, vector<8x128xf32>,
    %c0_249 = arith.constant 0 : index
    %c55_250 = arith.constant 55 : index
    %c0_251 = arith.constant 0 : index
    %277 = tpu.strided_load %arg2[%c0_249, %c55_250, %c0_251] {strides = array<i32: 1, 2, 1>} : memref<1x324x128xf32, #tpu.memory_space<vmem>>, vector<1x8x128xf32>
    %278 = vector.shape_cast %277 : vector<1x8x128xf32> to vector<8x128xf32>
    %c0_252 = arith.constant 0 : index
    %c56_253 = arith.constant 56 : index
    %c0_254 = arith.constant 0 : index
    %279 = tpu.strided_load %arg2[%c0_252, %c56_253, %c0_254] {strides = array<i32: 1, 2, 1>} : memref<1x324x128xf32, #tpu.memory_space<vmem>>, vector<1x8x128xf32>
    %280 = vector.shape_cast %279 : vector<1x8x128xf32> to vector<8x128xf32>
    %281 = arith.addf %278, %280 : vector<8x128xf32>
    %c0_255 = arith.constant 0 : index
    %c73_256 = arith.constant 73 : index
    %c0_257 = arith.constant 0 : index
    %282 = tpu.strided_load %arg2[%c0_255, %c73_256, %c0_257] {strides = array<i32: 1, 2, 1>} : memref<1x324x128xf32, #tpu.memory_space<vmem>>, vector<1x8x128xf32>
    %283 = vector.shape_cast %282 : vector<1x8x128xf32> to vector<8x128xf32>
    %284 = arith.addf %281, %283 : vector<8x128xf32>
    %c0_258 = arith.constant 0 : index
    %c74_259 = arith.constant 74 : index
    %c0_260 = arith.constant 0 : index
    %285 = tpu.strided_load %arg2[%c0_258, %c74_259, %c0_260] {strides = array<i32: 1, 2, 1>} : memref<1x324x128xf32, #tpu.memory_space<vmem>>, vector<1x8x128xf32>
    %286 = vector.shape_cast %285 : vector<1x8x128xf32> to vector<8x128xf32>
    %287 = arith.addf %284, %286 : vector<8x128xf32>
    %cst_261 = arith.constant 2.500000e-01 : f32
    %288 = vector.broadcast %cst_261 : f32 to vector<8x128xf32>
    %289 = arith.mulf %287, %288 : vector<8x128xf32>
    %c21_262 = arith.constant 21 : index
    %c0_263 = arith.constant 0 : index
    %290 = vector.load %arg18[%c21_262, %c0_263] : memref<100x128xf32, #tpu.memory_space<vmem>>, vector<8x128xf32>
    tpu.vector_store %arg18[%c21_262, %c0_263], %289 {strides = array<i32>} : memref<100x128xf32, #tpu.memory_space<vmem>>, vector<8x128xf32>,
    %c0_264 = arith.constant 0 : index
    %c91_265 = arith.constant 91 : index
    %c0_266 = arith.constant 0 : index
    %291 = tpu.strided_load %arg2[%c0_264, %c91_265, %c0_266] {strides = array<i32: 1, 2, 1>} : memref<1x324x128xf32, #tpu.memory_space<vmem>>, vector<1x8x128xf32>
    %292 = vector.shape_cast %291 : vector<1x8x128xf32> to vector<8x128xf32>
    %c0_267 = arith.constant 0 : index
    %c92_268 = arith.constant 92 : index
    %c0_269 = arith.constant 0 : index
    %293 = tpu.strided_load %arg2[%c0_267, %c92_268, %c0_269] {strides = array<i32: 1, 2, 1>} : memref<1x324x128xf32, #tpu.memory_space<vmem>>, vector<1x8x128xf32>
    %294 = vector.shape_cast %293 : vector<1x8x128xf32> to vector<8x128xf32>
    %295 = arith.addf %292, %294 : vector<8x128xf32>
    %c0_270 = arith.constant 0 : index
    %c109_271 = arith.constant 109 : index
    %c0_272 = arith.constant 0 : index
    %296 = tpu.strided_load %arg2[%c0_270, %c109_271, %c0_272] {strides = array<i32: 1, 2, 1>} : memref<1x324x128xf32, #tpu.memory_space<vmem>>, vector<1x8x128xf32>
    %297 = vector.shape_cast %296 : vector<1x8x128xf32> to vector<8x128xf32>
    %298 = arith.addf %295, %297 : vector<8x128xf32>
    %c0_273 = arith.constant 0 : index
    %c110_274 = arith.constant 110 : index
    %c0_275 = arith.constant 0 : index
    %299 = tpu.strided_load %arg2[%c0_273, %c110_274, %c0_275] {strides = array<i32: 1, 2, 1>} : memref<1x324x128xf32, #tpu.memory_space<vmem>>, vector<1x8x128xf32>
    %300 = vector.shape_cast %299 : vector<1x8x128xf32> to vector<8x128xf32>
    %301 = arith.addf %298, %300 : vector<8x128xf32>
    %cst_276 = arith.constant 2.500000e-01 : f32
    %302 = vector.broadcast %cst_276 : f32 to vector<8x128xf32>
    %303 = arith.mulf %301, %302 : vector<8x128xf32>
    %c31_277 = arith.constant 31 : index
    %c0_278 = arith.constant 0 : index
    %304 = vector.load %arg18[%c31_277, %c0_278] : memref<100x128xf32, #tpu.memory_space<vmem>>, vector<8x128xf32>
    tpu.vector_store %arg18[%c31_277, %c0_278], %303 {strides = array<i32>} : memref<100x128xf32, #tpu.memory_space<vmem>>, vector<8x128xf32>,
    %c0_279 = arith.constant 0 : index
    %c127_280 = arith.constant 127 : index
    %c0_281 = arith.constant 0 : index
    %305 = tpu.strided_load %arg2[%c0_279, %c127_280, %c0_281] {strides = array<i32: 1, 2, 1>} : memref<1x324x128xf32, #tpu.memory_space<vmem>>, vector<1x8x128xf32>
    %306 = vector.shape_cast %305 : vector<1x8x128xf32> to vector<8x128xf32>
    %c0_282 = arith.constant 0 : index
    %c128_283 = arith.constant 128 : index
    %c0_284 = arith.constant 0 : index
    %307 = tpu.strided_load %arg2[%c0_282, %c128_283, %c0_284] {strides = array<i32: 1, 2, 1>} : memref<1x324x128xf32, #tpu.memory_space<vmem>>, vector<1x8x128xf32>
    %308 = vector.shape_cast %307 : vector<1x8x128xf32> to vector<8x128xf32>
    %309 = arith.addf %306, %308 : vector<8x128xf32>
    %c0_285 = arith.constant 0 : index
    %c145_286 = arith.constant 145 : index
    %c0_287 = arith.constant 0 : index
    %310 = tpu.strided_load %arg2[%c0_285, %c145_286, %c0_287] {strides = array<i32: 1, 2, 1>} : memref<1x324x128xf32, #tpu.memory_space<vmem>>, vector<1x8x128xf32>
    %311 = vector.shape_cast %310 : vector<1x8x128xf32> to vector<8x128xf32>
    %312 = arith.addf %309, %311 : vector<8x128xf32>
    %c0_288 = arith.constant 0 : index
    %c146_289 = arith.constant 146 : index
    %c0_290 = arith.constant 0 : index
    %313 = tpu.strided_load %arg2[%c0_288, %c146_289, %c0_290] {strides = array<i32: 1, 2, 1>} : memref<1x324x128xf32, #tpu.memory_space<vmem>>, vector<1x8x128xf32>
    %314 = vector.shape_cast %313 : vector<1x8x128xf32> to vector<8x128xf32>
    %315 = arith.addf %312, %314 : vector<8x128xf32>
    %cst_291 = arith.constant 2.500000e-01 : f32
    %316 = vector.broadcast %cst_291 : f32 to vector<8x128xf32>
    %317 = arith.mulf %315, %316 : vector<8x128xf32>
    %c41_292 = arith.constant 41 : index
    %c0_293 = arith.constant 0 : index
    %318 = vector.load %arg18[%c41_292, %c0_293] : memref<100x128xf32, #tpu.memory_space<vmem>>, vector<8x128xf32>
    tpu.vector_store %arg18[%c41_292, %c0_293], %317 {strides = array<i32>} : memref<100x128xf32, #tpu.memory_space<vmem>>, vector<8x128xf32>,
    %c0_294 = arith.constant 0 : index
    %c163_295 = arith.constant 163 : index
    %c0_296 = arith.constant 0 : index
    %319 = tpu.strided_load %arg2[%c0_294, %c163_295, %c0_296] {strides = array<i32: 1, 2, 1>} : memref<1x324x128xf32, #tpu.memory_space<vmem>>, vector<1x8x128xf32>
    %320 = vector.shape_cast %319 : vector<1x8x128xf32> to vector<8x128xf32>
    %c0_297 = arith.constant 0 : index
    %c164_298 = arith.constant 164 : index
    %c0_299 = arith.constant 0 : index
    %321 = tpu.strided_load %arg2[%c0_297, %c164_298, %c0_299] {strides = array<i32: 1, 2, 1>} : memref<1x324x128xf32, #tpu.memory_space<vmem>>, vector<1x8x128xf32>
    %322 = vector.shape_cast %321 : vector<1x8x128xf32> to vector<8x128xf32>
    %323 = arith.addf %320, %322 : vector<8x128xf32>
    %c0_300 = arith.constant 0 : index
    %c181_301 = arith.constant 181 : index
    %c0_302 = arith.constant 0 : index
    %324 = tpu.strided_load %arg2[%c0_300, %c181_301, %c0_302] {strides = array<i32: 1, 2, 1>} : memref<1x324x128xf32, #tpu.memory_space<vmem>>, vector<1x8x128xf32>
    %325 = vector.shape_cast %324 : vector<1x8x128xf32> to vector<8x128xf32>
    %326 = arith.addf %323, %325 : vector<8x128xf32>
    %c0_303 = arith.constant 0 : index
    %c182_304 = arith.constant 182 : index
    %c0_305 = arith.constant 0 : index
    %327 = tpu.strided_load %arg2[%c0_303, %c182_304, %c0_305] {strides = array<i32: 1, 2, 1>} : memref<1x324x128xf32, #tpu.memory_space<vmem>>, vector<1x8x128xf32>
    %328 = vector.shape_cast %327 : vector<1x8x128xf32> to vector<8x128xf32>
    %329 = arith.addf %326, %328 : vector<8x128xf32>
    %cst_306 = arith.constant 2.500000e-01 : f32
    %330 = vector.broadcast %cst_306 : f32 to vector<8x128xf32>
    %331 = arith.mulf %329, %330 : vector<8x128xf32>
    %c51_307 = arith.constant 51 : index
    %c0_308 = arith.constant 0 : index
    %332 = vector.load %arg18[%c51_307, %c0_308] : memref<100x128xf32, #tpu.memory_space<vmem>>, vector<8x128xf32>
    tpu.vector_store %arg18[%c51_307, %c0_308], %331 {strides = array<i32>} : memref<100x128xf32, #tpu.memory_space<vmem>>, vector<8x128xf32>,
    %c0_309 = arith.constant 0 : index
    %c199_310 = arith.constant 199 : index
    %c0_311 = arith.constant 0 : index
    %333 = tpu.strided_load %arg2[%c0_309, %c199_310, %c0_311] {strides = array<i32: 1, 2, 1>} : memref<1x324x128xf32, #tpu.memory_space<vmem>>, vector<1x8x128xf32>
    %334 = vector.shape_cast %333 : vector<1x8x128xf32> to vector<8x128xf32>
    %c0_312 = arith.constant 0 : index
    %c200_313 = arith.constant 200 : index
    %c0_314 = arith.constant 0 : index
    %335 = tpu.strided_load %arg2[%c0_312, %c200_313, %c0_314] {strides = array<i32: 1, 2, 1>} : memref<1x324x128xf32, #tpu.memory_space<vmem>>, vector<1x8x128xf32>
    %336 = vector.shape_cast %335 : vector<1x8x128xf32> to vector<8x128xf32>
    %337 = arith.addf %334, %336 : vector<8x128xf32>
    %c0_315 = arith.constant 0 : index
    %c217_316 = arith.constant 217 : index
    %c0_317 = arith.constant 0 : index
    %338 = tpu.strided_load %arg2[%c0_315, %c217_316, %c0_317] {strides = array<i32: 1, 2, 1>} : memref<1x324x128xf32, #tpu.memory_space<vmem>>, vector<1x8x128xf32>
    %339 = vector.shape_cast %338 : vector<1x8x128xf32> to vector<8x128xf32>
    %340 = arith.addf %337, %339 : vector<8x128xf32>
    %c0_318 = arith.constant 0 : index
    %c218_319 = arith.constant 218 : index
    %c0_320 = arith.constant 0 : index
    %341 = tpu.strided_load %arg2[%c0_318, %c218_319, %c0_320] {strides = array<i32: 1, 2, 1>} : memref<1x324x128xf32, #tpu.memory_space<vmem>>, vector<1x8x128xf32>
    %342 = vector.shape_cast %341 : vector<1x8x128xf32> to vector<8x128xf32>
    %343 = arith.addf %340, %342 : vector<8x128xf32>
    %cst_321 = arith.constant 2.500000e-01 : f32
    %344 = vector.broadcast %cst_321 : f32 to vector<8x128xf32>
    %345 = arith.mulf %343, %344 : vector<8x128xf32>
    %c61_322 = arith.constant 61 : index
    %c0_323 = arith.constant 0 : index
    %346 = vector.load %arg18[%c61_322, %c0_323] : memref<100x128xf32, #tpu.memory_space<vmem>>, vector<8x128xf32>
    tpu.vector_store %arg18[%c61_322, %c0_323], %345 {strides = array<i32>} : memref<100x128xf32, #tpu.memory_space<vmem>>, vector<8x128xf32>,
    %c0_324 = arith.constant 0 : index
    %c235_325 = arith.constant 235 : index
    %c0_326 = arith.constant 0 : index
    %347 = tpu.strided_load %arg2[%c0_324, %c235_325, %c0_326] {strides = array<i32: 1, 2, 1>} : memref<1x324x128xf32, #tpu.memory_space<vmem>>, vector<1x8x128xf32>
    %348 = vector.shape_cast %347 : vector<1x8x128xf32> to vector<8x128xf32>
    %c0_327 = arith.constant 0 : index
    %c236_328 = arith.constant 236 : index
    %c0_329 = arith.constant 0 : index
    %349 = tpu.strided_load %arg2[%c0_327, %c236_328, %c0_329] {strides = array<i32: 1, 2, 1>} : memref<1x324x128xf32, #tpu.memory_space<vmem>>, vector<1x8x128xf32>
    %350 = vector.shape_cast %349 : vector<1x8x128xf32> to vector<8x128xf32>
    %351 = arith.addf %348, %350 : vector<8x128xf32>
    %c0_330 = arith.constant 0 : index
    %c253_331 = arith.constant 253 : index
    %c0_332 = arith.constant 0 : index
    %352 = tpu.strided_load %arg2[%c0_330, %c253_331, %c0_332] {strides = array<i32: 1, 2, 1>} : memref<1x324x128xf32, #tpu.memory_space<vmem>>, vector<1x8x128xf32>
    %353 = vector.shape_cast %352 : vector<1x8x128xf32> to vector<8x128xf32>
    %354 = arith.addf %351, %353 : vector<8x128xf32>
    %c0_333 = arith.constant 0 : index
    %c254_334 = arith.constant 254 : index
    %c0_335 = arith.constant 0 : index
    %355 = tpu.strided_load %arg2[%c0_333, %c254_334, %c0_335] {strides = array<i32: 1, 2, 1>} : memref<1x324x128xf32, #tpu.memory_space<vmem>>, vector<1x8x128xf32>
    %356 = vector.shape_cast %355 : vector<1x8x128xf32> to vector<8x128xf32>
    %357 = arith.addf %354, %356 : vector<8x128xf32>
    %cst_336 = arith.constant 2.500000e-01 : f32
    %358 = vector.broadcast %cst_336 : f32 to vector<8x128xf32>
    %359 = arith.mulf %357, %358 : vector<8x128xf32>
    %c71_337 = arith.constant 71 : index
    %c0_338 = arith.constant 0 : index
    %360 = vector.load %arg18[%c71_337, %c0_338] : memref<100x128xf32, #tpu.memory_space<vmem>>, vector<8x128xf32>
    tpu.vector_store %arg18[%c71_337, %c0_338], %359 {strides = array<i32>} : memref<100x128xf32, #tpu.memory_space<vmem>>, vector<8x128xf32>,
    %c0_339 = arith.constant 0 : index
    %c271_340 = arith.constant 271 : index
    %c0_341 = arith.constant 0 : index
    %361 = tpu.strided_load %arg2[%c0_339, %c271_340, %c0_341] {strides = array<i32: 1, 2, 1>} : memref<1x324x128xf32, #tpu.memory_space<vmem>>, vector<1x8x128xf32>
    %362 = vector.shape_cast %361 : vector<1x8x128xf32> to vector<8x128xf32>
    %c0_342 = arith.constant 0 : index
    %c272_343 = arith.constant 272 : index
    %c0_344 = arith.constant 0 : index
    %363 = tpu.strided_load %arg2[%c0_342, %c272_343, %c0_344] {strides = array<i32: 1, 2, 1>} : memref<1x324x128xf32, #tpu.memory_space<vmem>>, vector<1x8x128xf32>
    %364 = vector.shape_cast %363 : vector<1x8x128xf32> to vector<8x128xf32>
    %365 = arith.addf %362, %364 : vector<8x128xf32>
    %c0_345 = arith.constant 0 : index
    %c289_346 = arith.constant 289 : index
    %c0_347 = arith.constant 0 : index
    %366 = tpu.strided_load %arg2[%c0_345, %c289_346, %c0_347] {strides = array<i32: 1, 2, 1>} : memref<1x324x128xf32, #tpu.memory_space<vmem>>, vector<1x8x128xf32>
    %367 = vector.shape_cast %366 : vector<1x8x128xf32> to vector<8x128xf32>
    %368 = arith.addf %365, %367 : vector<8x128xf32>
    %c0_348 = arith.constant 0 : index
    %c290_349 = arith.constant 290 : index
    %c0_350 = arith.constant 0 : index
    %369 = tpu.strided_load %arg2[%c0_348, %c290_349, %c0_350] {strides = array<i32: 1, 2, 1>} : memref<1x324x128xf32, #tpu.memory_space<vmem>>, vector<1x8x128xf32>
    %370 = vector.shape_cast %369 : vector<1x8x128xf32> to vector<8x128xf32>
    %371 = arith.addf %368, %370 : vector<8x128xf32>
    %cst_351 = arith.constant 2.500000e-01 : f32
    %372 = vector.broadcast %cst_351 : f32 to vector<8x128xf32>
    %373 = arith.mulf %371, %372 : vector<8x128xf32>
    %c81_352 = arith.constant 81 : index
    %c0_353 = arith.constant 0 : index
    %374 = vector.load %arg18[%c81_352, %c0_353] : memref<100x128xf32, #tpu.memory_space<vmem>>, vector<8x128xf32>
    tpu.vector_store %arg18[%c81_352, %c0_353], %373 {strides = array<i32>} : memref<100x128xf32, #tpu.memory_space<vmem>>, vector<8x128xf32>,
    %c11_354 = arith.constant 11 : index
    %c0_355 = arith.constant 0 : index
    %375 = vector.load %arg18[%c11_354, %c0_355] : memref<100x128xf32, #tpu.memory_space<vmem>>, vector<78x128xf32>
    %376 = arith.truncf %375 : vector<78x128xf32> to vector<78x128xbf16>
    %c0_356 = arith.constant 0 : index
    %c0_357 = arith.constant 0 : index
    %377 = vector.load %arg9[%c0_356, %c0_357] : memref<128x128xbf16, #tpu.memory_space<vmem>>, vector<128x128xbf16>
    %cst_358 = arith.constant dense<0.000000e+00> : vector<78x128xf32>
    %378 = tpu.matmul %376, %377, %cst_358 {dimension_numbers = #tpu.dot_dimension_numbers<[1], [0], [0], [1], [0, 0, 1, 1], [], []>} : vector<78x128xbf16>, vector<128x128xbf16>, vector<78x128xf32> -> vector<78x128xf32>
    %c0_359 = arith.constant 0 : index
    %c0_360 = arith.constant 0 : index
    %379 = vector.load %arg10[%c0_359, %c0_360] : memref<1x128xf32, #tpu.memory_space<vmem>>, vector<1x128xf32>
    %380 = vector.broadcast %379 : vector<1x128xf32> to vector<78x128xf32>
    %381 = arith.addf %378, %380 : vector<78x128xf32>
    %c11_361 = arith.constant 11 : index
    %c0_362 = arith.constant 0 : index
    %382 = vector.load %arg16[%c11_361, %c0_362] : memref<324x128xf32, #tpu.memory_space<vmem>>, vector<78x128xf32>
    tpu.vector_store %arg16[%c11_361, %c0_362], %381 {strides = array<i32>} : memref<324x128xf32, #tpu.memory_space<vmem>>, vector<78x128xf32>,
    %c0_363 = arith.constant 0 : index
    %383 = memref.load %arg1[%c0_363] : memref<1xf32, #tpu.memory_space<smem>>
    %c11_364 = arith.constant 11 : index
    %c0_365 = arith.constant 0 : index
    %384 = vector.load %arg17[%c11_364, %c0_365] : memref<324x128xf32, #tpu.memory_space<vmem>>, vector<78x128xf32>
    %385 = vector.broadcast %383 : f32 to vector<78x128xf32>
    %386 = arith.mulf %385, %384 : vector<78x128xf32>
    %cst_366 = arith.constant 1.000000e+00 : f32
    %387 = arith.subf %cst_366, %383 : f32
    %c11_367 = arith.constant 11 : index
    %c0_368 = arith.constant 0 : index
    %388 = vector.load %arg16[%c11_367, %c0_368] : memref<324x128xf32, #tpu.memory_space<vmem>>, vector<78x128xf32>
    %389 = vector.broadcast %387 : f32 to vector<78x128xf32>
    %390 = arith.mulf %389, %388 : vector<78x128xf32>
    %391 = arith.addf %386, %390 : vector<78x128xf32>
    %392 = math.tanh %391 : vector<78x128xf32>
    %c11_369 = arith.constant 11 : index
    %c0_370 = arith.constant 0 : index
    %393 = vector.load %arg16[%c11_369, %c0_370] : memref<324x128xf32, #tpu.memory_space<vmem>>, vector<78x128xf32>
    tpu.vector_store %arg16[%c11_369, %c0_370], %392 {strides = array<i32>} : memref<324x128xf32, #tpu.memory_space<vmem>>, vector<78x128xf32>,
    %cst_371 = arith.constant 0.000000e+00 : f32
    %394 = vector.broadcast %cst_371 : f32 to vector<11x128xf32>
    %c0_372 = arith.constant 0 : index
    %c0_373 = arith.constant 0 : index
    %395 = vector.load %arg16[%c0_372, %c0_373] : memref<324x128xf32, #tpu.memory_space<vmem>>, vector<11x128xf32>
    tpu.vector_store %arg16[%c0_372, %c0_373], %394 {strides = array<i32>} : memref<324x128xf32, #tpu.memory_space<vmem>>, vector<11x128xf32>,
    %cst_374 = arith.constant 0.000000e+00 : f32
    %396 = vector.broadcast %cst_374 : f32 to vector<11x128xf32>
    %c89_375 = arith.constant 89 : index
    %c0_376 = arith.constant 0 : index
    %397 = vector.load %arg16[%c89_375, %c0_376] : memref<324x128xf32, #tpu.memory_space<vmem>>, vector<11x128xf32>
    tpu.vector_store %arg16[%c89_375, %c0_376], %396 {strides = array<i32>} : memref<324x128xf32, #tpu.memory_space<vmem>>, vector<11x128xf32>,
    %cst_377 = arith.constant 0.000000e+00 : f32
    %398 = vector.broadcast %cst_377 : f32 to vector<2x128xf32>
    %c19_378 = arith.constant 19 : index
    %c0_379 = arith.constant 0 : index
    %399 = vector.load %arg16[%c19_378, %c0_379] : memref<324x128xf32, #tpu.memory_space<vmem>>, vector<2x128xf32>
    tpu.vector_store %arg16[%c19_378, %c0_379], %398 {strides = array<i32>} : memref<324x128xf32, #tpu.memory_space<vmem>>, vector<2x128xf32>,
    %cst_380 = arith.constant 0.000000e+00 : f32
    %400 = vector.broadcast %cst_380 : f32 to vector<2x128xf32>
    %c29 = arith.constant 29 : index
    %c0_381 = arith.constant 0 : index
    %401 = vector.load %arg16[%c29, %c0_381] : memref<324x128xf32, #tpu.memory_space<vmem>>, vector<2x128xf32>
    tpu.vector_store %arg16[%c29, %c0_381], %400 {strides = array<i32>} : memref<324x128xf32, #tpu.memory_space<vmem>>, vector<2x128xf32>,
    %cst_382 = arith.constant 0.000000e+00 : f32
    %402 = vector.broadcast %cst_382 : f32 to vector<2x128xf32>
    %c39 = arith.constant 39 : index
    %c0_383 = arith.constant 0 : index
    %403 = vector.load %arg16[%c39, %c0_383] : memref<324x128xf32, #tpu.memory_space<vmem>>, vector<2x128xf32>
    tpu.vector_store %arg16[%c39, %c0_383], %402 {strides = array<i32>} : memref<324x128xf32, #tpu.memory_space<vmem>>, vector<2x128xf32>,
    %cst_384 = arith.constant 0.000000e+00 : f32
    %404 = vector.broadcast %cst_384 : f32 to vector<2x128xf32>
    %c49 = arith.constant 49 : index
    %c0_385 = arith.constant 0 : index
    %405 = vector.load %arg16[%c49, %c0_385] : memref<324x128xf32, #tpu.memory_space<vmem>>, vector<2x128xf32>
    tpu.vector_store %arg16[%c49, %c0_385], %404 {strides = array<i32>} : memref<324x128xf32, #tpu.memory_space<vmem>>, vector<2x128xf32>,
    %cst_386 = arith.constant 0.000000e+00 : f32
    %406 = vector.broadcast %cst_386 : f32 to vector<2x128xf32>
    %c59 = arith.constant 59 : index
    %c0_387 = arith.constant 0 : index
    %407 = vector.load %arg16[%c59, %c0_387] : memref<324x128xf32, #tpu.memory_space<vmem>>, vector<2x128xf32>
    tpu.vector_store %arg16[%c59, %c0_387], %406 {strides = array<i32>} : memref<324x128xf32, #tpu.memory_space<vmem>>, vector<2x128xf32>,
    %cst_388 = arith.constant 0.000000e+00 : f32
    %408 = vector.broadcast %cst_388 : f32 to vector<2x128xf32>
    %c69 = arith.constant 69 : index
    %c0_389 = arith.constant 0 : index
    %409 = vector.load %arg16[%c69, %c0_389] : memref<324x128xf32, #tpu.memory_space<vmem>>, vector<2x128xf32>
    tpu.vector_store %arg16[%c69, %c0_389], %408 {strides = array<i32>} : memref<324x128xf32, #tpu.memory_space<vmem>>, vector<2x128xf32>,
    %cst_390 = arith.constant 0.000000e+00 : f32
    %410 = vector.broadcast %cst_390 : f32 to vector<2x128xf32>
    %c79 = arith.constant 79 : index
    %c0_391 = arith.constant 0 : index
    %411 = vector.load %arg16[%c79, %c0_391] : memref<324x128xf32, #tpu.memory_space<vmem>>, vector<2x128xf32>
    tpu.vector_store %arg16[%c79, %c0_391], %410 {strides = array<i32>} : memref<324x128xf32, #tpu.memory_space<vmem>>, vector<2x128xf32>,
    %cst_392 = arith.constant 0.000000e+00 : f32
    %412 = vector.broadcast %cst_392 : f32 to vector<78x128xf32>
    %c0_393 = arith.constant 0 : index
    %c0_394 = arith.constant 0 : index
    %413 = vector.load %arg16[%c0_393, %c0_394] : memref<324x128xf32, #tpu.memory_space<vmem>>, vector<78x128xf32>
    %414 = arith.truncf %413 : vector<78x128xf32> to vector<78x128xbf16>
    %c0_395 = arith.constant 0 : index
    %c0_396 = arith.constant 0 : index
    %415 = vector.load %arg11[%c0_395, %c0_396] : memref<1152x128xbf16, #tpu.memory_space<vmem>>, vector<128x128xbf16>
    %cst_397 = arith.constant dense<0.000000e+00> : vector<78x128xf32>
    %416 = tpu.matmul %414, %415, %cst_397 {dimension_numbers = #tpu.dot_dimension_numbers<[1], [0], [0], [1], [0, 0, 1, 1], [], []>} : vector<78x128xbf16>, vector<128x128xbf16>, vector<78x128xf32> -> vector<78x128xf32>
    %417 = arith.addf %412, %416 : vector<78x128xf32>
    %c1_398 = arith.constant 1 : index
    %c0_399 = arith.constant 0 : index
    %418 = vector.load %arg16[%c1_398, %c0_399] : memref<324x128xf32, #tpu.memory_space<vmem>>, vector<78x128xf32>
    %419 = arith.truncf %418 : vector<78x128xf32> to vector<78x128xbf16>
    %c128_400 = arith.constant 128 : index
    %c0_401 = arith.constant 0 : index
    %420 = vector.load %arg11[%c128_400, %c0_401] : memref<1152x128xbf16, #tpu.memory_space<vmem>>, vector<128x128xbf16>
    %cst_402 = arith.constant dense<0.000000e+00> : vector<78x128xf32>
    %421 = tpu.matmul %419, %420, %cst_402 {dimension_numbers = #tpu.dot_dimension_numbers<[1], [0], [0], [1], [0, 0, 1, 1], [], []>} : vector<78x128xbf16>, vector<128x128xbf16>, vector<78x128xf32> -> vector<78x128xf32>
    %422 = arith.addf %417, %421 : vector<78x128xf32>
    %c2_403 = arith.constant 2 : index
    %c0_404 = arith.constant 0 : index
    %423 = vector.load %arg16[%c2_403, %c0_404] : memref<324x128xf32, #tpu.memory_space<vmem>>, vector<78x128xf32>
    %424 = arith.truncf %423 : vector<78x128xf32> to vector<78x128xbf16>
    %c256_405 = arith.constant 256 : index
    %c0_406 = arith.constant 0 : index
    %425 = vector.load %arg11[%c256_405, %c0_406] : memref<1152x128xbf16, #tpu.memory_space<vmem>>, vector<128x128xbf16>
    %cst_407 = arith.constant dense<0.000000e+00> : vector<78x128xf32>
    %426 = tpu.matmul %424, %425, %cst_407 {dimension_numbers = #tpu.dot_dimension_numbers<[1], [0], [0], [1], [0, 0, 1, 1], [], []>} : vector<78x128xbf16>, vector<128x128xbf16>, vector<78x128xf32> -> vector<78x128xf32>
    %427 = arith.addf %422, %426 : vector<78x128xf32>
    %c10 = arith.constant 10 : index
    %c0_408 = arith.constant 0 : index
    %428 = vector.load %arg16[%c10, %c0_408] : memref<324x128xf32, #tpu.memory_space<vmem>>, vector<78x128xf32>
    %429 = arith.truncf %428 : vector<78x128xf32> to vector<78x128xbf16>
    %c384_409 = arith.constant 384 : index
    %c0_410 = arith.constant 0 : index
    %430 = vector.load %arg11[%c384_409, %c0_410] : memref<1152x128xbf16, #tpu.memory_space<vmem>>, vector<128x128xbf16>
    %cst_411 = arith.constant dense<0.000000e+00> : vector<78x128xf32>
    %431 = tpu.matmul %429, %430, %cst_411 {dimension_numbers = #tpu.dot_dimension_numbers<[1], [0], [0], [1], [0, 0, 1, 1], [], []>} : vector<78x128xbf16>, vector<128x128xbf16>, vector<78x128xf32> -> vector<78x128xf32>
    %432 = arith.addf %427, %431 : vector<78x128xf32>
    %c11_412 = arith.constant 11 : index
    %c0_413 = arith.constant 0 : index
    %433 = vector.load %arg16[%c11_412, %c0_413] : memref<324x128xf32, #tpu.memory_space<vmem>>, vector<78x128xf32>
    %434 = arith.truncf %433 : vector<78x128xf32> to vector<78x128xbf16>
    %c512_414 = arith.constant 512 : index
    %c0_415 = arith.constant 0 : index
    %435 = vector.load %arg11[%c512_414, %c0_415] : memref<1152x128xbf16, #tpu.memory_space<vmem>>, vector<128x128xbf16>
    %cst_416 = arith.constant dense<0.000000e+00> : vector<78x128xf32>
    %436 = tpu.matmul %434, %435, %cst_416 {dimension_numbers = #tpu.dot_dimension_numbers<[1], [0], [0], [1], [0, 0, 1, 1], [], []>} : vector<78x128xbf16>, vector<128x128xbf16>, vector<78x128xf32> -> vector<78x128xf32>
    %437 = arith.addf %432, %436 : vector<78x128xf32>
    %c12 = arith.constant 12 : index
    %c0_417 = arith.constant 0 : index
    %438 = vector.load %arg16[%c12, %c0_417] : memref<324x128xf32, #tpu.memory_space<vmem>>, vector<78x128xf32>
    %439 = arith.truncf %438 : vector<78x128xf32> to vector<78x128xbf16>
    %c640_418 = arith.constant 640 : index
    %c0_419 = arith.constant 0 : index
    %440 = vector.load %arg11[%c640_418, %c0_419] : memref<1152x128xbf16, #tpu.memory_space<vmem>>, vector<128x128xbf16>
    %cst_420 = arith.constant dense<0.000000e+00> : vector<78x128xf32>
    %441 = tpu.matmul %439, %440, %cst_420 {dimension_numbers = #tpu.dot_dimension_numbers<[1], [0], [0], [1], [0, 0, 1, 1], [], []>} : vector<78x128xbf16>, vector<128x128xbf16>, vector<78x128xf32> -> vector<78x128xf32>
    %442 = arith.addf %437, %441 : vector<78x128xf32>
    %c20_421 = arith.constant 20 : index
    %c0_422 = arith.constant 0 : index
    %443 = vector.load %arg16[%c20_421, %c0_422] : memref<324x128xf32, #tpu.memory_space<vmem>>, vector<78x128xf32>
    %444 = arith.truncf %443 : vector<78x128xf32> to vector<78x128xbf16>
    %c768_423 = arith.constant 768 : index
    %c0_424 = arith.constant 0 : index
    %445 = vector.load %arg11[%c768_423, %c0_424] : memref<1152x128xbf16, #tpu.memory_space<vmem>>, vector<128x128xbf16>
    %cst_425 = arith.constant dense<0.000000e+00> : vector<78x128xf32>
    %446 = tpu.matmul %444, %445, %cst_425 {dimension_numbers = #tpu.dot_dimension_numbers<[1], [0], [0], [1], [0, 0, 1, 1], [], []>} : vector<78x128xbf16>, vector<128x128xbf16>, vector<78x128xf32> -> vector<78x128xf32>
    %447 = arith.addf %442, %446 : vector<78x128xf32>
    %c21_426 = arith.constant 21 : index
    %c0_427 = arith.constant 0 : index
    %448 = vector.load %arg16[%c21_426, %c0_427] : memref<324x128xf32, #tpu.memory_space<vmem>>, vector<78x128xf32>
    %449 = arith.truncf %448 : vector<78x128xf32> to vector<78x128xbf16>
    %c896_428 = arith.constant 896 : index
    %c0_429 = arith.constant 0 : index
    %450 = vector.load %arg11[%c896_428, %c0_429] : memref<1152x128xbf16, #tpu.memory_space<vmem>>, vector<128x128xbf16>
    %cst_430 = arith.constant dense<0.000000e+00> : vector<78x128xf32>
    %451 = tpu.matmul %449, %450, %cst_430 {dimension_numbers = #tpu.dot_dimension_numbers<[1], [0], [0], [1], [0, 0, 1, 1], [], []>} : vector<78x128xbf16>, vector<128x128xbf16>, vector<78x128xf32> -> vector<78x128xf32>
    %452 = arith.addf %447, %451 : vector<78x128xf32>
    %c22 = arith.constant 22 : index
    %c0_431 = arith.constant 0 : index
    %453 = vector.load %arg16[%c22, %c0_431] : memref<324x128xf32, #tpu.memory_space<vmem>>, vector<78x128xf32>
    %454 = arith.truncf %453 : vector<78x128xf32> to vector<78x128xbf16>
    %c1024_432 = arith.constant 1024 : index
    %c0_433 = arith.constant 0 : index
    %455 = vector.load %arg11[%c1024_432, %c0_433] : memref<1152x128xbf16, #tpu.memory_space<vmem>>, vector<128x128xbf16>
    %cst_434 = arith.constant dense<0.000000e+00> : vector<78x128xf32>
    %456 = tpu.matmul %454, %455, %cst_434 {dimension_numbers = #tpu.dot_dimension_numbers<[1], [0], [0], [1], [0, 0, 1, 1], [], []>} : vector<78x128xbf16>, vector<128x128xbf16>, vector<78x128xf32> -> vector<78x128xf32>
    %457 = arith.addf %452, %456 : vector<78x128xf32>
    %c0_435 = arith.constant 0 : index
    %c0_436 = arith.constant 0 : index
    %458 = vector.load %arg12[%c0_435, %c0_436] : memref<1x128xf32, #tpu.memory_space<vmem>>, vector<1x128xf32>
    %459 = vector.broadcast %458 : vector<1x128xf32> to vector<78x128xf32>
    %460 = arith.addf %457, %459 : vector<78x128xf32>
    %cst_437 = arith.constant 2.000000e-01 : f32
    %461 = vector.broadcast %cst_437 : f32 to vector<78x128xf32>
    %462 = arith.mulf %461, %460 : vector<78x128xf32>
    %463 = arith.maximumf %460, %462 : vector<78x128xf32>
    %c11_438 = arith.constant 11 : index
    %c0_439 = arith.constant 0 : index
    %464 = vector.load %arg17[%c11_438, %c0_439] : memref<324x128xf32, #tpu.memory_space<vmem>>, vector<78x128xf32>
    tpu.vector_store %arg17[%c11_438, %c0_439], %463 {strides = array<i32>} : memref<324x128xf32, #tpu.memory_space<vmem>>, vector<78x128xf32>,
    %cst_440 = arith.constant 0.000000e+00 : f32
    %465 = vector.broadcast %cst_440 : f32 to vector<11x128xf32>
    %c0_441 = arith.constant 0 : index
    %c0_442 = arith.constant 0 : index
    %466 = vector.load %arg17[%c0_441, %c0_442] : memref<324x128xf32, #tpu.memory_space<vmem>>, vector<11x128xf32>
    tpu.vector_store %arg17[%c0_441, %c0_442], %465 {strides = array<i32>} : memref<324x128xf32, #tpu.memory_space<vmem>>, vector<11x128xf32>,
    %cst_443 = arith.constant 0.000000e+00 : f32
    %467 = vector.broadcast %cst_443 : f32 to vector<11x128xf32>
    %c89_444 = arith.constant 89 : index
    %c0_445 = arith.constant 0 : index
    %468 = vector.load %arg17[%c89_444, %c0_445] : memref<324x128xf32, #tpu.memory_space<vmem>>, vector<11x128xf32>
    tpu.vector_store %arg17[%c89_444, %c0_445], %467 {strides = array<i32>} : memref<324x128xf32, #tpu.memory_space<vmem>>, vector<11x128xf32>,
    %cst_446 = arith.constant 0.000000e+00 : f32
    %469 = vector.broadcast %cst_446 : f32 to vector<2x128xf32>
    %c19_447 = arith.constant 19 : index
    %c0_448 = arith.constant 0 : index
    %470 = vector.load %arg17[%c19_447, %c0_448] : memref<324x128xf32, #tpu.memory_space<vmem>>, vector<2x128xf32>
    tpu.vector_store %arg17[%c19_447, %c0_448], %469 {strides = array<i32>} : memref<324x128xf32, #tpu.memory_space<vmem>>, vector<2x128xf32>,
    %cst_449 = arith.constant 0.000000e+00 : f32
    %471 = vector.broadcast %cst_449 : f32 to vector<2x128xf32>
    %c29_450 = arith.constant 29 : index
    %c0_451 = arith.constant 0 : index
    %472 = vector.load %arg17[%c29_450, %c0_451] : memref<324x128xf32, #tpu.memory_space<vmem>>, vector<2x128xf32>
    tpu.vector_store %arg17[%c29_450, %c0_451], %471 {strides = array<i32>} : memref<324x128xf32, #tpu.memory_space<vmem>>, vector<2x128xf32>,
    %cst_452 = arith.constant 0.000000e+00 : f32
    %473 = vector.broadcast %cst_452 : f32 to vector<2x128xf32>
    %c39_453 = arith.constant 39 : index
    %c0_454 = arith.constant 0 : index
    %474 = vector.load %arg17[%c39_453, %c0_454] : memref<324x128xf32, #tpu.memory_space<vmem>>, vector<2x128xf32>
    tpu.vector_store %arg17[%c39_453, %c0_454], %473 {strides = array<i32>} : memref<324x128xf32, #tpu.memory_space<vmem>>, vector<2x128xf32>,
    %cst_455 = arith.constant 0.000000e+00 : f32
    %475 = vector.broadcast %cst_455 : f32 to vector<2x128xf32>
    %c49_456 = arith.constant 49 : index
    %c0_457 = arith.constant 0 : index
    %476 = vector.load %arg17[%c49_456, %c0_457] : memref<324x128xf32, #tpu.memory_space<vmem>>, vector<2x128xf32>
    tpu.vector_store %arg17[%c49_456, %c0_457], %475 {strides = array<i32>} : memref<324x128xf32, #tpu.memory_space<vmem>>, vector<2x128xf32>,
    %cst_458 = arith.constant 0.000000e+00 : f32
    %477 = vector.broadcast %cst_458 : f32 to vector<2x128xf32>
    %c59_459 = arith.constant 59 : index
    %c0_460 = arith.constant 0 : index
    %478 = vector.load %arg17[%c59_459, %c0_460] : memref<324x128xf32, #tpu.memory_space<vmem>>, vector<2x128xf32>
    tpu.vector_store %arg17[%c59_459, %c0_460], %477 {strides = array<i32>} : memref<324x128xf32, #tpu.memory_space<vmem>>, vector<2x128xf32>,
    %cst_461 = arith.constant 0.000000e+00 : f32
    %479 = vector.broadcast %cst_461 : f32 to vector<2x128xf32>
    %c69_462 = arith.constant 69 : index
    %c0_463 = arith.constant 0 : index
    %480 = vector.load %arg17[%c69_462, %c0_463] : memref<324x128xf32, #tpu.memory_space<vmem>>, vector<2x128xf32>
    tpu.vector_store %arg17[%c69_462, %c0_463], %479 {strides = array<i32>} : memref<324x128xf32, #tpu.memory_space<vmem>>, vector<2x128xf32>,
    %cst_464 = arith.constant 0.000000e+00 : f32
    %481 = vector.broadcast %cst_464 : f32 to vector<2x128xf32>
    %c79_465 = arith.constant 79 : index
    %c0_466 = arith.constant 0 : index
    %482 = vector.load %arg17[%c79_465, %c0_466] : memref<324x128xf32, #tpu.memory_space<vmem>>, vector<2x128xf32>
    tpu.vector_store %arg17[%c79_465, %c0_466], %481 {strides = array<i32>} : memref<324x128xf32, #tpu.memory_space<vmem>>, vector<2x128xf32>,
    %cst_467 = arith.constant 0.000000e+00 : f32
    %483 = vector.broadcast %cst_467 : f32 to vector<78x128xf32>
    %c0_468 = arith.constant 0 : index
    %c0_469 = arith.constant 0 : index
    %484 = vector.load %arg17[%c0_468, %c0_469] : memref<324x128xf32, #tpu.memory_space<vmem>>, vector<78x128xf32>
    %485 = arith.truncf %484 : vector<78x128xf32> to vector<78x128xbf16>
    %c0_470 = arith.constant 0 : index
    %c0_471 = arith.constant 0 : index
    %486 = vector.load %arg13[%c0_470, %c0_471] : memref<1152x128xbf16, #tpu.memory_space<vmem>>, vector<128x128xbf16>
    %cst_472 = arith.constant dense<0.000000e+00> : vector<78x128xf32>
    %487 = tpu.matmul %485, %486, %cst_472 {dimension_numbers = #tpu.dot_dimension_numbers<[1], [0], [0], [1], [0, 0, 1, 1], [], []>} : vector<78x128xbf16>, vector<128x128xbf16>, vector<78x128xf32> -> vector<78x128xf32>
    %488 = arith.addf %483, %487 : vector<78x128xf32>
    %c1_473 = arith.constant 1 : index
    %c0_474 = arith.constant 0 : index
    %489 = vector.load %arg17[%c1_473, %c0_474] : memref<324x128xf32, #tpu.memory_space<vmem>>, vector<78x128xf32>
    %490 = arith.truncf %489 : vector<78x128xf32> to vector<78x128xbf16>
    %c128_475 = arith.constant 128 : index
    %c0_476 = arith.constant 0 : index
    %491 = vector.load %arg13[%c128_475, %c0_476] : memref<1152x128xbf16, #tpu.memory_space<vmem>>, vector<128x128xbf16>
    %cst_477 = arith.constant dense<0.000000e+00> : vector<78x128xf32>
    %492 = tpu.matmul %490, %491, %cst_477 {dimension_numbers = #tpu.dot_dimension_numbers<[1], [0], [0], [1], [0, 0, 1, 1], [], []>} : vector<78x128xbf16>, vector<128x128xbf16>, vector<78x128xf32> -> vector<78x128xf32>
    %493 = arith.addf %488, %492 : vector<78x128xf32>
    %c2_478 = arith.constant 2 : index
    %c0_479 = arith.constant 0 : index
    %494 = vector.load %arg17[%c2_478, %c0_479] : memref<324x128xf32, #tpu.memory_space<vmem>>, vector<78x128xf32>
    %495 = arith.truncf %494 : vector<78x128xf32> to vector<78x128xbf16>
    %c256_480 = arith.constant 256 : index
    %c0_481 = arith.constant 0 : index
    %496 = vector.load %arg13[%c256_480, %c0_481] : memref<1152x128xbf16, #tpu.memory_space<vmem>>, vector<128x128xbf16>
    %cst_482 = arith.constant dense<0.000000e+00> : vector<78x128xf32>
    %497 = tpu.matmul %495, %496, %cst_482 {dimension_numbers = #tpu.dot_dimension_numbers<[1], [0], [0], [1], [0, 0, 1, 1], [], []>} : vector<78x128xbf16>, vector<128x128xbf16>, vector<78x128xf32> -> vector<78x128xf32>
    %498 = arith.addf %493, %497 : vector<78x128xf32>
    %c10_483 = arith.constant 10 : index
    %c0_484 = arith.constant 0 : index
    %499 = vector.load %arg17[%c10_483, %c0_484] : memref<324x128xf32, #tpu.memory_space<vmem>>, vector<78x128xf32>
    %500 = arith.truncf %499 : vector<78x128xf32> to vector<78x128xbf16>
    %c384_485 = arith.constant 384 : index
    %c0_486 = arith.constant 0 : index
    %501 = vector.load %arg13[%c384_485, %c0_486] : memref<1152x128xbf16, #tpu.memory_space<vmem>>, vector<128x128xbf16>
    %cst_487 = arith.constant dense<0.000000e+00> : vector<78x128xf32>
    %502 = tpu.matmul %500, %501, %cst_487 {dimension_numbers = #tpu.dot_dimension_numbers<[1], [0], [0], [1], [0, 0, 1, 1], [], []>} : vector<78x128xbf16>, vector<128x128xbf16>, vector<78x128xf32> -> vector<78x128xf32>
    %503 = arith.addf %498, %502 : vector<78x128xf32>
    %c11_488 = arith.constant 11 : index
    %c0_489 = arith.constant 0 : index
    %504 = vector.load %arg17[%c11_488, %c0_489] : memref<324x128xf32, #tpu.memory_space<vmem>>, vector<78x128xf32>
    %505 = arith.truncf %504 : vector<78x128xf32> to vector<78x128xbf16>
    %c512_490 = arith.constant 512 : index
    %c0_491 = arith.constant 0 : index
    %506 = vector.load %arg13[%c512_490, %c0_491] : memref<1152x128xbf16, #tpu.memory_space<vmem>>, vector<128x128xbf16>
    %cst_492 = arith.constant dense<0.000000e+00> : vector<78x128xf32>
    %507 = tpu.matmul %505, %506, %cst_492 {dimension_numbers = #tpu.dot_dimension_numbers<[1], [0], [0], [1], [0, 0, 1, 1], [], []>} : vector<78x128xbf16>, vector<128x128xbf16>, vector<78x128xf32> -> vector<78x128xf32>
    %508 = arith.addf %503, %507 : vector<78x128xf32>
    %c12_493 = arith.constant 12 : index
    %c0_494 = arith.constant 0 : index
    %509 = vector.load %arg17[%c12_493, %c0_494] : memref<324x128xf32, #tpu.memory_space<vmem>>, vector<78x128xf32>
    %510 = arith.truncf %509 : vector<78x128xf32> to vector<78x128xbf16>
    %c640_495 = arith.constant 640 : index
    %c0_496 = arith.constant 0 : index
    %511 = vector.load %arg13[%c640_495, %c0_496] : memref<1152x128xbf16, #tpu.memory_space<vmem>>, vector<128x128xbf16>
    %cst_497 = arith.constant dense<0.000000e+00> : vector<78x128xf32>
    %512 = tpu.matmul %510, %511, %cst_497 {dimension_numbers = #tpu.dot_dimension_numbers<[1], [0], [0], [1], [0, 0, 1, 1], [], []>} : vector<78x128xbf16>, vector<128x128xbf16>, vector<78x128xf32> -> vector<78x128xf32>
    %513 = arith.addf %508, %512 : vector<78x128xf32>
    %c20_498 = arith.constant 20 : index
    %c0_499 = arith.constant 0 : index
    %514 = vector.load %arg17[%c20_498, %c0_499] : memref<324x128xf32, #tpu.memory_space<vmem>>, vector<78x128xf32>
    %515 = arith.truncf %514 : vector<78x128xf32> to vector<78x128xbf16>
    %c768_500 = arith.constant 768 : index
    %c0_501 = arith.constant 0 : index
    %516 = vector.load %arg13[%c768_500, %c0_501] : memref<1152x128xbf16, #tpu.memory_space<vmem>>, vector<128x128xbf16>
    %cst_502 = arith.constant dense<0.000000e+00> : vector<78x128xf32>
    %517 = tpu.matmul %515, %516, %cst_502 {dimension_numbers = #tpu.dot_dimension_numbers<[1], [0], [0], [1], [0, 0, 1, 1], [], []>} : vector<78x128xbf16>, vector<128x128xbf16>, vector<78x128xf32> -> vector<78x128xf32>
    %518 = arith.addf %513, %517 : vector<78x128xf32>
    %c21_503 = arith.constant 21 : index
    %c0_504 = arith.constant 0 : index
    %519 = vector.load %arg17[%c21_503, %c0_504] : memref<324x128xf32, #tpu.memory_space<vmem>>, vector<78x128xf32>
    %520 = arith.truncf %519 : vector<78x128xf32> to vector<78x128xbf16>
    %c896_505 = arith.constant 896 : index
    %c0_506 = arith.constant 0 : index
    %521 = vector.load %arg13[%c896_505, %c0_506] : memref<1152x128xbf16, #tpu.memory_space<vmem>>, vector<128x128xbf16>
    %cst_507 = arith.constant dense<0.000000e+00> : vector<78x128xf32>
    %522 = tpu.matmul %520, %521, %cst_507 {dimension_numbers = #tpu.dot_dimension_numbers<[1], [0], [0], [1], [0, 0, 1, 1], [], []>} : vector<78x128xbf16>, vector<128x128xbf16>, vector<78x128xf32> -> vector<78x128xf32>
    %523 = arith.addf %518, %522 : vector<78x128xf32>
    %c22_508 = arith.constant 22 : index
    %c0_509 = arith.constant 0 : index
    %524 = vector.load %arg17[%c22_508, %c0_509] : memref<324x128xf32, #tpu.memory_space<vmem>>, vector<78x128xf32>
    %525 = arith.truncf %524 : vector<78x128xf32> to vector<78x128xbf16>
    %c1024_510 = arith.constant 1024 : index
    %c0_511 = arith.constant 0 : index
    %526 = vector.load %arg13[%c1024_510, %c0_511] : memref<1152x128xbf16, #tpu.memory_space<vmem>>, vector<128x128xbf16>
    %cst_512 = arith.constant dense<0.000000e+00> : vector<78x128xf32>
    %527 = tpu.matmul %525, %526, %cst_512 {dimension_numbers = #tpu.dot_dimension_numbers<[1], [0], [0], [1], [0, 0, 1, 1], [], []>} : vector<78x128xbf16>, vector<128x128xbf16>, vector<78x128xf32> -> vector<78x128xf32>
    %528 = arith.addf %523, %527 : vector<78x128xf32>
    %c0_513 = arith.constant 0 : index
    %c0_514 = arith.constant 0 : index
    %529 = vector.load %arg14[%c0_513, %c0_514] : memref<1x128xf32, #tpu.memory_space<vmem>>, vector<1x128xf32>
    %530 = vector.broadcast %529 : vector<1x128xf32> to vector<78x128xf32>
    %531 = arith.addf %528, %530 : vector<78x128xf32>
    %cst_515 = arith.constant 2.000000e-01 : f32
    %532 = vector.broadcast %cst_515 : f32 to vector<78x128xf32>
    %533 = arith.mulf %532, %531 : vector<78x128xf32>
    %534 = arith.maximumf %531, %533 : vector<78x128xf32>
    %c11_516 = arith.constant 11 : index
    %c0_517 = arith.constant 0 : index
    %535 = vector.load %arg16[%c11_516, %c0_517] : memref<324x128xf32, #tpu.memory_space<vmem>>, vector<78x128xf32>
    tpu.vector_store %arg16[%c11_516, %c0_517], %534 {strides = array<i32>} : memref<324x128xf32, #tpu.memory_space<vmem>>, vector<78x128xf32>,
    %c11_518 = arith.constant 11 : index
    %c0_519 = arith.constant 0 : index
    %536 = tpu.strided_load %arg16[%c11_518, %c0_519] {strides = array<i32: 2, 1>} : memref<324x128xf32, #tpu.memory_space<vmem>>, vector<4x128xf32>
    %c12_520 = arith.constant 12 : index
    %c0_521 = arith.constant 0 : index
    %537 = tpu.strided_load %arg16[%c12_520, %c0_521] {strides = array<i32: 2, 1>} : memref<324x128xf32, #tpu.memory_space<vmem>>, vector<4x128xf32>
    %538 = arith.addf %536, %537 : vector<4x128xf32>
    %c21_522 = arith.constant 21 : index
    %c0_523 = arith.constant 0 : index
    %539 = tpu.strided_load %arg16[%c21_522, %c0_523] {strides = array<i32: 2, 1>} : memref<324x128xf32, #tpu.memory_space<vmem>>, vector<4x128xf32>
    %540 = arith.addf %538, %539 : vector<4x128xf32>
    %c22_524 = arith.constant 22 : index
    %c0_525 = arith.constant 0 : index
    %541 = tpu.strided_load %arg16[%c22_524, %c0_525] {strides = array<i32: 2, 1>} : memref<324x128xf32, #tpu.memory_space<vmem>>, vector<4x128xf32>
    %542 = arith.addf %540, %541 : vector<4x128xf32>
    %cst_526 = arith.constant 2.500000e-01 : f32
    %543 = vector.broadcast %cst_526 : f32 to vector<4x128xf32>
    %544 = arith.mulf %542, %543 : vector<4x128xf32>
    %c7 = arith.constant 7 : index
    %c0_527 = arith.constant 0 : index
    %545 = vector.load %arg17[%c7, %c0_527] : memref<324x128xf32, #tpu.memory_space<vmem>>, vector<4x128xf32>
    tpu.vector_store %arg17[%c7, %c0_527], %544 {strides = array<i32>} : memref<324x128xf32, #tpu.memory_space<vmem>>, vector<4x128xf32>,
    %c31_528 = arith.constant 31 : index
    %c0_529 = arith.constant 0 : index
    %546 = tpu.strided_load %arg16[%c31_528, %c0_529] {strides = array<i32: 2, 1>} : memref<324x128xf32, #tpu.memory_space<vmem>>, vector<4x128xf32>
    %c32 = arith.constant 32 : index
    %c0_530 = arith.constant 0 : index
    %547 = tpu.strided_load %arg16[%c32, %c0_530] {strides = array<i32: 2, 1>} : memref<324x128xf32, #tpu.memory_space<vmem>>, vector<4x128xf32>
    %548 = arith.addf %546, %547 : vector<4x128xf32>
    %c41_531 = arith.constant 41 : index
    %c0_532 = arith.constant 0 : index
    %549 = tpu.strided_load %arg16[%c41_531, %c0_532] {strides = array<i32: 2, 1>} : memref<324x128xf32, #tpu.memory_space<vmem>>, vector<4x128xf32>
    %550 = arith.addf %548, %549 : vector<4x128xf32>
    %c42 = arith.constant 42 : index
    %c0_533 = arith.constant 0 : index
    %551 = tpu.strided_load %arg16[%c42, %c0_533] {strides = array<i32: 2, 1>} : memref<324x128xf32, #tpu.memory_space<vmem>>, vector<4x128xf32>
    %552 = arith.addf %550, %551 : vector<4x128xf32>
    %cst_534 = arith.constant 2.500000e-01 : f32
    %553 = vector.broadcast %cst_534 : f32 to vector<4x128xf32>
    %554 = arith.mulf %552, %553 : vector<4x128xf32>
    %c13 = arith.constant 13 : index
    %c0_535 = arith.constant 0 : index
    %555 = vector.load %arg17[%c13, %c0_535] : memref<324x128xf32, #tpu.memory_space<vmem>>, vector<4x128xf32>
    tpu.vector_store %arg17[%c13, %c0_535], %554 {strides = array<i32>} : memref<324x128xf32, #tpu.memory_space<vmem>>, vector<4x128xf32>,
    %c51_536 = arith.constant 51 : index
    %c0_537 = arith.constant 0 : index
    %556 = tpu.strided_load %arg16[%c51_536, %c0_537] {strides = array<i32: 2, 1>} : memref<324x128xf32, #tpu.memory_space<vmem>>, vector<4x128xf32>
    %c52 = arith.constant 52 : index
    %c0_538 = arith.constant 0 : index
    %557 = tpu.strided_load %arg16[%c52, %c0_538] {strides = array<i32: 2, 1>} : memref<324x128xf32, #tpu.memory_space<vmem>>, vector<4x128xf32>
    %558 = arith.addf %556, %557 : vector<4x128xf32>
    %c61_539 = arith.constant 61 : index
    %c0_540 = arith.constant 0 : index
    %559 = tpu.strided_load %arg16[%c61_539, %c0_540] {strides = array<i32: 2, 1>} : memref<324x128xf32, #tpu.memory_space<vmem>>, vector<4x128xf32>
    %560 = arith.addf %558, %559 : vector<4x128xf32>
    %c62 = arith.constant 62 : index
    %c0_541 = arith.constant 0 : index
    %561 = tpu.strided_load %arg16[%c62, %c0_541] {strides = array<i32: 2, 1>} : memref<324x128xf32, #tpu.memory_space<vmem>>, vector<4x128xf32>
    %562 = arith.addf %560, %561 : vector<4x128xf32>
    %cst_542 = arith.constant 2.500000e-01 : f32
    %563 = vector.broadcast %cst_542 : f32 to vector<4x128xf32>
    %564 = arith.mulf %562, %563 : vector<4x128xf32>
    %c19_543 = arith.constant 19 : index
    %c0_544 = arith.constant 0 : index
    %565 = vector.load %arg17[%c19_543, %c0_544] : memref<324x128xf32, #tpu.memory_space<vmem>>, vector<4x128xf32>
    tpu.vector_store %arg17[%c19_543, %c0_544], %564 {strides = array<i32>} : memref<324x128xf32, #tpu.memory_space<vmem>>, vector<4x128xf32>,
    %c71_545 = arith.constant 71 : index
    %c0_546 = arith.constant 0 : index
    %566 = tpu.strided_load %arg16[%c71_545, %c0_546] {strides = array<i32: 2, 1>} : memref<324x128xf32, #tpu.memory_space<vmem>>, vector<4x128xf32>
    %c72 = arith.constant 72 : index
    %c0_547 = arith.constant 0 : index
    %567 = tpu.strided_load %arg16[%c72, %c0_547] {strides = array<i32: 2, 1>} : memref<324x128xf32, #tpu.memory_space<vmem>>, vector<4x128xf32>
    %568 = arith.addf %566, %567 : vector<4x128xf32>
    %c81_548 = arith.constant 81 : index
    %c0_549 = arith.constant 0 : index
    %569 = tpu.strided_load %arg16[%c81_548, %c0_549] {strides = array<i32: 2, 1>} : memref<324x128xf32, #tpu.memory_space<vmem>>, vector<4x128xf32>
    %570 = arith.addf %568, %569 : vector<4x128xf32>
    %c82 = arith.constant 82 : index
    %c0_550 = arith.constant 0 : index
    %571 = tpu.strided_load %arg16[%c82, %c0_550] {strides = array<i32: 2, 1>} : memref<324x128xf32, #tpu.memory_space<vmem>>, vector<4x128xf32>
    %572 = arith.addf %570, %571 : vector<4x128xf32>
    %cst_551 = arith.constant 2.500000e-01 : f32
    %573 = vector.broadcast %cst_551 : f32 to vector<4x128xf32>
    %574 = arith.mulf %572, %573 : vector<4x128xf32>
    %c25 = arith.constant 25 : index
    %c0_552 = arith.constant 0 : index
    %575 = vector.load %arg17[%c25, %c0_552] : memref<324x128xf32, #tpu.memory_space<vmem>>, vector<4x128xf32>
    tpu.vector_store %arg17[%c25, %c0_552], %574 {strides = array<i32>} : memref<324x128xf32, #tpu.memory_space<vmem>>, vector<4x128xf32>,
    %c7_553 = arith.constant 7 : index
    %c0_554 = arith.constant 0 : index
    %576 = vector.load %arg17[%c7_553, %c0_554] : memref<324x128xf32, #tpu.memory_space<vmem>>, vector<4x128xf32>
    %c0_555 = arith.constant 0 : index
    %c0_556 = arith.constant 0 : index
    %c0_557 = arith.constant 0 : index
    %577 = vector.load %arg15[%c0_555, %c0_556, %c0_557] : memref<1x16x128xf32, #tpu.memory_space<vmem>>, vector<1x4x128xf32>
    %578 = vector.shape_cast %577 : vector<1x4x128xf32> to vector<4x128xf32>
    %579 = vector.shape_cast %576 : vector<4x128xf32> to vector<1x4x128xf32>
    tpu.vector_store %arg15[%c0_555, %c0_556, %c0_557], %579 {strides = array<i32>} : memref<1x16x128xf32, #tpu.memory_space<vmem>>, vector<1x4x128xf32>,
    %c13_558 = arith.constant 13 : index
    %c0_559 = arith.constant 0 : index
    %580 = vector.load %arg17[%c13_558, %c0_559] : memref<324x128xf32, #tpu.memory_space<vmem>>, vector<4x128xf32>
    %c0_560 = arith.constant 0 : index
    %c4 = arith.constant 4 : index
    %c0_561 = arith.constant 0 : index
    %581 = vector.load %arg15[%c0_560, %c4, %c0_561] : memref<1x16x128xf32, #tpu.memory_space<vmem>>, vector<1x4x128xf32>
    %582 = vector.shape_cast %581 : vector<1x4x128xf32> to vector<4x128xf32>
    %583 = vector.shape_cast %580 : vector<4x128xf32> to vector<1x4x128xf32>
    tpu.vector_store %arg15[%c0_560, %c4, %c0_561], %583 {strides = array<i32>} : memref<1x16x128xf32, #tpu.memory_space<vmem>>, vector<1x4x128xf32>,
    %c19_562 = arith.constant 19 : index
    %c0_563 = arith.constant 0 : index
    %584 = vector.load %arg17[%c19_562, %c0_563] : memref<324x128xf32, #tpu.memory_space<vmem>>, vector<4x128xf32>
    %c0_564 = arith.constant 0 : index
    %c8 = arith.constant 8 : index
    %c0_565 = arith.constant 0 : index
    %585 = vector.load %arg15[%c0_564, %c8, %c0_565] : memref<1x16x128xf32, #tpu.memory_space<vmem>>, vector<1x4x128xf32>
    %586 = vector.shape_cast %585 : vector<1x4x128xf32> to vector<4x128xf32>
    %587 = vector.shape_cast %584 : vector<4x128xf32> to vector<1x4x128xf32>
    tpu.vector_store %arg15[%c0_564, %c8, %c0_565], %587 {strides = array<i32>} : memref<1x16x128xf32, #tpu.memory_space<vmem>>, vector<1x4x128xf32>,
    %c25_566 = arith.constant 25 : index
    %c0_567 = arith.constant 0 : index
    %588 = vector.load %arg17[%c25_566, %c0_567] : memref<324x128xf32, #tpu.memory_space<vmem>>, vector<4x128xf32>
    %c0_568 = arith.constant 0 : index
    %c12_569 = arith.constant 12 : index
    %c0_570 = arith.constant 0 : index
    %589 = vector.load %arg15[%c0_568, %c12_569, %c0_570] : memref<1x16x128xf32, #tpu.memory_space<vmem>>, vector<1x4x128xf32>
    %590 = vector.shape_cast %589 : vector<1x4x128xf32> to vector<4x128xf32>
    %591 = vector.shape_cast %588 : vector<4x128xf32> to vector<1x4x128xf32>
    tpu.vector_store %arg15[%c0_568, %c12_569, %c0_570], %591 {strides = array<i32>} : memref<1x16x128xf32, #tpu.memory_space<vmem>>, vector<1x4x128xf32>,
    return
  }
  func.func @transform_0(%arg0: i32) -> i32 {
    %c0_i32 = arith.constant 0 : i32
    %c0_i32_0 = arith.constant 0 : i32
    return %c0_i32 : i32
  }
  func.func @transform_1(%arg0: i32) -> (i32, i32, i32) {
    %c0_i32 = arith.constant 0 : i32
    %c0_i32_0 = arith.constant 0 : i32
    %c0_i32_1 = arith.constant 0 : i32
    return %arg0, %c0_i32, %c0_i32_0 : i32, i32, i32
  }
  func.func @transform_2(%arg0: i32) -> (i32, i32) {
    %c0_i32 = arith.constant 0 : i32
    %c0_i32_0 = arith.constant 0 : i32
    %c0_i32_1 = arith.constant 0 : i32
    return %c0_i32, %c0_i32_0 : i32, i32
  }
  func.func @transform_3(%arg0: i32) -> (i32, i32) {
    %c0_i32 = arith.constant 0 : i32
    %c0_i32_0 = arith.constant 0 : i32
    %c0_i32_1 = arith.constant 0 : i32
    return %c0_i32, %c0_i32_0 : i32, i32
  }
  func.func @transform_4(%arg0: i32) -> (i32, i32) {
    %c0_i32 = arith.constant 0 : i32
    %c0_i32_0 = arith.constant 0 : i32
    %c0_i32_1 = arith.constant 0 : i32
    return %c0_i32, %c0_i32_0 : i32, i32
  }
  func.func @transform_5(%arg0: i32) -> (i32, i32) {
    %c0_i32 = arith.constant 0 : i32
    %c0_i32_0 = arith.constant 0 : i32
    %c0_i32_1 = arith.constant 0 : i32
    return %c0_i32, %c0_i32_0 : i32, i32
  }
  func.func @transform_6(%arg0: i32) -> (i32, i32) {
    %c0_i32 = arith.constant 0 : i32
    %c0_i32_0 = arith.constant 0 : i32
    %c0_i32_1 = arith.constant 0 : i32
    return %c0_i32, %c0_i32_0 : i32, i32
  }
  func.func @transform_7(%arg0: i32) -> (i32, i32) {
    %c0_i32 = arith.constant 0 : i32
    %c0_i32_0 = arith.constant 0 : i32
    %c0_i32_1 = arith.constant 0 : i32
    return %c0_i32, %c0_i32_0 : i32, i32
  }
  func.func @transform_8(%arg0: i32) -> (i32, i32) {
    %c0_i32 = arith.constant 0 : i32
    %c0_i32_0 = arith.constant 0 : i32
    %c0_i32_1 = arith.constant 0 : i32
    return %c0_i32, %c0_i32_0 : i32, i32
  }
  func.func @transform_9(%arg0: i32) -> (i32, i32) {
    %c0_i32 = arith.constant 0 : i32
    %c0_i32_0 = arith.constant 0 : i32
    %c0_i32_1 = arith.constant 0 : i32
    return %c0_i32, %c0_i32_0 : i32, i32
  }
  func.func @transform_10(%arg0: i32) -> (i32, i32) {
    %c0_i32 = arith.constant 0 : i32
    %c0_i32_0 = arith.constant 0 : i32
    %c0_i32_1 = arith.constant 0 : i32
    return %c0_i32, %c0_i32_0 : i32, i32
  }
  func.func @transform_11(%arg0: i32) -> (i32, i32) {
    %c0_i32 = arith.constant 0 : i32
    %c0_i32_0 = arith.constant 0 : i32
    %c0_i32_1 = arith.constant 0 : i32
    return %c0_i32, %c0_i32_0 : i32, i32
  }
  func.func @transform_12(%arg0: i32) -> (i32, i32) {
    %c0_i32 = arith.constant 0 : i32
    %c0_i32_0 = arith.constant 0 : i32
    %c0_i32_1 = arith.constant 0 : i32
    return %c0_i32, %c0_i32_0 : i32, i32
  }
  func.func @transform_13(%arg0: i32) -> (i32, i32) {
    %c0_i32 = arith.constant 0 : i32
    %c0_i32_0 = arith.constant 0 : i32
    %c0_i32_1 = arith.constant 0 : i32
    return %c0_i32, %c0_i32_0 : i32, i32
  }
  func.func @transform_14(%arg0: i32) -> (i32, i32, i32) {
    %c0_i32 = arith.constant 0 : i32
    %c0_i32_0 = arith.constant 0 : i32
    %c0_i32_1 = arith.constant 0 : i32
    return %arg0, %c0_i32, %c0_i32_0 : i32, i32, i32
  }
}

</mosaic_0001>

<llo_original>
// kernel: tpu_custom_call.1
$region0: #{tpu_custom_call.1}
  #allocation0 [shape = 'u32[]', space=smem, size = 0x4, offset = 0x4, fixed_abs, tag = 'smem constant byte address 0x4 - core index']
  #allocation1 [shape = 'u32[72,128]{1,0:T(1,128)}', space=vmem, size = 0x9000, scoped, tag = 'internal scratch']
  #allocation2 [shape = 'f32[324,128]{1,0:T(8,128)}', space=vmem, size = 0x29000, scoped, tag = 'scratch operand']
  #allocation3 [shape = 'f32[324,128]{1,0:T(8,128)}', space=vmem, size = 0x29000, scoped, tag = 'scratch operand']
  #allocation4 [shape = 'f32[100,128]{1,0:T(8,128)}', space=vmem, size = 0xd000, scoped, tag = 'scratch operand']
  #allocation5 [shape = 'f32[1]{0:T(128)S(6)}', space=smem, size = 0x200, scoped, tag = 'scoped memory for tpu_custom_call.1']
  %s0 = inlined_call_operand.<no memory space> [shape: f32[1], index: 0, kind: input, shape index: {}]
  %s1 = inlined_call_operand.vmem [shape: f32[2,324,128], index: 1, kind: input, shape index: {}]
  %s2 = inlined_call_operand.vmem [shape: bf16[128,128], index: 2, kind: input, shape index: {}]
  %s3 = inlined_call_operand.vmem [shape: f32[1,128], index: 3, kind: input, shape index: {}]
  %s4 = inlined_call_operand.vmem [shape: bf16[1152,128], index: 4, kind: input, shape index: {}]
  %s5 = inlined_call_operand.vmem [shape: f32[1,128], index: 5, kind: input, shape index: {}]
  %s6 = inlined_call_operand.vmem [shape: bf16[1152,128], index: 6, kind: input, shape index: {}]
  %s7 = inlined_call_operand.vmem [shape: f32[1,128], index: 7, kind: input, shape index: {}]
  %s8 = inlined_call_operand.vmem [shape: bf16[128,128], index: 8, kind: input, shape index: {}]
  %s9 = inlined_call_operand.vmem [shape: f32[1,128], index: 9, kind: input, shape index: {}]
  %s10 = inlined_call_operand.hbm [shape: bf16[1152,128], index: 10, kind: input, shape index: {}]
  %s11 = inlined_call_operand.vmem [shape: f32[1,128], index: 11, kind: input, shape index: {}]
  %s12 = inlined_call_operand.hbm [shape: bf16[1152,128], index: 12, kind: input, shape index: {}]
  %s13 = inlined_call_operand.vmem [shape: f32[1,128], index: 13, kind: input, shape index: {}]
  %s14 = inlined_call_operand.hbm [shape: f32[2,16,128], index: 14, kind: output, shape index: {}]
  %s15 = sld [smem:[#allocation0]]
  $region97: #{tpu_custom_call.1} parent=0
    _
  %s17 = ssub.s32 1, %s15
  %s18 = scalar_select 0, %s17, %s15
  %19 = sst [smem:[#allocation5]] %s0
  $region1: #{tpu_custom_call.1} parent=0
    #allocation6 [shape = 'u8[294912]{0}', space=vmem, size = 0x48000, scoped, tag = 'input window, operand 10, single buffered']
    #allocation7 [shape = 's32[2]{0}', space=sflag, size = 0x8, scoped, tag = 'scoped memory for tpu_custom_call.1']
    #allocation8 [shape = 's32[2]{0}', space=sflag, size = 0x8, scoped, tag = 'scoped memory for tpu_custom_call.1']
    #allocation9 [shape = 'u8[294912]{0}', space=vmem, size = 0x48000, scoped, tag = 'input window, operand 12, single buffered']
    #allocation10 [shape = 's32[1]{0}', space=sflag, size = 0x4, scoped, tag = 'scoped memory for tpu_custom_call.1']
    #allocation11 [shape = 'u8[16384]{0}', space=vmem, size = 0x4000, scoped, tag = 'output window, operand 0']
    %20 = vsyncpa [#allocation7], 0
    %21 = vsyncpa [#allocation10], 0
    %22 = vsyncpa [#allocation8], 0
    %s23 = scalar_lea.sflag [#allocation8], 1
    %24 = vsyncpa %s23, 0
    loop: start=0, step=1, limit=4
    $region2: #{tpu_custom_call.1} parent=1 // loop_pre_header
      _
    $region3: #{tpu_custom_call.1} parent=1 // loop_header
      %s26 = sphi 0, %s30
      %p27 = scmp.ge.s32.totalorder %s26, 4
      %s34 = sphi 0, %s34
      %s36 = sphi 0, %s34
      %s37 = sphi 0, %s36
      %s51 = sphi 0, %s37
      %s57 = sphi 0, %s59
      %s60 = sphi 0, %s57
      %s61 = sphi 0, %s60
      %s77 = sphi 0, %s61
      %s81 = sphi 0, %s81
      %s83 = sphi 0, %s81
      %s84 = sphi 0, %s83
      %s98 = sphi 0, %s84
      %s102 = sphi 0, %s102
      %s104 = sphi 0, %s102
      %s105 = sphi 0, %s104
      %s119 = sphi 0, %s105
      %s123 = sphi 0, %s123
      %s125 = sphi 0, %s123
      %s126 = sphi 0, %s125
      %s140 = sphi 0, %s126
      %s144 = sphi 0, %s144
      %s146 = sphi 0, %s144
      %s147 = sphi 0, %s146
      %s161 = sphi 0, %s147
      %s165 = sphi 0, %s165
      %s167 = sphi 0, %s165
      %s168 = sphi 0, %s167
      %s182 = sphi 0, %s168
      %s186 = sphi 0, %s186
      %s188 = sphi 0, %s186
      %s189 = sphi 0, %s188
      %s203 = sphi 0, %s189
      %s207 = sphi 0, %s207
      %s209 = sphi 0, %s207
      %s210 = sphi 0, %s209
      %s224 = sphi 0, %s210
      %s228 = sphi 0, %s228
      %s230 = sphi 0, %s228
      %s231 = sphi 0, %s230
      %s245 = sphi 0, %s231
      %s249 = sphi 0, %s249
      %s251 = sphi 0, %s249
      %s252 = sphi 0, %s251
      %s266 = sphi 0, %s252
      %s270 = sphi 0, %s270
      %s272 = sphi 0, %s270
      %s273 = sphi 0, %s272
      %s287 = sphi 0, %s273
      %s291 = sphi 0, %s291
      %s293 = sphi 0, %s291
      %s294 = sphi 0, %s293
      %s308 = sphi 0, %s294
      %s312 = sphi 0, %s312
      %s314 = sphi 0, %s312
      %s315 = sphi 0, %s314
      %s329 = sphi 0, %s315
      %s335 = sphi 0, %s337
      %s338 = sphi 0, %s335
      %s339 = sphi 0, %s338
      %s355 = sphi 0, %s339
    $region4: #{tpu_custom_call.1} parent=1 // loop_header_branch
      %29 = sbr.rel (%p27) target = $region8
    $region5: #{tpu_custom_call.1} parent=1 // loop_body
      %s31 = ssub.s32 %s26, 1
      %s32 = ssub.s32 %s26, 2
      %s33 = sadd.s32 %s26, 1
      %s35 = sadd.s32 %s34, 1
      %p38 = scmp.eq.s32.totalorder %s26, 1
      %p39 = scmp.ne.s32.totalorder %s34, %s36
      %p40 = scmp.eq.s32.totalorder %s26, 0
      %p41 = por %p39, %p40
      %p42 = scmp.ne.s32.totalorder %s34, %s36
      %p43 = scmp.eq.s32.totalorder %s31, 1
      %p44 = por %p42, %p43
      %p45 = scmp.ne.s32.totalorder %s36, %s37
      %p46 = scmp.eq.s32.totalorder %s31, 0
      %p47 = por %p45, %p46
      %p48 = scmp.ne.s32.totalorder %s36, %s37
      %p49 = scmp.eq.s32.totalorder %s32, 1
      %p50 = por %p48, %p49
      %p52 = scmp.ne.s32.totalorder %s37, %s51
      %p53 = scmp.eq.s32.totalorder %s32, 0
      %p54 = por %p52, %p53
      %s55 = ssub.s32 %s26, %s33
      %p56 = scmp.eq.s32.totalorder %s55, 0
      %s58 = sadd.s32 %s57, 1
      %s59 = scalar_select %p56, %s57, %s58
      %p62 = pneg %p56
      %p63 = scmp.eq.s32.totalorder %s26, 1
      %p64 = por %p62, %p63
      %p65 = scmp.ne.s32.totalorder %s57, %s60
      %p66 = scmp.eq.s32.totalorder %s26, 0
      %p67 = por %p65, %p66
      %p68 = scmp.ne.s32.totalorder %s57, %s60
      %p69 = scmp.eq.s32.totalorder %s31, 1
      %p70 = por %p68, %p69
      %p71 = scmp.ne.s32.totalorder %s60, %s61
      %p72 = scmp.eq.s32.totalorder %s31, 0
      %p73 = por %p71, %p72
      %p74 = scmp.ne.s32.totalorder %s60, %s61
      %p75 = scmp.eq.s32.totalorder %s32, 1
      %p76 = por %p74, %p75
      %p78 = scmp.ne.s32.totalorder %s61, %s77
      %p79 = scmp.eq.s32.totalorder %s32, 0
      %p80 = por %p78, %p79
      %s82 = sadd.s32 %s81, 1
      %p85 = scmp.eq.s32.totalorder %s26, 1
      %p86 = scmp.ne.s32.totalorder %s81, %s83
      %p87 = scmp.eq.s32.totalorder %s26, 0
      %p88 = por %p86, %p87
      %p89 = scmp.ne.s32.totalorder %s81, %s83
      %p90 = scmp.eq.s32.totalorder %s31, 1
      %p91 = por %p89, %p90
      %p92 = scmp.ne.s32.totalorder %s83, %s84
      %p93 = scmp.eq.s32.totalorder %s31, 0
      %p94 = por %p92, %p93
      %p95 = scmp.ne.s32.totalorder %s83, %s84
      %p96 = scmp.eq.s32.totalorder %s32, 1
      %p97 = por %p95, %p96
      %p99 = scmp.ne.s32.totalorder %s84, %s98
      %p100 = scmp.eq.s32.totalorder %s32, 0
      %p101 = por %p99, %p100
      %s103 = sadd.s32 %s102, 1
      %p106 = scmp.eq.s32.totalorder %s26, 1
      %p107 = scmp.ne.s32.totalorder %s102, %s104
      %p108 = scmp.eq.s32.totalorder %s26, 0
      %p109 = por %p107, %p108
      %p110 = scmp.ne.s32.totalorder %s102, %s104
      %p111 = scmp.eq.s32.totalorder %s31, 1
      %p112 = por %p110, %p111
      %p113 = scmp.ne.s32.totalorder %s104, %s105
      %p114 = scmp.eq.s32.totalorder %s31, 0
      %p115 = por %p113, %p114
      %p116 = scmp.ne.s32.totalorder %s104, %s105
      %p117 = scmp.eq.s32.totalorder %s32, 1
      %p118 = por %p116, %p117
      %p120 = scmp.ne.s32.totalorder %s105, %s119
      %p121 = scmp.eq.s32.totalorder %s32, 0
      %p122 = por %p120, %p121
      %s124 = sadd.s32 %s123, 1
      %p127 = scmp.eq.s32.totalorder %s26, 1
      %p128 = scmp.ne.s32.totalorder %s123, %s125
      %p129 = scmp.eq.s32.totalorder %s26, 0
      %p130 = por %p128, %p129
      %p131 = scmp.ne.s32.totalorder %s123, %s125
      %p132 = scmp.eq.s32.totalorder %s31, 1
      %p133 = por %p131, %p132
      %p134 = scmp.ne.s32.totalorder %s125, %s126
      %p135 = scmp.eq.s32.totalorder %s31, 0
      %p136 = por %p134, %p135
      %p137 = scmp.ne.s32.totalorder %s125, %s126
      %p138 = scmp.eq.s32.totalorder %s32, 1
      %p139 = por %p137, %p138
      %p141 = scmp.ne.s32.totalorder %s126, %s140
      %p142 = scmp.eq.s32.totalorder %s32, 0
      %p143 = por %p141, %p142
      %s145 = sadd.s32 %s144, 1
      %p148 = scmp.eq.s32.totalorder %s26, 1
      %p149 = scmp.ne.s32.totalorder %s144, %s146
      %p150 = scmp.eq.s32.totalorder %s26, 0
      %p151 = por %p149, %p150
      %p152 = scmp.ne.s32.totalorder %s144, %s146
      %p153 = scmp.eq.s32.totalorder %s31, 1
      %p154 = por %p152, %p153
      %p155 = scmp.ne.s32.totalorder %s146, %s147
      %p156 = scmp.eq.s32.totalorder %s31, 0
      %p157 = por %p155, %p156
      %p158 = scmp.ne.s32.totalorder %s146, %s147
      %p159 = scmp.eq.s32.totalorder %s32, 1
      %p160 = por %p158, %p159
      %p162 = scmp.ne.s32.totalorder %s147, %s161
      %p163 = scmp.eq.s32.totalorder %s32, 0
      %p164 = por %p162, %p163
      %s166 = sadd.s32 %s165, 1
      %p169 = scmp.eq.s32.totalorder %s26, 1
      %p170 = scmp.ne.s32.totalorder %s165, %s167
      %p171 = scmp.eq.s32.totalorder %s26, 0
      %p172 = por %p170, %p171
      %p173 = scmp.ne.s32.totalorder %s165, %s167
      %p174 = scmp.eq.s32.totalorder %s31, 1
      %p175 = por %p173, %p174
      %p176 = scmp.ne.s32.totalorder %s167, %s168
      %p177 = scmp.eq.s32.totalorder %s31, 0
      %p178 = por %p176, %p177
      %p179 = scmp.ne.s32.totalorder %s167, %s168
      %p180 = scmp.eq.s32.totalorder %s32, 1
      %p181 = por %p179, %p180
      %p183 = scmp.ne.s32.totalorder %s168, %s182
      %p184 = scmp.eq.s32.totalorder %s32, 0
      %p185 = por %p183, %p184
      %s187 = sadd.s32 %s186, 1
      %p190 = scmp.eq.s32.totalorder %s26, 1
      %p191 = scmp.ne.s32.totalorder %s186, %s188
      %p192 = scmp.eq.s32.totalorder %s26, 0
      %p193 = por %p191, %p192
      %p194 = scmp.ne.s32.totalorder %s186, %s188
      %p195 = scmp.eq.s32.totalorder %s31, 1
      %p196 = por %p194, %p195
      %p197 = scmp.ne.s32.totalorder %s188, %s189
      %p198 = scmp.eq.s32.totalorder %s31, 0
      %p199 = por %p197, %p198
      %p200 = scmp.ne.s32.totalorder %s188, %s189
      %p201 = scmp.eq.s32.totalorder %s32, 1
      %p202 = por %p200, %p201
      %p204 = scmp.ne.s32.totalorder %s189, %s203
      %p205 = scmp.eq.s32.totalorder %s32, 0
      %p206 = por %p204, %p205
      %s208 = sadd.s32 %s207, 1
      %p211 = scmp.eq.s32.totalorder %s26, 1
      %p212 = scmp.ne.s32.totalorder %s207, %s209
      %p213 = scmp.eq.s32.totalorder %s26, 0
      %p214 = por %p212, %p213
      %p215 = scmp.ne.s32.totalorder %s207, %s209
      %p216 = scmp.eq.s32.totalorder %s31, 1
      %p217 = por %p215, %p216
      %p218 = scmp.ne.s32.totalorder %s209, %s210
      %p219 = scmp.eq.s32.totalorder %s31, 0
      %p220 = por %p218, %p219
      %p221 = scmp.ne.s32.totalorder %s209, %s210
      %p222 = scmp.eq.s32.totalorder %s32, 1
      %p223 = por %p221, %p222
      %p225 = scmp.ne.s32.totalorder %s210, %s224
      %p226 = scmp.eq.s32.totalorder %s32, 0
      %p227 = por %p225, %p226
      %s229 = sadd.s32 %s228, 1
      %p232 = scmp.eq.s32.totalorder %s26, 1
      %p233 = scmp.ne.s32.totalorder %s228, %s230
      %p234 = scmp.eq.s32.totalorder %s26, 0
      %p235 = por %p233, %p234
      %p236 = scmp.ne.s32.totalorder %s228, %s230
      %p237 = scmp.eq.s32.totalorder %s31, 1
      %p238 = por %p236, %p237
      %p239 = scmp.ne.s32.totalorder %s230, %s231
      %p240 = scmp.eq.s32.totalorder %s31, 0
      %p241 = por %p239, %p240
      %p242 = scmp.ne.s32.totalorder %s230, %s231
      %p243 = scmp.eq.s32.totalorder %s32, 1
      %p244 = por %p242, %p243
      %p246 = scmp.ne.s32.totalorder %s231, %s245
      %p247 = scmp.eq.s32.totalorder %s32, 0
      %p248 = por %p246, %p247
      %s250 = sadd.s32 %s249, 1
      %p253 = scmp.eq.s32.totalorder %s26, 1
      %p254 = scmp.ne.s32.totalorder %s249, %s251
      %p255 = scmp.eq.s32.totalorder %s26, 0
      %p256 = por %p254, %p255
      %p257 = scmp.ne.s32.totalorder %s249, %s251
      %p258 = scmp.eq.s32.totalorder %s31, 1
      %p259 = por %p257, %p258
      %p260 = scmp.ne.s32.totalorder %s251, %s252
      %p261 = scmp.eq.s32.totalorder %s31, 0
      %p262 = por %p260, %p261
      %p263 = scmp.ne.s32.totalorder %s251, %s252
      %p264 = scmp.eq.s32.totalorder %s32, 1
      %p265 = por %p263, %p264
      %p267 = scmp.ne.s32.totalorder %s252, %s266
      %p268 = scmp.eq.s32.totalorder %s32, 0
      %p269 = por %p267, %p268
      %s271 = sadd.s32 %s270, 1
      %p274 = scmp.eq.s32.totalorder %s26, 1
      %p275 = scmp.ne.s32.totalorder %s270, %s272
      %p276 = scmp.eq.s32.totalorder %s26, 0
      %p277 = por %p275, %p276
      %p278 = scmp.ne.s32.totalorder %s270, %s272
      %p279 = scmp.eq.s32.totalorder %s31, 1
      %p280 = por %p278, %p279
      %p281 = scmp.ne.s32.totalorder %s272, %s273
      %p282 = scmp.eq.s32.totalorder %s31, 0
      %p283 = por %p281, %p282
      %p284 = scmp.ne.s32.totalorder %s272, %s273
      %p285 = scmp.eq.s32.totalorder %s32, 1
      %p286 = por %p284, %p285
      %p288 = scmp.ne.s32.totalorder %s273, %s287
      %p289 = scmp.eq.s32.totalorder %s32, 0
      %p290 = por %p288, %p289
      %s292 = sadd.s32 %s291, 1
      %p295 = scmp.eq.s32.totalorder %s26, 1
      %p296 = scmp.ne.s32.totalorder %s291, %s293
      %p297 = scmp.eq.s32.totalorder %s26, 0
      %p298 = por %p296, %p297
      %p299 = scmp.ne.s32.totalorder %s291, %s293
      %p300 = scmp.eq.s32.totalorder %s31, 1
      %p301 = por %p299, %p300
      %p302 = scmp.ne.s32.totalorder %s293, %s294
      %p303 = scmp.eq.s32.totalorder %s31, 0
      %p304 = por %p302, %p303
      %p305 = scmp.ne.s32.totalorder %s293, %s294
      %p306 = scmp.eq.s32.totalorder %s32, 1
      %p307 = por %p305, %p306
      %p309 = scmp.ne.s32.totalorder %s294, %s308
      %p310 = scmp.eq.s32.totalorder %s32, 0
      %p311 = por %p309, %p310
      %s313 = sadd.s32 %s312, 1
      %p316 = scmp.eq.s32.totalorder %s26, 1
      %p317 = scmp.ne.s32.totalorder %s312, %s314
      %p318 = scmp.eq.s32.totalorder %s26, 0
      %p319 = por %p317, %p318
      %p320 = scmp.ne.s32.totalorder %s312, %s314
      %p321 = scmp.eq.s32.totalorder %s31, 1
      %p322 = por %p320, %p321
      %p323 = scmp.ne.s32.totalorder %s314, %s315
      %p324 = scmp.eq.s32.totalorder %s31, 0
      %p325 = por %p323, %p324
      %p326 = scmp.ne.s32.totalorder %s314, %s315
      %p327 = scmp.eq.s32.totalorder %s32, 1
      %p328 = por %p326, %p327
      %p330 = scmp.ne.s32.totalorder %s315, %s329
      %p331 = scmp.eq.s32.totalorder %s32, 0
      %p332 = por %p330, %p331
      %s333 = ssub.s32 %s26, %s33
      %p334 = scmp.eq.s32.totalorder %s333, 0
      %s336 = sadd.s32 %s335, 1
      %s337 = scalar_select %p334, %s335, %s336
      %p340 = pneg %p334
      %p341 = scmp.eq.s32.totalorder %s26, 1
      %p342 = por %p340, %p341
      %p343 = scmp.ne.s32.totalorder %s335, %s338
      %p344 = scmp.eq.s32.totalorder %s26, 0
      %p345 = por %p343, %p344
      %p346 = scmp.ne.s32.totalorder %s335, %s338
      %p347 = scmp.eq.s32.totalorder %s31, 1
      %p348 = por %p346, %p347
      %p349 = scmp.ne.s32.totalorder %s338, %s339
      %p350 = scmp.eq.s32.totalorder %s31, 0
      %p351 = por %p349, %p350
      %p352 = scmp.ne.s32.totalorder %s338, %s339
      %p353 = scmp.eq.s32.totalorder %s32, 1
      %p354 = por %p352, %p353
      %p356 = scmp.ne.s32.totalorder %s339, %s355
      %p357 = scmp.eq.s32.totalorder %s32, 0
      %p358 = por %p356, %p357
      %p359 = scmp.le.s32.totalorder 1, %s26
      %p360 = scmp.lt.s32.totalorder %s26, 3
      %p361 = pnand %p359, %p360
      %p362 = pneg %p361
      // Predicated region
      $region9: #{tpu_custom_call.1} parent=5 // pred_check
        _
      $region10: #{tpu_custom_call.1} parent=5 // pred_check_branch
        %364 = sbr.rel (%p361) target = $region12
      $region11: #{tpu_custom_call.1} parent=5 // pred_region
        %s365 = ssub.s32 %s26, 1
        // Predicated region
        $region13: #{tpu_custom_call.1} parent=11 // pred_check
          %p366 = pneg %p47
        $region14: #{tpu_custom_call.1} parent=11 // pred_check_branch
          %368 = sbr.rel (%p366) target = $region16
        $region15: #{tpu_custom_call.1} parent=11 // pred_region
          _
        $region16: #{tpu_custom_call.1} parent=11 // pred_fallthru
          _
        // Predicated region
        $region17: #{tpu_custom_call.1} parent=11 // pred_check
          %p369 = pneg %p94
        $region18: #{tpu_custom_call.1} parent=11 // pred_check_branch
          %371 = sbr.rel (%p369) target = $region20
        $region19: #{tpu_custom_call.1} parent=11 // pred_region
          _
        $region20: #{tpu_custom_call.1} parent=11 // pred_fallthru
          _
        // Predicated region
        $region21: #{tpu_custom_call.1} parent=11 // pred_check
          %p372 = pneg %p115
        $region22: #{tpu_custom_call.1} parent=11 // pred_check_branch
          %374 = sbr.rel (%p372) target = $region24
        $region23: #{tpu_custom_call.1} parent=11 // pred_region
          _
        $region24: #{tpu_custom_call.1} parent=11 // pred_fallthru
          _
        // Predicated region
        $region25: #{tpu_custom_call.1} parent=11 // pred_check
          %p375 = pneg %p136
        $region26: #{tpu_custom_call.1} parent=11 // pred_check_branch
          %377 = sbr.rel (%p375) target = $region28
        $region27: #{tpu_custom_call.1} parent=11 // pred_region
          _
        $region28: #{tpu_custom_call.1} parent=11 // pred_fallthru
          _
        // Predicated region
        $region29: #{tpu_custom_call.1} parent=11 // pred_check
          %p378 = pneg %p157
        $region30: #{tpu_custom_call.1} parent=11 // pred_check_branch
          %380 = sbr.rel (%p378) target = $region32
        $region31: #{tpu_custom_call.1} parent=11 // pred_region
          _
        $region32: #{tpu_custom_call.1} parent=11 // pred_fallthru
          _
        // Predicated region
        $region33: #{tpu_custom_call.1} parent=11 // pred_check
          %p381 = pneg %p178
        $region34: #{tpu_custom_call.1} parent=11 // pred_check_branch
          %383 = sbr.rel (%p381) target = $region36
        $region35: #{tpu_custom_call.1} parent=11 // pred_region
          _
        $region36: #{tpu_custom_call.1} parent=11 // pred_fallthru
          _
        // Predicated region
        $region37: #{tpu_custom_call.1} parent=11 // pred_check
          %p384 = pneg %p199
        $region38: #{tpu_custom_call.1} parent=11 // pred_check_branch
          %386 = sbr.rel (%p384) target = $region40
        $region39: #{tpu_custom_call.1} parent=11 // pred_region
          _
        $region40: #{tpu_custom_call.1} parent=11 // pred_fallthru
          _
        // Predicated region
        $region41: #{tpu_custom_call.1} parent=11 // pred_check
          %p387 = pneg %p220
        $region42: #{tpu_custom_call.1} parent=11 // pred_check_branch
          %389 = sbr.rel (%p387) target = $region44
        $region43: #{tpu_custom_call.1} parent=11 // pred_region
          _
        $region44: #{tpu_custom_call.1} parent=11 // pred_fallthru
          _
        // Predicated region
        $region45: #{tpu_custom_call.1} parent=11 // pred_check
          %p390 = pneg %p241
        $region46: #{tpu_custom_call.1} parent=11 // pred_check_branch
          %392 = sbr.rel (%p390) target = $region48
        $region47: #{tpu_custom_call.1} parent=11 // pred_region
          _
        $region48: #{tpu_custom_call.1} parent=11 // pred_fallthru
          _
        // Predicated region
        $region49: #{tpu_custom_call.1} parent=11 // pred_check
          %p393 = pneg %p262
        $region50: #{tpu_custom_call.1} parent=11 // pred_check_branch
          %395 = sbr.rel (%p393) target = $region52
        $region51: #{tpu_custom_call.1} parent=11 // pred_region
          %397 = vsyncadd [#allocation7], 0
          %s398 = sshll.u32 %s10, 4
          %s399 = int_to_ptr.hbm [resolvable:$true] %s398
          %s400 = sshll.u32 [#allocation6], 4
          %s401 = int_to_ptr.vmem [resolvable:$true] %s400
          %406 = dma.hbm_to_vmem [thread:$0]  %s399, 9216, %s401, [#allocation7], 64, 64, 4
        $region52: #{tpu_custom_call.1} parent=11 // pred_fallthru
          _
        // Predicated region
        $region53: #{tpu_custom_call.1} parent=11 // pred_check
          %p407 = pneg %p283
        $region54: #{tpu_custom_call.1} parent=11 // pred_check_branch
          %409 = sbr.rel (%p407) target = $region56
        $region55: #{tpu_custom_call.1} parent=11 // pred_region
          _
        $region56: #{tpu_custom_call.1} parent=11 // pred_fallthru
          _
        // Predicated region
        $region57: #{tpu_custom_call.1} parent=11 // pred_check
          %p410 = pneg %p304
        $region58: #{tpu_custom_call.1} parent=11 // pred_check_branch
          %412 = sbr.rel (%p410) target = $region60
        $region59: #{tpu_custom_call.1} parent=11 // pred_region
          %414 = vsyncadd [#allocation10], 0
          %s415 = sshll.u32 %s12, 4
          %s416 = int_to_ptr.hbm [resolvable:$true] %s415
          %s417 = sshll.u32 [#allocation9], 4
          %s418 = int_to_ptr.vmem [resolvable:$true] %s417
          %423 = dma.hbm_to_vmem [thread:$0]  %s416, 9216, %s418, [#allocation10], 64, 64, 4
        $region60: #{tpu_custom_call.1} parent=11 // pred_fallthru
          _
        // Predicated region
        $region61: #{tpu_custom_call.1} parent=11 // pred_check
          %p424 = pneg %p325
        $region62: #{tpu_custom_call.1} parent=11 // pred_check_branch
          %426 = sbr.rel (%p424) target = $region64
        $region63: #{tpu_custom_call.1} parent=11 // pred_region
          _
        $region64: #{tpu_custom_call.1} parent=11 // pred_fallthru
          _
      $region12: #{tpu_custom_call.1} parent=5 // pred_fallthru
        _
      %p427 = scmp.lt.s32.totalorder %s26, 2
      // Predicated region
      $region65: #{tpu_custom_call.1} parent=5 // pred_check
        %p428 = pneg %p427
      $region66: #{tpu_custom_call.1} parent=5 // pred_check_branch
        %430 = sbr.rel (%p428) target = $region68
      $region67: #{tpu_custom_call.1} parent=5 // pred_region
        // Predicated region
        $region69: #{tpu_custom_call.1} parent=67 // pred_check
          %p431 = pneg %p67
        $region70: #{tpu_custom_call.1} parent=67 // pred_check_branch
          %433 = sbr.rel (%p431) target = $region72
        $region71: #{tpu_custom_call.1} parent=67 // pred_region
          %p434 = scmp.lt.s32.totalorder %s26, 1
          %s435 = scalar_select %p434, %s26, 1
          %s436 = smul.addr %s435, 41
          %s437 = smul.addr %s436, 8
          %s438 = scalar_lea.vmem %s1, %s437
        $region72: #{tpu_custom_call.1} parent=67 // pred_fallthru
          _
      $region68: #{tpu_custom_call.1} parent=5 // pred_fallthru
        _
      %p439 = scmp.le.s32.totalorder 1, %s26
      %p440 = scmp.lt.s32.totalorder %s26, 3
      %p441 = pnand %p439, %p440
      %p442 = pneg %p441
      // Predicated region
      $region73: #{tpu_custom_call.1} parent=5 // pred_check
        _
      $region74: #{tpu_custom_call.1} parent=5 // pred_check_branch
        %444 = sbr.rel (%p441) target = $region76
      $region75: #{tpu_custom_call.1} parent=5 // pred_region
        %s445 = ssub.s32 %s26, 1
        // Predicated region
        $region77: #{tpu_custom_call.1} parent=75 // pred_check
          %p446 = pneg %p262
        $region78: #{tpu_custom_call.1} parent=75 // pred_check_branch
          %448 = sbr.rel (%p446) target = $region80
        $region79: #{tpu_custom_call.1} parent=75 // pred_region
          %450 = dma.done [#allocation7], 9216
        $region80: #{tpu_custom_call.1} parent=75 // pred_fallthru
          _
        // Predicated region
        $region81: #{tpu_custom_call.1} parent=75 // pred_check
          %p451 = pneg %p304
        $region82: #{tpu_custom_call.1} parent=75 // pred_check_branch
          %453 = sbr.rel (%p451) target = $region84
        $region83: #{tpu_custom_call.1} parent=75 // pred_region
          %455 = dma.done [#allocation10], 9216
        $region84: #{tpu_custom_call.1} parent=75 // pred_fallthru
          _
        %p456 = pneg %p47
        %p457 = pneg %p44
        %p458 = scmp.lt.s32.totalorder %s31, 1
        %s459 = scalar_select %p458, %s31, 1
        %s460 = smul.addr %s459, 41
        %s461 = smul.addr %s460, 8
        %s462 = scalar_lea.vmem %s1, %s461
        %p463 = pneg %p73
        %p464 = pneg %p70
        %p465 = pneg %p94
        %p466 = pneg %p91
        %p467 = pneg %p115
        %p468 = pneg %p112
        %p469 = pneg %p136
        %p470 = pneg %p133
        %p471 = pneg %p157
        %p472 = pneg %p154
        %p473 = pneg %p178
        %p474 = pneg %p175
        %p475 = pneg %p199
        %p476 = pneg %p196
        %p477 = pneg %p220
        %p478 = pneg %p217
        %p479 = pneg %p241
        %p480 = pneg %p238
        %p481 = pneg %p262
        %p482 = pneg %p259
        %p483 = pneg %p283
        %p484 = pneg %p280
        %p485 = pneg %p304
        %p486 = pneg %p301
        %p487 = pneg %p325
        %p488 = pneg %p322
        %p489 = pneg %p351
        %p490 = pneg %p348
        %s491 = sand.u32 %s338, 1
        %s492 = scalar_lea.sflag [#allocation8], %s491
        %s493 = sand.u32 %s338, 1
        %s494 = smul.addr %s493, 16
        %s495 = scalar_lea.vmem [#allocation11], %s494
        %p496 = scmp.lt.s32.totalorder %s31, 1
        %s497 = scalar_select %p496, %s31, 1
        %s498 = smul.addr %s497, 41
        %s499 = smul.addr %s498, 8
        %s500 = scalar_lea.vmem %s1, %s499
        %v501 = vld [vmem:[%s500 + $0x13] sm:$0xff]
        %v502 = vld [vmem:[%s500 + $0x1b] sm:$0xff]
        %v503 = vld [vmem:[%s500 + $0x23] sm:$0xff]
        %v504 = vld [vmem:[%s500 + $0x2b] sm:$0xff]
        %v505 = vld [vmem:[%s500 + $0x33] sm:$0xff]
        %v506 = vld [vmem:[%s500 + $0x3b] sm:$0xff]
        %v507 = vld [vmem:[%s500 + $0x43] sm:$0xff]
        %v508 = vld [vmem:[%s500 + $0x4b] sm:$0xff]
        %v509 = vld [vmem:[%s500 + $0x53] sm:$0xff]
        %v510 = vld [vmem:[%s500 + $0x5b] sm:$0xff]
        %v511 = vld [vmem:[%s500 + $0x63] sm:$0xff]
        %v512 = vld [vmem:[%s500 + $0x6b] sm:$0xff]
        %v513 = vld [vmem:[%s500 + $0x73] sm:$0xff]
        %v514 = vld [vmem:[%s500 + $0x7b] sm:$0xff]
        %v515 = vld [vmem:[%s500 + $0x83] sm:$0xff]
        %v516 = vld [vmem:[%s500 + $0x8b] sm:$0xff]
        %v517 = vld [vmem:[%s500 + $0x93] sm:$0xff]
        %v518 = vld [vmem:[%s500 + $0x9b] sm:$0xff]
        %v519 = vld [vmem:[%s500 + $0xa3] sm:$0xff]
        %v520 = vld [vmem:[%s500 + $0xab] sm:$0xff]
        %v521 = vld [vmem:[%s500 + $0xb3] sm:$0xff]
        %v522 = vld [vmem:[%s500 + $0xbb] sm:$0xff]
        %v523 = vld [vmem:[%s500 + $0xc3] sm:$0xff]
        %v524 = vld [vmem:[%s500 + $0xcb] sm:$0xff]
        %v525 = vld [vmem:[%s500 + $0xd3] sm:$0xff]
        %v526 = vld [vmem:[%s500 + $0xdb] sm:$0xff]
        %v527 = vld [vmem:[%s500 + $0xe3] sm:$0xff]
        %v528 = vld [vmem:[%s500 + $0xeb] sm:$0xff]
        %v529 = vld [vmem:[%s500 + $0xf3] sm:$0xff]
        %v530 = vld [vmem:[%s500 + $0xfb] sm:$0xff]
        %v531 = vld [vmem:[%s500 + $0x103] sm:$0xff]
        %v532 = vld [vmem:[%s500 + $0x10b] sm:$0xff]
        %v533 = vld [vmem:[%s500 + $0x113] sm:$0xff]
        %v534 = vld [vmem:[%s500 + $0x11b] sm:$0xff]
        %v535 = vld [vmem:[%s500 + $0x123] sm:$0xff]
        %v536 = vld [vmem:[%s500 + $0x12b] sm:$0x3f]
        %v537 = vpack.c.bf16 %v502, %v501
        %v538 = vpack.c.bf16 %v504, %v503
        %v539 = vpack.c.bf16 %v506, %v505
        %v540 = vpack.c.bf16 %v508, %v507
        %v541 = vpack.c.bf16 %v510, %v509
        %v542 = vpack.c.bf16 %v512, %v511
        %v543 = vpack.c.bf16 %v514, %v513
        %v544 = vpack.c.bf16 %v516, %v515
        %v545 = vpack.c.bf16 %v518, %v517
        %v546 = vpack.c.bf16 %v520, %v519
        %v547 = vpack.c.bf16 %v522, %v521
        %v548 = vpack.c.bf16 %v524, %v523
        %v549 = vpack.c.bf16 %v526, %v525
        %v550 = vpack.c.bf16 %v528, %v527
        %v551 = vpack.c.bf16 %v530, %v529
        %v552 = vpack.c.bf16 %v532, %v531
        %v553 = vpack.c.bf16 %v534, %v533
        %v554 = vpack.c.bf16 %v536, %v535
        %v555 = vld [vmem:[%s2] sm:$0xf]
        %v556 = vld [vmem:[%s2 + $0x4] sm:$0xf]
        %v557 = vld [vmem:[%s2 + $0x8] sm:$0xf]
        %v558 = vld [vmem:[%s2 + $0xc] sm:$0xf]
        %v559 = vld [vmem:[%s2 + $0x10] sm:$0xf]
        %v560 = vld [vmem:[%s2 + $0x14] sm:$0xf]
        %v561 = vld [vmem:[%s2 + $0x18] sm:$0xf]
        %v562 = vld [vmem:[%s2 + $0x1c] sm:$0xf]
        %v563 = vld [vmem:[%s2 + $0x20] sm:$0xf]
        %v564 = vld [vmem:[%s2 + $0x24] sm:$0xf]
        %v565 = vld [vmem:[%s2 + $0x28] sm:$0xf]
        %v566 = vld [vmem:[%s2 + $0x2c] sm:$0xf]
        %v567 = vld [vmem:[%s2 + $0x30] sm:$0xf]
        %v568 = vld [vmem:[%s2 + $0x34] sm:$0xf]
        %v569 = vld [vmem:[%s2 + $0x38] sm:$0xf]
        %v570 = vld [vmem:[%s2 + $0x3c] sm:$0xf]
        %v571 = vld [vmem:[%s3] sm:$0x1]
        %v573 = vperm.slane %v571, 0
        %v591 = vunpack.c.l.b16 %v555
        %v592 = vunpack.c.l.b16 %v556
        %v593 = vunpack.c.l.b16 %v557
        %v594 = vunpack.c.l.b16 %v558
        %v595 = vunpack.c.l.b16 %v559
        %v596 = vunpack.c.l.b16 %v560
        %v597 = vunpack.c.l.b16 %v561
        %v598 = vunpack.c.l.b16 %v562
        %v599 = vunpack.c.l.b16 %v563
        %v600 = vunpack.c.l.b16 %v564
        %v601 = vunpack.c.l.b16 %v565
        %v602 = vunpack.c.l.b16 %v566
        %v603 = vunpack.c.l.b16 %v567
        %v604 = vunpack.c.l.b16 %v568
        %v605 = vunpack.c.l.b16 %v569
        %v606 = vunpack.c.l.b16 %v570
        %v607 = vpack.c.b16 %v592, %v591
        %v608 = vpack.c.b16 %v594, %v593
        %v609 = vpack.c.b16 %v596, %v595
        %v610 = vpack.c.b16 %v598, %v597
        %v611 = vpack.c.b16 %v600, %v599
        %v612 = vpack.c.b16 %v602, %v601
        %v613 = vpack.c.b16 %v604, %v603
        %v614 = vpack.c.b16 %v606, %v605
        %623 = vmatpush.bf16.msra.mxu0 %v614
        %624 = vmatpush.bf16.msra.mxu0 %v613
        %625 = vmatpush.bf16.msra.mxu0 %v612
        %626 = vmatpush.bf16.msra.mxu0 %v611
        %627 = vmatpush.bf16.msra.mxu0 %v610
        %628 = vmatpush.bf16.msra.mxu0 %v609
        %629 = vmatpush.bf16.msra.mxu0 %v608
        %630 = vmatpush.bf16.msra.mxu0 %v607
        %631 = vmatmul.bf16.gmra.mxu0 %v537
        %v632 = vpop.f32.mrf.mxu0
        %v633 = vadd.f32 %v573, %v632
        %v634 = vpop.f32.mrf.mxu0
        %v635 = vadd.f32 %v573, %v634
        %636 = vmatmul.bf16.gmra.mxu0 %v538
        %v637 = vpop.f32.mrf.mxu0
        %v638 = vadd.f32 %v573, %v637
        %v639 = vpop.f32.mrf.mxu0
        %v640 = vadd.f32 %v573, %v639
        %641 = vmatmul.bf16.gmra.mxu0 %v539
        %v642 = vpop.f32.mrf.mxu0
        %v643 = vadd.f32 %v573, %v642
        %v644 = vpop.f32.mrf.mxu0
        %v645 = vadd.f32 %v573, %v644
        %646 = vmatmul.bf16.gmra.mxu0 %v540
        %v647 = vpop.f32.mrf.mxu0
        %v648 = vadd.f32 %v573, %v647
        %v649 = vpop.f32.mrf.mxu0
        %v650 = vadd.f32 %v573, %v649
        %651 = vmatmul.bf16.gmra.mxu0 %v541
        %v652 = vpop.f32.mrf.mxu0
        %v653 = vadd.f32 %v573, %v652
        %v654 = vpop.f32.mrf.mxu0
        %v655 = vadd.f32 %v573, %v654
        %656 = vmatmul.bf16.gmra.mxu0 %v542
        %v657 = vpop.f32.mrf.mxu0
        %v658 = vadd.f32 %v573, %v657
        %v659 = vpop.f32.mrf.mxu0
        %v660 = vadd.f32 %v573, %v659
        %661 = vmatmul.bf16.gmra.mxu0 %v543
        %v662 = vpop.f32.mrf.mxu0
        %v663 = vadd.f32 %v573, %v662
        %v664 = vpop.f32.mrf.mxu0
        %v665 = vadd.f32 %v573, %v664
        %666 = vmatmul.bf16.gmra.mxu0 %v544
        %v667 = vpop.f32.mrf.mxu0
        %v668 = vadd.f32 %v573, %v667
        %v669 = vpop.f32.mrf.mxu0
        %v670 = vadd.f32 %v573, %v669
        %671 = vmatmul.bf16.gmra.mxu0 %v545
        %v672 = vpop.f32.mrf.mxu0
        %v673 = vadd.f32 %v573, %v672
        %v674 = vpop.f32.mrf.mxu0
        %v675 = vadd.f32 %v573, %v674
        %676 = vmatmul.bf16.gmra.mxu0 %v546
        %v677 = vpop.f32.mrf.mxu0
        %v678 = vadd.f32 %v573, %v677
        %v679 = vpop.f32.mrf.mxu0
        %v680 = vadd.f32 %v573, %v679
        %681 = vmatmul.bf16.gmra.mxu0 %v547
        %v682 = vpop.f32.mrf.mxu0
        %v683 = vadd.f32 %v573, %v682
        %v684 = vpop.f32.mrf.mxu0
        %v685 = vadd.f32 %v573, %v684
        %686 = vmatmul.bf16.gmra.mxu0 %v548
        %v687 = vpop.f32.mrf.mxu0
        %v688 = vadd.f32 %v573, %v687
        %v689 = vpop.f32.mrf.mxu0
        %v690 = vadd.f32 %v573, %v689
        %691 = vmatmul.bf16.gmra.mxu0 %v549
        %v692 = vpop.f32.mrf.mxu0
        %v693 = vadd.f32 %v573, %v692
        %v694 = vpop.f32.mrf.mxu0
        %v695 = vadd.f32 %v573, %v694
        %696 = vmatmul.bf16.gmra.mxu0 %v550
        %v697 = vpop.f32.mrf.mxu0
        %v698 = vadd.f32 %v573, %v697
        %v699 = vpop.f32.mrf.mxu0
        %v700 = vadd.f32 %v573, %v699
        %701 = vmatmul.bf16.gmra.mxu0 %v551
        %v702 = vpop.f32.mrf.mxu0
        %v703 = vadd.f32 %v573, %v702
        %v704 = vpop.f32.mrf.mxu0
        %v705 = vadd.f32 %v573, %v704
        %706 = vmatmul.bf16.gmra.mxu0 %v552
        %v707 = vpop.f32.mrf.mxu0
        %v708 = vadd.f32 %v573, %v707
        %v709 = vpop.f32.mrf.mxu0
        %v710 = vadd.f32 %v573, %v709
        %711 = vmatmul.bf16.gmra.mxu0 %v553
        %v712 = vpop.f32.mrf.mxu0
        %v713 = vadd.f32 %v573, %v712
        %v714 = vpop.f32.mrf.mxu0
        %v715 = vadd.f32 %v573, %v714
        %716 = vmatmul.bf16.gmra.mxu0 %v554
        %v717 = vpop.f32.mrf.mxu0
        %v718 = vadd.f32 %v573, %v717
        %v719 = vpop.f32.mrf.mxu0
        %v720 = vadd.f32 %v573, %v719
        %721 = vdwg.mxu0
        %722 = vst [vmem:[#allocation2 + $0x13] sm:$0xff] %v633
        %723 = vst [vmem:[#allocation2 + $0x1b] sm:$0xff] %v635
        %724 = vst [vmem:[#allocation2 + $0x23] sm:$0xff] %v638
        %725 = vst [vmem:[#allocation2 + $0x2b] sm:$0xff] %v640
        %726 = vst [vmem:[#allocation2 + $0x33] sm:$0xff] %v643
        %727 = vst [vmem:[#allocation2 + $0x3b] sm:$0xff] %v645
        %728 = vst [vmem:[#allocation2 + $0x43] sm:$0xff] %v648
        %729 = vst [vmem:[#allocation2 + $0x4b] sm:$0xff] %v650
        %730 = vst [vmem:[#allocation2 + $0x53] sm:$0xff] %v653
        %731 = vst [vmem:[#allocation2 + $0x5b] sm:$0xff] %v655
        %732 = vst [vmem:[#allocation2 + $0x63] sm:$0xff] %v658
        %733 = vst [vmem:[#allocation2 + $0x6b] sm:$0xff] %v660
        %734 = vst [vmem:[#allocation2 + $0x73] sm:$0xff] %v663
        %735 = vst [vmem:[#allocation2 + $0x7b] sm:$0xff] %v665
        %736 = vst [vmem:[#allocation2 + $0x83] sm:$0xff] %v668
        %737 = vst [vmem:[#allocation2 + $0x8b] sm:$0xff] %v670
        %738 = vst [vmem:[#allocation2 + $0x93] sm:$0xff] %v673
        %739 = vst [vmem:[#allocation2 + $0x9b] sm:$0xff] %v675
        %740 = vst [vmem:[#allocation2 + $0xa3] sm:$0xff] %v678
        %741 = vst [vmem:[#allocation2 + $0xab] sm:$0xff] %v680
        %742 = vst [vmem:[#allocation2 + $0xb3] sm:$0xff] %v683
        %743 = vst [vmem:[#allocation2 + $0xbb] sm:$0xff] %v685
        %744 = vst [vmem:[#allocation2 + $0xc3] sm:$0xff] %v688
        %745 = vst [vmem:[#allocation2 + $0xcb] sm:$0xff] %v690
        %746 = vst [vmem:[#allocation2 + $0xd3] sm:$0xff] %v693
        %747 = vst [vmem:[#allocation2 + $0xdb] sm:$0xff] %v695
        %748 = vst [vmem:[#allocation2 + $0xe3] sm:$0xff] %v698
        %749 = vst [vmem:[#allocation2 + $0xeb] sm:$0xff] %v700
        %750 = vst [vmem:[#allocation2 + $0xf3] sm:$0xff] %v703
        %751 = vst [vmem:[#allocation2 + $0xfb] sm:$0xff] %v705
        %752 = vst [vmem:[#allocation2 + $0x103] sm:$0xff] %v708
        %753 = vst [vmem:[#allocation2 + $0x10b] sm:$0xff] %v710
        %754 = vst [vmem:[#allocation2 + $0x113] sm:$0xff] %v713
        %755 = vst [vmem:[#allocation2 + $0x11b] sm:$0xff] %v715
        %756 = vst [vmem:[#allocation2 + $0x123] sm:$0xff] %v718
        %757 = vst [vmem:[#allocation2 + $0x12b] sm:$0x3f] %v720
        %758 = vst [vmem:[#allocation2] sm:$0xff] 0.0
        %759 = vst [vmem:[#allocation2 + $0x8] sm:$0xff] 0.0
        %760 = vst [vmem:[#allocation2 + $0x10] sm:$0x7] 0.0
        %761 = vst [vmem:[#allocation2 + $0x131] sm:$0xff] 0.0
        %762 = vst [vmem:[#allocation2 + $0x139] sm:$0xff] 0.0
        %763 = vst [vmem:[#allocation2 + $0x141] sm:$0x7] 0.0
        %764 = vst [vmem:[#allocation2 + $0x23] sm:$0x3] 0.0
        %765 = vst [vmem:[#allocation2 + $0x35] sm:$0x3] 0.0
        %766 = vst [vmem:[#allocation2 + $0x47] sm:$0x3] 0.0
        %767 = vst [vmem:[#allocation2 + $0x59] sm:$0x3] 0.0
        %768 = vst [vmem:[#allocation2 + $0x6b] sm:$0x3] 0.0
        %769 = vst [vmem:[#allocation2 + $0x7d] sm:$0x3] 0.0
        %770 = vst [vmem:[#allocation2 + $0x8f] sm:$0x3] 0.0
        %771 = vst [vmem:[#allocation2 + $0xa1] sm:$0x3] 0.0
        %772 = vst [vmem:[#allocation2 + $0xb3] sm:$0x3] 0.0
        %773 = vst [vmem:[#allocation2 + $0xc5] sm:$0x3] 0.0
        %774 = vst [vmem:[#allocation2 + $0xd7] sm:$0x3] 0.0
        %775 = vst [vmem:[#allocation2 + $0xe9] sm:$0x3] 0.0
        %776 = vst [vmem:[#allocation2 + $0xfb] sm:$0x3] 0.0
        %777 = vst [vmem:[#allocation2 + $0x10d] sm:$0x3] 0.0
        %778 = vst [vmem:[#allocation2 + $0x11f] sm:$0x3] 0.0
        %v779 = vld [vmem:[#allocation2] sm:$0xff]
        %v780 = vld [vmem:[#allocation2 + $0x8] sm:$0xff]
        %v781 = vld [vmem:[#allocation2 + $0x10] sm:$0xff]
        %v782 = vld [vmem:[#allocation2 + $0x18] sm:$0xff]
        %v783 = vld [vmem:[#allocation2 + $0x20] sm:$0xff]
        %v784 = vld [vmem:[#allocation2 + $0x28] sm:$0xff]
        %v785 = vld [vmem:[#allocation2 + $0x30] sm:$0xff]
        %v786 = vld [vmem:[#allocation2 + $0x38] sm:$0xff]
        %v787 = vld [vmem:[#allocation2 + $0x40] sm:$0xff]
        %v788 = vld [vmem:[#allocation2 + $0x48] sm:$0xff]
        %v789 = vld [vmem:[#allocation2 + $0x50] sm:$0xff]
        %v790 = vld [vmem:[#allocation2 + $0x58] sm:$0xff]
        %v791 = vld [vmem:[#allocation2 + $0x60] sm:$0xff]
        %v792 = vld [vmem:[#allocation2 + $0x68] sm:$0xff]
        %v793 = vld [vmem:[#allocation2 + $0x70] sm:$0xff]
        %v794 = vld [vmem:[#allocation2 + $0x78] sm:$0xff]
        %v795 = vld [vmem:[#allocation2 + $0x80] sm:$0xff]
        %v796 = vld [vmem:[#allocation2 + $0x88] sm:$0xff]
        %v797 = vld [vmem:[#allocation2 + $0x90] sm:$0xff]
        %v798 = vld [vmem:[#allocation2 + $0x98] sm:$0xff]
        %v799 = vld [vmem:[#allocation2 + $0xa0] sm:$0xff]
        %v800 = vld [vmem:[#allocation2 + $0xa8] sm:$0xff]
        %v801 = vld [vmem:[#allocation2 + $0xb0] sm:$0xff]
        %v802 = vld [vmem:[#allocation2 + $0xb8] sm:$0xff]
        %v803 = vld [vmem:[#allocation2 + $0xc0] sm:$0xff]
        %v804 = vld [vmem:[#allocation2 + $0xc8] sm:$0xff]
        %v805 = vld [vmem:[#allocation2 + $0xd0] sm:$0xff]
        %v806 = vld [vmem:[#allocation2 + $0xd8] sm:$0xff]
        %v807 = vld [vmem:[#allocation2 + $0xe0] sm:$0xff]
        %v808 = vld [vmem:[#allocation2 + $0xe8] sm:$0xff]
        %v809 = vld [vmem:[#allocation2 + $0xf0] sm:$0xff]
        %v810 = vld [vmem:[#allocation2 + $0xf8] sm:$0xff]
        %v811 = vld [vmem:[#allocation2 + $0x100] sm:$0xff]
        %v812 = vld [vmem:[#allocation2 + $0x108] sm:$0xff]
        %v813 = vld [vmem:[#allocation2 + $0x110] sm:$0xff]
        %v814 = vld [vmem:[#allocation2 + $0x118] sm:$0x3f]
        %v815 = vpack.c.bf16 %v780, %v779
        %v816 = vpack.c.bf16 %v782, %v781
        %v817 = vpack.c.bf16 %v784, %v783
        %v818 = vpack.c.bf16 %v786, %v785
        %v819 = vpack.c.bf16 %v788, %v787
        %v820 = vpack.c.bf16 %v790, %v789
        %v821 = vpack.c.bf16 %v792, %v791
        %v822 = vpack.c.bf16 %v794, %v793
        %v823 = vpack.c.bf16 %v796, %v795
        %v824 = vpack.c.bf16 %v798, %v797
        %v825 = vpack.c.bf16 %v800, %v799
        %v826 = vpack.c.bf16 %v802, %v801
        %v827 = vpack.c.bf16 %v804, %v803
        %v828 = vpack.c.bf16 %v806, %v805
        %v829 = vpack.c.bf16 %v808, %v807
        %v830 = vpack.c.bf16 %v810, %v809
        %v831 = vpack.c.bf16 %v812, %v811
        %v832 = vpack.c.bf16 %v814, %v813
        %v833 = vld [vmem:[%s4] sm:$0xf]
        %v834 = vld [vmem:[%s4 + $0x4] sm:$0xf]
        %v835 = vld [vmem:[%s4 + $0x8] sm:$0xf]
        %v836 = vld [vmem:[%s4 + $0xc] sm:$0xf]
        %v837 = vld [vmem:[%s4 + $0x10] sm:$0xf]
        %v838 = vld [vmem:[%s4 + $0x14] sm:$0xf]
        %v839 = vld [vmem:[%s4 + $0x18] sm:$0xf]
        %v840 = vld [vmem:[%s4 + $0x1c] sm:$0xf]
        %v841 = vld [vmem:[%s4 + $0x20] sm:$0xf]
        %v842 = vld [vmem:[%s4 + $0x24] sm:$0xf]
        %v843 = vld [vmem:[%s4 + $0x28] sm:$0xf]
        %v844 = vld [vmem:[%s4 + $0x2c] sm:$0xf]
        %v845 = vld [vmem:[%s4 + $0x30] sm:$0xf]
        %v846 = vld [vmem:[%s4 + $0x34] sm:$0xf]
        %v847 = vld [vmem:[%s4 + $0x38] sm:$0xf]
        %v848 = vld [vmem:[%s4 + $0x3c] sm:$0xf]
        %v849 = vld [vmem:[#allocation2 + $0x1] sm:$0xff]
        %v850 = vld [vmem:[#allocation2 + $0x9] sm:$0xff]
        %v851 = vld [vmem:[#allocation2 + $0x11] sm:$0xff]
        %v852 = vld [vmem:[#allocation2 + $0x19] sm:$0xff]
        %v853 = vld [vmem:[#allocation2 + $0x21] sm:$0xff]
        %v854 = vld [vmem:[#allocation2 + $0x29] sm:$0xff]
        %v855 = vld [vmem:[#allocation2 + $0x31] sm:$0xff]
        %v856 = vld [vmem:[#allocation2 + $0x39] sm:$0xff]
        %v857 = vld [vmem:[#allocation2 + $0x41] sm:$0xff]
        %v858 = vld [vmem:[#allocation2 + $0x49] sm:$0xff]
        %v859 = vld [vmem:[#allocation2 + $0x51] sm:$0xff]
        %v860 = vld [vmem:[#allocation2 + $0x59] sm:$0xff]
        %v861 = vld [vmem:[#allocation2 + $0x61] sm:$0xff]
        %v862 = vld [vmem:[#allocation2 + $0x69] sm:$0xff]
        %v863 = vld [vmem:[#allocation2 + $0x71] sm:$0xff]
        %v864 = vld [vmem:[#allocation2 + $0x79] sm:$0xff]
        %v865 = vld [vmem:[#allocation2 + $0x81] sm:$0xff]
        %v866 = vld [vmem:[#allocation2 + $0x89] sm:$0xff]
        %v867 = vld [vmem:[#allocation2 + $0x91] sm:$0xff]
        %v868 = vld [vmem:[#allocation2 + $0x99] sm:$0xff]
        %v869 = vld [vmem:[#allocation2 + $0xa1] sm:$0xff]
        %v870 = vld [vmem:[#allocation2 + $0xa9] sm:$0xff]
        %v871 = vld [vmem:[#allocation2 + $0xb1] sm:$0xff]
        %v872 = vld [vmem:[#allocation2 + $0xb9] sm:$0xff]
        %v873 = vld [vmem:[#allocation2 + $0xc1] sm:$0xff]
        %v874 = vld [vmem:[#allocation2 + $0xc9] sm:$0xff]
        %v875 = vld [vmem:[#allocation2 + $0xd1] sm:$0xff]
        %v876 = vld [vmem:[#allocation2 + $0xd9] sm:$0xff]
        %v877 = vld [vmem:[#allocation2 + $0xe1] sm:$0xff]
        %v878 = vld [vmem:[#allocation2 + $0xe9] sm:$0xff]
        %v879 = vld [vmem:[#allocation2 + $0xf1] sm:$0xff]
        %v880 = vld [vmem:[#allocation2 + $0xf9] sm:$0xff]
        %v881 = vld [vmem:[#allocation2 + $0x101] sm:$0xff]
        %v882 = vld [vmem:[#allocation2 + $0x109] sm:$0xff]
        %v883 = vld [vmem:[#allocation2 + $0x111] sm:$0xff]
        %v884 = vld [vmem:[#allocation2 + $0x119] sm:$0x3f]
        %v885 = vpack.c.bf16 %v850, %v849
        %v886 = vpack.c.bf16 %v852, %v851
        %v887 = vpack.c.bf16 %v854, %v853
        %v888 = vpack.c.bf16 %v856, %v855
        %v889 = vpack.c.bf16 %v858, %v857
        %v890 = vpack.c.bf16 %v860, %v859
        %v891 = vpack.c.bf16 %v862, %v861
        %v892 = vpack.c.bf16 %v864, %v863
        %v893 = vpack.c.bf16 %v866, %v865
        %v894 = vpack.c.bf16 %v868, %v867
        %v895 = vpack.c.bf16 %v870, %v869
        %v896 = vpack.c.bf16 %v872, %v871
        %v897 = vpack.c.bf16 %v874, %v873
        %v898 = vpack.c.bf16 %v876, %v875
        %v899 = vpack.c.bf16 %v878, %v877
        %v900 = vpack.c.bf16 %v880, %v879
        %v901 = vpack.c.bf16 %v882, %v881
        %v902 = vpack.c.bf16 %v884, %v883
        %v903 = vld [vmem:[%s4 + $0x40] sm:$0xf]
        %v904 = vld [vmem:[%s4 + $0x44] sm:$0xf]
        %v905 = vld [vmem:[%s4 + $0x48] sm:$0xf]
        %v906 = vld [vmem:[%s4 + $0x4c] sm:$0xf]
        %v907 = vld [vmem:[%s4 + $0x50] sm:$0xf]
        %v908 = vld [vmem:[%s4 + $0x54] sm:$0xf]
        %v909 = vld [vmem:[%s4 + $0x58] sm:$0xf]
        %v910 = vld [vmem:[%s4 + $0x5c] sm:$0xf]
        %v911 = vld [vmem:[%s4 + $0x60] sm:$0xf]
        %v912 = vld [vmem:[%s4 + $0x64] sm:$0xf]
        %v913 = vld [vmem:[%s4 + $0x68] sm:$0xf]
        %v914 = vld [vmem:[%s4 + $0x6c] sm:$0xf]
        %v915 = vld [vmem:[%s4 + $0x70] sm:$0xf]
        %v916 = vld [vmem:[%s4 + $0x74] sm:$0xf]
        %v917 = vld [vmem:[%s4 + $0x78] sm:$0xf]
        %v918 = vld [vmem:[%s4 + $0x7c] sm:$0xf]
        %v935 = vunpack.c.l.b16 %v903
        %v936 = vunpack.c.l.b16 %v904
        %v937 = vunpack.c.l.b16 %v905
        %v938 = vunpack.c.l.b16 %v906
        %v939 = vunpack.c.l.b16 %v907
        %v940 = vunpack.c.l.b16 %v908
        %v941 = vunpack.c.l.b16 %v909
        %v942 = vunpack.c.l.b16 %v910
        %v943 = vunpack.c.l.b16 %v911
        %v944 = vunpack.c.l.b16 %v912
        %v945 = vunpack.c.l.b16 %v913
        %v946 = vunpack.c.l.b16 %v914
        %v947 = vunpack.c.l.b16 %v915
        %v948 = vunpack.c.l.b16 %v916
        %v949 = vunpack.c.l.b16 %v917
        %v950 = vunpack.c.l.b16 %v918
        %v951 = vpack.c.b16 %v936, %v935
        %v952 = vpack.c.b16 %v938, %v937
        %v953 = vpack.c.b16 %v940, %v939
        %v954 = vpack.c.b16 %v942, %v941
        %v955 = vpack.c.b16 %v944, %v943
        %v956 = vpack.c.b16 %v946, %v945
        %v957 = vpack.c.b16 %v948, %v947
        %v958 = vpack.c.b16 %v950, %v949
        %967 = vmatpush.bf16.msra.mxu0 %v958
        %968 = vmatpush.bf16.msra.mxu0 %v957
        %969 = vmatpush.bf16.msra.mxu0 %v956
        %970 = vmatpush.bf16.msra.mxu0 %v955
        %971 = vmatpush.bf16.msra.mxu0 %v954
        %972 = vmatpush.bf16.msra.mxu0 %v953
        %973 = vmatpush.bf16.msra.mxu0 %v952
        %974 = vmatpush.bf16.msra.mxu0 %v951
        %975 = vmatmul.bf16.gmra.mxu0 %v885
        %v976 = vpop.f32.mrf.mxu0
        %v977 = vadd.f32 0.0, %v976
        %v978 = vpop.f32.mrf.mxu0
        %v979 = vadd.f32 0.0, %v978
        %980 = vmatmul.bf16.gmra.mxu0 %v886
        %v981 = vpop.f32.mrf.mxu0
        %v982 = vadd.f32 0.0, %v981
        %v983 = vpop.f32.mrf.mxu0
        %v984 = vadd.f32 0.0, %v983
        %985 = vmatmul.bf16.gmra.mxu0 %v887
        %v986 = vpop.f32.mrf.mxu0
        %v987 = vadd.f32 0.0, %v986
        %v988 = vpop.f32.mrf.mxu0
        %v989 = vadd.f32 0.0, %v988
        %990 = vmatmul.bf16.gmra.mxu0 %v888
        %v991 = vpop.f32.mrf.mxu0
        %v992 = vadd.f32 0.0, %v991
        %v993 = vpop.f32.mrf.mxu0
        %v994 = vadd.f32 0.0, %v993
        %995 = vmatmul.bf16.gmra.mxu0 %v889
        %v996 = vpop.f32.mrf.mxu0
        %v997 = vadd.f32 0.0, %v996
        %v998 = vpop.f32.mrf.mxu0
        %v999 = vadd.f32 0.0, %v998
        %1000 = vmatmul.bf16.gmra.mxu0 %v890
        %v1001 = vpop.f32.mrf.mxu0
        %v1002 = vadd.f32 0.0, %v1001
        %v1003 = vpop.f32.mrf.mxu0
        %v1004 = vadd.f32 0.0, %v1003
        %1005 = vmatmul.bf16.gmra.mxu0 %v891
        %v1006 = vpop.f32.mrf.mxu0
        %v1007 = vadd.f32 0.0, %v1006
        %v1008 = vpop.f32.mrf.mxu0
        %v1009 = vadd.f32 0.0, %v1008
        %1010 = vmatmul.bf16.gmra.mxu0 %v892
        %v1011 = vpop.f32.mrf.mxu0
        %v1012 = vadd.f32 0.0, %v1011
        %v1013 = vpop.f32.mrf.mxu0
        %v1014 = vadd.f32 0.0, %v1013
        %1015 = vmatmul.bf16.gmra.mxu0 %v893
        %v1016 = vpop.f32.mrf.mxu0
        %v1017 = vadd.f32 0.0, %v1016
        %v1018 = vpop.f32.mrf.mxu0
        %v1019 = vadd.f32 0.0, %v1018
        %1020 = vmatmul.bf16.gmra.mxu0 %v894
        %v1021 = vpop.f32.mrf.mxu0
        %v1022 = vadd.f32 0.0, %v1021
        %v1023 = vpop.f32.mrf.mxu0
        %v1024 = vadd.f32 0.0, %v1023
        %1025 = vmatmul.bf16.gmra.mxu0 %v895
        %v1026 = vpop.f32.mrf.mxu0
        %v1027 = vadd.f32 0.0, %v1026
        %v1028 = vpop.f32.mrf.mxu0
        %v1029 = vadd.f32 0.0, %v1028
        %1030 = vmatmul.bf16.gmra.mxu0 %v896
        %v1031 = vpop.f32.mrf.mxu0
        %v1032 = vadd.f32 0.0, %v1031
        %v1033 = vpop.f32.mrf.mxu0
        %v1034 = vadd.f32 0.0, %v1033
        %1035 = vmatmul.bf16.gmra.mxu0 %v897
        %v1036 = vpop.f32.mrf.mxu0
        %v1037 = vadd.f32 0.0, %v1036
        %v1038 = vpop.f32.mrf.mxu0
        %v1039 = vadd.f32 0.0, %v1038
        %1040 = vmatmul.bf16.gmra.mxu0 %v898
        %v1041 = vpop.f32.mrf.mxu0
        %v1042 = vadd.f32 0.0, %v1041
        %v1043 = vpop.f32.mrf.mxu0
        %v1044 = vadd.f32 0.0, %v1043
        %1045 = vmatmul.bf16.gmra.mxu0 %v899
        %v1046 = vpop.f32.mrf.mxu0
        %v1047 = vadd.f32 0.0, %v1046
        %v1048 = vpop.f32.mrf.mxu0
        %v1049 = vadd.f32 0.0, %v1048
        %1050 = vmatmul.bf16.gmra.mxu0 %v900
        %v1051 = vpop.f32.mrf.mxu0
        %v1052 = vadd.f32 0.0, %v1051
        %v1053 = vpop.f32.mrf.mxu0
        %v1054 = vadd.f32 0.0, %v1053
        %1055 = vmatmul.bf16.gmra.mxu0 %v901
        %v1056 = vpop.f32.mrf.mxu0
        %v1057 = vadd.f32 0.0, %v1056
        %v1058 = vpop.f32.mrf.mxu0
        %v1059 = vadd.f32 0.0, %v1058
        %1060 = vmatmul.bf16.gmra.mxu0 %v902
        %v1061 = vpop.f32.mrf.mxu0
        %v1062 = vadd.f32 0.0, %v1061
        %v1063 = vpop.f32.mrf.mxu0
        %v1064 = vadd.f32 0.0, %v1063
        %1065 = vdwg.mxu0
        %v1082 = vunpack.c.l.b16 %v833
        %v1083 = vunpack.c.l.b16 %v834
        %v1084 = vunpack.c.l.b16 %v835
        %v1085 = vunpack.c.l.b16 %v836
        %v1086 = vunpack.c.l.b16 %v837
        %v1087 = vunpack.c.l.b16 %v838
        %v1088 = vunpack.c.l.b16 %v839
        %v1089 = vunpack.c.l.b16 %v840
        %v1090 = vunpack.c.l.b16 %v841
        %v1091 = vunpack.c.l.b16 %v842
        %v1092 = vunpack.c.l.b16 %v843
        %v1093 = vunpack.c.l.b16 %v844
        %v1094 = vunpack.c.l.b16 %v845
        %v1095 = vunpack.c.l.b16 %v846
        %v1096 = vunpack.c.l.b16 %v847
        %v1097 = vunpack.c.l.b16 %v848
        %v1098 = vpack.c.b16 %v1083, %v1082
        %v1099 = vpack.c.b16 %v1085, %v1084
        %v1100 = vpack.c.b16 %v1087, %v1086
        %v1101 = vpack.c.b16 %v1089, %v1088
        %v1102 = vpack.c.b16 %v1091, %v1090
        %v1103 = vpack.c.b16 %v1093, %v1092
        %v1104 = vpack.c.b16 %v1095, %v1094
        %v1105 = vpack.c.b16 %v1097, %v1096
        %1114 = vmatpush.bf16.msra.mxu0 %v1105
        %1115 = vmatpush.bf16.msra.mxu0 %v1104
        %1116 = vmatpush.bf16.msra.mxu0 %v1103
        %1117 = vmatpush.bf16.msra.mxu0 %v1102
        %1118 = vmatpush.bf16.msra.mxu0 %v1101
        %1119 = vmatpush.bf16.msra.mxu0 %v1100
        %1120 = vmatpush.bf16.msra.mxu0 %v1099
        %1121 = vmatpush.bf16.msra.mxu0 %v1098
        %1122 = vmatmul.bf16.gmra.mxu0 %v815
        %v1123 = vpop.f32.mrf.mxu0
        %v1124 = vadd.f32 %v977, %v1123
        %v1125 = vpop.f32.mrf.mxu0
        %v1126 = vadd.f32 %v979, %v1125
        %1127 = vmatmul.bf16.gmra.mxu0 %v816
        %v1128 = vpop.f32.mrf.mxu0
        %v1129 = vadd.f32 %v982, %v1128
        %v1130 = vpop.f32.mrf.mxu0
        %v1131 = vadd.f32 %v984, %v1130
        %1132 = vmatmul.bf16.gmra.mxu0 %v817
        %v1133 = vpop.f32.mrf.mxu0
        %v1134 = vadd.f32 %v987, %v1133
        %v1135 = vpop.f32.mrf.mxu0
        %v1136 = vadd.f32 %v989, %v1135
        %1137 = vmatmul.bf16.gmra.mxu0 %v818
        %v1138 = vpop.f32.mrf.mxu0
        %v1139 = vadd.f32 %v992, %v1138
        %v1140 = vpop.f32.mrf.mxu0
        %v1141 = vadd.f32 %v994, %v1140
        %1142 = vmatmul.bf16.gmra.mxu0 %v819
        %v1143 = vpop.f32.mrf.mxu0
        %v1144 = vadd.f32 %v997, %v1143
        %v1145 = vpop.f32.mrf.mxu0
        %v1146 = vadd.f32 %v999, %v1145
        %1147 = vmatmul.bf16.gmra.mxu0 %v820
        %v1148 = vpop.f32.mrf.mxu0
        %v1149 = vadd.f32 %v1002, %v1148
        %v1150 = vpop.f32.mrf.mxu0
        %v1151 = vadd.f32 %v1004, %v1150
        %1152 = vmatmul.bf16.gmra.mxu0 %v821
        %v1153 = vpop.f32.mrf.mxu0
        %v1154 = vadd.f32 %v1007, %v1153
        %v1155 = vpop.f32.mrf.mxu0
        %v1156 = vadd.f32 %v1009, %v1155
        %1157 = vmatmul.bf16.gmra.mxu0 %v822
        %v1158 = vpop.f32.mrf.mxu0
        %v1159 = vadd.f32 %v1012, %v1158
        %v1160 = vpop.f32.mrf.mxu0
        %v1161 = vadd.f32 %v1014, %v1160
        %1162 = vmatmul.bf16.gmra.mxu0 %v823
        %v1163 = vpop.f32.mrf.mxu0
        %v1164 = vadd.f32 %v1017, %v1163
        %v1165 = vpop.f32.mrf.mxu0
        %v1166 = vadd.f32 %v1019, %v1165
        %1167 = vmatmul.bf16.gmra.mxu0 %v824
        %v1168 = vpop.f32.mrf.mxu0
        %v1169 = vadd.f32 %v1022, %v1168
        %v1170 = vpop.f32.mrf.mxu0
        %v1171 = vadd.f32 %v1024, %v1170
        %1172 = vmatmul.bf16.gmra.mxu0 %v825
        %v1173 = vpop.f32.mrf.mxu0
        %v1174 = vadd.f32 %v1027, %v1173
        %v1175 = vpop.f32.mrf.mxu0
        %v1176 = vadd.f32 %v1029, %v1175
        %1177 = vmatmul.bf16.gmra.mxu0 %v826
        %v1178 = vpop.f32.mrf.mxu0
        %v1179 = vadd.f32 %v1032, %v1178
        %v1180 = vpop.f32.mrf.mxu0
        %v1181 = vadd.f32 %v1034, %v1180
        %1182 = vmatmul.bf16.gmra.mxu0 %v827
        %v1183 = vpop.f32.mrf.mxu0
        %v1184 = vadd.f32 %v1037, %v1183
        %v1185 = vpop.f32.mrf.mxu0
        %v1186 = vadd.f32 %v1039, %v1185
        %1187 = vmatmul.bf16.gmra.mxu0 %v828
        %v1188 = vpop.f32.mrf.mxu0
        %v1189 = vadd.f32 %v1042, %v1188
        %v1190 = vpop.f32.mrf.mxu0
        %v1191 = vadd.f32 %v1044, %v1190
        %1192 = vmatmul.bf16.gmra.mxu0 %v829
        %v1193 = vpop.f32.mrf.mxu0
        %v1194 = vadd.f32 %v1047, %v1193
        %v1195 = vpop.f32.mrf.mxu0
        %v1196 = vadd.f32 %v1049, %v1195
        %1197 = vmatmul.bf16.gmra.mxu0 %v830
        %v1198 = vpop.f32.mrf.mxu0
        %v1199 = vadd.f32 %v1052, %v1198
        %v1200 = vpop.f32.mrf.mxu0
        %v1201 = vadd.f32 %v1054, %v1200
        %1202 = vmatmul.bf16.gmra.mxu0 %v831
        %v1203 = vpop.f32.mrf.mxu0
        %v1204 = vadd.f32 %v1057, %v1203
        %v1205 = vpop.f32.mrf.mxu0
        %v1206 = vadd.f32 %v1059, %v1205
        %1207 = vmatmul.bf16.gmra.mxu0 %v832
        %v1208 = vpop.f32.mrf.mxu0
        %v1209 = vadd.f32 %v1062, %v1208
        %v1210 = vpop.f32.mrf.mxu0
        %v1211 = vadd.f32 %v1064, %v1210
        %1212 = vdwg.mxu0
        %v1213 = vld [vmem:[#allocation2 + $0x2] sm:$0xff]
        %v1214 = vld [vmem:[#allocation2 + $0xa] sm:$0xff]
        %v1215 = vld [vmem:[#allocation2 + $0x12] sm:$0xff]
        %v1216 = vld [vmem:[#allocation2 + $0x1a] sm:$0xff]
        %v1217 = vld [vmem:[#allocation2 + $0x22] sm:$0xff]
        %v1218 = vld [vmem:[#allocation2 + $0x2a] sm:$0xff]
        %v1219 = vld [vmem:[#allocation2 + $0x32] sm:$0xff]
        %v1220 = vld [vmem:[#allocation2 + $0x3a] sm:$0xff]
        %v1221 = vld [vmem:[#allocation2 + $0x42] sm:$0xff]
        %v1222 = vld [vmem:[#allocation2 + $0x4a] sm:$0xff]
        %v1223 = vld [vmem:[#allocation2 + $0x52] sm:$0xff]
        %v1224 = vld [vmem:[#allocation2 + $0x5a] sm:$0xff]
        %v1225 = vld [vmem:[#allocation2 + $0x62] sm:$0xff]
        %v1226 = vld [vmem:[#allocation2 + $0x6a] sm:$0xff]
        %v1227 = vld [vmem:[#allocation2 + $0x72] sm:$0xff]
        %v1228 = vld [vmem:[#allocation2 + $0x7a] sm:$0xff]
        %v1229 = vld [vmem:[#allocation2 + $0x82] sm:$0xff]
        %v1230 = vld [vmem:[#allocation2 + $0x8a] sm:$0xff]
        %v1231 = vld [vmem:[#allocation2 + $0x92] sm:$0xff]
        %v1232 = vld [vmem:[#allocation2 + $0x9a] sm:$0xff]
        %v1233 = vld [vmem:[#allocation2 + $0xa2] sm:$0xff]
        %v1234 = vld [vmem:[#allocation2 + $0xaa] sm:$0xff]
        %v1235 = vld [vmem:[#allocation2 + $0xb2] sm:$0xff]
        %v1236 = vld [vmem:[#allocation2 + $0xba] sm:$0xff]
        %v1237 = vld [vmem:[#allocation2 + $0xc2] sm:$0xff]
        %v1238 = vld [vmem:[#allocation2 + $0xca] sm:$0xff]
        %v1239 = vld [vmem:[#allocation2 + $0xd2] sm:$0xff]
        %v1240 = vld [vmem:[#allocation2 + $0xda] sm:$0xff]
        %v1241 = vld [vmem:[#allocation2 + $0xe2] sm:$0xff]
        %v1242 = vld [vmem:[#allocation2 + $0xea] sm:$0xff]
        %v1243 = vld [vmem:[#allocation2 + $0xf2] sm:$0xff]
        %v1244 = vld [vmem:[#allocation2 + $0xfa] sm:$0xff]
        %v1245 = vld [vmem:[#allocation2 + $0x102] sm:$0xff]
        %v1246 = vld [vmem:[#allocation2 + $0x10a] sm:$0xff]
        %v1247 = vld [vmem:[#allocation2 + $0x112] sm:$0xff]
        %v1248 = vld [vmem:[#allocation2 + $0x11a] sm:$0x3f]
        %v1249 = vpack.c.bf16 %v1214, %v1213
        %v1250 = vpack.c.bf16 %v1216, %v1215
        %v1251 = vpack.c.bf16 %v1218, %v1217
        %v1252 = vpack.c.bf16 %v1220, %v1219
        %v1253 = vpack.c.bf16 %v1222, %v1221
        %v1254 = vpack.c.bf16 %v1224, %v1223
        %v1255 = vpack.c.bf16 %v1226, %v1225
        %v1256 = vpack.c.bf16 %v1228, %v1227
        %v1257 = vpack.c.bf16 %v1230, %v1229
        %v1258 = vpack.c.bf16 %v1232, %v1231
        %v1259 = vpack.c.bf16 %v1234, %v1233
        %v1260 = vpack.c.bf16 %v1236, %v1235
        %v1261 = vpack.c.bf16 %v1238, %v1237
        %v1262 = vpack.c.bf16 %v1240, %v1239
        %v1263 = vpack.c.bf16 %v1242, %v1241
        %v1264 = vpack.c.bf16 %v1244, %v1243
        %v1265 = vpack.c.bf16 %v1246, %v1245
        %v1266 = vpack.c.bf16 %v1248, %v1247
        %v1267 = vld [vmem:[%s4 + $0x80] sm:$0xf]
        %v1268 = vld [vmem:[%s4 + $0x84] sm:$0xf]
        %v1269 = vld [vmem:[%s4 + $0x88] sm:$0xf]
        %v1270 = vld [vmem:[%s4 + $0x8c] sm:$0xf]
        %v1271 = vld [vmem:[%s4 + $0x90] sm:$0xf]
        %v1272 = vld [vmem:[%s4 + $0x94] sm:$0xf]
        %v1273 = vld [vmem:[%s4 + $0x98] sm:$0xf]
        %v1274 = vld [vmem:[%s4 + $0x9c] sm:$0xf]
        %v1275 = vld [vmem:[%s4 + $0xa0] sm:$0xf]
        %v1276 = vld [vmem:[%s4 + $0xa4] sm:$0xf]
        %v1277 = vld [vmem:[%s4 + $0xa8] sm:$0xf]
        %v1278 = vld [vmem:[%s4 + $0xac] sm:$0xf]
        %v1279 = vld [vmem:[%s4 + $0xb0] sm:$0xf]
        %v1280 = vld [vmem:[%s4 + $0xb4] sm:$0xf]
        %v1281 = vld [vmem:[%s4 + $0xb8] sm:$0xf]
        %v1282 = vld [vmem:[%s4 + $0xbc] sm:$0xf]
        %v1299 = vunpack.c.l.b16 %v1267
        %v1300 = vunpack.c.l.b16 %v1268
        %v1301 = vunpack.c.l.b16 %v1269
        %v1302 = vunpack.c.l.b16 %v1270
        %v1303 = vunpack.c.l.b16 %v1271
        %v1304 = vunpack.c.l.b16 %v1272
        %v1305 = vunpack.c.l.b16 %v1273
        %v1306 = vunpack.c.l.b16 %v1274
        %v1307 = vunpack.c.l.b16 %v1275
        %v1308 = vunpack.c.l.b16 %v1276
        %v1309 = vunpack.c.l.b16 %v1277
        %v1310 = vunpack.c.l.b16 %v1278
        %v1311 = vunpack.c.l.b16 %v1279
        %v1312 = vunpack.c.l.b16 %v1280
        %v1313 = vunpack.c.l.b16 %v1281
        %v1314 = vunpack.c.l.b16 %v1282
        %v1315 = vpack.c.b16 %v1300, %v1299
        %v1316 = vpack.c.b16 %v1302, %v1301
        %v1317 = vpack.c.b16 %v1304, %v1303
        %v1318 = vpack.c.b16 %v1306, %v1305
        %v1319 = vpack.c.b16 %v1308, %v1307
        %v1320 = vpack.c.b16 %v1310, %v1309
        %v1321 = vpack.c.b16 %v1312, %v1311
        %v1322 = vpack.c.b16 %v1314, %v1313
        %1331 = vmatpush.bf16.msra.mxu0 %v1322
        %1332 = vmatpush.bf16.msra.mxu0 %v1321
        %1333 = vmatpush.bf16.msra.mxu0 %v1320
        %1334 = vmatpush.bf16.msra.mxu0 %v1319
        %1335 = vmatpush.bf16.msra.mxu0 %v1318
        %1336 = vmatpush.bf16.msra.mxu0 %v1317
        %1337 = vmatpush.bf16.msra.mxu0 %v1316
        %1338 = vmatpush.bf16.msra.mxu0 %v1315
        %1339 = vmatmul.bf16.gmra.mxu0 %v1249
        %v1340 = vpop.f32.mrf.mxu0
        %v1341 = vadd.f32 0.0, %v1340
        %v1342 = vpop.f32.mrf.mxu0
        %v1343 = vadd.f32 0.0, %v1342
        %1344 = vmatmul.bf16.gmra.mxu0 %v1250
        %v1345 = vpop.f32.mrf.mxu0
        %v1346 = vadd.f32 0.0, %v1345
        %v1347 = vpop.f32.mrf.mxu0
        %v1348 = vadd.f32 0.0, %v1347
        %1349 = vmatmul.bf16.gmra.mxu0 %v1251
        %v1350 = vpop.f32.mrf.mxu0
        %v1351 = vadd.f32 0.0, %v1350
        %v1352 = vpop.f32.mrf.mxu0
        %v1353 = vadd.f32 0.0, %v1352
        %1354 = vmatmul.bf16.gmra.mxu0 %v1252
        %v1355 = vpop.f32.mrf.mxu0
        %v1356 = vadd.f32 0.0, %v1355
        %v1357 = vpop.f32.mrf.mxu0
        %v1358 = vadd.f32 0.0, %v1357
        %1359 = vmatmul.bf16.gmra.mxu0 %v1253
        %v1360 = vpop.f32.mrf.mxu0
        %v1361 = vadd.f32 0.0, %v1360
        %v1362 = vpop.f32.mrf.mxu0
        %v1363 = vadd.f32 0.0, %v1362
        %1364 = vmatmul.bf16.gmra.mxu0 %v1254
        %v1365 = vpop.f32.mrf.mxu0
        %v1366 = vadd.f32 0.0, %v1365
        %v1367 = vpop.f32.mrf.mxu0
        %v1368 = vadd.f32 0.0, %v1367
        %1369 = vmatmul.bf16.gmra.mxu0 %v1255
        %v1370 = vpop.f32.mrf.mxu0
        %v1371 = vadd.f32 0.0, %v1370
        %v1372 = vpop.f32.mrf.mxu0
        %v1373 = vadd.f32 0.0, %v1372
        %1374 = vmatmul.bf16.gmra.mxu0 %v1256
        %v1375 = vpop.f32.mrf.mxu0
        %v1376 = vadd.f32 0.0, %v1375
        %v1377 = vpop.f32.mrf.mxu0
        %v1378 = vadd.f32 0.0, %v1377
        %1379 = vmatmul.bf16.gmra.mxu0 %v1257
        %v1380 = vpop.f32.mrf.mxu0
        %v1381 = vadd.f32 0.0, %v1380
        %v1382 = vpop.f32.mrf.mxu0
        %v1383 = vadd.f32 0.0, %v1382
        %1384 = vmatmul.bf16.gmra.mxu0 %v1258
        %v1385 = vpop.f32.mrf.mxu0
        %v1386 = vadd.f32 0.0, %v1385
        %v1387 = vpop.f32.mrf.mxu0
        %v1388 = vadd.f32 0.0, %v1387
        %1389 = vmatmul.bf16.gmra.mxu0 %v1259
        %v1390 = vpop.f32.mrf.mxu0
        %v1391 = vadd.f32 0.0, %v1390
        %v1392 = vpop.f32.mrf.mxu0
        %v1393 = vadd.f32 0.0, %v1392
        %1394 = vmatmul.bf16.gmra.mxu0 %v1260
        %v1395 = vpop.f32.mrf.mxu0
        %v1396 = vadd.f32 0.0, %v1395
        %v1397 = vpop.f32.mrf.mxu0
        %v1398 = vadd.f32 0.0, %v1397
        %1399 = vmatmul.bf16.gmra.mxu0 %v1261
        %v1400 = vpop.f32.mrf.mxu0
        %v1401 = vadd.f32 0.0, %v1400
        %v1402 = vpop.f32.mrf.mxu0
        %v1403 = vadd.f32 0.0, %v1402
        %1404 = vmatmul.bf16.gmra.mxu0 %v1262
        %v1405 = vpop.f32.mrf.mxu0
        %v1406 = vadd.f32 0.0, %v1405
        %v1407 = vpop.f32.mrf.mxu0
        %v1408 = vadd.f32 0.0, %v1407
        %1409 = vmatmul.bf16.gmra.mxu0 %v1263
        %v1410 = vpop.f32.mrf.mxu0
        %v1411 = vadd.f32 0.0, %v1410
        %v1412 = vpop.f32.mrf.mxu0
        %v1413 = vadd.f32 0.0, %v1412
        %1414 = vmatmul.bf16.gmra.mxu0 %v1264
        %v1415 = vpop.f32.mrf.mxu0
        %v1416 = vadd.f32 0.0, %v1415
        %v1417 = vpop.f32.mrf.mxu0
        %v1418 = vadd.f32 0.0, %v1417
        %1419 = vmatmul.bf16.gmra.mxu0 %v1265
        %v1420 = vpop.f32.mrf.mxu0
        %v1421 = vadd.f32 0.0, %v1420
        %v1422 = vpop.f32.mrf.mxu0
        %v1423 = vadd.f32 0.0, %v1422
        %1424 = vmatmul.bf16.gmra.mxu0 %v1266
        %v1425 = vpop.f32.mrf.mxu0
        %v1426 = vadd.f32 0.0, %v1425
        %v1427 = vpop.f32.mrf.mxu0
        %v1428 = vadd.f32 0.0, %v1427
        %1429 = vdwg.mxu0
        %v1430 = vadd.f32 %v1124, %v1341
        %v1431 = vadd.f32 %v1126, %v1343
        %v1432 = vadd.f32 %v1129, %v1346
        %v1433 = vadd.f32 %v1131, %v1348
        %v1434 = vadd.f32 %v1134, %v1351
        %v1435 = vadd.f32 %v1136, %v1353
        %v1436 = vadd.f32 %v1139, %v1356
        %v1437 = vadd.f32 %v1141, %v1358
        %v1438 = vadd.f32 %v1144, %v1361
        %v1439 = vadd.f32 %v1146, %v1363
        %v1440 = vadd.f32 %v1149, %v1366
        %v1441 = vadd.f32 %v1151, %v1368
        %v1442 = vadd.f32 %v1154, %v1371
        %v1443 = vadd.f32 %v1156, %v1373
        %v1444 = vadd.f32 %v1159, %v1376
        %v1445 = vadd.f32 %v1161, %v1378
        %v1446 = vadd.f32 %v1164, %v1381
        %v1447 = vadd.f32 %v1166, %v1383
        %v1448 = vadd.f32 %v1169, %v1386
        %v1449 = vadd.f32 %v1171, %v1388
        %v1450 = vadd.f32 %v1174, %v1391
        %v1451 = vadd.f32 %v1176, %v1393
        %v1452 = vadd.f32 %v1179, %v1396
        %v1453 = vadd.f32 %v1181, %v1398
        %v1454 = vadd.f32 %v1184, %v1401
        %v1455 = vadd.f32 %v1186, %v1403
        %v1456 = vadd.f32 %v1189, %v1406
        %v1457 = vadd.f32 %v1191, %v1408
        %v1458 = vadd.f32 %v1194, %v1411
        %v1459 = vadd.f32 %v1196, %v1413
        %v1460 = vadd.f32 %v1199, %v1416
        %v1461 = vadd.f32 %v1201, %v1418
        %v1462 = vadd.f32 %v1204, %v1421
        %v1463 = vadd.f32 %v1206, %v1423
        %v1464 = vadd.f32 %v1209, %v1426
        %v1465 = vadd.f32 %v1211, %v1428
        %v1466 = vld [vmem:[#allocation2 + $0x12] sm:$0xff]
        %v1467 = vld [vmem:[#allocation2 + $0x1a] sm:$0xff]
        %v1468 = vld [vmem:[#allocation2 + $0x22] sm:$0xff]
        %v1469 = vld [vmem:[#allocation2 + $0x2a] sm:$0xff]
        %v1470 = vld [vmem:[#allocation2 + $0x32] sm:$0xff]
        %v1471 = vld [vmem:[#allocation2 + $0x3a] sm:$0xff]
        %v1472 = vld [vmem:[#allocation2 + $0x42] sm:$0xff]
        %v1473 = vld [vmem:[#allocation2 + $0x4a] sm:$0xff]
        %v1474 = vld [vmem:[#allocation2 + $0x52] sm:$0xff]
        %v1475 = vld [vmem:[#allocation2 + $0x5a] sm:$0xff]
        %v1476 = vld [vmem:[#allocation2 + $0x62] sm:$0xff]
        %v1477 = vld [vmem:[#allocation2 + $0x6a] sm:$0xff]
        %v1478 = vld [vmem:[#allocation2 + $0x72] sm:$0xff]
        %v1479 = vld [vmem:[#allocation2 + $0x7a] sm:$0xff]
        %v1480 = vld [vmem:[#allocation2 + $0x82] sm:$0xff]
        %v1481 = vld [vmem:[#allocation2 + $0x8a] sm:$0xff]
        %v1482 = vld [vmem:[#allocation2 + $0x92] sm:$0xff]
        %v1483 = vld [vmem:[#allocation2 + $0x9a] sm:$0xff]
        %v1484 = vld [vmem:[#allocation2 + $0xa2] sm:$0xff]
        %v1485 = vld [vmem:[#allocation2 + $0xaa] sm:$0xff]
        %v1486 = vld [vmem:[#allocation2 + $0xb2] sm:$0xff]
        %v1487 = vld [vmem:[#allocation2 + $0xba] sm:$0xff]
        %v1488 = vld [vmem:[#allocation2 + $0xc2] sm:$0xff]
        %v1489 = vld [vmem:[#allocation2 + $0xca] sm:$0xff]
        %v1490 = vld [vmem:[#allocation2 + $0xd2] sm:$0xff]
        %v1491 = vld [vmem:[#allocation2 + $0xda] sm:$0xff]
        %v1492 = vld [vmem:[#allocation2 + $0xe2] sm:$0xff]
        %v1493 = vld [vmem:[#allocation2 + $0xea] sm:$0xff]
        %v1494 = vld [vmem:[#allocation2 + $0xf2] sm:$0xff]
        %v1495 = vld [vmem:[#allocation2 + $0xfa] sm:$0xff]
        %v1496 = vld [vmem:[#allocation2 + $0x102] sm:$0xff]
        %v1497 = vld [vmem:[#allocation2 + $0x10a] sm:$0xff]
        %v1498 = vld [vmem:[#allocation2 + $0x112] sm:$0xff]
        %v1499 = vld [vmem:[#allocation2 + $0x11a] sm:$0xff]
        %v1500 = vld [vmem:[#allocation2 + $0x122] sm:$0xff]
        %v1501 = vld [vmem:[#allocation2 + $0x12a] sm:$0x3f]
        %v1502 = vpack.c.bf16 %v1467, %v1466
        %v1503 = vpack.c.bf16 %v1469, %v1468
        %v1504 = vpack.c.bf16 %v1471, %v1470
        %v1505 = vpack.c.bf16 %v1473, %v1472
        %v1506 = vpack.c.bf16 %v1475, %v1474
        %v1507 = vpack.c.bf16 %v1477, %v1476
        %v1508 = vpack.c.bf16 %v1479, %v1478
        %v1509 = vpack.c.bf16 %v1481, %v1480
        %v1510 = vpack.c.bf16 %v1483, %v1482
        %v1511 = vpack.c.bf16 %v1485, %v1484
        %v1512 = vpack.c.bf16 %v1487, %v1486
        %v1513 = vpack.c.bf16 %v1489, %v1488
        %v1514 = vpack.c.bf16 %v1491, %v1490
        %v1515 = vpack.c.bf16 %v1493, %v1492
        %v1516 = vpack.c.bf16 %v1495, %v1494
        %v1517 = vpack.c.bf16 %v1497, %v1496
        %v1518 = vpack.c.bf16 %v1499, %v1498
        %v1519 = vpack.c.bf16 %v1501, %v1500
        %v1520 = vld [vmem:[%s4 + $0xc0] sm:$0xf]
        %v1521 = vld [vmem:[%s4 + $0xc4] sm:$0xf]
        %v1522 = vld [vmem:[%s4 + $0xc8] sm:$0xf]
        %v1523 = vld [vmem:[%s4 + $0xcc] sm:$0xf]
        %v1524 = vld [vmem:[%s4 + $0xd0] sm:$0xf]
        %v1525 = vld [vmem:[%s4 + $0xd4] sm:$0xf]
        %v1526 = vld [vmem:[%s4 + $0xd8] sm:$0xf]
        %v1527 = vld [vmem:[%s4 + $0xdc] sm:$0xf]
        %v1528 = vld [vmem:[%s4 + $0xe0] sm:$0xf]
        %v1529 = vld [vmem:[%s4 + $0xe4] sm:$0xf]
        %v1530 = vld [vmem:[%s4 + $0xe8] sm:$0xf]
        %v1531 = vld [vmem:[%s4 + $0xec] sm:$0xf]
        %v1532 = vld [vmem:[%s4 + $0xf0] sm:$0xf]
        %v1533 = vld [vmem:[%s4 + $0xf4] sm:$0xf]
        %v1534 = vld [vmem:[%s4 + $0xf8] sm:$0xf]
        %v1535 = vld [vmem:[%s4 + $0xfc] sm:$0xf]
        %v1552 = vunpack.c.l.b16 %v1520
        %v1553 = vunpack.c.l.b16 %v1521
        %v1554 = vunpack.c.l.b16 %v1522
        %v1555 = vunpack.c.l.b16 %v1523
        %v1556 = vunpack.c.l.b16 %v1524
        %v1557 = vunpack.c.l.b16 %v1525
        %v1558 = vunpack.c.l.b16 %v1526
        %v1559 = vunpack.c.l.b16 %v1527
        %v1560 = vunpack.c.l.b16 %v1528
        %v1561 = vunpack.c.l.b16 %v1529
        %v1562 = vunpack.c.l.b16 %v1530
        %v1563 = vunpack.c.l.b16 %v1531
        %v1564 = vunpack.c.l.b16 %v1532
        %v1565 = vunpack.c.l.b16 %v1533
        %v1566 = vunpack.c.l.b16 %v1534
        %v1567 = vunpack.c.l.b16 %v1535
        %v1568 = vpack.c.b16 %v1553, %v1552
        %v1569 = vpack.c.b16 %v1555, %v1554
        %v1570 = vpack.c.b16 %v1557, %v1556
        %v1571 = vpack.c.b16 %v1559, %v1558
        %v1572 = vpack.c.b16 %v1561, %v1560
        %v1573 = vpack.c.b16 %v1563, %v1562
        %v1574 = vpack.c.b16 %v1565, %v1564
        %v1575 = vpack.c.b16 %v1567, %v1566
        %1584 = vmatpush.bf16.msra.mxu0 %v1575
        %1585 = vmatpush.bf16.msra.mxu0 %v1574
        %1586 = vmatpush.bf16.msra.mxu0 %v1573
        %1587 = vmatpush.bf16.msra.mxu0 %v1572
        %1588 = vmatpush.bf16.msra.mxu0 %v1571
        %1589 = vmatpush.bf16.msra.mxu0 %v1570
        %1590 = vmatpush.bf16.msra.mxu0 %v1569
        %1591 = vmatpush.bf16.msra.mxu0 %v1568
        %1592 = vmatmul.bf16.gmra.mxu0 %v1502
        %v1593 = vpop.f32.mrf.mxu0
        %v1594 = vadd.f32 0.0, %v1593
        %v1595 = vpop.f32.mrf.mxu0
        %v1596 = vadd.f32 0.0, %v1595
        %1597 = vmatmul.bf16.gmra.mxu0 %v1503
        %v1598 = vpop.f32.mrf.mxu0
        %v1599 = vadd.f32 0.0, %v1598
        %v1600 = vpop.f32.mrf.mxu0
        %v1601 = vadd.f32 0.0, %v1600
        %1602 = vmatmul.bf16.gmra.mxu0 %v1504
        %v1603 = vpop.f32.mrf.mxu0
        %v1604 = vadd.f32 0.0, %v1603
        %v1605 = vpop.f32.mrf.mxu0
        %v1606 = vadd.f32 0.0, %v1605
        %1607 = vmatmul.bf16.gmra.mxu0 %v1505
        %v1608 = vpop.f32.mrf.mxu0
        %v1609 = vadd.f32 0.0, %v1608
        %v1610 = vpop.f32.mrf.mxu0
        %v1611 = vadd.f32 0.0, %v1610
        %1612 = vmatmul.bf16.gmra.mxu0 %v1506
        %v1613 = vpop.f32.mrf.mxu0
        %v1614 = vadd.f32 0.0, %v1613
        %v1615 = vpop.f32.mrf.mxu0
        %v1616 = vadd.f32 0.0, %v1615
        %1617 = vmatmul.bf16.gmra.mxu0 %v1507
        %v1618 = vpop.f32.mrf.mxu0
        %v1619 = vadd.f32 0.0, %v1618
        %v1620 = vpop.f32.mrf.mxu0
        %v1621 = vadd.f32 0.0, %v1620
        %1622 = vmatmul.bf16.gmra.mxu0 %v1508
        %v1623 = vpop.f32.mrf.mxu0
        %v1624 = vadd.f32 0.0, %v1623
        %v1625 = vpop.f32.mrf.mxu0
        %v1626 = vadd.f32 0.0, %v1625
        %1627 = vmatmul.bf16.gmra.mxu0 %v1509
        %v1628 = vpop.f32.mrf.mxu0
        %v1629 = vadd.f32 0.0, %v1628
        %v1630 = vpop.f32.mrf.mxu0
        %v1631 = vadd.f32 0.0, %v1630
        %1632 = vmatmul.bf16.gmra.mxu0 %v1510
        %v1633 = vpop.f32.mrf.mxu0
        %v1634 = vadd.f32 0.0, %v1633
        %v1635 = vpop.f32.mrf.mxu0
        %v1636 = vadd.f32 0.0, %v1635
        %1637 = vmatmul.bf16.gmra.mxu0 %v1511
        %v1638 = vpop.f32.mrf.mxu0
        %v1639 = vadd.f32 0.0, %v1638
        %v1640 = vpop.f32.mrf.mxu0
        %v1641 = vadd.f32 0.0, %v1640
        %1642 = vmatmul.bf16.gmra.mxu0 %v1512
        %v1643 = vpop.f32.mrf.mxu0
        %v1644 = vadd.f32 0.0, %v1643
        %v1645 = vpop.f32.mrf.mxu0
        %v1646 = vadd.f32 0.0, %v1645
        %1647 = vmatmul.bf16.gmra.mxu0 %v1513
        %v1648 = vpop.f32.mrf.mxu0
        %v1649 = vadd.f32 0.0, %v1648
        %v1650 = vpop.f32.mrf.mxu0
        %v1651 = vadd.f32 0.0, %v1650
        %1652 = vmatmul.bf16.gmra.mxu0 %v1514
        %v1653 = vpop.f32.mrf.mxu0
        %v1654 = vadd.f32 0.0, %v1653
        %v1655 = vpop.f32.mrf.mxu0
        %v1656 = vadd.f32 0.0, %v1655
        %1657 = vmatmul.bf16.gmra.mxu0 %v1515
        %v1658 = vpop.f32.mrf.mxu0
        %v1659 = vadd.f32 0.0, %v1658
        %v1660 = vpop.f32.mrf.mxu0
        %v1661 = vadd.f32 0.0, %v1660
        %1662 = vmatmul.bf16.gmra.mxu0 %v1516
        %v1663 = vpop.f32.mrf.mxu0
        %v1664 = vadd.f32 0.0, %v1663
        %v1665 = vpop.f32.mrf.mxu0
        %v1666 = vadd.f32 0.0, %v1665
        %1667 = vmatmul.bf16.gmra.mxu0 %v1517
        %v1668 = vpop.f32.mrf.mxu0
        %v1669 = vadd.f32 0.0, %v1668
        %v1670 = vpop.f32.mrf.mxu0
        %v1671 = vadd.f32 0.0, %v1670
        %1672 = vmatmul.bf16.gmra.mxu0 %v1518
        %v1673 = vpop.f32.mrf.mxu0
        %v1674 = vadd.f32 0.0, %v1673
        %v1675 = vpop.f32.mrf.mxu0
        %v1676 = vadd.f32 0.0, %v1675
        %1677 = vmatmul.bf16.gmra.mxu0 %v1519
        %v1678 = vpop.f32.mrf.mxu0
        %v1679 = vadd.f32 0.0, %v1678
        %v1680 = vpop.f32.mrf.mxu0
        %v1681 = vadd.f32 0.0, %v1680
        %1682 = vdwg.mxu0
        %v1683 = vadd.f32 %v1430, %v1594
        %v1684 = vadd.f32 %v1431, %v1596
        %v1685 = vadd.f32 %v1432, %v1599
        %v1686 = vadd.f32 %v1433, %v1601
        %v1687 = vadd.f32 %v1434, %v1604
        %v1688 = vadd.f32 %v1435, %v1606
        %v1689 = vadd.f32 %v1436, %v1609
        %v1690 = vadd.f32 %v1437, %v1611
        %v1691 = vadd.f32 %v1438, %v1614
        %v1692 = vadd.f32 %v1439, %v1616
        %v1693 = vadd.f32 %v1440, %v1619
        %v1694 = vadd.f32 %v1441, %v1621
        %v1695 = vadd.f32 %v1442, %v1624
        %v1696 = vadd.f32 %v1443, %v1626
        %v1697 = vadd.f32 %v1444, %v1629
        %v1698 = vadd.f32 %v1445, %v1631
        %v1699 = vadd.f32 %v1446, %v1634
        %v1700 = vadd.f32 %v1447, %v1636
        %v1701 = vadd.f32 %v1448, %v1639
        %v1702 = vadd.f32 %v1449, %v1641
        %v1703 = vadd.f32 %v1450, %v1644
        %v1704 = vadd.f32 %v1451, %v1646
        %v1705 = vadd.f32 %v1452, %v1649
        %v1706 = vadd.f32 %v1453, %v1651
        %v1707 = vadd.f32 %v1454, %v1654
        %v1708 = vadd.f32 %v1455, %v1656
        %v1709 = vadd.f32 %v1456, %v1659
        %v1710 = vadd.f32 %v1457, %v1661
        %v1711 = vadd.f32 %v1458, %v1664
        %v1712 = vadd.f32 %v1459, %v1666
        %v1713 = vadd.f32 %v1460, %v1669
        %v1714 = vadd.f32 %v1461, %v1671
        %v1715 = vadd.f32 %v1462, %v1674
        %v1716 = vadd.f32 %v1463, %v1676
        %v1717 = vadd.f32 %v1464, %v1679
        %v1718 = vadd.f32 %v1465, %v1681
        %v1719 = vld [vmem:[#allocation2 + $0x13] sm:$0xff]
        %v1720 = vld [vmem:[#allocation2 + $0x1b] sm:$0xff]
        %v1721 = vld [vmem:[#allocation2 + $0x23] sm:$0xff]
        %v1722 = vld [vmem:[#allocation2 + $0x2b] sm:$0xff]
        %v1723 = vld [vmem:[#allocation2 + $0x33] sm:$0xff]
        %v1724 = vld [vmem:[#allocation2 + $0x3b] sm:$0xff]
        %v1725 = vld [vmem:[#allocation2 + $0x43] sm:$0xff]
        %v1726 = vld [vmem:[#allocation2 + $0x4b] sm:$0xff]
        %v1727 = vld [vmem:[#allocation2 + $0x53] sm:$0xff]
        %v1728 = vld [vmem:[#allocation2 + $0x5b] sm:$0xff]
        %v1729 = vld [vmem:[#allocation2 + $0x63] sm:$0xff]
        %v1730 = vld [vmem:[#allocation2 + $0x6b] sm:$0xff]
        %v1731 = vld [vmem:[#allocation2 + $0x73] sm:$0xff]
        %v1732 = vld [vmem:[#allocation2 + $0x7b] sm:$0xff]
        %v1733 = vld [vmem:[#allocation2 + $0x83] sm:$0xff]
        %v1734 = vld [vmem:[#allocation2 + $0x8b] sm:$0xff]
        %v1735 = vld [vmem:[#allocation2 + $0x93] sm:$0xff]
        %v1736 = vld [vmem:[#allocation2 + $0x9b] sm:$0xff]
        %v1737 = vld [vmem:[#allocation2 + $0xa3] sm:$0xff]
        %v1738 = vld [vmem:[#allocation2 + $0xab] sm:$0xff]
        %v1739 = vld [vmem:[#allocation2 + $0xb3] sm:$0xff]
        %v1740 = vld [vmem:[#allocation2 + $0xbb] sm:$0xff]
        %v1741 = vld [vmem:[#allocation2 + $0xc3] sm:$0xff]
        %v1742 = vld [vmem:[#allocation2 + $0xcb] sm:$0xff]
        %v1743 = vld [vmem:[#allocation2 + $0xd3] sm:$0xff]
        %v1744 = vld [vmem:[#allocation2 + $0xdb] sm:$0xff]
        %v1745 = vld [vmem:[#allocation2 + $0xe3] sm:$0xff]
        %v1746 = vld [vmem:[#allocation2 + $0xeb] sm:$0xff]
        %v1747 = vld [vmem:[#allocation2 + $0xf3] sm:$0xff]
        %v1748 = vld [vmem:[#allocation2 + $0xfb] sm:$0xff]
        %v1749 = vld [vmem:[#allocation2 + $0x103] sm:$0xff]
        %v1750 = vld [vmem:[#allocation2 + $0x10b] sm:$0xff]
        %v1751 = vld [vmem:[#allocation2 + $0x113] sm:$0xff]
        %v1752 = vld [vmem:[#allocation2 + $0x11b] sm:$0xff]
        %v1753 = vld [vmem:[#allocation2 + $0x123] sm:$0xff]
        %v1754 = vld [vmem:[#allocation2 + $0x12b] sm:$0x3f]
        %v1755 = vpack.c.bf16 %v1720, %v1719
        %v1756 = vpack.c.bf16 %v1722, %v1721
        %v1757 = vpack.c.bf16 %v1724, %v1723
        %v1758 = vpack.c.bf16 %v1726, %v1725
        %v1759 = vpack.c.bf16 %v1728, %v1727
        %v1760 = vpack.c.bf16 %v1730, %v1729
        %v1761 = vpack.c.bf16 %v1732, %v1731
        %v1762 = vpack.c.bf16 %v1734, %v1733
        %v1763 = vpack.c.bf16 %v1736, %v1735
        %v1764 = vpack.c.bf16 %v1738, %v1737
        %v1765 = vpack.c.bf16 %v1740, %v1739
        %v1766 = vpack.c.bf16 %v1742, %v1741
        %v1767 = vpack.c.bf16 %v1744, %v1743
        %v1768 = vpack.c.bf16 %v1746, %v1745
        %v1769 = vpack.c.bf16 %v1748, %v1747
        %v1770 = vpack.c.bf16 %v1750, %v1749
        %v1771 = vpack.c.bf16 %v1752, %v1751
        %v1772 = vpack.c.bf16 %v1754, %v1753
        %v1773 = vld [vmem:[%s4 + $0x100] sm:$0xf]
        %v1774 = vld [vmem:[%s4 + $0x104] sm:$0xf]
        %v1775 = vld [vmem:[%s4 + $0x108] sm:$0xf]
        %v1776 = vld [vmem:[%s4 + $0x10c] sm:$0xf]
        %v1777 = vld [vmem:[%s4 + $0x110] sm:$0xf]
        %v1778 = vld [vmem:[%s4 + $0x114] sm:$0xf]
        %v1779 = vld [vmem:[%s4 + $0x118] sm:$0xf]
        %v1780 = vld [vmem:[%s4 + $0x11c] sm:$0xf]
        %v1781 = vld [vmem:[%s4 + $0x120] sm:$0xf]
        %v1782 = vld [vmem:[%s4 + $0x124] sm:$0xf]
        %v1783 = vld [vmem:[%s4 + $0x128] sm:$0xf]
        %v1784 = vld [vmem:[%s4 + $0x12c] sm:$0xf]
        %v1785 = vld [vmem:[%s4 + $0x130] sm:$0xf]
        %v1786 = vld [vmem:[%s4 + $0x134] sm:$0xf]
        %v1787 = vld [vmem:[%s4 + $0x138] sm:$0xf]
        %v1788 = vld [vmem:[%s4 + $0x13c] sm:$0xf]
        %v1805 = vunpack.c.l.b16 %v1773
        %v1806 = vunpack.c.l.b16 %v1774
        %v1807 = vunpack.c.l.b16 %v1775
        %v1808 = vunpack.c.l.b16 %v1776
        %v1809 = vunpack.c.l.b16 %v1777
        %v1810 = vunpack.c.l.b16 %v1778
        %v1811 = vunpack.c.l.b16 %v1779
        %v1812 = vunpack.c.l.b16 %v1780
        %v1813 = vunpack.c.l.b16 %v1781
        %v1814 = vunpack.c.l.b16 %v1782
        %v1815 = vunpack.c.l.b16 %v1783
        %v1816 = vunpack.c.l.b16 %v1784
        %v1817 = vunpack.c.l.b16 %v1785
        %v1818 = vunpack.c.l.b16 %v1786
        %v1819 = vunpack.c.l.b16 %v1787
        %v1820 = vunpack.c.l.b16 %v1788
        %v1821 = vpack.c.b16 %v1806, %v1805
        %v1822 = vpack.c.b16 %v1808, %v1807
        %v1823 = vpack.c.b16 %v1810, %v1809
        %v1824 = vpack.c.b16 %v1812, %v1811
        %v1825 = vpack.c.b16 %v1814, %v1813
        %v1826 = vpack.c.b16 %v1816, %v1815
        %v1827 = vpack.c.b16 %v1818, %v1817
        %v1828 = vpack.c.b16 %v1820, %v1819
        %1837 = vmatpush.bf16.msra.mxu0 %v1828
        %1838 = vmatpush.bf16.msra.mxu0 %v1827
        %1839 = vmatpush.bf16.msra.mxu0 %v1826
        %1840 = vmatpush.bf16.msra.mxu0 %v1825
        %1841 = vmatpush.bf16.msra.mxu0 %v1824
        %1842 = vmatpush.bf16.msra.mxu0 %v1823
        %1843 = vmatpush.bf16.msra.mxu0 %v1822
        %1844 = vmatpush.bf16.msra.mxu0 %v1821
        %1845 = vmatmul.bf16.gmra.mxu0 %v1755
        %v1846 = vpop.f32.mrf.mxu0
        %v1847 = vadd.f32 0.0, %v1846
        %v1848 = vpop.f32.mrf.mxu0
        %v1849 = vadd.f32 0.0, %v1848
        %1850 = vmatmul.bf16.gmra.mxu0 %v1756
        %v1851 = vpop.f32.mrf.mxu0
        %v1852 = vadd.f32 0.0, %v1851
        %v1853 = vpop.f32.mrf.mxu0
        %v1854 = vadd.f32 0.0, %v1853
        %1855 = vmatmul.bf16.gmra.mxu0 %v1757
        %v1856 = vpop.f32.mrf.mxu0
        %v1857 = vadd.f32 0.0, %v1856
        %v1858 = vpop.f32.mrf.mxu0
        %v1859 = vadd.f32 0.0, %v1858
        %1860 = vmatmul.bf16.gmra.mxu0 %v1758
        %v1861 = vpop.f32.mrf.mxu0
        %v1862 = vadd.f32 0.0, %v1861
        %v1863 = vpop.f32.mrf.mxu0
        %v1864 = vadd.f32 0.0, %v1863
        %1865 = vmatmul.bf16.gmra.mxu0 %v1759
        %v1866 = vpop.f32.mrf.mxu0
        %v1867 = vadd.f32 0.0, %v1866
        %v1868 = vpop.f32.mrf.mxu0
        %v1869 = vadd.f32 0.0, %v1868
        %1870 = vmatmul.bf16.gmra.mxu0 %v1760
        %v1871 = vpop.f32.mrf.mxu0
        %v1872 = vadd.f32 0.0, %v1871
        %v1873 = vpop.f32.mrf.mxu0
        %v1874 = vadd.f32 0.0, %v1873
        %1875 = vmatmul.bf16.gmra.mxu0 %v1761
        %v1876 = vpop.f32.mrf.mxu0
        %v1877 = vadd.f32 0.0, %v1876
        %v1878 = vpop.f32.mrf.mxu0
        %v1879 = vadd.f32 0.0, %v1878
        %1880 = vmatmul.bf16.gmra.mxu0 %v1762
        %v1881 = vpop.f32.mrf.mxu0
        %v1882 = vadd.f32 0.0, %v1881
        %v1883 = vpop.f32.mrf.mxu0
        %v1884 = vadd.f32 0.0, %v1883
        %1885 = vmatmul.bf16.gmra.mxu0 %v1763
        %v1886 = vpop.f32.mrf.mxu0
        %v1887 = vadd.f32 0.0, %v1886
        %v1888 = vpop.f32.mrf.mxu0
        %v1889 = vadd.f32 0.0, %v1888
        %1890 = vmatmul.bf16.gmra.mxu0 %v1764
        %v1891 = vpop.f32.mrf.mxu0
        %v1892 = vadd.f32 0.0, %v1891
        %v1893 = vpop.f32.mrf.mxu0
        %v1894 = vadd.f32 0.0, %v1893
        %1895 = vmatmul.bf16.gmra.mxu0 %v1765
        %v1896 = vpop.f32.mrf.mxu0
        %v1897 = vadd.f32 0.0, %v1896
        %v1898 = vpop.f32.mrf.mxu0
        %v1899 = vadd.f32 0.0, %v1898
        %1900 = vmatmul.bf16.gmra.mxu0 %v1766
        %v1901 = vpop.f32.mrf.mxu0
        %v1902 = vadd.f32 0.0, %v1901
        %v1903 = vpop.f32.mrf.mxu0
        %v1904 = vadd.f32 0.0, %v1903
        %1905 = vmatmul.bf16.gmra.mxu0 %v1767
        %v1906 = vpop.f32.mrf.mxu0
        %v1907 = vadd.f32 0.0, %v1906
        %v1908 = vpop.f32.mrf.mxu0
        %v1909 = vadd.f32 0.0, %v1908
        %1910 = vmatmul.bf16.gmra.mxu0 %v1768
        %v1911 = vpop.f32.mrf.mxu0
        %v1912 = vadd.f32 0.0, %v1911
        %v1913 = vpop.f32.mrf.mxu0
        %v1914 = vadd.f32 0.0, %v1913
        %1915 = vmatmul.bf16.gmra.mxu0 %v1769
        %v1916 = vpop.f32.mrf.mxu0
        %v1917 = vadd.f32 0.0, %v1916
        %v1918 = vpop.f32.mrf.mxu0
        %v1919 = vadd.f32 0.0, %v1918
        %1920 = vmatmul.bf16.gmra.mxu0 %v1770
        %v1921 = vpop.f32.mrf.mxu0
        %v1922 = vadd.f32 0.0, %v1921
        %v1923 = vpop.f32.mrf.mxu0
        %v1924 = vadd.f32 0.0, %v1923
        %1925 = vmatmul.bf16.gmra.mxu0 %v1771
        %v1926 = vpop.f32.mrf.mxu0
        %v1927 = vadd.f32 0.0, %v1926
        %v1928 = vpop.f32.mrf.mxu0
        %v1929 = vadd.f32 0.0, %v1928
        %1930 = vmatmul.bf16.gmra.mxu0 %v1772
        %v1931 = vpop.f32.mrf.mxu0
        %v1932 = vadd.f32 0.0, %v1931
        %v1933 = vpop.f32.mrf.mxu0
        %v1934 = vadd.f32 0.0, %v1933
        %1935 = vdwg.mxu0
        %v1936 = vadd.f32 %v1683, %v1847
        %v1937 = vadd.f32 %v1684, %v1849
        %v1938 = vadd.f32 %v1685, %v1852
        %v1939 = vadd.f32 %v1686, %v1854
        %v1940 = vadd.f32 %v1687, %v1857
        %v1941 = vadd.f32 %v1688, %v1859
        %v1942 = vadd.f32 %v1689, %v1862
        %v1943 = vadd.f32 %v1690, %v1864
        %v1944 = vadd.f32 %v1691, %v1867
        %v1945 = vadd.f32 %v1692, %v1869
        %v1946 = vadd.f32 %v1693, %v1872
        %v1947 = vadd.f32 %v1694, %v1874
        %v1948 = vadd.f32 %v1695, %v1877
        %v1949 = vadd.f32 %v1696, %v1879
        %v1950 = vadd.f32 %v1697, %v1882
        %v1951 = vadd.f32 %v1698, %v1884
        %v1952 = vadd.f32 %v1699, %v1887
        %v1953 = vadd.f32 %v1700, %v1889
        %v1954 = vadd.f32 %v1701, %v1892
        %v1955 = vadd.f32 %v1702, %v1894
        %v1956 = vadd.f32 %v1703, %v1897
        %v1957 = vadd.f32 %v1704, %v1899
        %v1958 = vadd.f32 %v1705, %v1902
        %v1959 = vadd.f32 %v1706, %v1904
        %v1960 = vadd.f32 %v1707, %v1907
        %v1961 = vadd.f32 %v1708, %v1909
        %v1962 = vadd.f32 %v1709, %v1912
        %v1963 = vadd.f32 %v1710, %v1914
        %v1964 = vadd.f32 %v1711, %v1917
        %v1965 = vadd.f32 %v1712, %v1919
        %v1966 = vadd.f32 %v1713, %v1922
        %v1967 = vadd.f32 %v1714, %v1924
        %v1968 = vadd.f32 %v1715, %v1927
        %v1969 = vadd.f32 %v1716, %v1929
        %v1970 = vadd.f32 %v1717, %v1932
        %v1971 = vadd.f32 %v1718, %v1934
        %v1972 = vld [vmem:[#allocation2 + $0x14] sm:$0xff]
        %v1973 = vld [vmem:[#allocation2 + $0x1c] sm:$0xff]
        %v1974 = vld [vmem:[#allocation2 + $0x24] sm:$0xff]
        %v1975 = vld [vmem:[#allocation2 + $0x2c] sm:$0xff]
        %v1976 = vld [vmem:[#allocation2 + $0x34] sm:$0xff]
        %v1977 = vld [vmem:[#allocation2 + $0x3c] sm:$0xff]
        %v1978 = vld [vmem:[#allocation2 + $0x44] sm:$0xff]
        %v1979 = vld [vmem:[#allocation2 + $0x4c] sm:$0xff]
        %v1980 = vld [vmem:[#allocation2 + $0x54] sm:$0xff]
        %v1981 = vld [vmem:[#allocation2 + $0x5c] sm:$0xff]
        %v1982 = vld [vmem:[#allocation2 + $0x64] sm:$0xff]
        %v1983 = vld [vmem:[#allocation2 + $0x6c] sm:$0xff]
        %v1984 = vld [vmem:[#allocation2 + $0x74] sm:$0xff]
        %v1985 = vld [vmem:[#allocation2 + $0x7c] sm:$0xff]
        %v1986 = vld [vmem:[#allocation2 + $0x84] sm:$0xff]
        %v1987 = vld [vmem:[#allocation2 + $0x8c] sm:$0xff]
        %v1988 = vld [vmem:[#allocation2 + $0x94] sm:$0xff]
        %v1989 = vld [vmem:[#allocation2 + $0x9c] sm:$0xff]
        %v1990 = vld [vmem:[#allocation2 + $0xa4] sm:$0xff]
        %v1991 = vld [vmem:[#allocation2 + $0xac] sm:$0xff]
        %v1992 = vld [vmem:[#allocation2 + $0xb4] sm:$0xff]
        %v1993 = vld [vmem:[#allocation2 + $0xbc] sm:$0xff]
        %v1994 = vld [vmem:[#allocation2 + $0xc4] sm:$0xff]
        %v1995 = vld [vmem:[#allocation2 + $0xcc] sm:$0xff]
        %v1996 = vld [vmem:[#allocation2 + $0xd4] sm:$0xff]
        %v1997 = vld [vmem:[#allocation2 + $0xdc] sm:$0xff]
        %v1998 = vld [vmem:[#allocation2 + $0xe4] sm:$0xff]
        %v1999 = vld [vmem:[#allocation2 + $0xec] sm:$0xff]
        %v2000 = vld [vmem:[#allocation2 + $0xf4] sm:$0xff]
        %v2001 = vld [vmem:[#allocation2 + $0xfc] sm:$0xff]
        %v2002 = vld [vmem:[#allocation2 + $0x104] sm:$0xff]
        %v2003 = vld [vmem:[#allocation2 + $0x10c] sm:$0xff]
        %v2004 = vld [vmem:[#allocation2 + $0x114] sm:$0xff]
        %v2005 = vld [vmem:[#allocation2 + $0x11c] sm:$0xff]
        %v2006 = vld [vmem:[#allocation2 + $0x124] sm:$0xff]
        %v2007 = vld [vmem:[#allocation2 + $0x12c] sm:$0x3f]
        %v2008 = vpack.c.bf16 %v1973, %v1972
        %v2009 = vpack.c.bf16 %v1975, %v1974
        %v2010 = vpack.c.bf16 %v1977, %v1976
        %v2011 = vpack.c.bf16 %v1979, %v1978
        %v2012 = vpack.c.bf16 %v1981, %v1980
        %v2013 = vpack.c.bf16 %v1983, %v1982
        %v2014 = vpack.c.bf16 %v1985, %v1984
        %v2015 = vpack.c.bf16 %v1987, %v1986
        %v2016 = vpack.c.bf16 %v1989, %v1988
        %v2017 = vpack.c.bf16 %v1991, %v1990
        %v2018 = vpack.c.bf16 %v1993, %v1992
        %v2019 = vpack.c.bf16 %v1995, %v1994
        %v2020 = vpack.c.bf16 %v1997, %v1996
        %v2021 = vpack.c.bf16 %v1999, %v1998
        %v2022 = vpack.c.bf16 %v2001, %v2000
        %v2023 = vpack.c.bf16 %v2003, %v2002
        %v2024 = vpack.c.bf16 %v2005, %v2004
        %v2025 = vpack.c.bf16 %v2007, %v2006
        %v2026 = vld [vmem:[%s4 + $0x140] sm:$0xf]
        %v2027 = vld [vmem:[%s4 + $0x144] sm:$0xf]
        %v2028 = vld [vmem:[%s4 + $0x148] sm:$0xf]
        %v2029 = vld [vmem:[%s4 + $0x14c] sm:$0xf]
        %v2030 = vld [vmem:[%s4 + $0x150] sm:$0xf]
        %v2031 = vld [vmem:[%s4 + $0x154] sm:$0xf]
        %v2032 = vld [vmem:[%s4 + $0x158] sm:$0xf]
        %v2033 = vld [vmem:[%s4 + $0x15c] sm:$0xf]
        %v2034 = vld [vmem:[%s4 + $0x160] sm:$0xf]
        %v2035 = vld [vmem:[%s4 + $0x164] sm:$0xf]
        %v2036 = vld [vmem:[%s4 + $0x168] sm:$0xf]
        %v2037 = vld [vmem:[%s4 + $0x16c] sm:$0xf]
        %v2038 = vld [vmem:[%s4 + $0x170] sm:$0xf]
        %v2039 = vld [vmem:[%s4 + $0x174] sm:$0xf]
        %v2040 = vld [vmem:[%s4 + $0x178] sm:$0xf]
        %v2041 = vld [vmem:[%s4 + $0x17c] sm:$0xf]
        %v2058 = vunpack.c.l.b16 %v2026
        %v2059 = vunpack.c.l.b16 %v2027
        %v2060 = vunpack.c.l.b16 %v2028
        %v2061 = vunpack.c.l.b16 %v2029
        %v2062 = vunpack.c.l.b16 %v2030
        %v2063 = vunpack.c.l.b16 %v2031
        %v2064 = vunpack.c.l.b16 %v2032
        %v2065 = vunpack.c.l.b16 %v2033
        %v2066 = vunpack.c.l.b16 %v2034
        %v2067 = vunpack.c.l.b16 %v2035
        %v2068 = vunpack.c.l.b16 %v2036
        %v2069 = vunpack.c.l.b16 %v2037
        %v2070 = vunpack.c.l.b16 %v2038
        %v2071 = vunpack.c.l.b16 %v2039
        %v2072 = vunpack.c.l.b16 %v2040
        %v2073 = vunpack.c.l.b16 %v2041
        %v2074 = vpack.c.b16 %v2059, %v2058
        %v2075 = vpack.c.b16 %v2061, %v2060
        %v2076 = vpack.c.b16 %v2063, %v2062
        %v2077 = vpack.c.b16 %v2065, %v2064
        %v2078 = vpack.c.b16 %v2067, %v2066
        %v2079 = vpack.c.b16 %v2069, %v2068
        %v2080 = vpack.c.b16 %v2071, %v2070
        %v2081 = vpack.c.b16 %v2073, %v2072
        %2090 = vmatpush.bf16.msra.mxu0 %v2081
        %2091 = vmatpush.bf16.msra.mxu0 %v2080
        %2092 = vmatpush.bf16.msra.mxu0 %v2079
        %2093 = vmatpush.bf16.msra.mxu0 %v2078
        %2094 = vmatpush.bf16.msra.mxu0 %v2077
        %2095 = vmatpush.bf16.msra.mxu0 %v2076
        %2096 = vmatpush.bf16.msra.mxu0 %v2075
        %2097 = vmatpush.bf16.msra.mxu0 %v2074
        %2098 = vmatmul.bf16.gmra.mxu0 %v2008
        %v2099 = vpop.f32.mrf.mxu0
        %v2100 = vadd.f32 0.0, %v2099
        %v2101 = vpop.f32.mrf.mxu0
        %v2102 = vadd.f32 0.0, %v2101
        %2103 = vmatmul.bf16.gmra.mxu0 %v2009
        %v2104 = vpop.f32.mrf.mxu0
        %v2105 = vadd.f32 0.0, %v2104
        %v2106 = vpop.f32.mrf.mxu0
        %v2107 = vadd.f32 0.0, %v2106
        %2108 = vmatmul.bf16.gmra.mxu0 %v2010
        %v2109 = vpop.f32.mrf.mxu0
        %v2110 = vadd.f32 0.0, %v2109
        %v2111 = vpop.f32.mrf.mxu0
        %v2112 = vadd.f32 0.0, %v2111
        %2113 = vmatmul.bf16.gmra.mxu0 %v2011
        %v2114 = vpop.f32.mrf.mxu0
        %v2115 = vadd.f32 0.0, %v2114
        %v2116 = vpop.f32.mrf.mxu0
        %v2117 = vadd.f32 0.0, %v2116
        %2118 = vmatmul.bf16.gmra.mxu0 %v2012
        %v2119 = vpop.f32.mrf.mxu0
        %v2120 = vadd.f32 0.0, %v2119
        %v2121 = vpop.f32.mrf.mxu0
        %v2122 = vadd.f32 0.0, %v2121
        %2123 = vmatmul.bf16.gmra.mxu0 %v2013
        %v2124 = vpop.f32.mrf.mxu0
        %v2125 = vadd.f32 0.0, %v2124
        %v2126 = vpop.f32.mrf.mxu0
        %v2127 = vadd.f32 0.0, %v2126
        %2128 = vmatmul.bf16.gmra.mxu0 %v2014
        %v2129 = vpop.f32.mrf.mxu0
        %v2130 = vadd.f32 0.0, %v2129
        %v2131 = vpop.f32.mrf.mxu0
        %v2132 = vadd.f32 0.0, %v2131
        %2133 = vmatmul.bf16.gmra.mxu0 %v2015
        %v2134 = vpop.f32.mrf.mxu0
        %v2135 = vadd.f32 0.0, %v2134
        %v2136 = vpop.f32.mrf.mxu0
        %v2137 = vadd.f32 0.0, %v2136
        %2138 = vmatmul.bf16.gmra.mxu0 %v2016
        %v2139 = vpop.f32.mrf.mxu0
        %v2140 = vadd.f32 0.0, %v2139
        %v2141 = vpop.f32.mrf.mxu0
        %v2142 = vadd.f32 0.0, %v2141
        %2143 = vmatmul.bf16.gmra.mxu0 %v2017
        %v2144 = vpop.f32.mrf.mxu0
        %v2145 = vadd.f32 0.0, %v2144
        %v2146 = vpop.f32.mrf.mxu0
        %v2147 = vadd.f32 0.0, %v2146
        %2148 = vmatmul.bf16.gmra.mxu0 %v2018
        %v2149 = vpop.f32.mrf.mxu0
        %v2150 = vadd.f32 0.0, %v2149
        %v2151 = vpop.f32.mrf.mxu0
        %v2152 = vadd.f32 0.0, %v2151
        %2153 = vmatmul.bf16.gmra.mxu0 %v2019
        %v2154 = vpop.f32.mrf.mxu0
        %v2155 = vadd.f32 0.0, %v2154
        %v2156 = vpop.f32.mrf.mxu0
        %v2157 = vadd.f32 0.0, %v2156
        %2158 = vmatmul.bf16.gmra.mxu0 %v2020
        %v2159 = vpop.f32.mrf.mxu0
        %v2160 = vadd.f32 0.0, %v2159
        %v2161 = vpop.f32.mrf.mxu0
        %v2162 = vadd.f32 0.0, %v2161
        %2163 = vmatmul.bf16.gmra.mxu0 %v2021
        %v2164 = vpop.f32.mrf.mxu0
        %v2165 = vadd.f32 0.0, %v2164
        %v2166 = vpop.f32.mrf.mxu0
        %v2167 = vadd.f32 0.0, %v2166
        %2168 = vmatmul.bf16.gmra.mxu0 %v2022
        %v2169 = vpop.f32.mrf.mxu0
        %v2170 = vadd.f32 0.0, %v2169
        %v2171 = vpop.f32.mrf.mxu0
        %v2172 = vadd.f32 0.0, %v2171
        %2173 = vmatmul.bf16.gmra.mxu0 %v2023
        %v2174 = vpop.f32.mrf.mxu0
        %v2175 = vadd.f32 0.0, %v2174
        %v2176 = vpop.f32.mrf.mxu0
        %v2177 = vadd.f32 0.0, %v2176
        %2178 = vmatmul.bf16.gmra.mxu0 %v2024
        %v2179 = vpop.f32.mrf.mxu0
        %v2180 = vadd.f32 0.0, %v2179
        %v2181 = vpop.f32.mrf.mxu0
        %v2182 = vadd.f32 0.0, %v2181
        %2183 = vmatmul.bf16.gmra.mxu0 %v2025
        %v2184 = vpop.f32.mrf.mxu0
        %v2185 = vadd.f32 0.0, %v2184
        %v2186 = vpop.f32.mrf.mxu0
        %v2187 = vadd.f32 0.0, %v2186
        %2188 = vdwg.mxu0
        %v2189 = vadd.f32 %v1936, %v2100
        %v2190 = vadd.f32 %v1937, %v2102
        %v2191 = vadd.f32 %v1938, %v2105
        %v2192 = vadd.f32 %v1939, %v2107
        %v2193 = vadd.f32 %v1940, %v2110
        %v2194 = vadd.f32 %v1941, %v2112
        %v2195 = vadd.f32 %v1942, %v2115
        %v2196 = vadd.f32 %v1943, %v2117
        %v2197 = vadd.f32 %v1944, %v2120
        %v2198 = vadd.f32 %v1945, %v2122
        %v2199 = vadd.f32 %v1946, %v2125
        %v2200 = vadd.f32 %v1947, %v2127
        %v2201 = vadd.f32 %v1948, %v2130
        %v2202 = vadd.f32 %v1949, %v2132
        %v2203 = vadd.f32 %v1950, %v2135
        %v2204 = vadd.f32 %v1951, %v2137
        %v2205 = vadd.f32 %v1952, %v2140
        %v2206 = vadd.f32 %v1953, %v2142
        %v2207 = vadd.f32 %v1954, %v2145
        %v2208 = vadd.f32 %v1955, %v2147
        %v2209 = vadd.f32 %v1956, %v2150
        %v2210 = vadd.f32 %v1957, %v2152
        %v2211 = vadd.f32 %v1958, %v2155
        %v2212 = vadd.f32 %v1959, %v2157
        %v2213 = vadd.f32 %v1960, %v2160
        %v2214 = vadd.f32 %v1961, %v2162
        %v2215 = vadd.f32 %v1962, %v2165
        %v2216 = vadd.f32 %v1963, %v2167
        %v2217 = vadd.f32 %v1964, %v2170
        %v2218 = vadd.f32 %v1965, %v2172
        %v2219 = vadd.f32 %v1966, %v2175
        %v2220 = vadd.f32 %v1967, %v2177
        %v2221 = vadd.f32 %v1968, %v2180
        %v2222 = vadd.f32 %v1969, %v2182
        %v2223 = vadd.f32 %v1970, %v2185
        %v2224 = vadd.f32 %v1971, %v2187
        %v2225 = vld [vmem:[#allocation2 + $0x24] sm:$0xff]
        %v2226 = vld [vmem:[#allocation2 + $0x2c] sm:$0xff]
        %v2227 = vld [vmem:[#allocation2 + $0x34] sm:$0xff]
        %v2228 = vld [vmem:[#allocation2 + $0x3c] sm:$0xff]
        %v2229 = vld [vmem:[#allocation2 + $0x44] sm:$0xff]
        %v2230 = vld [vmem:[#allocation2 + $0x4c] sm:$0xff]
        %v2231 = vld [vmem:[#allocation2 + $0x54] sm:$0xff]
        %v2232 = vld [vmem:[#allocation2 + $0x5c] sm:$0xff]
        %v2233 = vld [vmem:[#allocation2 + $0x64] sm:$0xff]
        %v2234 = vld [vmem:[#allocation2 + $0x6c] sm:$0xff]
        %v2235 = vld [vmem:[#allocation2 + $0x74] sm:$0xff]
        %v2236 = vld [vmem:[#allocation2 + $0x7c] sm:$0xff]
        %v2237 = vld [vmem:[#allocation2 + $0x84] sm:$0xff]
        %v2238 = vld [vmem:[#allocation2 + $0x8c] sm:$0xff]
        %v2239 = vld [vmem:[#allocation2 + $0x94] sm:$0xff]
        %v2240 = vld [vmem:[#allocation2 + $0x9c] sm:$0xff]
        %v2241 = vld [vmem:[#allocation2 + $0xa4] sm:$0xff]
        %v2242 = vld [vmem:[#allocation2 + $0xac] sm:$0xff]
        %v2243 = vld [vmem:[#allocation2 + $0xb4] sm:$0xff]
        %v2244 = vld [vmem:[#allocation2 + $0xbc] sm:$0xff]
        %v2245 = vld [vmem:[#allocation2 + $0xc4] sm:$0xff]
        %v2246 = vld [vmem:[#allocation2 + $0xcc] sm:$0xff]
        %v2247 = vld [vmem:[#allocation2 + $0xd4] sm:$0xff]
        %v2248 = vld [vmem:[#allocation2 + $0xdc] sm:$0xff]
        %v2249 = vld [vmem:[#allocation2 + $0xe4] sm:$0xff]
        %v2250 = vld [vmem:[#allocation2 + $0xec] sm:$0xff]
        %v2251 = vld [vmem:[#allocation2 + $0xf4] sm:$0xff]
        %v2252 = vld [vmem:[#allocation2 + $0xfc] sm:$0xff]
        %v2253 = vld [vmem:[#allocation2 + $0x104] sm:$0xff]
        %v2254 = vld [vmem:[#allocation2 + $0x10c] sm:$0xff]
        %v2255 = vld [vmem:[#allocation2 + $0x114] sm:$0xff]
        %v2256 = vld [vmem:[#allocation2 + $0x11c] sm:$0xff]
        %v2257 = vld [vmem:[#allocation2 + $0x124] sm:$0xff]
        %v2258 = vld [vmem:[#allocation2 + $0x12c] sm:$0xff]
        %v2259 = vld [vmem:[#allocation2 + $0x134] sm:$0xff]
        %v2260 = vld [vmem:[#allocation2 + $0x13c] sm:$0x3f]
        %v2261 = vpack.c.bf16 %v2226, %v2225
        %v2262 = vpack.c.bf16 %v2228, %v2227
        %v2263 = vpack.c.bf16 %v2230, %v2229
        %v2264 = vpack.c.bf16 %v2232, %v2231
        %v2265 = vpack.c.bf16 %v2234, %v2233
        %v2266 = vpack.c.bf16 %v2236, %v2235
        %v2267 = vpack.c.bf16 %v2238, %v2237
        %v2268 = vpack.c.bf16 %v2240, %v2239
        %v2269 = vpack.c.bf16 %v2242, %v2241
        %v2270 = vpack.c.bf16 %v2244, %v2243
        %v2271 = vpack.c.bf16 %v2246, %v2245
        %v2272 = vpack.c.bf16 %v2248, %v2247
        %v2273 = vpack.c.bf16 %v2250, %v2249
        %v2274 = vpack.c.bf16 %v2252, %v2251
        %v2275 = vpack.c.bf16 %v2254, %v2253
        %v2276 = vpack.c.bf16 %v2256, %v2255
        %v2277 = vpack.c.bf16 %v2258, %v2257
        %v2278 = vpack.c.bf16 %v2260, %v2259
        %v2279 = vld [vmem:[%s4 + $0x180] sm:$0xf]
        %v2280 = vld [vmem:[%s4 + $0x184] sm:$0xf]
        %v2281 = vld [vmem:[%s4 + $0x188] sm:$0xf]
        %v2282 = vld [vmem:[%s4 + $0x18c] sm:$0xf]
        %v2283 = vld [vmem:[%s4 + $0x190] sm:$0xf]
        %v2284 = vld [vmem:[%s4 + $0x194] sm:$0xf]
        %v2285 = vld [vmem:[%s4 + $0x198] sm:$0xf]
        %v2286 = vld [vmem:[%s4 + $0x19c] sm:$0xf]
        %v2287 = vld [vmem:[%s4 + $0x1a0] sm:$0xf]
        %v2288 = vld [vmem:[%s4 + $0x1a4] sm:$0xf]
        %v2289 = vld [vmem:[%s4 + $0x1a8] sm:$0xf]
        %v2290 = vld [vmem:[%s4 + $0x1ac] sm:$0xf]
        %v2291 = vld [vmem:[%s4 + $0x1b0] sm:$0xf]
        %v2292 = vld [vmem:[%s4 + $0x1b4] sm:$0xf]
        %v2293 = vld [vmem:[%s4 + $0x1b8] sm:$0xf]
        %v2294 = vld [vmem:[%s4 + $0x1bc] sm:$0xf]
        %v2311 = vunpack.c.l.b16 %v2279
        %v2312 = vunpack.c.l.b16 %v2280
        %v2313 = vunpack.c.l.b16 %v2281
        %v2314 = vunpack.c.l.b16 %v2282
        %v2315 = vunpack.c.l.b16 %v2283
        %v2316 = vunpack.c.l.b16 %v2284
        %v2317 = vunpack.c.l.b16 %v2285
        %v2318 = vunpack.c.l.b16 %v2286
        %v2319 = vunpack.c.l.b16 %v2287
        %v2320 = vunpack.c.l.b16 %v2288
        %v2321 = vunpack.c.l.b16 %v2289
        %v2322 = vunpack.c.l.b16 %v2290
        %v2323 = vunpack.c.l.b16 %v2291
        %v2324 = vunpack.c.l.b16 %v2292
        %v2325 = vunpack.c.l.b16 %v2293
        %v2326 = vunpack.c.l.b16 %v2294
        %v2327 = vpack.c.b16 %v2312, %v2311
        %v2328 = vpack.c.b16 %v2314, %v2313
        %v2329 = vpack.c.b16 %v2316, %v2315
        %v2330 = vpack.c.b16 %v2318, %v2317
        %v2331 = vpack.c.b16 %v2320, %v2319
        %v2332 = vpack.c.b16 %v2322, %v2321
        %v2333 = vpack.c.b16 %v2324, %v2323
        %v2334 = vpack.c.b16 %v2326, %v2325
        %2343 = vmatpush.bf16.msra.mxu0 %v2334
        %2344 = vmatpush.bf16.msra.mxu0 %v2333
        %2345 = vmatpush.bf16.msra.mxu0 %v2332
        %2346 = vmatpush.bf16.msra.mxu0 %v2331
        %2347 = vmatpush.bf16.msra.mxu0 %v2330
        %2348 = vmatpush.bf16.msra.mxu0 %v2329
        %2349 = vmatpush.bf16.msra.mxu0 %v2328
        %2350 = vmatpush.bf16.msra.mxu0 %v2327
        %2351 = vmatmul.bf16.gmra.mxu0 %v2261
        %v2352 = vpop.f32.mrf.mxu0
        %v2353 = vadd.f32 0.0, %v2352
        %v2354 = vpop.f32.mrf.mxu0
        %v2355 = vadd.f32 0.0, %v2354
        %2356 = vmatmul.bf16.gmra.mxu0 %v2262
        %v2357 = vpop.f32.mrf.mxu0
        %v2358 = vadd.f32 0.0, %v2357
        %v2359 = vpop.f32.mrf.mxu0
        %v2360 = vadd.f32 0.0, %v2359
        %2361 = vmatmul.bf16.gmra.mxu0 %v2263
        %v2362 = vpop.f32.mrf.mxu0
        %v2363 = vadd.f32 0.0, %v2362
        %v2364 = vpop.f32.mrf.mxu0
        %v2365 = vadd.f32 0.0, %v2364
        %2366 = vmatmul.bf16.gmra.mxu0 %v2264
        %v2367 = vpop.f32.mrf.mxu0
        %v2368 = vadd.f32 0.0, %v2367
        %v2369 = vpop.f32.mrf.mxu0
        %v2370 = vadd.f32 0.0, %v2369
        %2371 = vmatmul.bf16.gmra.mxu0 %v2265
        %v2372 = vpop.f32.mrf.mxu0
        %v2373 = vadd.f32 0.0, %v2372
        %v2374 = vpop.f32.mrf.mxu0
        %v2375 = vadd.f32 0.0, %v2374
        %2376 = vmatmul.bf16.gmra.mxu0 %v2266
        %v2377 = vpop.f32.mrf.mxu0
        %v2378 = vadd.f32 0.0, %v2377
        %v2379 = vpop.f32.mrf.mxu0
        %v2380 = vadd.f32 0.0, %v2379
        %2381 = vmatmul.bf16.gmra.mxu0 %v2267
        %v2382 = vpop.f32.mrf.mxu0
        %v2383 = vadd.f32 0.0, %v2382
        %v2384 = vpop.f32.mrf.mxu0
        %v2385 = vadd.f32 0.0, %v2384
        %2386 = vmatmul.bf16.gmra.mxu0 %v2268
        %v2387 = vpop.f32.mrf.mxu0
        %v2388 = vadd.f32 0.0, %v2387
        %v2389 = vpop.f32.mrf.mxu0
        %v2390 = vadd.f32 0.0, %v2389
        %2391 = vmatmul.bf16.gmra.mxu0 %v2269
        %v2392 = vpop.f32.mrf.mxu0
        %v2393 = vadd.f32 0.0, %v2392
        %v2394 = vpop.f32.mrf.mxu0
        %v2395 = vadd.f32 0.0, %v2394
        %2396 = vmatmul.bf16.gmra.mxu0 %v2270
        %v2397 = vpop.f32.mrf.mxu0
        %v2398 = vadd.f32 0.0, %v2397
        %v2399 = vpop.f32.mrf.mxu0
        %v2400 = vadd.f32 0.0, %v2399
        %2401 = vmatmul.bf16.gmra.mxu0 %v2271
        %v2402 = vpop.f32.mrf.mxu0
        %v2403 = vadd.f32 0.0, %v2402
        %v2404 = vpop.f32.mrf.mxu0
        %v2405 = vadd.f32 0.0, %v2404
        %2406 = vmatmul.bf16.gmra.mxu0 %v2272
        %v2407 = vpop.f32.mrf.mxu0
        %v2408 = vadd.f32 0.0, %v2407
        %v2409 = vpop.f32.mrf.mxu0
        %v2410 = vadd.f32 0.0, %v2409
        %2411 = vmatmul.bf16.gmra.mxu0 %v2273
        %v2412 = vpop.f32.mrf.mxu0
        %v2413 = vadd.f32 0.0, %v2412
        %v2414 = vpop.f32.mrf.mxu0
        %v2415 = vadd.f32 0.0, %v2414
        %2416 = vmatmul.bf16.gmra.mxu0 %v2274
        %v2417 = vpop.f32.mrf.mxu0
        %v2418 = vadd.f32 0.0, %v2417
        %v2419 = vpop.f32.mrf.mxu0
        %v2420 = vadd.f32 0.0, %v2419
        %2421 = vmatmul.bf16.gmra.mxu0 %v2275
        %v2422 = vpop.f32.mrf.mxu0
        %v2423 = vadd.f32 0.0, %v2422
        %v2424 = vpop.f32.mrf.mxu0
        %v2425 = vadd.f32 0.0, %v2424
        %2426 = vmatmul.bf16.gmra.mxu0 %v2276
        %v2427 = vpop.f32.mrf.mxu0
        %v2428 = vadd.f32 0.0, %v2427
        %v2429 = vpop.f32.mrf.mxu0
        %v2430 = vadd.f32 0.0, %v2429
        %2431 = vmatmul.bf16.gmra.mxu0 %v2277
        %v2432 = vpop.f32.mrf.mxu0
        %v2433 = vadd.f32 0.0, %v2432
        %v2434 = vpop.f32.mrf.mxu0
        %v2435 = vadd.f32 0.0, %v2434
        %2436 = vmatmul.bf16.gmra.mxu0 %v2278
        %v2437 = vpop.f32.mrf.mxu0
        %v2438 = vadd.f32 0.0, %v2437
        %v2439 = vpop.f32.mrf.mxu0
        %v2440 = vadd.f32 0.0, %v2439
        %2441 = vdwg.mxu0
        %v2442 = vadd.f32 %v2189, %v2353
        %v2443 = vadd.f32 %v2190, %v2355
        %v2444 = vadd.f32 %v2191, %v2358
        %v2445 = vadd.f32 %v2192, %v2360
        %v2446 = vadd.f32 %v2193, %v2363
        %v2447 = vadd.f32 %v2194, %v2365
        %v2448 = vadd.f32 %v2195, %v2368
        %v2449 = vadd.f32 %v2196, %v2370
        %v2450 = vadd.f32 %v2197, %v2373
        %v2451 = vadd.f32 %v2198, %v2375
        %v2452 = vadd.f32 %v2199, %v2378
        %v2453 = vadd.f32 %v2200, %v2380
        %v2454 = vadd.f32 %v2201, %v2383
        %v2455 = vadd.f32 %v2202, %v2385
        %v2456 = vadd.f32 %v2203, %v2388
        %v2457 = vadd.f32 %v2204, %v2390
        %v2458 = vadd.f32 %v2205, %v2393
        %v2459 = vadd.f32 %v2206, %v2395
        %v2460 = vadd.f32 %v2207, %v2398
        %v2461 = vadd.f32 %v2208, %v2400
        %v2462 = vadd.f32 %v2209, %v2403
        %v2463 = vadd.f32 %v2210, %v2405
        %v2464 = vadd.f32 %v2211, %v2408
        %v2465 = vadd.f32 %v2212, %v2410
        %v2466 = vadd.f32 %v2213, %v2413
        %v2467 = vadd.f32 %v2214, %v2415
        %v2468 = vadd.f32 %v2215, %v2418
        %v2469 = vadd.f32 %v2216, %v2420
        %v2470 = vadd.f32 %v2217, %v2423
        %v2471 = vadd.f32 %v2218, %v2425
        %v2472 = vadd.f32 %v2219, %v2428
        %v2473 = vadd.f32 %v2220, %v2430
        %v2474 = vadd.f32 %v2221, %v2433
        %v2475 = vadd.f32 %v2222, %v2435
        %v2476 = vadd.f32 %v2223, %v2438
        %v2477 = vadd.f32 %v2224, %v2440
        %v2478 = vld [vmem:[#allocation2 + $0x25] sm:$0xff]
        %v2479 = vld [vmem:[#allocation2 + $0x2d] sm:$0xff]
        %v2480 = vld [vmem:[#allocation2 + $0x35] sm:$0xff]
        %v2481 = vld [vmem:[#allocation2 + $0x3d] sm:$0xff]
        %v2482 = vld [vmem:[#allocation2 + $0x45] sm:$0xff]
        %v2483 = vld [vmem:[#allocation2 + $0x4d] sm:$0xff]
        %v2484 = vld [vmem:[#allocation2 + $0x55] sm:$0xff]
        %v2485 = vld [vmem:[#allocation2 + $0x5d] sm:$0xff]
        %v2486 = vld [vmem:[#allocation2 + $0x65] sm:$0xff]
        %v2487 = vld [vmem:[#allocation2 + $0x6d] sm:$0xff]
        %v2488 = vld [vmem:[#allocation2 + $0x75] sm:$0xff]
        %v2489 = vld [vmem:[#allocation2 + $0x7d] sm:$0xff]
        %v2490 = vld [vmem:[#allocation2 + $0x85] sm:$0xff]
        %v2491 = vld [vmem:[#allocation2 + $0x8d] sm:$0xff]
        %v2492 = vld [vmem:[#allocation2 + $0x95] sm:$0xff]
        %v2493 = vld [vmem:[#allocation2 + $0x9d] sm:$0xff]
        %v2494 = vld [vmem:[#allocation2 + $0xa5] sm:$0xff]
        %v2495 = vld [vmem:[#allocation2 + $0xad] sm:$0xff]
        %v2496 = vld [vmem:[#allocation2 + $0xb5] sm:$0xff]
        %v2497 = vld [vmem:[#allocation2 + $0xbd] sm:$0xff]
        %v2498 = vld [vmem:[#allocation2 + $0xc5] sm:$0xff]
        %v2499 = vld [vmem:[#allocation2 + $0xcd] sm:$0xff]
        %v2500 = vld [vmem:[#allocation2 + $0xd5] sm:$0xff]
        %v2501 = vld [vmem:[#allocation2 + $0xdd] sm:$0xff]
        %v2502 = vld [vmem:[#allocation2 + $0xe5] sm:$0xff]
        %v2503 = vld [vmem:[#allocation2 + $0xed] sm:$0xff]
        %v2504 = vld [vmem:[#allocation2 + $0xf5] sm:$0xff]
        %v2505 = vld [vmem:[#allocation2 + $0xfd] sm:$0xff]
        %v2506 = vld [vmem:[#allocation2 + $0x105] sm:$0xff]
        %v2507 = vld [vmem:[#allocation2 + $0x10d] sm:$0xff]
        %v2508 = vld [vmem:[#allocation2 + $0x115] sm:$0xff]
        %v2509 = vld [vmem:[#allocation2 + $0x11d] sm:$0xff]
        %v2510 = vld [vmem:[#allocation2 + $0x125] sm:$0xff]
        %v2511 = vld [vmem:[#allocation2 + $0x12d] sm:$0xff]
        %v2512 = vld [vmem:[#allocation2 + $0x135] sm:$0xff]
        %v2513 = vld [vmem:[#allocation2 + $0x13d] sm:$0x3f]
        %v2514 = vpack.c.bf16 %v2479, %v2478
        %v2515 = vpack.c.bf16 %v2481, %v2480
        %v2516 = vpack.c.bf16 %v2483, %v2482
        %v2517 = vpack.c.bf16 %v2485, %v2484
        %v2518 = vpack.c.bf16 %v2487, %v2486
        %v2519 = vpack.c.bf16 %v2489, %v2488
        %v2520 = vpack.c.bf16 %v2491, %v2490
        %v2521 = vpack.c.bf16 %v2493, %v2492
        %v2522 = vpack.c.bf16 %v2495, %v2494
        %v2523 = vpack.c.bf16 %v2497, %v2496
        %v2524 = vpack.c.bf16 %v2499, %v2498
        %v2525 = vpack.c.bf16 %v2501, %v2500
        %v2526 = vpack.c.bf16 %v2503, %v2502
        %v2527 = vpack.c.bf16 %v2505, %v2504
        %v2528 = vpack.c.bf16 %v2507, %v2506
        %v2529 = vpack.c.bf16 %v2509, %v2508
        %v2530 = vpack.c.bf16 %v2511, %v2510
        %v2531 = vpack.c.bf16 %v2513, %v2512
        %v2532 = vld [vmem:[%s4 + $0x1c0] sm:$0xf]
        %v2533 = vld [vmem:[%s4 + $0x1c4] sm:$0xf]
        %v2534 = vld [vmem:[%s4 + $0x1c8] sm:$0xf]
        %v2535 = vld [vmem:[%s4 + $0x1cc] sm:$0xf]
        %v2536 = vld [vmem:[%s4 + $0x1d0] sm:$0xf]
        %v2537 = vld [vmem:[%s4 + $0x1d4] sm:$0xf]
        %v2538 = vld [vmem:[%s4 + $0x1d8] sm:$0xf]
        %v2539 = vld [vmem:[%s4 + $0x1dc] sm:$0xf]
        %v2540 = vld [vmem:[%s4 + $0x1e0] sm:$0xf]
        %v2541 = vld [vmem:[%s4 + $0x1e4] sm:$0xf]
        %v2542 = vld [vmem:[%s4 + $0x1e8] sm:$0xf]
        %v2543 = vld [vmem:[%s4 + $0x1ec] sm:$0xf]
        %v2544 = vld [vmem:[%s4 + $0x1f0] sm:$0xf]
        %v2545 = vld [vmem:[%s4 + $0x1f4] sm:$0xf]
        %v2546 = vld [vmem:[%s4 + $0x1f8] sm:$0xf]
        %v2547 = vld [vmem:[%s4 + $0x1fc] sm:$0xf]
        %v2564 = vunpack.c.l.b16 %v2532
        %v2565 = vunpack.c.l.b16 %v2533
        %v2566 = vunpack.c.l.b16 %v2534
        %v2567 = vunpack.c.l.b16 %v2535
        %v2568 = vunpack.c.l.b16 %v2536
        %v2569 = vunpack.c.l.b16 %v2537
        %v2570 = vunpack.c.l.b16 %v2538
        %v2571 = vunpack.c.l.b16 %v2539
        %v2572 = vunpack.c.l.b16 %v2540
        %v2573 = vunpack.c.l.b16 %v2541
        %v2574 = vunpack.c.l.b16 %v2542
        %v2575 = vunpack.c.l.b16 %v2543
        %v2576 = vunpack.c.l.b16 %v2544
        %v2577 = vunpack.c.l.b16 %v2545
        %v2578 = vunpack.c.l.b16 %v2546
        %v2579 = vunpack.c.l.b16 %v2547
        %v2580 = vpack.c.b16 %v2565, %v2564
        %v2581 = vpack.c.b16 %v2567, %v2566
        %v2582 = vpack.c.b16 %v2569, %v2568
        %v2583 = vpack.c.b16 %v2571, %v2570
        %v2584 = vpack.c.b16 %v2573, %v2572
        %v2585 = vpack.c.b16 %v2575, %v2574
        %v2586 = vpack.c.b16 %v2577, %v2576
        %v2587 = vpack.c.b16 %v2579, %v2578
        %2596 = vmatpush.bf16.msra.mxu0 %v2587
        %2597 = vmatpush.bf16.msra.mxu0 %v2586
        %2598 = vmatpush.bf16.msra.mxu0 %v2585
        %2599 = vmatpush.bf16.msra.mxu0 %v2584
        %2600 = vmatpush.bf16.msra.mxu0 %v2583
        %2601 = vmatpush.bf16.msra.mxu0 %v2582
        %2602 = vmatpush.bf16.msra.mxu0 %v2581
        %2603 = vmatpush.bf16.msra.mxu0 %v2580
        %2604 = vmatmul.bf16.gmra.mxu0 %v2514
        %v2605 = vpop.f32.mrf.mxu0
        %v2606 = vadd.f32 0.0, %v2605
        %v2607 = vpop.f32.mrf.mxu0
        %v2608 = vadd.f32 0.0, %v2607
        %2609 = vmatmul.bf16.gmra.mxu0 %v2515
        %v2610 = vpop.f32.mrf.mxu0
        %v2611 = vadd.f32 0.0, %v2610
        %v2612 = vpop.f32.mrf.mxu0
        %v2613 = vadd.f32 0.0, %v2612
        %2614 = vmatmul.bf16.gmra.mxu0 %v2516
        %v2615 = vpop.f32.mrf.mxu0
        %v2616 = vadd.f32 0.0, %v2615
        %v2617 = vpop.f32.mrf.mxu0
        %v2618 = vadd.f32 0.0, %v2617
        %2619 = vmatmul.bf16.gmra.mxu0 %v2517
        %v2620 = vpop.f32.mrf.mxu0
        %v2621 = vadd.f32 0.0, %v2620
        %v2622 = vpop.f32.mrf.mxu0
        %v2623 = vadd.f32 0.0, %v2622
        %2624 = vmatmul.bf16.gmra.mxu0 %v2518
        %v2625 = vpop.f32.mrf.mxu0
        %v2626 = vadd.f32 0.0, %v2625
        %v2627 = vpop.f32.mrf.mxu0
        %v2628 = vadd.f32 0.0, %v2627
        %2629 = vmatmul.bf16.gmra.mxu0 %v2519
        %v2630 = vpop.f32.mrf.mxu0
        %v2631 = vadd.f32 0.0, %v2630
        %v2632 = vpop.f32.mrf.mxu0
        %v2633 = vadd.f32 0.0, %v2632
        %2634 = vmatmul.bf16.gmra.mxu0 %v2520
        %v2635 = vpop.f32.mrf.mxu0
        %v2636 = vadd.f32 0.0, %v2635
        %v2637 = vpop.f32.mrf.mxu0
        %v2638 = vadd.f32 0.0, %v2637
        %2639 = vmatmul.bf16.gmra.mxu0 %v2521
        %v2640 = vpop.f32.mrf.mxu0
        %v2641 = vadd.f32 0.0, %v2640
        %v2642 = vpop.f32.mrf.mxu0
        %v2643 = vadd.f32 0.0, %v2642
        %2644 = vmatmul.bf16.gmra.mxu0 %v2522
        %v2645 = vpop.f32.mrf.mxu0
        %v2646 = vadd.f32 0.0, %v2645
        %v2647 = vpop.f32.mrf.mxu0
        %v2648 = vadd.f32 0.0, %v2647
        %2649 = vmatmul.bf16.gmra.mxu0 %v2523
        %v2650 = vpop.f32.mrf.mxu0
        %v2651 = vadd.f32 0.0, %v2650
        %v2652 = vpop.f32.mrf.mxu0
        %v2653 = vadd.f32 0.0, %v2652
        %2654 = vmatmul.bf16.gmra.mxu0 %v2524
        %v2655 = vpop.f32.mrf.mxu0
        %v2656 = vadd.f32 0.0, %v2655
        %v2657 = vpop.f32.mrf.mxu0
        %v2658 = vadd.f32 0.0, %v2657
        %2659 = vmatmul.bf16.gmra.mxu0 %v2525
        %v2660 = vpop.f32.mrf.mxu0
        %v2661 = vadd.f32 0.0, %v2660
        %v2662 = vpop.f32.mrf.mxu0
        %v2663 = vadd.f32 0.0, %v2662
        %2664 = vmatmul.bf16.gmra.mxu0 %v2526
        %v2665 = vpop.f32.mrf.mxu0
        %v2666 = vadd.f32 0.0, %v2665
        %v2667 = vpop.f32.mrf.mxu0
        %v2668 = vadd.f32 0.0, %v2667
        %2669 = vmatmul.bf16.gmra.mxu0 %v2527
        %v2670 = vpop.f32.mrf.mxu0
        %v2671 = vadd.f32 0.0, %v2670
        %v2672 = vpop.f32.mrf.mxu0
        %v2673 = vadd.f32 0.0, %v2672
        %2674 = vmatmul.bf16.gmra.mxu0 %v2528
        %v2675 = vpop.f32.mrf.mxu0
        %v2676 = vadd.f32 0.0, %v2675
        %v2677 = vpop.f32.mrf.mxu0
        %v2678 = vadd.f32 0.0, %v2677
        %2679 = vmatmul.bf16.gmra.mxu0 %v2529
        %v2680 = vpop.f32.mrf.mxu0
        %v2681 = vadd.f32 0.0, %v2680
        %v2682 = vpop.f32.mrf.mxu0
        %v2683 = vadd.f32 0.0, %v2682
        %2684 = vmatmul.bf16.gmra.mxu0 %v2530
        %v2685 = vpop.f32.mrf.mxu0
        %v2686 = vadd.f32 0.0, %v2685
        %v2687 = vpop.f32.mrf.mxu0
        %v2688 = vadd.f32 0.0, %v2687
        %2689 = vmatmul.bf16.gmra.mxu0 %v2531
        %v2690 = vpop.f32.mrf.mxu0
        %v2691 = vadd.f32 0.0, %v2690
        %v2692 = vpop.f32.mrf.mxu0
        %v2693 = vadd.f32 0.0, %v2692
        %2694 = vdwg.mxu0
        %v2695 = vadd.f32 %v2442, %v2606
        %v2696 = vadd.f32 %v2443, %v2608
        %v2697 = vadd.f32 %v2444, %v2611
        %v2698 = vadd.f32 %v2445, %v2613
        %v2699 = vadd.f32 %v2446, %v2616
        %v2700 = vadd.f32 %v2447, %v2618
        %v2701 = vadd.f32 %v2448, %v2621
        %v2702 = vadd.f32 %v2449, %v2623
        %v2703 = vadd.f32 %v2450, %v2626
        %v2704 = vadd.f32 %v2451, %v2628
        %v2705 = vadd.f32 %v2452, %v2631
        %v2706 = vadd.f32 %v2453, %v2633
        %v2707 = vadd.f32 %v2454, %v2636
        %v2708 = vadd.f32 %v2455, %v2638
        %v2709 = vadd.f32 %v2456, %v2641
        %v2710 = vadd.f32 %v2457, %v2643
        %v2711 = vadd.f32 %v2458, %v2646
        %v2712 = vadd.f32 %v2459, %v2648
        %v2713 = vadd.f32 %v2460, %v2651
        %v2714 = vadd.f32 %v2461, %v2653
        %v2715 = vadd.f32 %v2462, %v2656
        %v2716 = vadd.f32 %v2463, %v2658
        %v2717 = vadd.f32 %v2464, %v2661
        %v2718 = vadd.f32 %v2465, %v2663
        %v2719 = vadd.f32 %v2466, %v2666
        %v2720 = vadd.f32 %v2467, %v2668
        %v2721 = vadd.f32 %v2468, %v2671
        %v2722 = vadd.f32 %v2469, %v2673
        %v2723 = vadd.f32 %v2470, %v2676
        %v2724 = vadd.f32 %v2471, %v2678
        %v2725 = vadd.f32 %v2472, %v2681
        %v2726 = vadd.f32 %v2473, %v2683
        %v2727 = vadd.f32 %v2474, %v2686
        %v2728 = vadd.f32 %v2475, %v2688
        %v2729 = vadd.f32 %v2476, %v2691
        %v2730 = vadd.f32 %v2477, %v2693
        %v2731 = vld [vmem:[#allocation2 + $0x26] sm:$0xff]
        %v2732 = vld [vmem:[#allocation2 + $0x2e] sm:$0xff]
        %v2733 = vld [vmem:[#allocation2 + $0x36] sm:$0xff]
        %v2734 = vld [vmem:[#allocation2 + $0x3e] sm:$0xff]
        %v2735 = vld [vmem:[#allocation2 + $0x46] sm:$0xff]
        %v2736 = vld [vmem:[#allocation2 + $0x4e] sm:$0xff]
        %v2737 = vld [vmem:[#allocation2 + $0x56] sm:$0xff]
        %v2738 = vld [vmem:[#allocation2 + $0x5e] sm:$0xff]
        %v2739 = vld [vmem:[#allocation2 + $0x66] sm:$0xff]
        %v2740 = vld [vmem:[#allocation2 + $0x6e] sm:$0xff]
        %v2741 = vld [vmem:[#allocation2 + $0x76] sm:$0xff]
        %v2742 = vld [vmem:[#allocation2 + $0x7e] sm:$0xff]
        %v2743 = vld [vmem:[#allocation2 + $0x86] sm:$0xff]
        %v2744 = vld [vmem:[#allocation2 + $0x8e] sm:$0xff]
        %v2745 = vld [vmem:[#allocation2 + $0x96] sm:$0xff]
        %v2746 = vld [vmem:[#allocation2 + $0x9e] sm:$0xff]
        %v2747 = vld [vmem:[#allocation2 + $0xa6] sm:$0xff]
        %v2748 = vld [vmem:[#allocation2 + $0xae] sm:$0xff]
        %v2749 = vld [vmem:[#allocation2 + $0xb6] sm:$0xff]
        %v2750 = vld [vmem:[#allocation2 + $0xbe] sm:$0xff]
        %v2751 = vld [vmem:[#allocation2 + $0xc6] sm:$0xff]
        %v2752 = vld [vmem:[#allocation2 + $0xce] sm:$0xff]
        %v2753 = vld [vmem:[#allocation2 + $0xd6] sm:$0xff]
        %v2754 = vld [vmem:[#allocation2 + $0xde] sm:$0xff]
        %v2755 = vld [vmem:[#allocation2 + $0xe6] sm:$0xff]
        %v2756 = vld [vmem:[#allocation2 + $0xee] sm:$0xff]
        %v2757 = vld [vmem:[#allocation2 + $0xf6] sm:$0xff]
        %v2758 = vld [vmem:[#allocation2 + $0xfe] sm:$0xff]
        %v2759 = vld [vmem:[#allocation2 + $0x106] sm:$0xff]
        %v2760 = vld [vmem:[#allocation2 + $0x10e] sm:$0xff]
        %v2761 = vld [vmem:[#allocation2 + $0x116] sm:$0xff]
        %v2762 = vld [vmem:[#allocation2 + $0x11e] sm:$0xff]
        %v2763 = vld [vmem:[#allocation2 + $0x126] sm:$0xff]
        %v2764 = vld [vmem:[#allocation2 + $0x12e] sm:$0xff]
        %v2765 = vld [vmem:[#allocation2 + $0x136] sm:$0xff]
        %v2766 = vld [vmem:[#allocation2 + $0x13e] sm:$0x3f]
        %v2767 = vpack.c.bf16 %v2732, %v2731
        %v2768 = vpack.c.bf16 %v2734, %v2733
        %v2769 = vpack.c.bf16 %v2736, %v2735
        %v2770 = vpack.c.bf16 %v2738, %v2737
        %v2771 = vpack.c.bf16 %v2740, %v2739
        %v2772 = vpack.c.bf16 %v2742, %v2741
        %v2773 = vpack.c.bf16 %v2744, %v2743
        %v2774 = vpack.c.bf16 %v2746, %v2745
        %v2775 = vpack.c.bf16 %v2748, %v2747
        %v2776 = vpack.c.bf16 %v2750, %v2749
        %v2777 = vpack.c.bf16 %v2752, %v2751
        %v2778 = vpack.c.bf16 %v2754, %v2753
        %v2779 = vpack.c.bf16 %v2756, %v2755
        %v2780 = vpack.c.bf16 %v2758, %v2757
        %v2781 = vpack.c.bf16 %v2760, %v2759
        %v2782 = vpack.c.bf16 %v2762, %v2761
        %v2783 = vpack.c.bf16 %v2764, %v2763
        %v2784 = vpack.c.bf16 %v2766, %v2765
        %v2785 = vld [vmem:[%s4 + $0x200] sm:$0xf]
        %v2786 = vld [vmem:[%s4 + $0x204] sm:$0xf]
        %v2787 = vld [vmem:[%s4 + $0x208] sm:$0xf]
        %v2788 = vld [vmem:[%s4 + $0x20c] sm:$0xf]
        %v2789 = vld [vmem:[%s4 + $0x210] sm:$0xf]
        %v2790 = vld [vmem:[%s4 + $0x214] sm:$0xf]
        %v2791 = vld [vmem:[%s4 + $0x218] sm:$0xf]
        %v2792 = vld [vmem:[%s4 + $0x21c] sm:$0xf]
        %v2793 = vld [vmem:[%s4 + $0x220] sm:$0xf]
        %v2794 = vld [vmem:[%s4 + $0x224] sm:$0xf]
        %v2795 = vld [vmem:[%s4 + $0x228] sm:$0xf]
        %v2796 = vld [vmem:[%s4 + $0x22c] sm:$0xf]
        %v2797 = vld [vmem:[%s4 + $0x230] sm:$0xf]
        %v2798 = vld [vmem:[%s4 + $0x234] sm:$0xf]
        %v2799 = vld [vmem:[%s4 + $0x238] sm:$0xf]
        %v2800 = vld [vmem:[%s4 + $0x23c] sm:$0xf]
        %v2817 = vunpack.c.l.b16 %v2785
        %v2818 = vunpack.c.l.b16 %v2786
        %v2819 = vunpack.c.l.b16 %v2787
        %v2820 = vunpack.c.l.b16 %v2788
        %v2821 = vunpack.c.l.b16 %v2789
        %v2822 = vunpack.c.l.b16 %v2790
        %v2823 = vunpack.c.l.b16 %v2791
        %v2824 = vunpack.c.l.b16 %v2792
        %v2825 = vunpack.c.l.b16 %v2793
        %v2826 = vunpack.c.l.b16 %v2794
        %v2827 = vunpack.c.l.b16 %v2795
        %v2828 = vunpack.c.l.b16 %v2796
        %v2829 = vunpack.c.l.b16 %v2797
        %v2830 = vunpack.c.l.b16 %v2798
        %v2831 = vunpack.c.l.b16 %v2799
        %v2832 = vunpack.c.l.b16 %v2800
        %v2833 = vpack.c.b16 %v2818, %v2817
        %v2834 = vpack.c.b16 %v2820, %v2819
        %v2835 = vpack.c.b16 %v2822, %v2821
        %v2836 = vpack.c.b16 %v2824, %v2823
        %v2837 = vpack.c.b16 %v2826, %v2825
        %v2838 = vpack.c.b16 %v2828, %v2827
        %v2839 = vpack.c.b16 %v2830, %v2829
        %v2840 = vpack.c.b16 %v2832, %v2831
        %2849 = vmatpush.bf16.msra.mxu0 %v2840
        %2850 = vmatpush.bf16.msra.mxu0 %v2839
        %2851 = vmatpush.bf16.msra.mxu0 %v2838
        %2852 = vmatpush.bf16.msra.mxu0 %v2837
        %2853 = vmatpush.bf16.msra.mxu0 %v2836
        %2854 = vmatpush.bf16.msra.mxu0 %v2835
        %2855 = vmatpush.bf16.msra.mxu0 %v2834
        %2856 = vmatpush.bf16.msra.mxu0 %v2833
        %2857 = vmatmul.bf16.gmra.mxu0 %v2767
        %v2858 = vpop.f32.mrf.mxu0
        %v2859 = vadd.f32 0.0, %v2858
        %v2860 = vpop.f32.mrf.mxu0
        %v2861 = vadd.f32 0.0, %v2860
        %2862 = vmatmul.bf16.gmra.mxu0 %v2768
        %v2863 = vpop.f32.mrf.mxu0
        %v2864 = vadd.f32 0.0, %v2863
        %v2865 = vpop.f32.mrf.mxu0
        %v2866 = vadd.f32 0.0, %v2865
        %2867 = vmatmul.bf16.gmra.mxu0 %v2769
        %v2868 = vpop.f32.mrf.mxu0
        %v2869 = vadd.f32 0.0, %v2868
        %v2870 = vpop.f32.mrf.mxu0
        %v2871 = vadd.f32 0.0, %v2870
        %2872 = vmatmul.bf16.gmra.mxu0 %v2770
        %v2873 = vpop.f32.mrf.mxu0
        %v2874 = vadd.f32 0.0, %v2873
        %v2875 = vpop.f32.mrf.mxu0
        %v2876 = vadd.f32 0.0, %v2875
        %2877 = vmatmul.bf16.gmra.mxu0 %v2771
        %v2878 = vpop.f32.mrf.mxu0
        %v2879 = vadd.f32 0.0, %v2878
        %v2880 = vpop.f32.mrf.mxu0
        %v2881 = vadd.f32 0.0, %v2880
        %2882 = vmatmul.bf16.gmra.mxu0 %v2772
        %v2883 = vpop.f32.mrf.mxu0
        %v2884 = vadd.f32 0.0, %v2883
        %v2885 = vpop.f32.mrf.mxu0
        %v2886 = vadd.f32 0.0, %v2885
        %2887 = vmatmul.bf16.gmra.mxu0 %v2773
        %v2888 = vpop.f32.mrf.mxu0
        %v2889 = vadd.f32 0.0, %v2888
        %v2890 = vpop.f32.mrf.mxu0
        %v2891 = vadd.f32 0.0, %v2890
        %2892 = vmatmul.bf16.gmra.mxu0 %v2774
        %v2893 = vpop.f32.mrf.mxu0
        %v2894 = vadd.f32 0.0, %v2893
        %v2895 = vpop.f32.mrf.mxu0
        %v2896 = vadd.f32 0.0, %v2895
        %2897 = vmatmul.bf16.gmra.mxu0 %v2775
        %v2898 = vpop.f32.mrf.mxu0
        %v2899 = vadd.f32 0.0, %v2898
        %v2900 = vpop.f32.mrf.mxu0
        %v2901 = vadd.f32 0.0, %v2900
        %2902 = vmatmul.bf16.gmra.mxu0 %v2776
        %v2903 = vpop.f32.mrf.mxu0
        %v2904 = vadd.f32 0.0, %v2903
        %v2905 = vpop.f32.mrf.mxu0
        %v2906 = vadd.f32 0.0, %v2905
        %2907 = vmatmul.bf16.gmra.mxu0 %v2777
        %v2908 = vpop.f32.mrf.mxu0
        %v2909 = vadd.f32 0.0, %v2908
        %v2910 = vpop.f32.mrf.mxu0
        %v2911 = vadd.f32 0.0, %v2910
        %2912 = vmatmul.bf16.gmra.mxu0 %v2778
        %v2913 = vpop.f32.mrf.mxu0
        %v2914 = vadd.f32 0.0, %v2913
        %v2915 = vpop.f32.mrf.mxu0
        %v2916 = vadd.f32 0.0, %v2915
        %2917 = vmatmul.bf16.gmra.mxu0 %v2779
        %v2918 = vpop.f32.mrf.mxu0
        %v2919 = vadd.f32 0.0, %v2918
        %v2920 = vpop.f32.mrf.mxu0
        %v2921 = vadd.f32 0.0, %v2920
        %2922 = vmatmul.bf16.gmra.mxu0 %v2780
        %v2923 = vpop.f32.mrf.mxu0
        %v2924 = vadd.f32 0.0, %v2923
        %v2925 = vpop.f32.mrf.mxu0
        %v2926 = vadd.f32 0.0, %v2925
        %2927 = vmatmul.bf16.gmra.mxu0 %v2781
        %v2928 = vpop.f32.mrf.mxu0
        %v2929 = vadd.f32 0.0, %v2928
        %v2930 = vpop.f32.mrf.mxu0
        %v2931 = vadd.f32 0.0, %v2930
        %2932 = vmatmul.bf16.gmra.mxu0 %v2782
        %v2933 = vpop.f32.mrf.mxu0
        %v2934 = vadd.f32 0.0, %v2933
        %v2935 = vpop.f32.mrf.mxu0
        %v2936 = vadd.f32 0.0, %v2935
        %2937 = vmatmul.bf16.gmra.mxu0 %v2783
        %v2938 = vpop.f32.mrf.mxu0
        %v2939 = vadd.f32 0.0, %v2938
        %v2940 = vpop.f32.mrf.mxu0
        %v2941 = vadd.f32 0.0, %v2940
        %2942 = vmatmul.bf16.gmra.mxu0 %v2784
        %v2943 = vpop.f32.mrf.mxu0
        %v2944 = vadd.f32 0.0, %v2943
        %v2945 = vpop.f32.mrf.mxu0
        %v2946 = vadd.f32 0.0, %v2945
        %2947 = vdwg.mxu0
        %v2948 = vadd.f32 %v2695, %v2859
        %v2949 = vadd.f32 %v2696, %v2861
        %v2950 = vadd.f32 %v2697, %v2864
        %v2951 = vadd.f32 %v2698, %v2866
        %v2952 = vadd.f32 %v2699, %v2869
        %v2953 = vadd.f32 %v2700, %v2871
        %v2954 = vadd.f32 %v2701, %v2874
        %v2955 = vadd.f32 %v2702, %v2876
        %v2956 = vadd.f32 %v2703, %v2879
        %v2957 = vadd.f32 %v2704, %v2881
        %v2958 = vadd.f32 %v2705, %v2884
        %v2959 = vadd.f32 %v2706, %v2886
        %v2960 = vadd.f32 %v2707, %v2889
        %v2961 = vadd.f32 %v2708, %v2891
        %v2962 = vadd.f32 %v2709, %v2894
        %v2963 = vadd.f32 %v2710, %v2896
        %v2964 = vadd.f32 %v2711, %v2899
        %v2965 = vadd.f32 %v2712, %v2901
        %v2966 = vadd.f32 %v2713, %v2904
        %v2967 = vadd.f32 %v2714, %v2906
        %v2968 = vadd.f32 %v2715, %v2909
        %v2969 = vadd.f32 %v2716, %v2911
        %v2970 = vadd.f32 %v2717, %v2914
        %v2971 = vadd.f32 %v2718, %v2916
        %v2972 = vadd.f32 %v2719, %v2919
        %v2973 = vadd.f32 %v2720, %v2921
        %v2974 = vadd.f32 %v2721, %v2924
        %v2975 = vadd.f32 %v2722, %v2926
        %v2976 = vadd.f32 %v2723, %v2929
        %v2977 = vadd.f32 %v2724, %v2931
        %v2978 = vadd.f32 %v2725, %v2934
        %v2979 = vadd.f32 %v2726, %v2936
        %v2980 = vadd.f32 %v2727, %v2939
        %v2981 = vadd.f32 %v2728, %v2941
        %v2982 = vadd.f32 %v2729, %v2944
        %v2983 = vadd.f32 %v2730, %v2946
        %v2984 = vld [vmem:[%s5] sm:$0x1]
        %v2986 = vperm.slane %v2984, 0
        %v2988 = vadd.f32 %v2948, %v2986
        %v2989 = vadd.f32 %v2949, %v2986
        %v2990 = vadd.f32 %v2950, %v2986
        %v2991 = vadd.f32 %v2951, %v2986
        %v2992 = vadd.f32 %v2952, %v2986
        %v2993 = vadd.f32 %v2953, %v2986
        %v2994 = vadd.f32 %v2954, %v2986
        %v2995 = vadd.f32 %v2955, %v2986
        %v2996 = vadd.f32 %v2956, %v2986
        %v2997 = vadd.f32 %v2957, %v2986
        %v2998 = vadd.f32 %v2958, %v2986
        %v2999 = vadd.f32 %v2959, %v2986
        %v3000 = vadd.f32 %v2960, %v2986
        %v3001 = vadd.f32 %v2961, %v2986
        %v3002 = vadd.f32 %v2962, %v2986
        %v3003 = vadd.f32 %v2963, %v2986
        %v3004 = vadd.f32 %v2964, %v2986
        %v3005 = vadd.f32 %v2965, %v2986
        %v3006 = vadd.f32 %v2966, %v2986
        %v3007 = vadd.f32 %v2967, %v2986
        %v3008 = vadd.f32 %v2968, %v2986
        %v3009 = vadd.f32 %v2969, %v2986
        %v3010 = vadd.f32 %v2970, %v2986
        %v3011 = vadd.f32 %v2971, %v2986
        %v3012 = vadd.f32 %v2972, %v2986
        %v3013 = vadd.f32 %v2973, %v2986
        %v3014 = vadd.f32 %v2974, %v2986
        %v3015 = vadd.f32 %v2975, %v2986
        %v3016 = vadd.f32 %v2976, %v2986
        %v3017 = vadd.f32 %v2977, %v2986
        %v3018 = vadd.f32 %v2978, %v2986
        %v3019 = vadd.f32 %v2979, %v2986
        %v3020 = vadd.f32 %v2980, %v2986
        %v3021 = vadd.f32 %v2981, %v2986
        %v3022 = vadd.f32 %v2982, %v2986
        %v3023 = vadd.f32 %v2983, %v2986
        %v3024 = vmul.f32 %v2988, 0.2
        %v3025 = vmul.f32 %v2989, 0.2
        %v3026 = vmul.f32 %v2990, 0.2
        %v3027 = vmul.f32 %v2991, 0.2
        %v3028 = vmul.f32 %v2992, 0.2
        %v3029 = vmul.f32 %v2993, 0.2
        %v3030 = vmul.f32 %v2994, 0.2
        %v3031 = vmul.f32 %v2995, 0.2
        %v3032 = vmul.f32 %v2996, 0.2
        %v3033 = vmul.f32 %v2997, 0.2
        %v3034 = vmul.f32 %v2998, 0.2
        %v3035 = vmul.f32 %v2999, 0.2
        %v3036 = vmul.f32 %v3000, 0.2
        %v3037 = vmul.f32 %v3001, 0.2
        %v3038 = vmul.f32 %v3002, 0.2
        %v3039 = vmul.f32 %v3003, 0.2
        %v3040 = vmul.f32 %v3004, 0.2
        %v3041 = vmul.f32 %v3005, 0.2
        %v3042 = vmul.f32 %v3006, 0.2
        %v3043 = vmul.f32 %v3007, 0.2
        %v3044 = vmul.f32 %v3008, 0.2
        %v3045 = vmul.f32 %v3009, 0.2
        %v3046 = vmul.f32 %v3010, 0.2
        %v3047 = vmul.f32 %v3011, 0.2
        %v3048 = vmul.f32 %v3012, 0.2
        %v3049 = vmul.f32 %v3013, 0.2
        %v3050 = vmul.f32 %v3014, 0.2
        %v3051 = vmul.f32 %v3015, 0.2
        %v3052 = vmul.f32 %v3016, 0.2
        %v3053 = vmul.f32 %v3017, 0.2
        %v3054 = vmul.f32 %v3018, 0.2
        %v3055 = vmul.f32 %v3019, 0.2
        %v3056 = vmul.f32 %v3020, 0.2
        %v3057 = vmul.f32 %v3021, 0.2
        %v3058 = vmul.f32 %v3022, 0.2
        %v3059 = vmul.f32 %v3023, 0.2
        %v3060 = vmax.f32 %v2988, %v3024
        %v3061 = vmax.f32 %v2989, %v3025
        %v3062 = vmax.f32 %v2990, %v3026
        %v3063 = vmax.f32 %v2991, %v3027
        %v3064 = vmax.f32 %v2992, %v3028
        %v3065 = vmax.f32 %v2993, %v3029
        %v3066 = vmax.f32 %v2994, %v3030
        %v3067 = vmax.f32 %v2995, %v3031
        %v3068 = vmax.f32 %v2996, %v3032
        %v3069 = vmax.f32 %v2997, %v3033
        %v3070 = vmax.f32 %v2998, %v3034
        %v3071 = vmax.f32 %v2999, %v3035
        %v3072 = vmax.f32 %v3000, %v3036
        %v3073 = vmax.f32 %v3001, %v3037
        %v3074 = vmax.f32 %v3002, %v3038
        %v3075 = vmax.f32 %v3003, %v3039
        %v3076 = vmax.f32 %v3004, %v3040
        %v3077 = vmax.f32 %v3005, %v3041
        %v3078 = vmax.f32 %v3006, %v3042
        %v3079 = vmax.f32 %v3007, %v3043
        %v3080 = vmax.f32 %v3008, %v3044
        %v3081 = vmax.f32 %v3009, %v3045
        %v3082 = vmax.f32 %v3010, %v3046
        %v3083 = vmax.f32 %v3011, %v3047
        %v3084 = vmax.f32 %v3012, %v3048
        %v3085 = vmax.f32 %v3013, %v3049
        %v3086 = vmax.f32 %v3014, %v3050
        %v3087 = vmax.f32 %v3015, %v3051
        %v3088 = vmax.f32 %v3016, %v3052
        %v3089 = vmax.f32 %v3017, %v3053
        %v3090 = vmax.f32 %v3018, %v3054
        %v3091 = vmax.f32 %v3019, %v3055
        %v3092 = vmax.f32 %v3020, %v3056
        %v3093 = vmax.f32 %v3021, %v3057
        %v3094 = vmax.f32 %v3022, %v3058
        %v3095 = vmax.f32 %v3023, %v3059
        %3096 = vst [vmem:[#allocation3 + $0x13] sm:$0xff] %v3060
        %3097 = vst [vmem:[#allocation3 + $0x1b] sm:$0xff] %v3061
        %3098 = vst [vmem:[#allocation3 + $0x23] sm:$0xff] %v3062
        %3099 = vst [vmem:[#allocation3 + $0x2b] sm:$0xff] %v3063
        %3100 = vst [vmem:[#allocation3 + $0x33] sm:$0xff] %v3064
        %3101 = vst [vmem:[#allocation3 + $0x3b] sm:$0xff] %v3065
        %3102 = vst [vmem:[#allocation3 + $0x43] sm:$0xff] %v3066
        %3103 = vst [vmem:[#allocation3 + $0x4b] sm:$0xff] %v3067
        %3104 = vst [vmem:[#allocation3 + $0x53] sm:$0xff] %v3068
        %3105 = vst [vmem:[#allocation3 + $0x5b] sm:$0xff] %v3069
        %3106 = vst [vmem:[#allocation3 + $0x63] sm:$0xff] %v3070
        %3107 = vst [vmem:[#allocation3 + $0x6b] sm:$0xff] %v3071
        %3108 = vst [vmem:[#allocation3 + $0x73] sm:$0xff] %v3072
        %3109 = vst [vmem:[#allocation3 + $0x7b] sm:$0xff] %v3073
        %3110 = vst [vmem:[#allocation3 + $0x83] sm:$0xff] %v3074
        %3111 = vst [vmem:[#allocation3 + $0x8b] sm:$0xff] %v3075
        %3112 = vst [vmem:[#allocation3 + $0x93] sm:$0xff] %v3076
        %3113 = vst [vmem:[#allocation3 + $0x9b] sm:$0xff] %v3077
        %3114 = vst [vmem:[#allocation3 + $0xa3] sm:$0xff] %v3078
        %3115 = vst [vmem:[#allocation3 + $0xab] sm:$0xff] %v3079
        %3116 = vst [vmem:[#allocation3 + $0xb3] sm:$0xff] %v3080
        %3117 = vst [vmem:[#allocation3 + $0xbb] sm:$0xff] %v3081
        %3118 = vst [vmem:[#allocation3 + $0xc3] sm:$0xff] %v3082
        %3119 = vst [vmem:[#allocation3 + $0xcb] sm:$0xff] %v3083
        %3120 = vst [vmem:[#allocation3 + $0xd3] sm:$0xff] %v3084
        %3121 = vst [vmem:[#allocation3 + $0xdb] sm:$0xff] %v3085
        %3122 = vst [vmem:[#allocation3 + $0xe3] sm:$0xff] %v3086
        %3123 = vst [vmem:[#allocation3 + $0xeb] sm:$0xff] %v3087
        %3124 = vst [vmem:[#allocation3 + $0xf3] sm:$0xff] %v3088
        %3125 = vst [vmem:[#allocation3 + $0xfb] sm:$0xff] %v3089
        %3126 = vst [vmem:[#allocation3 + $0x103] sm:$0xff] %v3090
        %3127 = vst [vmem:[#allocation3 + $0x10b] sm:$0xff] %v3091
        %3128 = vst [vmem:[#allocation3 + $0x113] sm:$0xff] %v3092
        %3129 = vst [vmem:[#allocation3 + $0x11b] sm:$0xff] %v3093
        %3130 = vst [vmem:[#allocation3 + $0x123] sm:$0xff] %v3094
        %3131 = vst [vmem:[#allocation3 + $0x12b] sm:$0x3f] %v3095
        %3132 = vst [vmem:[#allocation3] sm:$0xff] 0.0
        %3133 = vst [vmem:[#allocation3 + $0x8] sm:$0xff] 0.0
        %3134 = vst [vmem:[#allocation3 + $0x10] sm:$0x7] 0.0
        %3135 = vst [vmem:[#allocation3 + $0x131] sm:$0xff] 0.0
        %3136 = vst [vmem:[#allocation3 + $0x139] sm:$0xff] 0.0
        %3137 = vst [vmem:[#allocation3 + $0x141] sm:$0x7] 0.0
        %3138 = vst [vmem:[#allocation3 + $0x23] sm:$0x3] 0.0
        %3139 = vst [vmem:[#allocation3 + $0x35] sm:$0x3] 0.0
        %3140 = vst [vmem:[#allocation3 + $0x47] sm:$0x3] 0.0
        %3141 = vst [vmem:[#allocation3 + $0x59] sm:$0x3] 0.0
        %3142 = vst [vmem:[#allocation3 + $0x6b] sm:$0x3] 0.0
        %3143 = vst [vmem:[#allocation3 + $0x7d] sm:$0x3] 0.0
        %3144 = vst [vmem:[#allocation3 + $0x8f] sm:$0x3] 0.0
        %3145 = vst [vmem:[#allocation3 + $0xa1] sm:$0x3] 0.0
        %3146 = vst [vmem:[#allocation3 + $0xb3] sm:$0x3] 0.0
        %3147 = vst [vmem:[#allocation3 + $0xc5] sm:$0x3] 0.0
        %3148 = vst [vmem:[#allocation3 + $0xd7] sm:$0x3] 0.0
        %3149 = vst [vmem:[#allocation3 + $0xe9] sm:$0x3] 0.0
        %3150 = vst [vmem:[#allocation3 + $0xfb] sm:$0x3] 0.0
        %3151 = vst [vmem:[#allocation3 + $0x10d] sm:$0x3] 0.0
        %3152 = vst [vmem:[#allocation3 + $0x11f] sm:$0x3] 0.0
        %v3153 = vld [vmem:[#allocation3] sm:$0xff]
        %v3154 = vld [vmem:[#allocation3 + $0x8] sm:$0xff]
        %v3155 = vld [vmem:[#allocation3 + $0x10] sm:$0xff]
        %v3156 = vld [vmem:[#allocation3 + $0x18] sm:$0xff]
        %v3157 = vld [vmem:[#allocation3 + $0x20] sm:$0xff]
        %v3158 = vld [vmem:[#allocation3 + $0x28] sm:$0xff]
        %v3159 = vld [vmem:[#allocation3 + $0x30] sm:$0xff]
        %v3160 = vld [vmem:[#allocation3 + $0x38] sm:$0xff]
        %v3161 = vld [vmem:[#allocation3 + $0x40] sm:$0xff]
        %v3162 = vld [vmem:[#allocation3 + $0x48] sm:$0xff]
        %v3163 = vld [vmem:[#allocation3 + $0x50] sm:$0xff]
        %v3164 = vld [vmem:[#allocation3 + $0x58] sm:$0xff]
        %v3165 = vld [vmem:[#allocation3 + $0x60] sm:$0xff]
        %v3166 = vld [vmem:[#allocation3 + $0x68] sm:$0xff]
        %v3167 = vld [vmem:[#allocation3 + $0x70] sm:$0xff]
        %v3168 = vld [vmem:[#allocation3 + $0x78] sm:$0xff]
        %v3169 = vld [vmem:[#allocation3 + $0x80] sm:$0xff]
        %v3170 = vld [vmem:[#allocation3 + $0x88] sm:$0xff]
        %v3171 = vld [vmem:[#allocation3 + $0x90] sm:$0xff]
        %v3172 = vld [vmem:[#allocation3 + $0x98] sm:$0xff]
        %v3173 = vld [vmem:[#allocation3 + $0xa0] sm:$0xff]
        %v3174 = vld [vmem:[#allocation3 + $0xa8] sm:$0xff]
        %v3175 = vld [vmem:[#allocation3 + $0xb0] sm:$0xff]
        %v3176 = vld [vmem:[#allocation3 + $0xb8] sm:$0xff]
        %v3177 = vld [vmem:[#allocation3 + $0xc0] sm:$0xff]
        %v3178 = vld [vmem:[#allocation3 + $0xc8] sm:$0xff]
        %v3179 = vld [vmem:[#allocation3 + $0xd0] sm:$0xff]
        %v3180 = vld [vmem:[#allocation3 + $0xd8] sm:$0xff]
        %v3181 = vld [vmem:[#allocation3 + $0xe0] sm:$0xff]
        %v3182 = vld [vmem:[#allocation3 + $0xe8] sm:$0xff]
        %v3183 = vld [vmem:[#allocation3 + $0xf0] sm:$0xff]
        %v3184 = vld [vmem:[#allocation3 + $0xf8] sm:$0xff]
        %v3185 = vld [vmem:[#allocation3 + $0x100] sm:$0xff]
        %v3186 = vld [vmem:[#allocation3 + $0x108] sm:$0xff]
        %v3187 = vld [vmem:[#allocation3 + $0x110] sm:$0xff]
        %v3188 = vld [vmem:[#allocation3 + $0x118] sm:$0x3f]
        %v3189 = vpack.c.bf16 %v3154, %v3153
        %v3190 = vpack.c.bf16 %v3156, %v3155
        %v3191 = vpack.c.bf16 %v3158, %v3157
        %v3192 = vpack.c.bf16 %v3160, %v3159
        %v3193 = vpack.c.bf16 %v3162, %v3161
        %v3194 = vpack.c.bf16 %v3164, %v3163
        %v3195 = vpack.c.bf16 %v3166, %v3165
        %v3196 = vpack.c.bf16 %v3168, %v3167
        %v3197 = vpack.c.bf16 %v3170, %v3169
        %v3198 = vpack.c.bf16 %v3172, %v3171
        %v3199 = vpack.c.bf16 %v3174, %v3173
        %v3200 = vpack.c.bf16 %v3176, %v3175
        %v3201 = vpack.c.bf16 %v3178, %v3177
        %v3202 = vpack.c.bf16 %v3180, %v3179
        %v3203 = vpack.c.bf16 %v3182, %v3181
        %v3204 = vpack.c.bf16 %v3184, %v3183
        %v3205 = vpack.c.bf16 %v3186, %v3185
        %v3206 = vpack.c.bf16 %v3188, %v3187
        %v3207 = vld [vmem:[%s6] sm:$0xf]
        %v3208 = vld [vmem:[%s6 + $0x4] sm:$0xf]
        %v3209 = vld [vmem:[%s6 + $0x8] sm:$0xf]
        %v3210 = vld [vmem:[%s6 + $0xc] sm:$0xf]
        %v3211 = vld [vmem:[%s6 + $0x10] sm:$0xf]
        %v3212 = vld [vmem:[%s6 + $0x14] sm:$0xf]
        %v3213 = vld [vmem:[%s6 + $0x18] sm:$0xf]
        %v3214 = vld [vmem:[%s6 + $0x1c] sm:$0xf]
        %v3215 = vld [vmem:[%s6 + $0x20] sm:$0xf]
        %v3216 = vld [vmem:[%s6 + $0x24] sm:$0xf]
        %v3217 = vld [vmem:[%s6 + $0x28] sm:$0xf]
        %v3218 = vld [vmem:[%s6 + $0x2c] sm:$0xf]
        %v3219 = vld [vmem:[%s6 + $0x30] sm:$0xf]
        %v3220 = vld [vmem:[%s6 + $0x34] sm:$0xf]
        %v3221 = vld [vmem:[%s6 + $0x38] sm:$0xf]
        %v3222 = vld [vmem:[%s6 + $0x3c] sm:$0xf]
        %v3223 = vld [vmem:[#allocation3 + $0x1] sm:$0xff]
        %v3224 = vld [vmem:[#allocation3 + $0x9] sm:$0xff]
        %v3225 = vld [vmem:[#allocation3 + $0x11] sm:$0xff]
        %v3226 = vld [vmem:[#allocation3 + $0x19] sm:$0xff]
        %v3227 = vld [vmem:[#allocation3 + $0x21] sm:$0xff]
        %v3228 = vld [vmem:[#allocation3 + $0x29] sm:$0xff]
        %v3229 = vld [vmem:[#allocation3 + $0x31] sm:$0xff]
        %v3230 = vld [vmem:[#allocation3 + $0x39] sm:$0xff]
        %v3231 = vld [vmem:[#allocation3 + $0x41] sm:$0xff]
        %v3232 = vld [vmem:[#allocation3 + $0x49] sm:$0xff]
        %v3233 = vld [vmem:[#allocation3 + $0x51] sm:$0xff]
        %v3234 = vld [vmem:[#allocation3 + $0x59] sm:$0xff]
        %v3235 = vld [vmem:[#allocation3 + $0x61] sm:$0xff]
        %v3236 = vld [vmem:[#allocation3 + $0x69] sm:$0xff]
        %v3237 = vld [vmem:[#allocation3 + $0x71] sm:$0xff]
        %v3238 = vld [vmem:[#allocation3 + $0x79] sm:$0xff]
        %v3239 = vld [vmem:[#allocation3 + $0x81] sm:$0xff]
        %v3240 = vld [vmem:[#allocation3 + $0x89] sm:$0xff]
        %v3241 = vld [vmem:[#allocation3 + $0x91] sm:$0xff]
        %v3242 = vld [vmem:[#allocation3 + $0x99] sm:$0xff]
        %v3243 = vld [vmem:[#allocation3 + $0xa1] sm:$0xff]
        %v3244 = vld [vmem:[#allocation3 + $0xa9] sm:$0xff]
        %v3245 = vld [vmem:[#allocation3 + $0xb1] sm:$0xff]
        %v3246 = vld [vmem:[#allocation3 + $0xb9] sm:$0xff]
        %v3247 = vld [vmem:[#allocation3 + $0xc1] sm:$0xff]
        %v3248 = vld [vmem:[#allocation3 + $0xc9] sm:$0xff]
        %v3249 = vld [vmem:[#allocation3 + $0xd1] sm:$0xff]
        %v3250 = vld [vmem:[#allocation3 + $0xd9] sm:$0xff]
        %v3251 = vld [vmem:[#allocation3 + $0xe1] sm:$0xff]
        %v3252 = vld [vmem:[#allocation3 + $0xe9] sm:$0xff]
        %v3253 = vld [vmem:[#allocation3 + $0xf1] sm:$0xff]
        %v3254 = vld [vmem:[#allocation3 + $0xf9] sm:$0xff]
        %v3255 = vld [vmem:[#allocation3 + $0x101] sm:$0xff]
        %v3256 = vld [vmem:[#allocation3 + $0x109] sm:$0xff]
        %v3257 = vld [vmem:[#allocation3 + $0x111] sm:$0xff]
        %v3258 = vld [vmem:[#allocation3 + $0x119] sm:$0x3f]
        %v3259 = vpack.c.bf16 %v3224, %v3223
        %v3260 = vpack.c.bf16 %v3226, %v3225
        %v3261 = vpack.c.bf16 %v3228, %v3227
        %v3262 = vpack.c.bf16 %v3230, %v3229
        %v3263 = vpack.c.bf16 %v3232, %v3231
        %v3264 = vpack.c.bf16 %v3234, %v3233
        %v3265 = vpack.c.bf16 %v3236, %v3235
        %v3266 = vpack.c.bf16 %v3238, %v3237
        %v3267 = vpack.c.bf16 %v3240, %v3239
        %v3268 = vpack.c.bf16 %v3242, %v3241
        %v3269 = vpack.c.bf16 %v3244, %v3243
        %v3270 = vpack.c.bf16 %v3246, %v3245
        %v3271 = vpack.c.bf16 %v3248, %v3247
        %v3272 = vpack.c.bf16 %v3250, %v3249
        %v3273 = vpack.c.bf16 %v3252, %v3251
        %v3274 = vpack.c.bf16 %v3254, %v3253
        %v3275 = vpack.c.bf16 %v3256, %v3255
        %v3276 = vpack.c.bf16 %v3258, %v3257
        %v3277 = vld [vmem:[%s6 + $0x40] sm:$0xf]
        %v3278 = vld [vmem:[%s6 + $0x44] sm:$0xf]
        %v3279 = vld [vmem:[%s6 + $0x48] sm:$0xf]
        %v3280 = vld [vmem:[%s6 + $0x4c] sm:$0xf]
        %v3281 = vld [vmem:[%s6 + $0x50] sm:$0xf]
        %v3282 = vld [vmem:[%s6 + $0x54] sm:$0xf]
        %v3283 = vld [vmem:[%s6 + $0x58] sm:$0xf]
        %v3284 = vld [vmem:[%s6 + $0x5c] sm:$0xf]
        %v3285 = vld [vmem:[%s6 + $0x60] sm:$0xf]
        %v3286 = vld [vmem:[%s6 + $0x64] sm:$0xf]
        %v3287 = vld [vmem:[%s6 + $0x68] sm:$0xf]
        %v3288 = vld [vmem:[%s6 + $0x6c] sm:$0xf]
        %v3289 = vld [vmem:[%s6 + $0x70] sm:$0xf]
        %v3290 = vld [vmem:[%s6 + $0x74] sm:$0xf]
        %v3291 = vld [vmem:[%s6 + $0x78] sm:$0xf]
        %v3292 = vld [vmem:[%s6 + $0x7c] sm:$0xf]
        %v3309 = vunpack.c.l.b16 %v3277
        %v3310 = vunpack.c.l.b16 %v3278
        %v3311 = vunpack.c.l.b16 %v3279
        %v3312 = vunpack.c.l.b16 %v3280
        %v3313 = vunpack.c.l.b16 %v3281
        %v3314 = vunpack.c.l.b16 %v3282
        %v3315 = vunpack.c.l.b16 %v3283
        %v3316 = vunpack.c.l.b16 %v3284
        %v3317 = vunpack.c.l.b16 %v3285
        %v3318 = vunpack.c.l.b16 %v3286
        %v3319 = vunpack.c.l.b16 %v3287
        %v3320 = vunpack.c.l.b16 %v3288
        %v3321 = vunpack.c.l.b16 %v3289
        %v3322 = vunpack.c.l.b16 %v3290
        %v3323 = vunpack.c.l.b16 %v3291
        %v3324 = vunpack.c.l.b16 %v3292
        %v3325 = vpack.c.b16 %v3310, %v3309
        %v3326 = vpack.c.b16 %v3312, %v3311
        %v3327 = vpack.c.b16 %v3314, %v3313
        %v3328 = vpack.c.b16 %v3316, %v3315
        %v3329 = vpack.c.b16 %v3318, %v3317
        %v3330 = vpack.c.b16 %v3320, %v3319
        %v3331 = vpack.c.b16 %v3322, %v3321
        %v3332 = vpack.c.b16 %v3324, %v3323
        %3341 = vmatpush.bf16.msra.mxu0 %v3332
        %3342 = vmatpush.bf16.msra.mxu0 %v3331
        %3343 = vmatpush.bf16.msra.mxu0 %v3330
        %3344 = vmatpush.bf16.msra.mxu0 %v3329
        %3345 = vmatpush.bf16.msra.mxu0 %v3328
        %3346 = vmatpush.bf16.msra.mxu0 %v3327
        %3347 = vmatpush.bf16.msra.mxu0 %v3326
        %3348 = vmatpush.bf16.msra.mxu0 %v3325
        %3349 = vmatmul.bf16.gmra.mxu0 %v3259
        %v3350 = vpop.f32.mrf.mxu0
        %v3351 = vadd.f32 0.0, %v3350
        %v3352 = vpop.f32.mrf.mxu0
        %v3353 = vadd.f32 0.0, %v3352
        %3354 = vmatmul.bf16.gmra.mxu0 %v3260
        %v3355 = vpop.f32.mrf.mxu0
        %v3356 = vadd.f32 0.0, %v3355
        %v3357 = vpop.f32.mrf.mxu0
        %v3358 = vadd.f32 0.0, %v3357
        %3359 = vmatmul.bf16.gmra.mxu0 %v3261
        %v3360 = vpop.f32.mrf.mxu0
        %v3361 = vadd.f32 0.0, %v3360
        %v3362 = vpop.f32.mrf.mxu0
        %v3363 = vadd.f32 0.0, %v3362
        %3364 = vmatmul.bf16.gmra.mxu0 %v3262
        %v3365 = vpop.f32.mrf.mxu0
        %v3366 = vadd.f32 0.0, %v3365
        %v3367 = vpop.f32.mrf.mxu0
        %v3368 = vadd.f32 0.0, %v3367
        %3369 = vmatmul.bf16.gmra.mxu0 %v3263
        %v3370 = vpop.f32.mrf.mxu0
        %v3371 = vadd.f32 0.0, %v3370
        %v3372 = vpop.f32.mrf.mxu0
        %v3373 = vadd.f32 0.0, %v3372
        %3374 = vmatmul.bf16.gmra.mxu0 %v3264
        %v3375 = vpop.f32.mrf.mxu0
        %v3376 = vadd.f32 0.0, %v3375
        %v3377 = vpop.f32.mrf.mxu0
        %v3378 = vadd.f32 0.0, %v3377
        %3379 = vmatmul.bf16.gmra.mxu0 %v3265
        %v3380 = vpop.f32.mrf.mxu0
        %v3381 = vadd.f32 0.0, %v3380
        %v3382 = vpop.f32.mrf.mxu0
        %v3383 = vadd.f32 0.0, %v3382
        %3384 = vmatmul.bf16.gmra.mxu0 %v3266
        %v3385 = vpop.f32.mrf.mxu0
        %v3386 = vadd.f32 0.0, %v3385
        %v3387 = vpop.f32.mrf.mxu0
        %v3388 = vadd.f32 0.0, %v3387
        %3389 = vmatmul.bf16.gmra.mxu0 %v3267
        %v3390 = vpop.f32.mrf.mxu0
        %v3391 = vadd.f32 0.0, %v3390
        %v3392 = vpop.f32.mrf.mxu0
        %v3393 = vadd.f32 0.0, %v3392
        %3394 = vmatmul.bf16.gmra.mxu0 %v3268
        %v3395 = vpop.f32.mrf.mxu0
        %v3396 = vadd.f32 0.0, %v3395
        %v3397 = vpop.f32.mrf.mxu0
        %v3398 = vadd.f32 0.0, %v3397
        %3399 = vmatmul.bf16.gmra.mxu0 %v3269
        %v3400 = vpop.f32.mrf.mxu0
        %v3401 = vadd.f32 0.0, %v3400
        %v3402 = vpop.f32.mrf.mxu0
        %v3403 = vadd.f32 0.0, %v3402
        %3404 = vmatmul.bf16.gmra.mxu0 %v3270
        %v3405 = vpop.f32.mrf.mxu0
        %v3406 = vadd.f32 0.0, %v3405
        %v3407 = vpop.f32.mrf.mxu0
        %v3408 = vadd.f32 0.0, %v3407
        %3409 = vmatmul.bf16.gmra.mxu0 %v3271
        %v3410 = vpop.f32.mrf.mxu0
        %v3411 = vadd.f32 0.0, %v3410
        %v3412 = vpop.f32.mrf.mxu0
        %v3413 = vadd.f32 0.0, %v3412
        %3414 = vmatmul.bf16.gmra.mxu0 %v3272
        %v3415 = vpop.f32.mrf.mxu0
        %v3416 = vadd.f32 0.0, %v3415
        %v3417 = vpop.f32.mrf.mxu0
        %v3418 = vadd.f32 0.0, %v3417
        %3419 = vmatmul.bf16.gmra.mxu0 %v3273
        %v3420 = vpop.f32.mrf.mxu0
        %v3421 = vadd.f32 0.0, %v3420
        %v3422 = vpop.f32.mrf.mxu0
        %v3423 = vadd.f32 0.0, %v3422
        %3424 = vmatmul.bf16.gmra.mxu0 %v3274
        %v3425 = vpop.f32.mrf.mxu0
        %v3426 = vadd.f32 0.0, %v3425
        %v3427 = vpop.f32.mrf.mxu0
        %v3428 = vadd.f32 0.0, %v3427
        %3429 = vmatmul.bf16.gmra.mxu0 %v3275
        %v3430 = vpop.f32.mrf.mxu0
        %v3431 = vadd.f32 0.0, %v3430
        %v3432 = vpop.f32.mrf.mxu0
        %v3433 = vadd.f32 0.0, %v3432
        %3434 = vmatmul.bf16.gmra.mxu0 %v3276
        %v3435 = vpop.f32.mrf.mxu0
        %v3436 = vadd.f32 0.0, %v3435
        %v3437 = vpop.f32.mrf.mxu0
        %v3438 = vadd.f32 0.0, %v3437
        %3439 = vdwg.mxu0
        %v3456 = vunpack.c.l.b16 %v3207
        %v3457 = vunpack.c.l.b16 %v3208
        %v3458 = vunpack.c.l.b16 %v3209
        %v3459 = vunpack.c.l.b16 %v3210
        %v3460 = vunpack.c.l.b16 %v3211
        %v3461 = vunpack.c.l.b16 %v3212
        %v3462 = vunpack.c.l.b16 %v3213
        %v3463 = vunpack.c.l.b16 %v3214
        %v3464 = vunpack.c.l.b16 %v3215
        %v3465 = vunpack.c.l.b16 %v3216
        %v3466 = vunpack.c.l.b16 %v3217
        %v3467 = vunpack.c.l.b16 %v3218
        %v3468 = vunpack.c.l.b16 %v3219
        %v3469 = vunpack.c.l.b16 %v3220
        %v3470 = vunpack.c.l.b16 %v3221
        %v3471 = vunpack.c.l.b16 %v3222
        %v3472 = vpack.c.b16 %v3457, %v3456
        %v3473 = vpack.c.b16 %v3459, %v3458
        %v3474 = vpack.c.b16 %v3461, %v3460
        %v3475 = vpack.c.b16 %v3463, %v3462
        %v3476 = vpack.c.b16 %v3465, %v3464
        %v3477 = vpack.c.b16 %v3467, %v3466
        %v3478 = vpack.c.b16 %v3469, %v3468
        %v3479 = vpack.c.b16 %v3471, %v3470
        %3488 = vmatpush.bf16.msra.mxu0 %v3479
        %3489 = vmatpush.bf16.msra.mxu0 %v3478
        %3490 = vmatpush.bf16.msra.mxu0 %v3477
        %3491 = vmatpush.bf16.msra.mxu0 %v3476
        %3492 = vmatpush.bf16.msra.mxu0 %v3475
        %3493 = vmatpush.bf16.msra.mxu0 %v3474
        %3494 = vmatpush.bf16.msra.mxu0 %v3473
        %3495 = vmatpush.bf16.msra.mxu0 %v3472
        %3496 = vmatmul.bf16.gmra.mxu0 %v3189
        %v3497 = vpop.f32.mrf.mxu0
        %v3498 = vadd.f32 %v3351, %v3497
        %v3499 = vpop.f32.mrf.mxu0
        %v3500 = vadd.f32 %v3353, %v3499
        %3501 = vmatmul.bf16.gmra.mxu0 %v3190
        %v3502 = vpop.f32.mrf.mxu0
        %v3503 = vadd.f32 %v3356, %v3502
        %v3504 = vpop.f32.mrf.mxu0
        %v3505 = vadd.f32 %v3358, %v3504
        %3506 = vmatmul.bf16.gmra.mxu0 %v3191
        %v3507 = vpop.f32.mrf.mxu0
        %v3508 = vadd.f32 %v3361, %v3507
        %v3509 = vpop.f32.mrf.mxu0
        %v3510 = vadd.f32 %v3363, %v3509
        %3511 = vmatmul.bf16.gmra.mxu0 %v3192
        %v3512 = vpop.f32.mrf.mxu0
        %v3513 = vadd.f32 %v3366, %v3512
        %v3514 = vpop.f32.mrf.mxu0
        %v3515 = vadd.f32 %v3368, %v3514
        %3516 = vmatmul.bf16.gmra.mxu0 %v3193
        %v3517 = vpop.f32.mrf.mxu0
        %v3518 = vadd.f32 %v3371, %v3517
        %v3519 = vpop.f32.mrf.mxu0
        %v3520 = vadd.f32 %v3373, %v3519
        %3521 = vmatmul.bf16.gmra.mxu0 %v3194
        %v3522 = vpop.f32.mrf.mxu0
        %v3523 = vadd.f32 %v3376, %v3522
        %v3524 = vpop.f32.mrf.mxu0
        %v3525 = vadd.f32 %v3378, %v3524
        %3526 = vmatmul.bf16.gmra.mxu0 %v3195
        %v3527 = vpop.f32.mrf.mxu0
        %v3528 = vadd.f32 %v3381, %v3527
        %v3529 = vpop.f32.mrf.mxu0
        %v3530 = vadd.f32 %v3383, %v3529
        %3531 = vmatmul.bf16.gmra.mxu0 %v3196
        %v3532 = vpop.f32.mrf.mxu0
        %v3533 = vadd.f32 %v3386, %v3532
        %v3534 = vpop.f32.mrf.mxu0
        %v3535 = vadd.f32 %v3388, %v3534
        %3536 = vmatmul.bf16.gmra.mxu0 %v3197
        %v3537 = vpop.f32.mrf.mxu0
        %v3538 = vadd.f32 %v3391, %v3537
        %v3539 = vpop.f32.mrf.mxu0
        %v3540 = vadd.f32 %v3393, %v3539
        %3541 = vmatmul.bf16.gmra.mxu0 %v3198
        %v3542 = vpop.f32.mrf.mxu0
        %v3543 = vadd.f32 %v3396, %v3542
        %v3544 = vpop.f32.mrf.mxu0
        %v3545 = vadd.f32 %v3398, %v3544
        %3546 = vmatmul.bf16.gmra.mxu0 %v3199
        %v3547 = vpop.f32.mrf.mxu0
        %v3548 = vadd.f32 %v3401, %v3547
        %v3549 = vpop.f32.mrf.mxu0
        %v3550 = vadd.f32 %v3403, %v3549
        %3551 = vmatmul.bf16.gmra.mxu0 %v3200
        %v3552 = vpop.f32.mrf.mxu0
        %v3553 = vadd.f32 %v3406, %v3552
        %v3554 = vpop.f32.mrf.mxu0
        %v3555 = vadd.f32 %v3408, %v3554
        %3556 = vmatmul.bf16.gmra.mxu0 %v3201
        %v3557 = vpop.f32.mrf.mxu0
        %v3558 = vadd.f32 %v3411, %v3557
        %v3559 = vpop.f32.mrf.mxu0
        %v3560 = vadd.f32 %v3413, %v3559
        %3561 = vmatmul.bf16.gmra.mxu0 %v3202
        %v3562 = vpop.f32.mrf.mxu0
        %v3563 = vadd.f32 %v3416, %v3562
        %v3564 = vpop.f32.mrf.mxu0
        %v3565 = vadd.f32 %v3418, %v3564
        %3566 = vmatmul.bf16.gmra.mxu0 %v3203
        %v3567 = vpop.f32.mrf.mxu0
        %v3568 = vadd.f32 %v3421, %v3567
        %v3569 = vpop.f32.mrf.mxu0
        %v3570 = vadd.f32 %v3423, %v3569
        %3571 = vmatmul.bf16.gmra.mxu0 %v3204
        %v3572 = vpop.f32.mrf.mxu0
        %v3573 = vadd.f32 %v3426, %v3572
        %v3574 = vpop.f32.mrf.mxu0
        %v3575 = vadd.f32 %v3428, %v3574
        %3576 = vmatmul.bf16.gmra.mxu0 %v3205
        %v3577 = vpop.f32.mrf.mxu0
        %v3578 = vadd.f32 %v3431, %v3577
        %v3579 = vpop.f32.mrf.mxu0
        %v3580 = vadd.f32 %v3433, %v3579
        %3581 = vmatmul.bf16.gmra.mxu0 %v3206
        %v3582 = vpop.f32.mrf.mxu0
        %v3583 = vadd.f32 %v3436, %v3582
        %v3584 = vpop.f32.mrf.mxu0
        %v3585 = vadd.f32 %v3438, %v3584
        %3586 = vdwg.mxu0
        %v3587 = vld [vmem:[#allocation3 + $0x2] sm:$0xff]
        %v3588 = vld [vmem:[#allocation3 + $0xa] sm:$0xff]
        %v3589 = vld [vmem:[#allocation3 + $0x12] sm:$0xff]
        %v3590 = vld [vmem:[#allocation3 + $0x1a] sm:$0xff]
        %v3591 = vld [vmem:[#allocation3 + $0x22] sm:$0xff]
        %v3592 = vld [vmem:[#allocation3 + $0x2a] sm:$0xff]
        %v3593 = vld [vmem:[#allocation3 + $0x32] sm:$0xff]
        %v3594 = vld [vmem:[#allocation3 + $0x3a] sm:$0xff]
        %v3595 = vld [vmem:[#allocation3 + $0x42] sm:$0xff]
        %v3596 = vld [vmem:[#allocation3 + $0x4a] sm:$0xff]
        %v3597 = vld [vmem:[#allocation3 + $0x52] sm:$0xff]
        %v3598 = vld [vmem:[#allocation3 + $0x5a] sm:$0xff]
        %v3599 = vld [vmem:[#allocation3 + $0x62] sm:$0xff]
        %v3600 = vld [vmem:[#allocation3 + $0x6a] sm:$0xff]
        %v3601 = vld [vmem:[#allocation3 + $0x72] sm:$0xff]
        %v3602 = vld [vmem:[#allocation3 + $0x7a] sm:$0xff]
        %v3603 = vld [vmem:[#allocation3 + $0x82] sm:$0xff]
        %v3604 = vld [vmem:[#allocation3 + $0x8a] sm:$0xff]
        %v3605 = vld [vmem:[#allocation3 + $0x92] sm:$0xff]
        %v3606 = vld [vmem:[#allocation3 + $0x9a] sm:$0xff]
        %v3607 = vld [vmem:[#allocation3 + $0xa2] sm:$0xff]
        %v3608 = vld [vmem:[#allocation3 + $0xaa] sm:$0xff]
        %v3609 = vld [vmem:[#allocation3 + $0xb2] sm:$0xff]
        %v3610 = vld [vmem:[#allocation3 + $0xba] sm:$0xff]
        %v3611 = vld [vmem:[#allocation3 + $0xc2] sm:$0xff]
        %v3612 = vld [vmem:[#allocation3 + $0xca] sm:$0xff]
        %v3613 = vld [vmem:[#allocation3 + $0xd2] sm:$0xff]
        %v3614 = vld [vmem:[#allocation3 + $0xda] sm:$0xff]
        %v3615 = vld [vmem:[#allocation3 + $0xe2] sm:$0xff]
        %v3616 = vld [vmem:[#allocation3 + $0xea] sm:$0xff]
        %v3617 = vld [vmem:[#allocation3 + $0xf2] sm:$0xff]
        %v3618 = vld [vmem:[#allocation3 + $0xfa] sm:$0xff]
        %v3619 = vld [vmem:[#allocation3 + $0x102] sm:$0xff]
        %v3620 = vld [vmem:[#allocation3 + $0x10a] sm:$0xff]
        %v3621 = vld [vmem:[#allocation3 + $0x112] sm:$0xff]
        %v3622 = vld [vmem:[#allocation3 + $0x11a] sm:$0x3f]
        %v3623 = vpack.c.bf16 %v3588, %v3587
        %v3624 = vpack.c.bf16 %v3590, %v3589
        %v3625 = vpack.c.bf16 %v3592, %v3591
        %v3626 = vpack.c.bf16 %v3594, %v3593
        %v3627 = vpack.c.bf16 %v3596, %v3595
        %v3628 = vpack.c.bf16 %v3598, %v3597
        %v3629 = vpack.c.bf16 %v3600, %v3599
        %v3630 = vpack.c.bf16 %v3602, %v3601
        %v3631 = vpack.c.bf16 %v3604, %v3603
        %v3632 = vpack.c.bf16 %v3606, %v3605
        %v3633 = vpack.c.bf16 %v3608, %v3607
        %v3634 = vpack.c.bf16 %v3610, %v3609
        %v3635 = vpack.c.bf16 %v3612, %v3611
        %v3636 = vpack.c.bf16 %v3614, %v3613
        %v3637 = vpack.c.bf16 %v3616, %v3615
        %v3638 = vpack.c.bf16 %v3618, %v3617
        %v3639 = vpack.c.bf16 %v3620, %v3619
        %v3640 = vpack.c.bf16 %v3622, %v3621
        %v3641 = vld [vmem:[%s6 + $0x80] sm:$0xf]
        %v3642 = vld [vmem:[%s6 + $0x84] sm:$0xf]
        %v3643 = vld [vmem:[%s6 + $0x88] sm:$0xf]
        %v3644 = vld [vmem:[%s6 + $0x8c] sm:$0xf]
        %v3645 = vld [vmem:[%s6 + $0x90] sm:$0xf]
        %v3646 = vld [vmem:[%s6 + $0x94] sm:$0xf]
        %v3647 = vld [vmem:[%s6 + $0x98] sm:$0xf]
        %v3648 = vld [vmem:[%s6 + $0x9c] sm:$0xf]
        %v3649 = vld [vmem:[%s6 + $0xa0] sm:$0xf]
        %v3650 = vld [vmem:[%s6 + $0xa4] sm:$0xf]
        %v3651 = vld [vmem:[%s6 + $0xa8] sm:$0xf]
        %v3652 = vld [vmem:[%s6 + $0xac] sm:$0xf]
        %v3653 = vld [vmem:[%s6 + $0xb0] sm:$0xf]
        %v3654 = vld [vmem:[%s6 + $0xb4] sm:$0xf]
        %v3655 = vld [vmem:[%s6 + $0xb8] sm:$0xf]
        %v3656 = vld [vmem:[%s6 + $0xbc] sm:$0xf]
        %v3673 = vunpack.c.l.b16 %v3641
        %v3674 = vunpack.c.l.b16 %v3642
        %v3675 = vunpack.c.l.b16 %v3643
        %v3676 = vunpack.c.l.b16 %v3644
        %v3677 = vunpack.c.l.b16 %v3645
        %v3678 = vunpack.c.l.b16 %v3646
        %v3679 = vunpack.c.l.b16 %v3647
        %v3680 = vunpack.c.l.b16 %v3648
        %v3681 = vunpack.c.l.b16 %v3649
        %v3682 = vunpack.c.l.b16 %v3650
        %v3683 = vunpack.c.l.b16 %v3651
        %v3684 = vunpack.c.l.b16 %v3652
        %v3685 = vunpack.c.l.b16 %v3653
        %v3686 = vunpack.c.l.b16 %v3654
        %v3687 = vunpack.c.l.b16 %v3655
        %v3688 = vunpack.c.l.b16 %v3656
        %v3689 = vpack.c.b16 %v3674, %v3673
        %v3690 = vpack.c.b16 %v3676, %v3675
        %v3691 = vpack.c.b16 %v3678, %v3677
        %v3692 = vpack.c.b16 %v3680, %v3679
        %v3693 = vpack.c.b16 %v3682, %v3681
        %v3694 = vpack.c.b16 %v3684, %v3683
        %v3695 = vpack.c.b16 %v3686, %v3685
        %v3696 = vpack.c.b16 %v3688, %v3687
        %3705 = vmatpush.bf16.msra.mxu0 %v3696
        %3706 = vmatpush.bf16.msra.mxu0 %v3695
        %3707 = vmatpush.bf16.msra.mxu0 %v3694
        %3708 = vmatpush.bf16.msra.mxu0 %v3693
        %3709 = vmatpush.bf16.msra.mxu0 %v3692
        %3710 = vmatpush.bf16.msra.mxu0 %v3691
        %3711 = vmatpush.bf16.msra.mxu0 %v3690
        %3712 = vmatpush.bf16.msra.mxu0 %v3689
        %3713 = vmatmul.bf16.gmra.mxu0 %v3623
        %v3714 = vpop.f32.mrf.mxu0
        %v3715 = vadd.f32 0.0, %v3714
        %v3716 = vpop.f32.mrf.mxu0
        %v3717 = vadd.f32 0.0, %v3716
        %3718 = vmatmul.bf16.gmra.mxu0 %v3624
        %v3719 = vpop.f32.mrf.mxu0
        %v3720 = vadd.f32 0.0, %v3719
        %v3721 = vpop.f32.mrf.mxu0
        %v3722 = vadd.f32 0.0, %v3721
        %3723 = vmatmul.bf16.gmra.mxu0 %v3625
        %v3724 = vpop.f32.mrf.mxu0
        %v3725 = vadd.f32 0.0, %v3724
        %v3726 = vpop.f32.mrf.mxu0
        %v3727 = vadd.f32 0.0, %v3726
        %3728 = vmatmul.bf16.gmra.mxu0 %v3626
        %v3729 = vpop.f32.mrf.mxu0
        %v3730 = vadd.f32 0.0, %v3729
        %v3731 = vpop.f32.mrf.mxu0
        %v3732 = vadd.f32 0.0, %v3731
        %3733 = vmatmul.bf16.gmra.mxu0 %v3627
        %v3734 = vpop.f32.mrf.mxu0
        %v3735 = vadd.f32 0.0, %v3734
        %v3736 = vpop.f32.mrf.mxu0
        %v3737 = vadd.f32 0.0, %v3736
        %3738 = vmatmul.bf16.gmra.mxu0 %v3628
        %v3739 = vpop.f32.mrf.mxu0
        %v3740 = vadd.f32 0.0, %v3739
        %v3741 = vpop.f32.mrf.mxu0
        %v3742 = vadd.f32 0.0, %v3741
        %3743 = vmatmul.bf16.gmra.mxu0 %v3629
        %v3744 = vpop.f32.mrf.mxu0
        %v3745 = vadd.f32 0.0, %v3744
        %v3746 = vpop.f32.mrf.mxu0
        %v3747 = vadd.f32 0.0, %v3746
        %3748 = vmatmul.bf16.gmra.mxu0 %v3630
        %v3749 = vpop.f32.mrf.mxu0
        %v3750 = vadd.f32 0.0, %v3749
        %v3751 = vpop.f32.mrf.mxu0
        %v3752 = vadd.f32 0.0, %v3751
        %3753 = vmatmul.bf16.gmra.mxu0 %v3631
        %v3754 = vpop.f32.mrf.mxu0
        %v3755 = vadd.f32 0.0, %v3754
        %v3756 = vpop.f32.mrf.mxu0
        %v3757 = vadd.f32 0.0, %v3756
        %3758 = vmatmul.bf16.gmra.mxu0 %v3632
        %v3759 = vpop.f32.mrf.mxu0
        %v3760 = vadd.f32 0.0, %v3759
        %v3761 = vpop.f32.mrf.mxu0
        %v3762 = vadd.f32 0.0, %v3761
        %3763 = vmatmul.bf16.gmra.mxu0 %v3633
        %v3764 = vpop.f32.mrf.mxu0
        %v3765 = vadd.f32 0.0, %v3764
        %v3766 = vpop.f32.mrf.mxu0
        %v3767 = vadd.f32 0.0, %v3766
        %3768 = vmatmul.bf16.gmra.mxu0 %v3634
        %v3769 = vpop.f32.mrf.mxu0
        %v3770 = vadd.f32 0.0, %v3769
        %v3771 = vpop.f32.mrf.mxu0
        %v3772 = vadd.f32 0.0, %v3771
        %3773 = vmatmul.bf16.gmra.mxu0 %v3635
        %v3774 = vpop.f32.mrf.mxu0
        %v3775 = vadd.f32 0.0, %v3774
        %v3776 = vpop.f32.mrf.mxu0
        %v3777 = vadd.f32 0.0, %v3776
        %3778 = vmatmul.bf16.gmra.mxu0 %v3636
        %v3779 = vpop.f32.mrf.mxu0
        %v3780 = vadd.f32 0.0, %v3779
        %v3781 = vpop.f32.mrf.mxu0
        %v3782 = vadd.f32 0.0, %v3781
        %3783 = vmatmul.bf16.gmra.mxu0 %v3637
        %v3784 = vpop.f32.mrf.mxu0
        %v3785 = vadd.f32 0.0, %v3784
        %v3786 = vpop.f32.mrf.mxu0
        %v3787 = vadd.f32 0.0, %v3786
        %3788 = vmatmul.bf16.gmra.mxu0 %v3638
        %v3789 = vpop.f32.mrf.mxu0
        %v3790 = vadd.f32 0.0, %v3789
        %v3791 = vpop.f32.mrf.mxu0
        %v3792 = vadd.f32 0.0, %v3791
        %3793 = vmatmul.bf16.gmra.mxu0 %v3639
        %v3794 = vpop.f32.mrf.mxu0
        %v3795 = vadd.f32 0.0, %v3794
        %v3796 = vpop.f32.mrf.mxu0
        %v3797 = vadd.f32 0.0, %v3796
        %3798 = vmatmul.bf16.gmra.mxu0 %v3640
        %v3799 = vpop.f32.mrf.mxu0
        %v3800 = vadd.f32 0.0, %v3799
        %v3801 = vpop.f32.mrf.mxu0
        %v3802 = vadd.f32 0.0, %v3801
        %3803 = vdwg.mxu0
        %v3804 = vadd.f32 %v3498, %v3715
        %v3805 = vadd.f32 %v3500, %v3717
        %v3806 = vadd.f32 %v3503, %v3720
        %v3807 = vadd.f32 %v3505, %v3722
        %v3808 = vadd.f32 %v3508, %v3725
        %v3809 = vadd.f32 %v3510, %v3727
        %v3810 = vadd.f32 %v3513, %v3730
        %v3811 = vadd.f32 %v3515, %v3732
        %v3812 = vadd.f32 %v3518, %v3735
        %v3813 = vadd.f32 %v3520, %v3737
        %v3814 = vadd.f32 %v3523, %v3740
        %v3815 = vadd.f32 %v3525, %v3742
        %v3816 = vadd.f32 %v3528, %v3745
        %v3817 = vadd.f32 %v3530, %v3747
        %v3818 = vadd.f32 %v3533, %v3750
        %v3819 = vadd.f32 %v3535, %v3752
        %v3820 = vadd.f32 %v3538, %v3755
        %v3821 = vadd.f32 %v3540, %v3757
        %v3822 = vadd.f32 %v3543, %v3760
        %v3823 = vadd.f32 %v3545, %v3762
        %v3824 = vadd.f32 %v3548, %v3765
        %v3825 = vadd.f32 %v3550, %v3767
        %v3826 = vadd.f32 %v3553, %v3770
        %v3827 = vadd.f32 %v3555, %v3772
        %v3828 = vadd.f32 %v3558, %v3775
        %v3829 = vadd.f32 %v3560, %v3777
        %v3830 = vadd.f32 %v3563, %v3780
        %v3831 = vadd.f32 %v3565, %v3782
        %v3832 = vadd.f32 %v3568, %v3785
        %v3833 = vadd.f32 %v3570, %v3787
        %v3834 = vadd.f32 %v3573, %v3790
        %v3835 = vadd.f32 %v3575, %v3792
        %v3836 = vadd.f32 %v3578, %v3795
        %v3837 = vadd.f32 %v3580, %v3797
        %v3838 = vadd.f32 %v3583, %v3800
        %v3839 = vadd.f32 %v3585, %v3802
        %v3840 = vld [vmem:[#allocation3 + $0x12] sm:$0xff]
        %v3841 = vld [vmem:[#allocation3 + $0x1a] sm:$0xff]
        %v3842 = vld [vmem:[#allocation3 + $0x22] sm:$0xff]
        %v3843 = vld [vmem:[#allocation3 + $0x2a] sm:$0xff]
        %v3844 = vld [vmem:[#allocation3 + $0x32] sm:$0xff]
        %v3845 = vld [vmem:[#allocation3 + $0x3a] sm:$0xff]
        %v3846 = vld [vmem:[#allocation3 + $0x42] sm:$0xff]
        %v3847 = vld [vmem:[#allocation3 + $0x4a] sm:$0xff]
        %v3848 = vld [vmem:[#allocation3 + $0x52] sm:$0xff]
        %v3849 = vld [vmem:[#allocation3 + $0x5a] sm:$0xff]
        %v3850 = vld [vmem:[#allocation3 + $0x62] sm:$0xff]
        %v3851 = vld [vmem:[#allocation3 + $0x6a] sm:$0xff]
        %v3852 = vld [vmem:[#allocation3 + $0x72] sm:$0xff]
        %v3853 = vld [vmem:[#allocation3 + $0x7a] sm:$0xff]
        %v3854 = vld [vmem:[#allocation3 + $0x82] sm:$0xff]
        %v3855 = vld [vmem:[#allocation3 + $0x8a] sm:$0xff]
        %v3856 = vld [vmem:[#allocation3 + $0x92] sm:$0xff]
        %v3857 = vld [vmem:[#allocation3 + $0x9a] sm:$0xff]
        %v3858 = vld [vmem:[#allocation3 + $0xa2] sm:$0xff]
        %v3859 = vld [vmem:[#allocation3 + $0xaa] sm:$0xff]
        %v3860 = vld [vmem:[#allocation3 + $0xb2] sm:$0xff]
        %v3861 = vld [vmem:[#allocation3 + $0xba] sm:$0xff]
        %v3862 = vld [vmem:[#allocation3 + $0xc2] sm:$0xff]
        %v3863 = vld [vmem:[#allocation3 + $0xca] sm:$0xff]
        %v3864 = vld [vmem:[#allocation3 + $0xd2] sm:$0xff]
        %v3865 = vld [vmem:[#allocation3 + $0xda] sm:$0xff]
        %v3866 = vld [vmem:[#allocation3 + $0xe2] sm:$0xff]
        %v3867 = vld [vmem:[#allocation3 + $0xea] sm:$0xff]
        %v3868 = vld [vmem:[#allocation3 + $0xf2] sm:$0xff]
        %v3869 = vld [vmem:[#allocation3 + $0xfa] sm:$0xff]
        %v3870 = vld [vmem:[#allocation3 + $0x102] sm:$0xff]
        %v3871 = vld [vmem:[#allocation3 + $0x10a] sm:$0xff]
        %v3872 = vld [vmem:[#allocation3 + $0x112] sm:$0xff]
        %v3873 = vld [vmem:[#allocation3 + $0x11a] sm:$0xff]
        %v3874 = vld [vmem:[#allocation3 + $0x122] sm:$0xff]
        %v3875 = vld [vmem:[#allocation3 + $0x12a] sm:$0x3f]
        %v3876 = vpack.c.bf16 %v3841, %v3840
        %v3877 = vpack.c.bf16 %v3843, %v3842
        %v3878 = vpack.c.bf16 %v3845, %v3844
        %v3879 = vpack.c.bf16 %v3847, %v3846
        %v3880 = vpack.c.bf16 %v3849, %v3848
        %v3881 = vpack.c.bf16 %v3851, %v3850
        %v3882 = vpack.c.bf16 %v3853, %v3852
        %v3883 = vpack.c.bf16 %v3855, %v3854
        %v3884 = vpack.c.bf16 %v3857, %v3856
        %v3885 = vpack.c.bf16 %v3859, %v3858
        %v3886 = vpack.c.bf16 %v3861, %v3860
        %v3887 = vpack.c.bf16 %v3863, %v3862
        %v3888 = vpack.c.bf16 %v3865, %v3864
        %v3889 = vpack.c.bf16 %v3867, %v3866
        %v3890 = vpack.c.bf16 %v3869, %v3868
        %v3891 = vpack.c.bf16 %v3871, %v3870
        %v3892 = vpack.c.bf16 %v3873, %v3872
        %v3893 = vpack.c.bf16 %v3875, %v3874
        %v3894 = vld [vmem:[%s6 + $0xc0] sm:$0xf]
        %v3895 = vld [vmem:[%s6 + $0xc4] sm:$0xf]
        %v3896 = vld [vmem:[%s6 + $0xc8] sm:$0xf]
        %v3897 = vld [vmem:[%s6 + $0xcc] sm:$0xf]
        %v3898 = vld [vmem:[%s6 + $0xd0] sm:$0xf]
        %v3899 = vld [vmem:[%s6 + $0xd4] sm:$0xf]
        %v3900 = vld [vmem:[%s6 + $0xd8] sm:$0xf]
        %v3901 = vld [vmem:[%s6 + $0xdc] sm:$0xf]
        %v3902 = vld [vmem:[%s6 + $0xe0] sm:$0xf]
        %v3903 = vld [vmem:[%s6 + $0xe4] sm:$0xf]
        %v3904 = vld [vmem:[%s6 + $0xe8] sm:$0xf]
        %v3905 = vld [vmem:[%s6 + $0xec] sm:$0xf]
        %v3906 = vld [vmem:[%s6 + $0xf0] sm:$0xf]
        %v3907 = vld [vmem:[%s6 + $0xf4] sm:$0xf]
        %v3908 = vld [vmem:[%s6 + $0xf8] sm:$0xf]
        %v3909 = vld [vmem:[%s6 + $0xfc] sm:$0xf]
        %v3926 = vunpack.c.l.b16 %v3894
        %v3927 = vunpack.c.l.b16 %v3895
        %v3928 = vunpack.c.l.b16 %v3896
        %v3929 = vunpack.c.l.b16 %v3897
        %v3930 = vunpack.c.l.b16 %v3898
        %v3931 = vunpack.c.l.b16 %v3899
        %v3932 = vunpack.c.l.b16 %v3900
        %v3933 = vunpack.c.l.b16 %v3901
        %v3934 = vunpack.c.l.b16 %v3902
        %v3935 = vunpack.c.l.b16 %v3903
        %v3936 = vunpack.c.l.b16 %v3904
        %v3937 = vunpack.c.l.b16 %v3905
        %v3938 = vunpack.c.l.b16 %v3906
        %v3939 = vunpack.c.l.b16 %v3907
        %v3940 = vunpack.c.l.b16 %v3908
        %v3941 = vunpack.c.l.b16 %v3909
        %v3942 = vpack.c.b16 %v3927, %v3926
        %v3943 = vpack.c.b16 %v3929, %v3928
        %v3944 = vpack.c.b16 %v3931, %v3930
        %v3945 = vpack.c.b16 %v3933, %v3932
        %v3946 = vpack.c.b16 %v3935, %v3934
        %v3947 = vpack.c.b16 %v3937, %v3936
        %v3948 = vpack.c.b16 %v3939, %v3938
        %v3949 = vpack.c.b16 %v3941, %v3940
        %3958 = vmatpush.bf16.msra.mxu0 %v3949
        %3959 = vmatpush.bf16.msra.mxu0 %v3948
        %3960 = vmatpush.bf16.msra.mxu0 %v3947
        %3961 = vmatpush.bf16.msra.mxu0 %v3946
        %3962 = vmatpush.bf16.msra.mxu0 %v3945
        %3963 = vmatpush.bf16.msra.mxu0 %v3944
        %3964 = vmatpush.bf16.msra.mxu0 %v3943
        %3965 = vmatpush.bf16.msra.mxu0 %v3942
        %3966 = vmatmul.bf16.gmra.mxu0 %v3876
        %v3967 = vpop.f32.mrf.mxu0
        %v3968 = vadd.f32 0.0, %v3967
        %v3969 = vpop.f32.mrf.mxu0
        %v3970 = vadd.f32 0.0, %v3969
        %3971 = vmatmul.bf16.gmra.mxu0 %v3877
        %v3972 = vpop.f32.mrf.mxu0
        %v3973 = vadd.f32 0.0, %v3972
        %v3974 = vpop.f32.mrf.mxu0
        %v3975 = vadd.f32 0.0, %v3974
        %3976 = vmatmul.bf16.gmra.mxu0 %v3878
        %v3977 = vpop.f32.mrf.mxu0
        %v3978 = vadd.f32 0.0, %v3977
        %v3979 = vpop.f32.mrf.mxu0
        %v3980 = vadd.f32 0.0, %v3979
        %3981 = vmatmul.bf16.gmra.mxu0 %v3879
        %v3982 = vpop.f32.mrf.mxu0
        %v3983 = vadd.f32 0.0, %v3982
        %v3984 = vpop.f32.mrf.mxu0
        %v3985 = vadd.f32 0.0, %v3984
        %3986 = vmatmul.bf16.gmra.mxu0 %v3880
        %v3987 = vpop.f32.mrf.mxu0
        %v3988 = vadd.f32 0.0, %v3987
        %v3989 = vpop.f32.mrf.mxu0
        %v3990 = vadd.f32 0.0, %v3989
        %3991 = vmatmul.bf16.gmra.mxu0 %v3881
        %v3992 = vpop.f32.mrf.mxu0
        %v3993 = vadd.f32 0.0, %v3992
        %v3994 = vpop.f32.mrf.mxu0
        %v3995 = vadd.f32 0.0, %v3994
        %3996 = vmatmul.bf16.gmra.mxu0 %v3882
        %v3997 = vpop.f32.mrf.mxu0
        %v3998 = vadd.f32 0.0, %v3997
        %v3999 = vpop.f32.mrf.mxu0
        %v4000 = vadd.f32 0.0, %v3999
        %4001 = vmatmul.bf16.gmra.mxu0 %v3883
        %v4002 = vpop.f32.mrf.mxu0
        %v4003 = vadd.f32 0.0, %v4002
        %v4004 = vpop.f32.mrf.mxu0
        %v4005 = vadd.f32 0.0, %v4004
        %4006 = vmatmul.bf16.gmra.mxu0 %v3884
        %v4007 = vpop.f32.mrf.mxu0
        %v4008 = vadd.f32 0.0, %v4007
        %v4009 = vpop.f32.mrf.mxu0
        %v4010 = vadd.f32 0.0, %v4009
        %4011 = vmatmul.bf16.gmra.mxu0 %v3885
        %v4012 = vpop.f32.mrf.mxu0
        %v4013 = vadd.f32 0.0, %v4012
        %v4014 = vpop.f32.mrf.mxu0
        %v4015 = vadd.f32 0.0, %v4014
        %4016 = vmatmul.bf16.gmra.mxu0 %v3886
        %v4017 = vpop.f32.mrf.mxu0
        %v4018 = vadd.f32 0.0, %v4017
        %v4019 = vpop.f32.mrf.mxu0
        %v4020 = vadd.f32 0.0, %v4019
        %4021 = vmatmul.bf16.gmra.mxu0 %v3887
        %v4022 = vpop.f32.mrf.mxu0
        %v4023 = vadd.f32 0.0, %v4022
        %v4024 = vpop.f32.mrf.mxu0
        %v4025 = vadd.f32 0.0, %v4024
        %4026 = vmatmul.bf16.gmra.mxu0 %v3888
        %v4027 = vpop.f32.mrf.mxu0
        %v4028 = vadd.f32 0.0, %v4027
        %v4029 = vpop.f32.mrf.mxu0
        %v4030 = vadd.f32 0.0, %v4029
        %4031 = vmatmul.bf16.gmra.mxu0 %v3889
        %v4032 = vpop.f32.mrf.mxu0
        %v4033 = vadd.f32 0.0, %v4032
        %v4034 = vpop.f32.mrf.mxu0
        %v4035 = vadd.f32 0.0, %v4034
        %4036 = vmatmul.bf16.gmra.mxu0 %v3890
        %v4037 = vpop.f32.mrf.mxu0
        %v4038 = vadd.f32 0.0, %v4037
        %v4039 = vpop.f32.mrf.mxu0
        %v4040 = vadd.f32 0.0, %v4039
        %4041 = vmatmul.bf16.gmra.mxu0 %v3891
        %v4042 = vpop.f32.mrf.mxu0
        %v4043 = vadd.f32 0.0, %v4042
        %v4044 = vpop.f32.mrf.mxu0
        %v4045 = vadd.f32 0.0, %v4044
        %4046 = vmatmul.bf16.gmra.mxu0 %v3892
        %v4047 = vpop.f32.mrf.mxu0
        %v4048 = vadd.f32 0.0, %v4047
        %v4049 = vpop.f32.mrf.mxu0
        %v4050 = vadd.f32 0.0, %v4049
        %4051 = vmatmul.bf16.gmra.mxu0 %v3893
        %v4052 = vpop.f32.mrf.mxu0
        %v4053 = vadd.f32 0.0, %v4052
        %v4054 = vpop.f32.mrf.mxu0
        %v4055 = vadd.f32 0.0, %v4054
        %4056 = vdwg.mxu0
        %v4057 = vadd.f32 %v3804, %v3968
        %v4058 = vadd.f32 %v3805, %v3970
        %v4059 = vadd.f32 %v3806, %v3973
        %v4060 = vadd.f32 %v3807, %v3975
        %v4061 = vadd.f32 %v3808, %v3978
        %v4062 = vadd.f32 %v3809, %v3980
        %v4063 = vadd.f32 %v3810, %v3983
        %v4064 = vadd.f32 %v3811, %v3985
        %v4065 = vadd.f32 %v3812, %v3988
        %v4066 = vadd.f32 %v3813, %v3990
        %v4067 = vadd.f32 %v3814, %v3993
        %v4068 = vadd.f32 %v3815, %v3995
        %v4069 = vadd.f32 %v3816, %v3998
        %v4070 = vadd.f32 %v3817, %v4000
        %v4071 = vadd.f32 %v3818, %v4003
        %v4072 = vadd.f32 %v3819, %v4005
        %v4073 = vadd.f32 %v3820, %v4008
        %v4074 = vadd.f32 %v3821, %v4010
        %v4075 = vadd.f32 %v3822, %v4013
        %v4076 = vadd.f32 %v3823, %v4015
        %v4077 = vadd.f32 %v3824, %v4018
        %v4078 = vadd.f32 %v3825, %v4020
        %v4079 = vadd.f32 %v3826, %v4023
        %v4080 = vadd.f32 %v3827, %v4025
        %v4081 = vadd.f32 %v3828, %v4028
        %v4082 = vadd.f32 %v3829, %v4030
        %v4083 = vadd.f32 %v3830, %v4033
        %v4084 = vadd.f32 %v3831, %v4035
        %v4085 = vadd.f32 %v3832, %v4038
        %v4086 = vadd.f32 %v3833, %v4040
        %v4087 = vadd.f32 %v3834, %v4043
        %v4088 = vadd.f32 %v3835, %v4045
        %v4089 = vadd.f32 %v3836, %v4048
        %v4090 = vadd.f32 %v3837, %v4050
        %v4091 = vadd.f32 %v3838, %v4053
        %v4092 = vadd.f32 %v3839, %v4055
        %v4093 = vld [vmem:[#allocation3 + $0x13] sm:$0xff]
        %v4094 = vld [vmem:[#allocation3 + $0x1b] sm:$0xff]
        %v4095 = vld [vmem:[#allocation3 + $0x23] sm:$0xff]
        %v4096 = vld [vmem:[#allocation3 + $0x2b] sm:$0xff]
        %v4097 = vld [vmem:[#allocation3 + $0x33] sm:$0xff]
        %v4098 = vld [vmem:[#allocation3 + $0x3b] sm:$0xff]
        %v4099 = vld [vmem:[#allocation3 + $0x43] sm:$0xff]
        %v4100 = vld [vmem:[#allocation3 + $0x4b] sm:$0xff]
        %v4101 = vld [vmem:[#allocation3 + $0x53] sm:$0xff]
        %v4102 = vld [vmem:[#allocation3 + $0x5b] sm:$0xff]
        %v4103 = vld [vmem:[#allocation3 + $0x63] sm:$0xff]
        %v4104 = vld [vmem:[#allocation3 + $0x6b] sm:$0xff]
        %v4105 = vld [vmem:[#allocation3 + $0x73] sm:$0xff]
        %v4106 = vld [vmem:[#allocation3 + $0x7b] sm:$0xff]
        %v4107 = vld [vmem:[#allocation3 + $0x83] sm:$0xff]
        %v4108 = vld [vmem:[#allocation3 + $0x8b] sm:$0xff]
        %v4109 = vld [vmem:[#allocation3 + $0x93] sm:$0xff]
        %v4110 = vld [vmem:[#allocation3 + $0x9b] sm:$0xff]
        %v4111 = vld [vmem:[#allocation3 + $0xa3] sm:$0xff]
        %v4112 = vld [vmem:[#allocation3 + $0xab] sm:$0xff]
        %v4113 = vld [vmem:[#allocation3 + $0xb3] sm:$0xff]
        %v4114 = vld [vmem:[#allocation3 + $0xbb] sm:$0xff]
        %v4115 = vld [vmem:[#allocation3 + $0xc3] sm:$0xff]
        %v4116 = vld [vmem:[#allocation3 + $0xcb] sm:$0xff]
        %v4117 = vld [vmem:[#allocation3 + $0xd3] sm:$0xff]
        %v4118 = vld [vmem:[#allocation3 + $0xdb] sm:$0xff]
        %v4119 = vld [vmem:[#allocation3 + $0xe3] sm:$0xff]
        %v4120 = vld [vmem:[#allocation3 + $0xeb] sm:$0xff]
        %v4121 = vld [vmem:[#allocation3 + $0xf3] sm:$0xff]
        %v4122 = vld [vmem:[#allocation3 + $0xfb] sm:$0xff]
        %v4123 = vld [vmem:[#allocation3 + $0x103] sm:$0xff]
        %v4124 = vld [vmem:[#allocation3 + $0x10b] sm:$0xff]
        %v4125 = vld [vmem:[#allocation3 + $0x113] sm:$0xff]
        %v4126 = vld [vmem:[#allocation3 + $0x11b] sm:$0xff]
        %v4127 = vld [vmem:[#allocation3 + $0x123] sm:$0xff]
        %v4128 = vld [vmem:[#allocation3 + $0x12b] sm:$0x3f]
        %v4129 = vpack.c.bf16 %v4094, %v4093
        %v4130 = vpack.c.bf16 %v4096, %v4095
        %v4131 = vpack.c.bf16 %v4098, %v4097
        %v4132 = vpack.c.bf16 %v4100, %v4099
        %v4133 = vpack.c.bf16 %v4102, %v4101
        %v4134 = vpack.c.bf16 %v4104, %v4103
        %v4135 = vpack.c.bf16 %v4106, %v4105
        %v4136 = vpack.c.bf16 %v4108, %v4107
        %v4137 = vpack.c.bf16 %v4110, %v4109
        %v4138 = vpack.c.bf16 %v4112, %v4111
        %v4139 = vpack.c.bf16 %v4114, %v4113
        %v4140 = vpack.c.bf16 %v4116, %v4115
        %v4141 = vpack.c.bf16 %v4118, %v4117
        %v4142 = vpack.c.bf16 %v4120, %v4119
        %v4143 = vpack.c.bf16 %v4122, %v4121
        %v4144 = vpack.c.bf16 %v4124, %v4123
        %v4145 = vpack.c.bf16 %v4126, %v4125
        %v4146 = vpack.c.bf16 %v4128, %v4127
        %v4147 = vld [vmem:[%s6 + $0x100] sm:$0xf]
        %v4148 = vld [vmem:[%s6 + $0x104] sm:$0xf]
        %v4149 = vld [vmem:[%s6 + $0x108] sm:$0xf]
        %v4150 = vld [vmem:[%s6 + $0x10c] sm:$0xf]
        %v4151 = vld [vmem:[%s6 + $0x110] sm:$0xf]
        %v4152 = vld [vmem:[%s6 + $0x114] sm:$0xf]
        %v4153 = vld [vmem:[%s6 + $0x118] sm:$0xf]
        %v4154 = vld [vmem:[%s6 + $0x11c] sm:$0xf]
        %v4155 = vld [vmem:[%s6 + $0x120] sm:$0xf]
        %v4156 = vld [vmem:[%s6 + $0x124] sm:$0xf]
        %v4157 = vld [vmem:[%s6 + $0x128] sm:$0xf]
        %v4158 = vld [vmem:[%s6 + $0x12c] sm:$0xf]
        %v4159 = vld [vmem:[%s6 + $0x130] sm:$0xf]
        %v4160 = vld [vmem:[%s6 + $0x134] sm:$0xf]
        %v4161 = vld [vmem:[%s6 + $0x138] sm:$0xf]
        %v4162 = vld [vmem:[%s6 + $0x13c] sm:$0xf]
        %v4179 = vunpack.c.l.b16 %v4147
        %v4180 = vunpack.c.l.b16 %v4148
        %v4181 = vunpack.c.l.b16 %v4149
        %v4182 = vunpack.c.l.b16 %v4150
        %v4183 = vunpack.c.l.b16 %v4151
        %v4184 = vunpack.c.l.b16 %v4152
        %v4185 = vunpack.c.l.b16 %v4153
        %v4186 = vunpack.c.l.b16 %v4154
        %v4187 = vunpack.c.l.b16 %v4155
        %v4188 = vunpack.c.l.b16 %v4156
        %v4189 = vunpack.c.l.b16 %v4157
        %v4190 = vunpack.c.l.b16 %v4158
        %v4191 = vunpack.c.l.b16 %v4159
        %v4192 = vunpack.c.l.b16 %v4160
        %v4193 = vunpack.c.l.b16 %v4161
        %v4194 = vunpack.c.l.b16 %v4162
        %v4195 = vpack.c.b16 %v4180, %v4179
        %v4196 = vpack.c.b16 %v4182, %v4181
        %v4197 = vpack.c.b16 %v4184, %v4183
        %v4198 = vpack.c.b16 %v4186, %v4185
        %v4199 = vpack.c.b16 %v4188, %v4187
        %v4200 = vpack.c.b16 %v4190, %v4189
        %v4201 = vpack.c.b16 %v4192, %v4191
        %v4202 = vpack.c.b16 %v4194, %v4193
        %4211 = vmatpush.bf16.msra.mxu0 %v4202
        %4212 = vmatpush.bf16.msra.mxu0 %v4201
        %4213 = vmatpush.bf16.msra.mxu0 %v4200
        %4214 = vmatpush.bf16.msra.mxu0 %v4199
        %4215 = vmatpush.bf16.msra.mxu0 %v4198
        %4216 = vmatpush.bf16.msra.mxu0 %v4197
        %4217 = vmatpush.bf16.msra.mxu0 %v4196
        %4218 = vmatpush.bf16.msra.mxu0 %v4195
        %4219 = vmatmul.bf16.gmra.mxu0 %v4129
        %v4220 = vpop.f32.mrf.mxu0
        %v4221 = vadd.f32 0.0, %v4220
        %v4222 = vpop.f32.mrf.mxu0
        %v4223 = vadd.f32 0.0, %v4222
        %4224 = vmatmul.bf16.gmra.mxu0 %v4130
        %v4225 = vpop.f32.mrf.mxu0
        %v4226 = vadd.f32 0.0, %v4225
        %v4227 = vpop.f32.mrf.mxu0
        %v4228 = vadd.f32 0.0, %v4227
        %4229 = vmatmul.bf16.gmra.mxu0 %v4131
        %v4230 = vpop.f32.mrf.mxu0
        %v4231 = vadd.f32 0.0, %v4230
        %v4232 = vpop.f32.mrf.mxu0
        %v4233 = vadd.f32 0.0, %v4232
        %4234 = vmatmul.bf16.gmra.mxu0 %v4132
        %v4235 = vpop.f32.mrf.mxu0
        %v4236 = vadd.f32 0.0, %v4235
        %v4237 = vpop.f32.mrf.mxu0
        %v4238 = vadd.f32 0.0, %v4237
        %4239 = vmatmul.bf16.gmra.mxu0 %v4133
        %v4240 = vpop.f32.mrf.mxu0
        %v4241 = vadd.f32 0.0, %v4240
        %v4242 = vpop.f32.mrf.mxu0
        %v4243 = vadd.f32 0.0, %v4242
        %4244 = vmatmul.bf16.gmra.mxu0 %v4134
        %v4245 = vpop.f32.mrf.mxu0
        %v4246 = vadd.f32 0.0, %v4245
        %v4247 = vpop.f32.mrf.mxu0
        %v4248 = vadd.f32 0.0, %v4247
        %4249 = vmatmul.bf16.gmra.mxu0 %v4135
        %v4250 = vpop.f32.mrf.mxu0
        %v4251 = vadd.f32 0.0, %v4250
        %v4252 = vpop.f32.mrf.mxu0
        %v4253 = vadd.f32 0.0, %v4252
        %4254 = vmatmul.bf16.gmra.mxu0 %v4136
        %v4255 = vpop.f32.mrf.mxu0
        %v4256 = vadd.f32 0.0, %v4255
        %v4257 = vpop.f32.mrf.mxu0
        %v4258 = vadd.f32 0.0, %v4257
        %4259 = vmatmul.bf16.gmra.mxu0 %v4137
        %v4260 = vpop.f32.mrf.mxu0
        %v4261 = vadd.f32 0.0, %v4260
        %v4262 = vpop.f32.mrf.mxu0
        %v4263 = vadd.f32 0.0, %v4262
        %4264 = vmatmul.bf16.gmra.mxu0 %v4138
        %v4265 = vpop.f32.mrf.mxu0
        %v4266 = vadd.f32 0.0, %v4265
        %v4267 = vpop.f32.mrf.mxu0
        %v4268 = vadd.f32 0.0, %v4267
        %4269 = vmatmul.bf16.gmra.mxu0 %v4139
        %v4270 = vpop.f32.mrf.mxu0
        %v4271 = vadd.f32 0.0, %v4270
        %v4272 = vpop.f32.mrf.mxu0
        %v4273 = vadd.f32 0.0, %v4272
        %4274 = vmatmul.bf16.gmra.mxu0 %v4140
        %v4275 = vpop.f32.mrf.mxu0
        %v4276 = vadd.f32 0.0, %v4275
        %v4277 = vpop.f32.mrf.mxu0
        %v4278 = vadd.f32 0.0, %v4277
        %4279 = vmatmul.bf16.gmra.mxu0 %v4141
        %v4280 = vpop.f32.mrf.mxu0
        %v4281 = vadd.f32 0.0, %v4280
        %v4282 = vpop.f32.mrf.mxu0
        %v4283 = vadd.f32 0.0, %v4282
        %4284 = vmatmul.bf16.gmra.mxu0 %v4142
        %v4285 = vpop.f32.mrf.mxu0
        %v4286 = vadd.f32 0.0, %v4285
        %v4287 = vpop.f32.mrf.mxu0
        %v4288 = vadd.f32 0.0, %v4287
        %4289 = vmatmul.bf16.gmra.mxu0 %v4143
        %v4290 = vpop.f32.mrf.mxu0
        %v4291 = vadd.f32 0.0, %v4290
        %v4292 = vpop.f32.mrf.mxu0
        %v4293 = vadd.f32 0.0, %v4292
        %4294 = vmatmul.bf16.gmra.mxu0 %v4144
        %v4295 = vpop.f32.mrf.mxu0
        %v4296 = vadd.f32 0.0, %v4295
        %v4297 = vpop.f32.mrf.mxu0
        %v4298 = vadd.f32 0.0, %v4297
        %4299 = vmatmul.bf16.gmra.mxu0 %v4145
        %v4300 = vpop.f32.mrf.mxu0
        %v4301 = vadd.f32 0.0, %v4300
        %v4302 = vpop.f32.mrf.mxu0
        %v4303 = vadd.f32 0.0, %v4302
        %4304 = vmatmul.bf16.gmra.mxu0 %v4146
        %v4305 = vpop.f32.mrf.mxu0
        %v4306 = vadd.f32 0.0, %v4305
        %v4307 = vpop.f32.mrf.mxu0
        %v4308 = vadd.f32 0.0, %v4307
        %4309 = vdwg.mxu0
        %v4310 = vadd.f32 %v4057, %v4221
        %v4311 = vadd.f32 %v4058, %v4223
        %v4312 = vadd.f32 %v4059, %v4226
        %v4313 = vadd.f32 %v4060, %v4228
        %v4314 = vadd.f32 %v4061, %v4231
        %v4315 = vadd.f32 %v4062, %v4233
        %v4316 = vadd.f32 %v4063, %v4236
        %v4317 = vadd.f32 %v4064, %v4238
        %v4318 = vadd.f32 %v4065, %v4241
        %v4319 = vadd.f32 %v4066, %v4243
        %v4320 = vadd.f32 %v4067, %v4246
        %v4321 = vadd.f32 %v4068, %v4248
        %v4322 = vadd.f32 %v4069, %v4251
        %v4323 = vadd.f32 %v4070, %v4253
        %v4324 = vadd.f32 %v4071, %v4256
        %v4325 = vadd.f32 %v4072, %v4258
        %v4326 = vadd.f32 %v4073, %v4261
        %v4327 = vadd.f32 %v4074, %v4263
        %v4328 = vadd.f32 %v4075, %v4266
        %v4329 = vadd.f32 %v4076, %v4268
        %v4330 = vadd.f32 %v4077, %v4271
        %v4331 = vadd.f32 %v4078, %v4273
        %v4332 = vadd.f32 %v4079, %v4276
        %v4333 = vadd.f32 %v4080, %v4278
        %v4334 = vadd.f32 %v4081, %v4281
        %v4335 = vadd.f32 %v4082, %v4283
        %v4336 = vadd.f32 %v4083, %v4286
        %v4337 = vadd.f32 %v4084, %v4288
        %v4338 = vadd.f32 %v4085, %v4291
        %v4339 = vadd.f32 %v4086, %v4293
        %v4340 = vadd.f32 %v4087, %v4296
        %v4341 = vadd.f32 %v4088, %v4298
        %v4342 = vadd.f32 %v4089, %v4301
        %v4343 = vadd.f32 %v4090, %v4303
        %v4344 = vadd.f32 %v4091, %v4306
        %v4345 = vadd.f32 %v4092, %v4308
        %v4346 = vld [vmem:[#allocation3 + $0x14] sm:$0xff]
        %v4347 = vld [vmem:[#allocation3 + $0x1c] sm:$0xff]
        %v4348 = vld [vmem:[#allocation3 + $0x24] sm:$0xff]
        %v4349 = vld [vmem:[#allocation3 + $0x2c] sm:$0xff]
        %v4350 = vld [vmem:[#allocation3 + $0x34] sm:$0xff]
        %v4351 = vld [vmem:[#allocation3 + $0x3c] sm:$0xff]
        %v4352 = vld [vmem:[#allocation3 + $0x44] sm:$0xff]
        %v4353 = vld [vmem:[#allocation3 + $0x4c] sm:$0xff]
        %v4354 = vld [vmem:[#allocation3 + $0x54] sm:$0xff]
        %v4355 = vld [vmem:[#allocation3 + $0x5c] sm:$0xff]
        %v4356 = vld [vmem:[#allocation3 + $0x64] sm:$0xff]
        %v4357 = vld [vmem:[#allocation3 + $0x6c] sm:$0xff]
        %v4358 = vld [vmem:[#allocation3 + $0x74] sm:$0xff]
        %v4359 = vld [vmem:[#allocation3 + $0x7c] sm:$0xff]
        %v4360 = vld [vmem:[#allocation3 + $0x84] sm:$0xff]
        %v4361 = vld [vmem:[#allocation3 + $0x8c] sm:$0xff]
        %v4362 = vld [vmem:[#allocation3 + $0x94] sm:$0xff]
        %v4363 = vld [vmem:[#allocation3 + $0x9c] sm:$0xff]
        %v4364 = vld [vmem:[#allocation3 + $0xa4] sm:$0xff]
        %v4365 = vld [vmem:[#allocation3 + $0xac] sm:$0xff]
        %v4366 = vld [vmem:[#allocation3 + $0xb4] sm:$0xff]
        %v4367 = vld [vmem:[#allocation3 + $0xbc] sm:$0xff]
        %v4368 = vld [vmem:[#allocation3 + $0xc4] sm:$0xff]
        %v4369 = vld [vmem:[#allocation3 + $0xcc] sm:$0xff]
        %v4370 = vld [vmem:[#allocation3 + $0xd4] sm:$0xff]
        %v4371 = vld [vmem:[#allocation3 + $0xdc] sm:$0xff]
        %v4372 = vld [vmem:[#allocation3 + $0xe4] sm:$0xff]
        %v4373 = vld [vmem:[#allocation3 + $0xec] sm:$0xff]
        %v4374 = vld [vmem:[#allocation3 + $0xf4] sm:$0xff]
        %v4375 = vld [vmem:[#allocation3 + $0xfc] sm:$0xff]
        %v4376 = vld [vmem:[#allocation3 + $0x104] sm:$0xff]
        %v4377 = vld [vmem:[#allocation3 + $0x10c] sm:$0xff]
        %v4378 = vld [vmem:[#allocation3 + $0x114] sm:$0xff]
        %v4379 = vld [vmem:[#allocation3 + $0x11c] sm:$0xff]
        %v4380 = vld [vmem:[#allocation3 + $0x124] sm:$0xff]
        %v4381 = vld [vmem:[#allocation3 + $0x12c] sm:$0x3f]
        %v4382 = vpack.c.bf16 %v4347, %v4346
        %v4383 = vpack.c.bf16 %v4349, %v4348
        %v4384 = vpack.c.bf16 %v4351, %v4350
        %v4385 = vpack.c.bf16 %v4353, %v4352
        %v4386 = vpack.c.bf16 %v4355, %v4354
        %v4387 = vpack.c.bf16 %v4357, %v4356
        %v4388 = vpack.c.bf16 %v4359, %v4358
        %v4389 = vpack.c.bf16 %v4361, %v4360
        %v4390 = vpack.c.bf16 %v4363, %v4362
        %v4391 = vpack.c.bf16 %v4365, %v4364
        %v4392 = vpack.c.bf16 %v4367, %v4366
        %v4393 = vpack.c.bf16 %v4369, %v4368
        %v4394 = vpack.c.bf16 %v4371, %v4370
        %v4395 = vpack.c.bf16 %v4373, %v4372
        %v4396 = vpack.c.bf16 %v4375, %v4374
        %v4397 = vpack.c.bf16 %v4377, %v4376
        %v4398 = vpack.c.bf16 %v4379, %v4378
        %v4399 = vpack.c.bf16 %v4381, %v4380
        %v4400 = vld [vmem:[%s6 + $0x140] sm:$0xf]
        %v4401 = vld [vmem:[%s6 + $0x144] sm:$0xf]
        %v4402 = vld [vmem:[%s6 + $0x148] sm:$0xf]
        %v4403 = vld [vmem:[%s6 + $0x14c] sm:$0xf]
        %v4404 = vld [vmem:[%s6 + $0x150] sm:$0xf]
        %v4405 = vld [vmem:[%s6 + $0x154] sm:$0xf]
        %v4406 = vld [vmem:[%s6 + $0x158] sm:$0xf]
        %v4407 = vld [vmem:[%s6 + $0x15c] sm:$0xf]
        %v4408 = vld [vmem:[%s6 + $0x160] sm:$0xf]
        %v4409 = vld [vmem:[%s6 + $0x164] sm:$0xf]
        %v4410 = vld [vmem:[%s6 + $0x168] sm:$0xf]
        %v4411 = vld [vmem:[%s6 + $0x16c] sm:$0xf]
        %v4412 = vld [vmem:[%s6 + $0x170] sm:$0xf]
        %v4413 = vld [vmem:[%s6 + $0x174] sm:$0xf]
        %v4414 = vld [vmem:[%s6 + $0x178] sm:$0xf]
        %v4415 = vld [vmem:[%s6 + $0x17c] sm:$0xf]
        %v4432 = vunpack.c.l.b16 %v4400
        %v4433 = vunpack.c.l.b16 %v4401
        %v4434 = vunpack.c.l.b16 %v4402
        %v4435 = vunpack.c.l.b16 %v4403
        %v4436 = vunpack.c.l.b16 %v4404
        %v4437 = vunpack.c.l.b16 %v4405
        %v4438 = vunpack.c.l.b16 %v4406
        %v4439 = vunpack.c.l.b16 %v4407
        %v4440 = vunpack.c.l.b16 %v4408
        %v4441 = vunpack.c.l.b16 %v4409
        %v4442 = vunpack.c.l.b16 %v4410
        %v4443 = vunpack.c.l.b16 %v4411
        %v4444 = vunpack.c.l.b16 %v4412
        %v4445 = vunpack.c.l.b16 %v4413
        %v4446 = vunpack.c.l.b16 %v4414
        %v4447 = vunpack.c.l.b16 %v4415
        %v4448 = vpack.c.b16 %v4433, %v4432
        %v4449 = vpack.c.b16 %v4435, %v4434
        %v4450 = vpack.c.b16 %v4437, %v4436
        %v4451 = vpack.c.b16 %v4439, %v4438
        %v4452 = vpack.c.b16 %v4441, %v4440
        %v4453 = vpack.c.b16 %v4443, %v4442
        %v4454 = vpack.c.b16 %v4445, %v4444
        %v4455 = vpack.c.b16 %v4447, %v4446
        %4464 = vmatpush.bf16.msra.mxu0 %v4455
        %4465 = vmatpush.bf16.msra.mxu0 %v4454
        %4466 = vmatpush.bf16.msra.mxu0 %v4453
        %4467 = vmatpush.bf16.msra.mxu0 %v4452
        %4468 = vmatpush.bf16.msra.mxu0 %v4451
        %4469 = vmatpush.bf16.msra.mxu0 %v4450
        %4470 = vmatpush.bf16.msra.mxu0 %v4449
        %4471 = vmatpush.bf16.msra.mxu0 %v4448
        %4472 = vmatmul.bf16.gmra.mxu0 %v4382
        %v4473 = vpop.f32.mrf.mxu0
        %v4474 = vadd.f32 0.0, %v4473
        %v4475 = vpop.f32.mrf.mxu0
        %v4476 = vadd.f32 0.0, %v4475
        %4477 = vmatmul.bf16.gmra.mxu0 %v4383
        %v4478 = vpop.f32.mrf.mxu0
        %v4479 = vadd.f32 0.0, %v4478
        %v4480 = vpop.f32.mrf.mxu0
        %v4481 = vadd.f32 0.0, %v4480
        %4482 = vmatmul.bf16.gmra.mxu0 %v4384
        %v4483 = vpop.f32.mrf.mxu0
        %v4484 = vadd.f32 0.0, %v4483
        %v4485 = vpop.f32.mrf.mxu0
        %v4486 = vadd.f32 0.0, %v4485
        %4487 = vmatmul.bf16.gmra.mxu0 %v4385
        %v4488 = vpop.f32.mrf.mxu0
        %v4489 = vadd.f32 0.0, %v4488
        %v4490 = vpop.f32.mrf.mxu0
        %v4491 = vadd.f32 0.0, %v4490
        %4492 = vmatmul.bf16.gmra.mxu0 %v4386
        %v4493 = vpop.f32.mrf.mxu0
        %v4494 = vadd.f32 0.0, %v4493
        %v4495 = vpop.f32.mrf.mxu0
        %v4496 = vadd.f32 0.0, %v4495
        %4497 = vmatmul.bf16.gmra.mxu0 %v4387
        %v4498 = vpop.f32.mrf.mxu0
        %v4499 = vadd.f32 0.0, %v4498
        %v4500 = vpop.f32.mrf.mxu0
        %v4501 = vadd.f32 0.0, %v4500
        %4502 = vmatmul.bf16.gmra.mxu0 %v4388
        %v4503 = vpop.f32.mrf.mxu0
        %v4504 = vadd.f32 0.0, %v4503
        %v4505 = vpop.f32.mrf.mxu0
        %v4506 = vadd.f32 0.0, %v4505
        %4507 = vmatmul.bf16.gmra.mxu0 %v4389
        %v4508 = vpop.f32.mrf.mxu0
        %v4509 = vadd.f32 0.0, %v4508
        %v4510 = vpop.f32.mrf.mxu0
        %v4511 = vadd.f32 0.0, %v4510
        %4512 = vmatmul.bf16.gmra.mxu0 %v4390
        %v4513 = vpop.f32.mrf.mxu0
        %v4514 = vadd.f32 0.0, %v4513
        %v4515 = vpop.f32.mrf.mxu0
        %v4516 = vadd.f32 0.0, %v4515
        %4517 = vmatmul.bf16.gmra.mxu0 %v4391
        %v4518 = vpop.f32.mrf.mxu0
        %v4519 = vadd.f32 0.0, %v4518
        %v4520 = vpop.f32.mrf.mxu0
        %v4521 = vadd.f32 0.0, %v4520
        %4522 = vmatmul.bf16.gmra.mxu0 %v4392
        %v4523 = vpop.f32.mrf.mxu0
        %v4524 = vadd.f32 0.0, %v4523
        %v4525 = vpop.f32.mrf.mxu0
        %v4526 = vadd.f32 0.0, %v4525
        %4527 = vmatmul.bf16.gmra.mxu0 %v4393
        %v4528 = vpop.f32.mrf.mxu0
        %v4529 = vadd.f32 0.0, %v4528
        %v4530 = vpop.f32.mrf.mxu0
        %v4531 = vadd.f32 0.0, %v4530
        %4532 = vmatmul.bf16.gmra.mxu0 %v4394
        %v4533 = vpop.f32.mrf.mxu0
        %v4534 = vadd.f32 0.0, %v4533
        %v4535 = vpop.f32.mrf.mxu0
        %v4536 = vadd.f32 0.0, %v4535
        %4537 = vmatmul.bf16.gmra.mxu0 %v4395
        %v4538 = vpop.f32.mrf.mxu0
        %v4539 = vadd.f32 0.0, %v4538
        %v4540 = vpop.f32.mrf.mxu0
        %v4541 = vadd.f32 0.0, %v4540
        %4542 = vmatmul.bf16.gmra.mxu0 %v4396
        %v4543 = vpop.f32.mrf.mxu0
        %v4544 = vadd.f32 0.0, %v4543
        %v4545 = vpop.f32.mrf.mxu0
        %v4546 = vadd.f32 0.0, %v4545
        %4547 = vmatmul.bf16.gmra.mxu0 %v4397
        %v4548 = vpop.f32.mrf.mxu0
        %v4549 = vadd.f32 0.0, %v4548
        %v4550 = vpop.f32.mrf.mxu0
        %v4551 = vadd.f32 0.0, %v4550
        %4552 = vmatmul.bf16.gmra.mxu0 %v4398
        %v4553 = vpop.f32.mrf.mxu0
        %v4554 = vadd.f32 0.0, %v4553
        %v4555 = vpop.f32.mrf.mxu0
        %v4556 = vadd.f32 0.0, %v4555
        %4557 = vmatmul.bf16.gmra.mxu0 %v4399
        %v4558 = vpop.f32.mrf.mxu0
        %v4559 = vadd.f32 0.0, %v4558
        %v4560 = vpop.f32.mrf.mxu0
        %v4561 = vadd.f32 0.0, %v4560
        %4562 = vdwg.mxu0
        %v4563 = vadd.f32 %v4310, %v4474
        %v4564 = vadd.f32 %v4311, %v4476
        %v4565 = vadd.f32 %v4312, %v4479
        %v4566 = vadd.f32 %v4313, %v4481
        %v4567 = vadd.f32 %v4314, %v4484
        %v4568 = vadd.f32 %v4315, %v4486
        %v4569 = vadd.f32 %v4316, %v4489
        %v4570 = vadd.f32 %v4317, %v4491
        %v4571 = vadd.f32 %v4318, %v4494
        %v4572 = vadd.f32 %v4319, %v4496
        %v4573 = vadd.f32 %v4320, %v4499
        %v4574 = vadd.f32 %v4321, %v4501
        %v4575 = vadd.f32 %v4322, %v4504
        %v4576 = vadd.f32 %v4323, %v4506
        %v4577 = vadd.f32 %v4324, %v4509
        %v4578 = vadd.f32 %v4325, %v4511
        %v4579 = vadd.f32 %v4326, %v4514
        %v4580 = vadd.f32 %v4327, %v4516
        %v4581 = vadd.f32 %v4328, %v4519
        %v4582 = vadd.f32 %v4329, %v4521
        %v4583 = vadd.f32 %v4330, %v4524
        %v4584 = vadd.f32 %v4331, %v4526
        %v4585 = vadd.f32 %v4332, %v4529
        %v4586 = vadd.f32 %v4333, %v4531
        %v4587 = vadd.f32 %v4334, %v4534
        %v4588 = vadd.f32 %v4335, %v4536
        %v4589 = vadd.f32 %v4336, %v4539
        %v4590 = vadd.f32 %v4337, %v4541
        %v4591 = vadd.f32 %v4338, %v4544
        %v4592 = vadd.f32 %v4339, %v4546
        %v4593 = vadd.f32 %v4340, %v4549
        %v4594 = vadd.f32 %v4341, %v4551
        %v4595 = vadd.f32 %v4342, %v4554
        %v4596 = vadd.f32 %v4343, %v4556
        %v4597 = vadd.f32 %v4344, %v4559
        %v4598 = vadd.f32 %v4345, %v4561
        %v4599 = vld [vmem:[#allocation3 + $0x24] sm:$0xff]
        %v4600 = vld [vmem:[#allocation3 + $0x2c] sm:$0xff]
        %v4601 = vld [vmem:[#allocation3 + $0x34] sm:$0xff]
        %v4602 = vld [vmem:[#allocation3 + $0x3c] sm:$0xff]
        %v4603 = vld [vmem:[#allocation3 + $0x44] sm:$0xff]
        %v4604 = vld [vmem:[#allocation3 + $0x4c] sm:$0xff]
        %v4605 = vld [vmem:[#allocation3 + $0x54] sm:$0xff]
        %v4606 = vld [vmem:[#allocation3 + $0x5c] sm:$0xff]
        %v4607 = vld [vmem:[#allocation3 + $0x64] sm:$0xff]
        %v4608 = vld [vmem:[#allocation3 + $0x6c] sm:$0xff]
        %v4609 = vld [vmem:[#allocation3 + $0x74] sm:$0xff]
        %v4610 = vld [vmem:[#allocation3 + $0x7c] sm:$0xff]
        %v4611 = vld [vmem:[#allocation3 + $0x84] sm:$0xff]
        %v4612 = vld [vmem:[#allocation3 + $0x8c] sm:$0xff]
        %v4613 = vld [vmem:[#allocation3 + $0x94] sm:$0xff]
        %v4614 = vld [vmem:[#allocation3 + $0x9c] sm:$0xff]
        %v4615 = vld [vmem:[#allocation3 + $0xa4] sm:$0xff]
        %v4616 = vld [vmem:[#allocation3 + $0xac] sm:$0xff]
        %v4617 = vld [vmem:[#allocation3 + $0xb4] sm:$0xff]
        %v4618 = vld [vmem:[#allocation3 + $0xbc] sm:$0xff]
        %v4619 = vld [vmem:[#allocation3 + $0xc4] sm:$0xff]
        %v4620 = vld [vmem:[#allocation3 + $0xcc] sm:$0xff]
        %v4621 = vld [vmem:[#allocation3 + $0xd4] sm:$0xff]
        %v4622 = vld [vmem:[#allocation3 + $0xdc] sm:$0xff]
        %v4623 = vld [vmem:[#allocation3 + $0xe4] sm:$0xff]
        %v4624 = vld [vmem:[#allocation3 + $0xec] sm:$0xff]
        %v4625 = vld [vmem:[#allocation3 + $0xf4] sm:$0xff]
        %v4626 = vld [vmem:[#allocation3 + $0xfc] sm:$0xff]
        %v4627 = vld [vmem:[#allocation3 + $0x104] sm:$0xff]
        %v4628 = vld [vmem:[#allocation3 + $0x10c] sm:$0xff]
        %v4629 = vld [vmem:[#allocation3 + $0x114] sm:$0xff]
        %v4630 = vld [vmem:[#allocation3 + $0x11c] sm:$0xff]
        %v4631 = vld [vmem:[#allocation3 + $0x124] sm:$0xff]
        %v4632 = vld [vmem:[#allocation3 + $0x12c] sm:$0xff]
        %v4633 = vld [vmem:[#allocation3 + $0x134] sm:$0xff]
        %v4634 = vld [vmem:[#allocation3 + $0x13c] sm:$0x3f]
        %v4635 = vpack.c.bf16 %v4600, %v4599
        %v4636 = vpack.c.bf16 %v4602, %v4601
        %v4637 = vpack.c.bf16 %v4604, %v4603
        %v4638 = vpack.c.bf16 %v4606, %v4605
        %v4639 = vpack.c.bf16 %v4608, %v4607
        %v4640 = vpack.c.bf16 %v4610, %v4609
        %v4641 = vpack.c.bf16 %v4612, %v4611
        %v4642 = vpack.c.bf16 %v4614, %v4613
        %v4643 = vpack.c.bf16 %v4616, %v4615
        %v4644 = vpack.c.bf16 %v4618, %v4617
        %v4645 = vpack.c.bf16 %v4620, %v4619
        %v4646 = vpack.c.bf16 %v4622, %v4621
        %v4647 = vpack.c.bf16 %v4624, %v4623
        %v4648 = vpack.c.bf16 %v4626, %v4625
        %v4649 = vpack.c.bf16 %v4628, %v4627
        %v4650 = vpack.c.bf16 %v4630, %v4629
        %v4651 = vpack.c.bf16 %v4632, %v4631
        %v4652 = vpack.c.bf16 %v4634, %v4633
        %v4653 = vld [vmem:[%s6 + $0x180] sm:$0xf]
        %v4654 = vld [vmem:[%s6 + $0x184] sm:$0xf]
        %v4655 = vld [vmem:[%s6 + $0x188] sm:$0xf]
        %v4656 = vld [vmem:[%s6 + $0x18c] sm:$0xf]
        %v4657 = vld [vmem:[%s6 + $0x190] sm:$0xf]
        %v4658 = vld [vmem:[%s6 + $0x194] sm:$0xf]
        %v4659 = vld [vmem:[%s6 + $0x198] sm:$0xf]
        %v4660 = vld [vmem:[%s6 + $0x19c] sm:$0xf]
        %v4661 = vld [vmem:[%s6 + $0x1a0] sm:$0xf]
        %v4662 = vld [vmem:[%s6 + $0x1a4] sm:$0xf]
        %v4663 = vld [vmem:[%s6 + $0x1a8] sm:$0xf]
        %v4664 = vld [vmem:[%s6 + $0x1ac] sm:$0xf]
        %v4665 = vld [vmem:[%s6 + $0x1b0] sm:$0xf]
        %v4666 = vld [vmem:[%s6 + $0x1b4] sm:$0xf]
        %v4667 = vld [vmem:[%s6 + $0x1b8] sm:$0xf]
        %v4668 = vld [vmem:[%s6 + $0x1bc] sm:$0xf]
        %v4685 = vunpack.c.l.b16 %v4653
        %v4686 = vunpack.c.l.b16 %v4654
        %v4687 = vunpack.c.l.b16 %v4655
        %v4688 = vunpack.c.l.b16 %v4656
        %v4689 = vunpack.c.l.b16 %v4657
        %v4690 = vunpack.c.l.b16 %v4658
        %v4691 = vunpack.c.l.b16 %v4659
        %v4692 = vunpack.c.l.b16 %v4660
        %v4693 = vunpack.c.l.b16 %v4661
        %v4694 = vunpack.c.l.b16 %v4662
        %v4695 = vunpack.c.l.b16 %v4663
        %v4696 = vunpack.c.l.b16 %v4664
        %v4697 = vunpack.c.l.b16 %v4665
        %v4698 = vunpack.c.l.b16 %v4666
        %v4699 = vunpack.c.l.b16 %v4667
        %v4700 = vunpack.c.l.b16 %v4668
        %v4701 = vpack.c.b16 %v4686, %v4685
        %v4702 = vpack.c.b16 %v4688, %v4687
        %v4703 = vpack.c.b16 %v4690, %v4689
        %v4704 = vpack.c.b16 %v4692, %v4691
        %v4705 = vpack.c.b16 %v4694, %v4693
        %v4706 = vpack.c.b16 %v4696, %v4695
        %v4707 = vpack.c.b16 %v4698, %v4697
        %v4708 = vpack.c.b16 %v4700, %v4699
        %4717 = vmatpush.bf16.msra.mxu0 %v4708
        %4718 = vmatpush.bf16.msra.mxu0 %v4707
        %4719 = vmatpush.bf16.msra.mxu0 %v4706
        %4720 = vmatpush.bf16.msra.mxu0 %v4705
        %4721 = vmatpush.bf16.msra.mxu0 %v4704
        %4722 = vmatpush.bf16.msra.mxu0 %v4703
        %4723 = vmatpush.bf16.msra.mxu0 %v4702
        %4724 = vmatpush.bf16.msra.mxu0 %v4701
        %4725 = vmatmul.bf16.gmra.mxu0 %v4635
        %v4726 = vpop.f32.mrf.mxu0
        %v4727 = vadd.f32 0.0, %v4726
        %v4728 = vpop.f32.mrf.mxu0
        %v4729 = vadd.f32 0.0, %v4728
        %4730 = vmatmul.bf16.gmra.mxu0 %v4636
        %v4731 = vpop.f32.mrf.mxu0
        %v4732 = vadd.f32 0.0, %v4731
        %v4733 = vpop.f32.mrf.mxu0
        %v4734 = vadd.f32 0.0, %v4733
        %4735 = vmatmul.bf16.gmra.mxu0 %v4637
        %v4736 = vpop.f32.mrf.mxu0
        %v4737 = vadd.f32 0.0, %v4736
        %v4738 = vpop.f32.mrf.mxu0
        %v4739 = vadd.f32 0.0, %v4738
        %4740 = vmatmul.bf16.gmra.mxu0 %v4638
        %v4741 = vpop.f32.mrf.mxu0
        %v4742 = vadd.f32 0.0, %v4741
        %v4743 = vpop.f32.mrf.mxu0
        %v4744 = vadd.f32 0.0, %v4743
        %4745 = vmatmul.bf16.gmra.mxu0 %v4639
        %v4746 = vpop.f32.mrf.mxu0
        %v4747 = vadd.f32 0.0, %v4746
        %v4748 = vpop.f32.mrf.mxu0
        %v4749 = vadd.f32 0.0, %v4748
        %4750 = vmatmul.bf16.gmra.mxu0 %v4640
        %v4751 = vpop.f32.mrf.mxu0
        %v4752 = vadd.f32 0.0, %v4751
        %v4753 = vpop.f32.mrf.mxu0
        %v4754 = vadd.f32 0.0, %v4753
        %4755 = vmatmul.bf16.gmra.mxu0 %v4641
        %v4756 = vpop.f32.mrf.mxu0
        %v4757 = vadd.f32 0.0, %v4756
        %v4758 = vpop.f32.mrf.mxu0
        %v4759 = vadd.f32 0.0, %v4758
        %4760 = vmatmul.bf16.gmra.mxu0 %v4642
        %v4761 = vpop.f32.mrf.mxu0
        %v4762 = vadd.f32 0.0, %v4761
        %v4763 = vpop.f32.mrf.mxu0
        %v4764 = vadd.f32 0.0, %v4763
        %4765 = vmatmul.bf16.gmra.mxu0 %v4643
        %v4766 = vpop.f32.mrf.mxu0
        %v4767 = vadd.f32 0.0, %v4766
        %v4768 = vpop.f32.mrf.mxu0
        %v4769 = vadd.f32 0.0, %v4768
        %4770 = vmatmul.bf16.gmra.mxu0 %v4644
        %v4771 = vpop.f32.mrf.mxu0
        %v4772 = vadd.f32 0.0, %v4771
        %v4773 = vpop.f32.mrf.mxu0
        %v4774 = vadd.f32 0.0, %v4773
        %4775 = vmatmul.bf16.gmra.mxu0 %v4645
        %v4776 = vpop.f32.mrf.mxu0
        %v4777 = vadd.f32 0.0, %v4776
        %v4778 = vpop.f32.mrf.mxu0
        %v4779 = vadd.f32 0.0, %v4778
        %4780 = vmatmul.bf16.gmra.mxu0 %v4646
        %v4781 = vpop.f32.mrf.mxu0
        %v4782 = vadd.f32 0.0, %v4781
        %v4783 = vpop.f32.mrf.mxu0
        %v4784 = vadd.f32 0.0, %v4783
        %4785 = vmatmul.bf16.gmra.mxu0 %v4647
        %v4786 = vpop.f32.mrf.mxu0
        %v4787 = vadd.f32 0.0, %v4786
        %v4788 = vpop.f32.mrf.mxu0
        %v4789 = vadd.f32 0.0, %v4788
        %4790 = vmatmul.bf16.gmra.mxu0 %v4648
        %v4791 = vpop.f32.mrf.mxu0
        %v4792 = vadd.f32 0.0, %v4791
        %v4793 = vpop.f32.mrf.mxu0
        %v4794 = vadd.f32 0.0, %v4793
        %4795 = vmatmul.bf16.gmra.mxu0 %v4649
        %v4796 = vpop.f32.mrf.mxu0
        %v4797 = vadd.f32 0.0, %v4796
        %v4798 = vpop.f32.mrf.mxu0
        %v4799 = vadd.f32 0.0, %v4798
        %4800 = vmatmul.bf16.gmra.mxu0 %v4650
        %v4801 = vpop.f32.mrf.mxu0
        %v4802 = vadd.f32 0.0, %v4801
        %v4803 = vpop.f32.mrf.mxu0
        %v4804 = vadd.f32 0.0, %v4803
        %4805 = vmatmul.bf16.gmra.mxu0 %v4651
        %v4806 = vpop.f32.mrf.mxu0
        %v4807 = vadd.f32 0.0, %v4806
        %v4808 = vpop.f32.mrf.mxu0
        %v4809 = vadd.f32 0.0, %v4808
        %4810 = vmatmul.bf16.gmra.mxu0 %v4652
        %v4811 = vpop.f32.mrf.mxu0
        %v4812 = vadd.f32 0.0, %v4811
        %v4813 = vpop.f32.mrf.mxu0
        %v4814 = vadd.f32 0.0, %v4813
        %4815 = vdwg.mxu0
        %v4816 = vadd.f32 %v4563, %v4727
        %v4817 = vadd.f32 %v4564, %v4729
        %v4818 = vadd.f32 %v4565, %v4732
        %v4819 = vadd.f32 %v4566, %v4734
        %v4820 = vadd.f32 %v4567, %v4737
        %v4821 = vadd.f32 %v4568, %v4739
        %v4822 = vadd.f32 %v4569, %v4742
        %v4823 = vadd.f32 %v4570, %v4744
        %v4824 = vadd.f32 %v4571, %v4747
        %v4825 = vadd.f32 %v4572, %v4749
        %v4826 = vadd.f32 %v4573, %v4752
        %v4827 = vadd.f32 %v4574, %v4754
        %v4828 = vadd.f32 %v4575, %v4757
        %v4829 = vadd.f32 %v4576, %v4759
        %v4830 = vadd.f32 %v4577, %v4762
        %v4831 = vadd.f32 %v4578, %v4764
        %v4832 = vadd.f32 %v4579, %v4767
        %v4833 = vadd.f32 %v4580, %v4769
        %v4834 = vadd.f32 %v4581, %v4772
        %v4835 = vadd.f32 %v4582, %v4774
        %v4836 = vadd.f32 %v4583, %v4777
        %v4837 = vadd.f32 %v4584, %v4779
        %v4838 = vadd.f32 %v4585, %v4782
        %v4839 = vadd.f32 %v4586, %v4784
        %v4840 = vadd.f32 %v4587, %v4787
        %v4841 = vadd.f32 %v4588, %v4789
        %v4842 = vadd.f32 %v4589, %v4792
        %v4843 = vadd.f32 %v4590, %v4794
        %v4844 = vadd.f32 %v4591, %v4797
        %v4845 = vadd.f32 %v4592, %v4799
        %v4846 = vadd.f32 %v4593, %v4802
        %v4847 = vadd.f32 %v4594, %v4804
        %v4848 = vadd.f32 %v4595, %v4807
        %v4849 = vadd.f32 %v4596, %v4809
        %v4850 = vadd.f32 %v4597, %v4812
        %v4851 = vadd.f32 %v4598, %v4814
        %v4852 = vld [vmem:[#allocation3 + $0x25] sm:$0xff]
        %v4853 = vld [vmem:[#allocation3 + $0x2d] sm:$0xff]
        %v4854 = vld [vmem:[#allocation3 + $0x35] sm:$0xff]
        %v4855 = vld [vmem:[#allocation3 + $0x3d] sm:$0xff]
        %v4856 = vld [vmem:[#allocation3 + $0x45] sm:$0xff]
        %v4857 = vld [vmem:[#allocation3 + $0x4d] sm:$0xff]
        %v4858 = vld [vmem:[#allocation3 + $0x55] sm:$0xff]
        %v4859 = vld [vmem:[#allocation3 + $0x5d] sm:$0xff]
        %v4860 = vld [vmem:[#allocation3 + $0x65] sm:$0xff]
        %v4861 = vld [vmem:[#allocation3 + $0x6d] sm:$0xff]
        %v4862 = vld [vmem:[#allocation3 + $0x75] sm:$0xff]
        %v4863 = vld [vmem:[#allocation3 + $0x7d] sm:$0xff]
        %v4864 = vld [vmem:[#allocation3 + $0x85] sm:$0xff]
        %v4865 = vld [vmem:[#allocation3 + $0x8d] sm:$0xff]
        %v4866 = vld [vmem:[#allocation3 + $0x95] sm:$0xff]
        %v4867 = vld [vmem:[#allocation3 + $0x9d] sm:$0xff]
        %v4868 = vld [vmem:[#allocation3 + $0xa5] sm:$0xff]
        %v4869 = vld [vmem:[#allocation3 + $0xad] sm:$0xff]
        %v4870 = vld [vmem:[#allocation3 + $0xb5] sm:$0xff]
        %v4871 = vld [vmem:[#allocation3 + $0xbd] sm:$0xff]
        %v4872 = vld [vmem:[#allocation3 + $0xc5] sm:$0xff]
        %v4873 = vld [vmem:[#allocation3 + $0xcd] sm:$0xff]
        %v4874 = vld [vmem:[#allocation3 + $0xd5] sm:$0xff]
        %v4875 = vld [vmem:[#allocation3 + $0xdd] sm:$0xff]
        %v4876 = vld [vmem:[#allocation3 + $0xe5] sm:$0xff]
        %v4877 = vld [vmem:[#allocation3 + $0xed] sm:$0xff]
        %v4878 = vld [vmem:[#allocation3 + $0xf5] sm:$0xff]
        %v4879 = vld [vmem:[#allocation3 + $0xfd] sm:$0xff]
        %v4880 = vld [vmem:[#allocation3 + $0x105] sm:$0xff]
        %v4881 = vld [vmem:[#allocation3 + $0x10d] sm:$0xff]
        %v4882 = vld [vmem:[#allocation3 + $0x115] sm:$0xff]
        %v4883 = vld [vmem:[#allocation3 + $0x11d] sm:$0xff]
        %v4884 = vld [vmem:[#allocation3 + $0x125] sm:$0xff]
        %v4885 = vld [vmem:[#allocation3 + $0x12d] sm:$0xff]
        %v4886 = vld [vmem:[#allocation3 + $0x135] sm:$0xff]
        %v4887 = vld [vmem:[#allocation3 + $0x13d] sm:$0x3f]
        %v4888 = vpack.c.bf16 %v4853, %v4852
        %v4889 = vpack.c.bf16 %v4855, %v4854
        %v4890 = vpack.c.bf16 %v4857, %v4856
        %v4891 = vpack.c.bf16 %v4859, %v4858
        %v4892 = vpack.c.bf16 %v4861, %v4860
        %v4893 = vpack.c.bf16 %v4863, %v4862
        %v4894 = vpack.c.bf16 %v4865, %v4864
        %v4895 = vpack.c.bf16 %v4867, %v4866
        %v4896 = vpack.c.bf16 %v4869, %v4868
        %v4897 = vpack.c.bf16 %v4871, %v4870
        %v4898 = vpack.c.bf16 %v4873, %v4872
        %v4899 = vpack.c.bf16 %v4875, %v4874
        %v4900 = vpack.c.bf16 %v4877, %v4876
        %v4901 = vpack.c.bf16 %v4879, %v4878
        %v4902 = vpack.c.bf16 %v4881, %v4880
        %v4903 = vpack.c.bf16 %v4883, %v4882
        %v4904 = vpack.c.bf16 %v4885, %v4884
        %v4905 = vpack.c.bf16 %v4887, %v4886
        %v4906 = vld [vmem:[%s6 + $0x1c0] sm:$0xf]
        %v4907 = vld [vmem:[%s6 + $0x1c4] sm:$0xf]
        %v4908 = vld [vmem:[%s6 + $0x1c8] sm:$0xf]
        %v4909 = vld [vmem:[%s6 + $0x1cc] sm:$0xf]
        %v4910 = vld [vmem:[%s6 + $0x1d0] sm:$0xf]
        %v4911 = vld [vmem:[%s6 + $0x1d4] sm:$0xf]
        %v4912 = vld [vmem:[%s6 + $0x1d8] sm:$0xf]
        %v4913 = vld [vmem:[%s6 + $0x1dc] sm:$0xf]
        %v4914 = vld [vmem:[%s6 + $0x1e0] sm:$0xf]
        %v4915 = vld [vmem:[%s6 + $0x1e4] sm:$0xf]
        %v4916 = vld [vmem:[%s6 + $0x1e8] sm:$0xf]
        %v4917 = vld [vmem:[%s6 + $0x1ec] sm:$0xf]
        %v4918 = vld [vmem:[%s6 + $0x1f0] sm:$0xf]
        %v4919 = vld [vmem:[%s6 + $0x1f4] sm:$0xf]
        %v4920 = vld [vmem:[%s6 + $0x1f8] sm:$0xf]
        %v4921 = vld [vmem:[%s6 + $0x1fc] sm:$0xf]
        %v4938 = vunpack.c.l.b16 %v4906
        %v4939 = vunpack.c.l.b16 %v4907
        %v4940 = vunpack.c.l.b16 %v4908
        %v4941 = vunpack.c.l.b16 %v4909
        %v4942 = vunpack.c.l.b16 %v4910
        %v4943 = vunpack.c.l.b16 %v4911
        %v4944 = vunpack.c.l.b16 %v4912
        %v4945 = vunpack.c.l.b16 %v4913
        %v4946 = vunpack.c.l.b16 %v4914
        %v4947 = vunpack.c.l.b16 %v4915
        %v4948 = vunpack.c.l.b16 %v4916
        %v4949 = vunpack.c.l.b16 %v4917
        %v4950 = vunpack.c.l.b16 %v4918
        %v4951 = vunpack.c.l.b16 %v4919
        %v4952 = vunpack.c.l.b16 %v4920
        %v4953 = vunpack.c.l.b16 %v4921
        %v4954 = vpack.c.b16 %v4939, %v4938
        %v4955 = vpack.c.b16 %v4941, %v4940
        %v4956 = vpack.c.b16 %v4943, %v4942
        %v4957 = vpack.c.b16 %v4945, %v4944
        %v4958 = vpack.c.b16 %v4947, %v4946
        %v4959 = vpack.c.b16 %v4949, %v4948
        %v4960 = vpack.c.b16 %v4951, %v4950
        %v4961 = vpack.c.b16 %v4953, %v4952
        %4970 = vmatpush.bf16.msra.mxu0 %v4961
        %4971 = vmatpush.bf16.msra.mxu0 %v4960
        %4972 = vmatpush.bf16.msra.mxu0 %v4959
        %4973 = vmatpush.bf16.msra.mxu0 %v4958
        %4974 = vmatpush.bf16.msra.mxu0 %v4957
        %4975 = vmatpush.bf16.msra.mxu0 %v4956
        %4976 = vmatpush.bf16.msra.mxu0 %v4955
        %4977 = vmatpush.bf16.msra.mxu0 %v4954
        %4978 = vmatmul.bf16.gmra.mxu0 %v4888
        %v4979 = vpop.f32.mrf.mxu0
        %v4980 = vadd.f32 0.0, %v4979
        %v4981 = vpop.f32.mrf.mxu0
        %v4982 = vadd.f32 0.0, %v4981
        %4983 = vmatmul.bf16.gmra.mxu0 %v4889
        %v4984 = vpop.f32.mrf.mxu0
        %v4985 = vadd.f32 0.0, %v4984
        %v4986 = vpop.f32.mrf.mxu0
        %v4987 = vadd.f32 0.0, %v4986
        %4988 = vmatmul.bf16.gmra.mxu0 %v4890
        %v4989 = vpop.f32.mrf.mxu0
        %v4990 = vadd.f32 0.0, %v4989
        %v4991 = vpop.f32.mrf.mxu0
        %v4992 = vadd.f32 0.0, %v4991
        %4993 = vmatmul.bf16.gmra.mxu0 %v4891
        %v4994 = vpop.f32.mrf.mxu0
        %v4995 = vadd.f32 0.0, %v4994
        %v4996 = vpop.f32.mrf.mxu0
        %v4997 = vadd.f32 0.0, %v4996
        %4998 = vmatmul.bf16.gmra.mxu0 %v4892
        %v4999 = vpop.f32.mrf.mxu0
        %v5000 = vadd.f32 0.0, %v4999
        %v5001 = vpop.f32.mrf.mxu0
        %v5002 = vadd.f32 0.0, %v5001
        %5003 = vmatmul.bf16.gmra.mxu0 %v4893
        %v5004 = vpop.f32.mrf.mxu0
        %v5005 = vadd.f32 0.0, %v5004
        %v5006 = vpop.f32.mrf.mxu0
        %v5007 = vadd.f32 0.0, %v5006
        %5008 = vmatmul.bf16.gmra.mxu0 %v4894
        %v5009 = vpop.f32.mrf.mxu0
        %v5010 = vadd.f32 0.0, %v5009
        %v5011 = vpop.f32.mrf.mxu0
        %v5012 = vadd.f32 0.0, %v5011
        %5013 = vmatmul.bf16.gmra.mxu0 %v4895
        %v5014 = vpop.f32.mrf.mxu0
        %v5015 = vadd.f32 0.0, %v5014
        %v5016 = vpop.f32.mrf.mxu0
        %v5017 = vadd.f32 0.0, %v5016
        %5018 = vmatmul.bf16.gmra.mxu0 %v4896
        %v5019 = vpop.f32.mrf.mxu0
        %v5020 = vadd.f32 0.0, %v5019
        %v5021 = vpop.f32.mrf.mxu0
        %v5022 = vadd.f32 0.0, %v5021
        %5023 = vmatmul.bf16.gmra.mxu0 %v4897
        %v5024 = vpop.f32.mrf.mxu0
        %v5025 = vadd.f32 0.0, %v5024
        %v5026 = vpop.f32.mrf.mxu0
        %v5027 = vadd.f32 0.0, %v5026
        %5028 = vmatmul.bf16.gmra.mxu0 %v4898
        %v5029 = vpop.f32.mrf.mxu0
        %v5030 = vadd.f32 0.0, %v5029
        %v5031 = vpop.f32.mrf.mxu0
        %v5032 = vadd.f32 0.0, %v5031
        %5033 = vmatmul.bf16.gmra.mxu0 %v4899
        %v5034 = vpop.f32.mrf.mxu0
        %v5035 = vadd.f32 0.0, %v5034
        %v5036 = vpop.f32.mrf.mxu0
        %v5037 = vadd.f32 0.0, %v5036
        %5038 = vmatmul.bf16.gmra.mxu0 %v4900
        %v5039 = vpop.f32.mrf.mxu0
        %v5040 = vadd.f32 0.0, %v5039
        %v5041 = vpop.f32.mrf.mxu0
        %v5042 = vadd.f32 0.0, %v5041
        %5043 = vmatmul.bf16.gmra.mxu0 %v4901
        %v5044 = vpop.f32.mrf.mxu0
        %v5045 = vadd.f32 0.0, %v5044
        %v5046 = vpop.f32.mrf.mxu0
        %v5047 = vadd.f32 0.0, %v5046
        %5048 = vmatmul.bf16.gmra.mxu0 %v4902
        %v5049 = vpop.f32.mrf.mxu0
        %v5050 = vadd.f32 0.0, %v5049
        %v5051 = vpop.f32.mrf.mxu0
        %v5052 = vadd.f32 0.0, %v5051
        %5053 = vmatmul.bf16.gmra.mxu0 %v4903
        %v5054 = vpop.f32.mrf.mxu0
        %v5055 = vadd.f32 0.0, %v5054
        %v5056 = vpop.f32.mrf.mxu0
        %v5057 = vadd.f32 0.0, %v5056
        %5058 = vmatmul.bf16.gmra.mxu0 %v4904
        %v5059 = vpop.f32.mrf.mxu0
        %v5060 = vadd.f32 0.0, %v5059
        %v5061 = vpop.f32.mrf.mxu0
        %v5062 = vadd.f32 0.0, %v5061
        %5063 = vmatmul.bf16.gmra.mxu0 %v4905
        %v5064 = vpop.f32.mrf.mxu0
        %v5065 = vadd.f32 0.0, %v5064
        %v5066 = vpop.f32.mrf.mxu0
        %v5067 = vadd.f32 0.0, %v5066
        %5068 = vdwg.mxu0
        %v5069 = vadd.f32 %v4816, %v4980
        %v5070 = vadd.f32 %v4817, %v4982
        %v5071 = vadd.f32 %v4818, %v4985
        %v5072 = vadd.f32 %v4819, %v4987
        %v5073 = vadd.f32 %v4820, %v4990
        %v5074 = vadd.f32 %v4821, %v4992
        %v5075 = vadd.f32 %v4822, %v4995
        %v5076 = vadd.f32 %v4823, %v4997
        %v5077 = vadd.f32 %v4824, %v5000
        %v5078 = vadd.f32 %v4825, %v5002
        %v5079 = vadd.f32 %v4826, %v5005
        %v5080 = vadd.f32 %v4827, %v5007
        %v5081 = vadd.f32 %v4828, %v5010
        %v5082 = vadd.f32 %v4829, %v5012
        %v5083 = vadd.f32 %v4830, %v5015
        %v5084 = vadd.f32 %v4831, %v5017
        %v5085 = vadd.f32 %v4832, %v5020
        %v5086 = vadd.f32 %v4833, %v5022
        %v5087 = vadd.f32 %v4834, %v5025
        %v5088 = vadd.f32 %v4835, %v5027
        %v5089 = vadd.f32 %v4836, %v5030
        %v5090 = vadd.f32 %v4837, %v5032
        %v5091 = vadd.f32 %v4838, %v5035
        %v5092 = vadd.f32 %v4839, %v5037
        %v5093 = vadd.f32 %v4840, %v5040
        %v5094 = vadd.f32 %v4841, %v5042
        %v5095 = vadd.f32 %v4842, %v5045
        %v5096 = vadd.f32 %v4843, %v5047
        %v5097 = vadd.f32 %v4844, %v5050
        %v5098 = vadd.f32 %v4845, %v5052
        %v5099 = vadd.f32 %v4846, %v5055
        %v5100 = vadd.f32 %v4847, %v5057
        %v5101 = vadd.f32 %v4848, %v5060
        %v5102 = vadd.f32 %v4849, %v5062
        %v5103 = vadd.f32 %v4850, %v5065
        %v5104 = vadd.f32 %v4851, %v5067
        %v5105 = vld [vmem:[#allocation3 + $0x26] sm:$0xff]
        %v5106 = vld [vmem:[#allocation3 + $0x2e] sm:$0xff]
        %v5107 = vld [vmem:[#allocation3 + $0x36] sm:$0xff]
        %v5108 = vld [vmem:[#allocation3 + $0x3e] sm:$0xff]
        %v5109 = vld [vmem:[#allocation3 + $0x46] sm:$0xff]
        %v5110 = vld [vmem:[#allocation3 + $0x4e] sm:$0xff]
        %v5111 = vld [vmem:[#allocation3 + $0x56] sm:$0xff]
        %v5112 = vld [vmem:[#allocation3 + $0x5e] sm:$0xff]
        %v5113 = vld [vmem:[#allocation3 + $0x66] sm:$0xff]
        %v5114 = vld [vmem:[#allocation3 + $0x6e] sm:$0xff]
        %v5115 = vld [vmem:[#allocation3 + $0x76] sm:$0xff]
        %v5116 = vld [vmem:[#allocation3 + $0x7e] sm:$0xff]
        %v5117 = vld [vmem:[#allocation3 + $0x86] sm:$0xff]
        %v5118 = vld [vmem:[#allocation3 + $0x8e] sm:$0xff]
        %v5119 = vld [vmem:[#allocation3 + $0x96] sm:$0xff]
        %v5120 = vld [vmem:[#allocation3 + $0x9e] sm:$0xff]
        %v5121 = vld [vmem:[#allocation3 + $0xa6] sm:$0xff]
        %v5122 = vld [vmem:[#allocation3 + $0xae] sm:$0xff]
        %v5123 = vld [vmem:[#allocation3 + $0xb6] sm:$0xff]
        %v5124 = vld [vmem:[#allocation3 + $0xbe] sm:$0xff]
        %v5125 = vld [vmem:[#allocation3 + $0xc6] sm:$0xff]
        %v5126 = vld [vmem:[#allocation3 + $0xce] sm:$0xff]
        %v5127 = vld [vmem:[#allocation3 + $0xd6] sm:$0xff]
        %v5128 = vld [vmem:[#allocation3 + $0xde] sm:$0xff]
        %v5129 = vld [vmem:[#allocation3 + $0xe6] sm:$0xff]
        %v5130 = vld [vmem:[#allocation3 + $0xee] sm:$0xff]
        %v5131 = vld [vmem:[#allocation3 + $0xf6] sm:$0xff]
        %v5132 = vld [vmem:[#allocation3 + $0xfe] sm:$0xff]
        %v5133 = vld [vmem:[#allocation3 + $0x106] sm:$0xff]
        %v5134 = vld [vmem:[#allocation3 + $0x10e] sm:$0xff]
        %v5135 = vld [vmem:[#allocation3 + $0x116] sm:$0xff]
        %v5136 = vld [vmem:[#allocation3 + $0x11e] sm:$0xff]
        %v5137 = vld [vmem:[#allocation3 + $0x126] sm:$0xff]
        %v5138 = vld [vmem:[#allocation3 + $0x12e] sm:$0xff]
        %v5139 = vld [vmem:[#allocation3 + $0x136] sm:$0xff]
        %v5140 = vld [vmem:[#allocation3 + $0x13e] sm:$0x3f]
        %v5141 = vpack.c.bf16 %v5106, %v5105
        %v5142 = vpack.c.bf16 %v5108, %v5107
        %v5143 = vpack.c.bf16 %v5110, %v5109
        %v5144 = vpack.c.bf16 %v5112, %v5111
        %v5145 = vpack.c.bf16 %v5114, %v5113
        %v5146 = vpack.c.bf16 %v5116, %v5115
        %v5147 = vpack.c.bf16 %v5118, %v5117
        %v5148 = vpack.c.bf16 %v5120, %v5119
        %v5149 = vpack.c.bf16 %v5122, %v5121
        %v5150 = vpack.c.bf16 %v5124, %v5123
        %v5151 = vpack.c.bf16 %v5126, %v5125
        %v5152 = vpack.c.bf16 %v5128, %v5127
        %v5153 = vpack.c.bf16 %v5130, %v5129
        %v5154 = vpack.c.bf16 %v5132, %v5131
        %v5155 = vpack.c.bf16 %v5134, %v5133
        %v5156 = vpack.c.bf16 %v5136, %v5135
        %v5157 = vpack.c.bf16 %v5138, %v5137
        %v5158 = vpack.c.bf16 %v5140, %v5139
        %v5159 = vld [vmem:[%s6 + $0x200] sm:$0xf]
        %v5160 = vld [vmem:[%s6 + $0x204] sm:$0xf]
        %v5161 = vld [vmem:[%s6 + $0x208] sm:$0xf]
        %v5162 = vld [vmem:[%s6 + $0x20c] sm:$0xf]
        %v5163 = vld [vmem:[%s6 + $0x210] sm:$0xf]
        %v5164 = vld [vmem:[%s6 + $0x214] sm:$0xf]
        %v5165 = vld [vmem:[%s6 + $0x218] sm:$0xf]
        %v5166 = vld [vmem:[%s6 + $0x21c] sm:$0xf]
        %v5167 = vld [vmem:[%s6 + $0x220] sm:$0xf]
        %v5168 = vld [vmem:[%s6 + $0x224] sm:$0xf]
        %v5169 = vld [vmem:[%s6 + $0x228] sm:$0xf]
        %v5170 = vld [vmem:[%s6 + $0x22c] sm:$0xf]
        %v5171 = vld [vmem:[%s6 + $0x230] sm:$0xf]
        %v5172 = vld [vmem:[%s6 + $0x234] sm:$0xf]
        %v5173 = vld [vmem:[%s6 + $0x238] sm:$0xf]
        %v5174 = vld [vmem:[%s6 + $0x23c] sm:$0xf]
        %v5191 = vunpack.c.l.b16 %v5159
        %v5192 = vunpack.c.l.b16 %v5160
        %v5193 = vunpack.c.l.b16 %v5161
        %v5194 = vunpack.c.l.b16 %v5162
        %v5195 = vunpack.c.l.b16 %v5163
        %v5196 = vunpack.c.l.b16 %v5164
        %v5197 = vunpack.c.l.b16 %v5165
        %v5198 = vunpack.c.l.b16 %v5166
        %v5199 = vunpack.c.l.b16 %v5167
        %v5200 = vunpack.c.l.b16 %v5168
        %v5201 = vunpack.c.l.b16 %v5169
        %v5202 = vunpack.c.l.b16 %v5170
        %v5203 = vunpack.c.l.b16 %v5171
        %v5204 = vunpack.c.l.b16 %v5172
        %v5205 = vunpack.c.l.b16 %v5173
        %v5206 = vunpack.c.l.b16 %v5174
        %v5207 = vpack.c.b16 %v5192, %v5191
        %v5208 = vpack.c.b16 %v5194, %v5193
        %v5209 = vpack.c.b16 %v5196, %v5195
        %v5210 = vpack.c.b16 %v5198, %v5197
        %v5211 = vpack.c.b16 %v5200, %v5199
        %v5212 = vpack.c.b16 %v5202, %v5201
        %v5213 = vpack.c.b16 %v5204, %v5203
        %v5214 = vpack.c.b16 %v5206, %v5205
        %5223 = vmatpush.bf16.msra.mxu0 %v5214
        %5224 = vmatpush.bf16.msra.mxu0 %v5213
        %5225 = vmatpush.bf16.msra.mxu0 %v5212
        %5226 = vmatpush.bf16.msra.mxu0 %v5211
        %5227 = vmatpush.bf16.msra.mxu0 %v5210
        %5228 = vmatpush.bf16.msra.mxu0 %v5209
        %5229 = vmatpush.bf16.msra.mxu0 %v5208
        %5230 = vmatpush.bf16.msra.mxu0 %v5207
        %5231 = vmatmul.bf16.gmra.mxu0 %v5141
        %v5232 = vpop.f32.mrf.mxu0
        %v5233 = vadd.f32 0.0, %v5232
        %v5234 = vpop.f32.mrf.mxu0
        %v5235 = vadd.f32 0.0, %v5234
        %5236 = vmatmul.bf16.gmra.mxu0 %v5142
        %v5237 = vpop.f32.mrf.mxu0
        %v5238 = vadd.f32 0.0, %v5237
        %v5239 = vpop.f32.mrf.mxu0
        %v5240 = vadd.f32 0.0, %v5239
        %5241 = vmatmul.bf16.gmra.mxu0 %v5143
        %v5242 = vpop.f32.mrf.mxu0
        %v5243 = vadd.f32 0.0, %v5242
        %v5244 = vpop.f32.mrf.mxu0
        %v5245 = vadd.f32 0.0, %v5244
        %5246 = vmatmul.bf16.gmra.mxu0 %v5144
        %v5247 = vpop.f32.mrf.mxu0
        %v5248 = vadd.f32 0.0, %v5247
        %v5249 = vpop.f32.mrf.mxu0
        %v5250 = vadd.f32 0.0, %v5249
        %5251 = vmatmul.bf16.gmra.mxu0 %v5145
        %v5252 = vpop.f32.mrf.mxu0
        %v5253 = vadd.f32 0.0, %v5252
        %v5254 = vpop.f32.mrf.mxu0
        %v5255 = vadd.f32 0.0, %v5254
        %5256 = vmatmul.bf16.gmra.mxu0 %v5146
        %v5257 = vpop.f32.mrf.mxu0
        %v5258 = vadd.f32 0.0, %v5257
        %v5259 = vpop.f32.mrf.mxu0
        %v5260 = vadd.f32 0.0, %v5259
        %5261 = vmatmul.bf16.gmra.mxu0 %v5147
        %v5262 = vpop.f32.mrf.mxu0
        %v5263 = vadd.f32 0.0, %v5262
        %v5264 = vpop.f32.mrf.mxu0
        %v5265 = vadd.f32 0.0, %v5264
        %5266 = vmatmul.bf16.gmra.mxu0 %v5148
        %v5267 = vpop.f32.mrf.mxu0
        %v5268 = vadd.f32 0.0, %v5267
        %v5269 = vpop.f32.mrf.mxu0
        %v5270 = vadd.f32 0.0, %v5269
        %5271 = vmatmul.bf16.gmra.mxu0 %v5149
        %v5272 = vpop.f32.mrf.mxu0
        %v5273 = vadd.f32 0.0, %v5272
        %v5274 = vpop.f32.mrf.mxu0
        %v5275 = vadd.f32 0.0, %v5274
        %5276 = vmatmul.bf16.gmra.mxu0 %v5150
        %v5277 = vpop.f32.mrf.mxu0
        %v5278 = vadd.f32 0.0, %v5277
        %v5279 = vpop.f32.mrf.mxu0
        %v5280 = vadd.f32 0.0, %v5279
        %5281 = vmatmul.bf16.gmra.mxu0 %v5151
        %v5282 = vpop.f32.mrf.mxu0
        %v5283 = vadd.f32 0.0, %v5282
        %v5284 = vpop.f32.mrf.mxu0
        %v5285 = vadd.f32 0.0, %v5284
        %5286 = vmatmul.bf16.gmra.mxu0 %v5152
        %v5287 = vpop.f32.mrf.mxu0
        %v5288 = vadd.f32 0.0, %v5287
        %v5289 = vpop.f32.mrf.mxu0
        %v5290 = vadd.f32 0.0, %v5289
        %5291 = vmatmul.bf16.gmra.mxu0 %v5153
        %v5292 = vpop.f32.mrf.mxu0
        %v5293 = vadd.f32 0.0, %v5292
        %v5294 = vpop.f32.mrf.mxu0
        %v5295 = vadd.f32 0.0, %v5294
        %5296 = vmatmul.bf16.gmra.mxu0 %v5154
        %v5297 = vpop.f32.mrf.mxu0
        %v5298 = vadd.f32 0.0, %v5297
        %v5299 = vpop.f32.mrf.mxu0
        %v5300 = vadd.f32 0.0, %v5299
        %5301 = vmatmul.bf16.gmra.mxu0 %v5155
        %v5302 = vpop.f32.mrf.mxu0
        %v5303 = vadd.f32 0.0, %v5302
        %v5304 = vpop.f32.mrf.mxu0
        %v5305 = vadd.f32 0.0, %v5304
        %5306 = vmatmul.bf16.gmra.mxu0 %v5156
        %v5307 = vpop.f32.mrf.mxu0
        %v5308 = vadd.f32 0.0, %v5307
        %v5309 = vpop.f32.mrf.mxu0
        %v5310 = vadd.f32 0.0, %v5309
        %5311 = vmatmul.bf16.gmra.mxu0 %v5157
        %v5312 = vpop.f32.mrf.mxu0
        %v5313 = vadd.f32 0.0, %v5312
        %v5314 = vpop.f32.mrf.mxu0
        %v5315 = vadd.f32 0.0, %v5314
        %5316 = vmatmul.bf16.gmra.mxu0 %v5158
        %v5317 = vpop.f32.mrf.mxu0
        %v5318 = vadd.f32 0.0, %v5317
        %v5319 = vpop.f32.mrf.mxu0
        %v5320 = vadd.f32 0.0, %v5319
        %5321 = vdwg.mxu0
        %v5322 = vadd.f32 %v5069, %v5233
        %v5323 = vadd.f32 %v5070, %v5235
        %v5324 = vadd.f32 %v5071, %v5238
        %v5325 = vadd.f32 %v5072, %v5240
        %v5326 = vadd.f32 %v5073, %v5243
        %v5327 = vadd.f32 %v5074, %v5245
        %v5328 = vadd.f32 %v5075, %v5248
        %v5329 = vadd.f32 %v5076, %v5250
        %v5330 = vadd.f32 %v5077, %v5253
        %v5331 = vadd.f32 %v5078, %v5255
        %v5332 = vadd.f32 %v5079, %v5258
        %v5333 = vadd.f32 %v5080, %v5260
        %v5334 = vadd.f32 %v5081, %v5263
        %v5335 = vadd.f32 %v5082, %v5265
        %v5336 = vadd.f32 %v5083, %v5268
        %v5337 = vadd.f32 %v5084, %v5270
        %v5338 = vadd.f32 %v5085, %v5273
        %v5339 = vadd.f32 %v5086, %v5275
        %v5340 = vadd.f32 %v5087, %v5278
        %v5341 = vadd.f32 %v5088, %v5280
        %v5342 = vadd.f32 %v5089, %v5283
        %v5343 = vadd.f32 %v5090, %v5285
        %v5344 = vadd.f32 %v5091, %v5288
        %v5345 = vadd.f32 %v5092, %v5290
        %v5346 = vadd.f32 %v5093, %v5293
        %v5347 = vadd.f32 %v5094, %v5295
        %v5348 = vadd.f32 %v5095, %v5298
        %v5349 = vadd.f32 %v5096, %v5300
        %v5350 = vadd.f32 %v5097, %v5303
        %v5351 = vadd.f32 %v5098, %v5305
        %v5352 = vadd.f32 %v5099, %v5308
        %v5353 = vadd.f32 %v5100, %v5310
        %v5354 = vadd.f32 %v5101, %v5313
        %v5355 = vadd.f32 %v5102, %v5315
        %v5356 = vadd.f32 %v5103, %v5318
        %v5357 = vadd.f32 %v5104, %v5320
        %v5358 = vld [vmem:[%s7] sm:$0x1]
        %v5360 = vperm.slane %v5358, 0
        %v5362 = vadd.f32 %v5322, %v5360
        %v5363 = vadd.f32 %v5323, %v5360
        %v5364 = vadd.f32 %v5324, %v5360
        %v5365 = vadd.f32 %v5325, %v5360
        %v5366 = vadd.f32 %v5326, %v5360
        %v5367 = vadd.f32 %v5327, %v5360
        %v5368 = vadd.f32 %v5328, %v5360
        %v5369 = vadd.f32 %v5329, %v5360
        %v5370 = vadd.f32 %v5330, %v5360
        %v5371 = vadd.f32 %v5331, %v5360
        %v5372 = vadd.f32 %v5332, %v5360
        %v5373 = vadd.f32 %v5333, %v5360
        %v5374 = vadd.f32 %v5334, %v5360
        %v5375 = vadd.f32 %v5335, %v5360
        %v5376 = vadd.f32 %v5336, %v5360
        %v5377 = vadd.f32 %v5337, %v5360
        %v5378 = vadd.f32 %v5338, %v5360
        %v5379 = vadd.f32 %v5339, %v5360
        %v5380 = vadd.f32 %v5340, %v5360
        %v5381 = vadd.f32 %v5341, %v5360
        %v5382 = vadd.f32 %v5342, %v5360
        %v5383 = vadd.f32 %v5343, %v5360
        %v5384 = vadd.f32 %v5344, %v5360
        %v5385 = vadd.f32 %v5345, %v5360
        %v5386 = vadd.f32 %v5346, %v5360
        %v5387 = vadd.f32 %v5347, %v5360
        %v5388 = vadd.f32 %v5348, %v5360
        %v5389 = vadd.f32 %v5349, %v5360
        %v5390 = vadd.f32 %v5350, %v5360
        %v5391 = vadd.f32 %v5351, %v5360
        %v5392 = vadd.f32 %v5352, %v5360
        %v5393 = vadd.f32 %v5353, %v5360
        %v5394 = vadd.f32 %v5354, %v5360
        %v5395 = vadd.f32 %v5355, %v5360
        %v5396 = vadd.f32 %v5356, %v5360
        %v5397 = vadd.f32 %v5357, %v5360
        %v5398 = vmul.f32 %v5362, 0.2
        %v5399 = vmul.f32 %v5363, 0.2
        %v5400 = vmul.f32 %v5364, 0.2
        %v5401 = vmul.f32 %v5365, 0.2
        %v5402 = vmul.f32 %v5366, 0.2
        %v5403 = vmul.f32 %v5367, 0.2
        %v5404 = vmul.f32 %v5368, 0.2
        %v5405 = vmul.f32 %v5369, 0.2
        %v5406 = vmul.f32 %v5370, 0.2
        %v5407 = vmul.f32 %v5371, 0.2
        %v5408 = vmul.f32 %v5372, 0.2
        %v5409 = vmul.f32 %v5373, 0.2
        %v5410 = vmul.f32 %v5374, 0.2
        %v5411 = vmul.f32 %v5375, 0.2
        %v5412 = vmul.f32 %v5376, 0.2
        %v5413 = vmul.f32 %v5377, 0.2
        %v5414 = vmul.f32 %v5378, 0.2
        %v5415 = vmul.f32 %v5379, 0.2
        %v5416 = vmul.f32 %v5380, 0.2
        %v5417 = vmul.f32 %v5381, 0.2
        %v5418 = vmul.f32 %v5382, 0.2
        %v5419 = vmul.f32 %v5383, 0.2
        %v5420 = vmul.f32 %v5384, 0.2
        %v5421 = vmul.f32 %v5385, 0.2
        %v5422 = vmul.f32 %v5386, 0.2
        %v5423 = vmul.f32 %v5387, 0.2
        %v5424 = vmul.f32 %v5388, 0.2
        %v5425 = vmul.f32 %v5389, 0.2
        %v5426 = vmul.f32 %v5390, 0.2
        %v5427 = vmul.f32 %v5391, 0.2
        %v5428 = vmul.f32 %v5392, 0.2
        %v5429 = vmul.f32 %v5393, 0.2
        %v5430 = vmul.f32 %v5394, 0.2
        %v5431 = vmul.f32 %v5395, 0.2
        %v5432 = vmul.f32 %v5396, 0.2
        %v5433 = vmul.f32 %v5397, 0.2
        %v5434 = vmax.f32 %v5362, %v5398
        %v5435 = vmax.f32 %v5363, %v5399
        %v5436 = vmax.f32 %v5364, %v5400
        %v5437 = vmax.f32 %v5365, %v5401
        %v5438 = vmax.f32 %v5366, %v5402
        %v5439 = vmax.f32 %v5367, %v5403
        %v5440 = vmax.f32 %v5368, %v5404
        %v5441 = vmax.f32 %v5369, %v5405
        %v5442 = vmax.f32 %v5370, %v5406
        %v5443 = vmax.f32 %v5371, %v5407
        %v5444 = vmax.f32 %v5372, %v5408
        %v5445 = vmax.f32 %v5373, %v5409
        %v5446 = vmax.f32 %v5374, %v5410
        %v5447 = vmax.f32 %v5375, %v5411
        %v5448 = vmax.f32 %v5376, %v5412
        %v5449 = vmax.f32 %v5377, %v5413
        %v5450 = vmax.f32 %v5378, %v5414
        %v5451 = vmax.f32 %v5379, %v5415
        %v5452 = vmax.f32 %v5380, %v5416
        %v5453 = vmax.f32 %v5381, %v5417
        %v5454 = vmax.f32 %v5382, %v5418
        %v5455 = vmax.f32 %v5383, %v5419
        %v5456 = vmax.f32 %v5384, %v5420
        %v5457 = vmax.f32 %v5385, %v5421
        %v5458 = vmax.f32 %v5386, %v5422
        %v5459 = vmax.f32 %v5387, %v5423
        %v5460 = vmax.f32 %v5388, %v5424
        %v5461 = vmax.f32 %v5389, %v5425
        %v5462 = vmax.f32 %v5390, %v5426
        %v5463 = vmax.f32 %v5391, %v5427
        %v5464 = vmax.f32 %v5392, %v5428
        %v5465 = vmax.f32 %v5393, %v5429
        %v5466 = vmax.f32 %v5394, %v5430
        %v5467 = vmax.f32 %v5395, %v5431
        %v5468 = vmax.f32 %v5396, %v5432
        %v5469 = vmax.f32 %v5397, %v5433
        %5470 = vst [vmem:[#allocation2 + $0x13] sm:$0xff] %v5434
        %5471 = vst [vmem:[#allocation2 + $0x1b] sm:$0xff] %v5435
        %5472 = vst [vmem:[#allocation2 + $0x23] sm:$0xff] %v5436
        %5473 = vst [vmem:[#allocation2 + $0x2b] sm:$0xff] %v5437
        %5474 = vst [vmem:[#allocation2 + $0x33] sm:$0xff] %v5438
        %5475 = vst [vmem:[#allocation2 + $0x3b] sm:$0xff] %v5439
        %5476 = vst [vmem:[#allocation2 + $0x43] sm:$0xff] %v5440
        %5477 = vst [vmem:[#allocation2 + $0x4b] sm:$0xff] %v5441
        %5478 = vst [vmem:[#allocation2 + $0x53] sm:$0xff] %v5442
        %5479 = vst [vmem:[#allocation2 + $0x5b] sm:$0xff] %v5443
        %5480 = vst [vmem:[#allocation2 + $0x63] sm:$0xff] %v5444
        %5481 = vst [vmem:[#allocation2 + $0x6b] sm:$0xff] %v5445
        %5482 = vst [vmem:[#allocation2 + $0x73] sm:$0xff] %v5446
        %5483 = vst [vmem:[#allocation2 + $0x7b] sm:$0xff] %v5447
        %5484 = vst [vmem:[#allocation2 + $0x83] sm:$0xff] %v5448
        %5485 = vst [vmem:[#allocation2 + $0x8b] sm:$0xff] %v5449
        %5486 = vst [vmem:[#allocation2 + $0x93] sm:$0xff] %v5450
        %5487 = vst [vmem:[#allocation2 + $0x9b] sm:$0xff] %v5451
        %5488 = vst [vmem:[#allocation2 + $0xa3] sm:$0xff] %v5452
        %5489 = vst [vmem:[#allocation2 + $0xab] sm:$0xff] %v5453
        %5490 = vst [vmem:[#allocation2 + $0xb3] sm:$0xff] %v5454
        %5491 = vst [vmem:[#allocation2 + $0xbb] sm:$0xff] %v5455
        %5492 = vst [vmem:[#allocation2 + $0xc3] sm:$0xff] %v5456
        %5493 = vst [vmem:[#allocation2 + $0xcb] sm:$0xff] %v5457
        %5494 = vst [vmem:[#allocation2 + $0xd3] sm:$0xff] %v5458
        %5495 = vst [vmem:[#allocation2 + $0xdb] sm:$0xff] %v5459
        %5496 = vst [vmem:[#allocation2 + $0xe3] sm:$0xff] %v5460
        %5497 = vst [vmem:[#allocation2 + $0xeb] sm:$0xff] %v5461
        %5498 = vst [vmem:[#allocation2 + $0xf3] sm:$0xff] %v5462
        %5499 = vst [vmem:[#allocation2 + $0xfb] sm:$0xff] %v5463
        %5500 = vst [vmem:[#allocation2 + $0x103] sm:$0xff] %v5464
        %5501 = vst [vmem:[#allocation2 + $0x10b] sm:$0xff] %v5465
        %5502 = vst [vmem:[#allocation2 + $0x113] sm:$0xff] %v5466
        %5503 = vst [vmem:[#allocation2 + $0x11b] sm:$0xff] %v5467
        %5504 = vst [vmem:[#allocation2 + $0x123] sm:$0xff] %v5468
        %5505 = vst [vmem:[#allocation2 + $0x12b] sm:$0x3f] %v5469
        %s5506 = scalar_lea.vmem [#allocation2], 19
        %v5507 = vld [vmem:[%s5506] ss:$2 sm:$0xff]
        %s5508 = scalar_lea.vmem [#allocation2], 20
        %v5509 = vld [vmem:[%s5508] ss:$2 sm:$0xff]
        %v5510 = vadd.f32 %v5507, %v5509
        %s5511 = scalar_lea.vmem [#allocation2], 37
        %v5512 = vld [vmem:[%s5511] ss:$2 sm:$0xff]
        %v5513 = vadd.f32 %v5510, %v5512
        %s5514 = scalar_lea.vmem [#allocation2], 38
        %v5515 = vld [vmem:[%s5514] ss:$2 sm:$0xff]
        %v5516 = vadd.f32 %v5513, %v5515
        %v5517 = vmul.f32 %v5516, 0.25
        %5518 = vst [vmem:[#allocation3 + $0xb] sm:$0xff] %v5517
        %s5519 = scalar_lea.vmem [#allocation2], 55
        %v5520 = vld [vmem:[%s5519] ss:$2 sm:$0xff]
        %s5521 = scalar_lea.vmem [#allocation2], 56
        %v5522 = vld [vmem:[%s5521] ss:$2 sm:$0xff]
        %v5523 = vadd.f32 %v5520, %v5522
        %s5524 = scalar_lea.vmem [#allocation2], 73
        %v5525 = vld [vmem:[%s5524] ss:$2 sm:$0xff]
        %v5526 = vadd.f32 %v5523, %v5525
        %s5527 = scalar_lea.vmem [#allocation2], 74
        %v5528 = vld [vmem:[%s5527] ss:$2 sm:$0xff]
        %v5529 = vadd.f32 %v5526, %v5528
        %v5530 = vmul.f32 %v5529, 0.25
        %5531 = vst [vmem:[#allocation3 + $0x15] sm:$0xff] %v5530
        %s5532 = scalar_lea.vmem [#allocation2], 91
        %v5533 = vld [vmem:[%s5532] ss:$2 sm:$0xff]
        %s5534 = scalar_lea.vmem [#allocation2], 92
        %v5535 = vld [vmem:[%s5534] ss:$2 sm:$0xff]
        %v5536 = vadd.f32 %v5533, %v5535
        %s5537 = scalar_lea.vmem [#allocation2], 109
        %v5538 = vld [vmem:[%s5537] ss:$2 sm:$0xff]
        %v5539 = vadd.f32 %v5536, %v5538
        %s5540 = scalar_lea.vmem [#allocation2], 110
        %v5541 = vld [vmem:[%s5540] ss:$2 sm:$0xff]
        %v5542 = vadd.f32 %v5539, %v5541
        %v5543 = vmul.f32 %v5542, 0.25
        %5544 = vst [vmem:[#allocation3 + $0x1f] sm:$0xff] %v5543
        %s5545 = scalar_lea.vmem [#allocation2], 127
        %v5546 = vld [vmem:[%s5545] ss:$2 sm:$0xff]
        %s5547 = scalar_lea.vmem [#allocation2], 128
        %v5548 = vld [vmem:[%s5547] ss:$2 sm:$0xff]
        %v5549 = vadd.f32 %v5546, %v5548
        %s5550 = scalar_lea.vmem [#allocation2], 145
        %v5551 = vld [vmem:[%s5550] ss:$2 sm:$0xff]
        %v5552 = vadd.f32 %v5549, %v5551
        %s5553 = scalar_lea.vmem [#allocation2], 146
        %v5554 = vld [vmem:[%s5553] ss:$2 sm:$0xff]
        %v5555 = vadd.f32 %v5552, %v5554
        %v5556 = vmul.f32 %v5555, 0.25
        %5557 = vst [vmem:[#allocation3 + $0x29] sm:$0xff] %v5556
        %s5558 = scalar_lea.vmem [#allocation2], 163
        %v5559 = vld [vmem:[%s5558] ss:$2 sm:$0xff]
        %s5560 = scalar_lea.vmem [#allocation2], 164
        %v5561 = vld [vmem:[%s5560] ss:$2 sm:$0xff]
        %v5562 = vadd.f32 %v5559, %v5561
        %s5563 = scalar_lea.vmem [#allocation2], 181
        %v5564 = vld [vmem:[%s5563] ss:$2 sm:$0xff]
        %v5565 = vadd.f32 %v5562, %v5564
        %s5566 = scalar_lea.vmem [#allocation2], 182
        %v5567 = vld [vmem:[%s5566] ss:$2 sm:$0xff]
        %v5568 = vadd.f32 %v5565, %v5567
        %v5569 = vmul.f32 %v5568, 0.25
        %5570 = vst [vmem:[#allocation3 + $0x33] sm:$0xff] %v5569
        %s5571 = scalar_lea.vmem [#allocation2], 199
        %v5572 = vld [vmem:[%s5571] ss:$2 sm:$0xff]
        %s5573 = scalar_lea.vmem [#allocation2], 200
        %v5574 = vld [vmem:[%s5573] ss:$2 sm:$0xff]
        %v5575 = vadd.f32 %v5572, %v5574
        %s5576 = scalar_lea.vmem [#allocation2], 217
        %v5577 = vld [vmem:[%s5576] ss:$2 sm:$0xff]
        %v5578 = vadd.f32 %v5575, %v5577
        %s5579 = scalar_lea.vmem [#allocation2], 218
        %v5580 = vld [vmem:[%s5579] ss:$2 sm:$0xff]
        %v5581 = vadd.f32 %v5578, %v5580
        %v5582 = vmul.f32 %v5581, 0.25
        %5583 = vst [vmem:[#allocation3 + $0x3d] sm:$0xff] %v5582
        %s5584 = scalar_lea.vmem [#allocation2], 235
        %v5585 = vld [vmem:[%s5584] ss:$2 sm:$0xff]
        %s5586 = scalar_lea.vmem [#allocation2], 236
        %v5587 = vld [vmem:[%s5586] ss:$2 sm:$0xff]
        %v5588 = vadd.f32 %v5585, %v5587
        %s5589 = scalar_lea.vmem [#allocation2], 253
        %v5590 = vld [vmem:[%s5589] ss:$2 sm:$0xff]
        %v5591 = vadd.f32 %v5588, %v5590
        %s5592 = scalar_lea.vmem [#allocation2], 254
        %v5593 = vld [vmem:[%s5592] ss:$2 sm:$0xff]
        %v5594 = vadd.f32 %v5591, %v5593
        %v5595 = vmul.f32 %v5594, 0.25
        %5596 = vst [vmem:[#allocation3 + $0x47] sm:$0xff] %v5595
        %s5597 = scalar_lea.vmem [#allocation2], 271
        %v5598 = vld [vmem:[%s5597] ss:$2 sm:$0xff]
        %s5599 = scalar_lea.vmem [#allocation2], 272
        %v5600 = vld [vmem:[%s5599] ss:$2 sm:$0xff]
        %v5601 = vadd.f32 %v5598, %v5600
        %s5602 = scalar_lea.vmem [#allocation2], 289
        %v5603 = vld [vmem:[%s5602] ss:$2 sm:$0xff]
        %v5604 = vadd.f32 %v5601, %v5603
        %s5605 = scalar_lea.vmem [#allocation2], 290
        %v5606 = vld [vmem:[%s5605] ss:$2 sm:$0xff]
        %v5607 = vadd.f32 %v5604, %v5606
        %v5608 = vmul.f32 %v5607, 0.25
        %5609 = vst [vmem:[#allocation3 + $0x51] sm:$0xff] %v5608
        %s5610 = scalar_lea.vmem %s500, 19
        %v5611 = vld [vmem:[%s5610] ss:$2 sm:$0xff]
        %s5612 = scalar_lea.vmem %s500, 20
        %v5613 = vld [vmem:[%s5612] ss:$2 sm:$0xff]
        %v5614 = vadd.f32 %v5611, %v5613
        %s5615 = scalar_lea.vmem %s500, 37
        %v5616 = vld [vmem:[%s5615] ss:$2 sm:$0xff]
        %v5617 = vadd.f32 %v5614, %v5616
        %s5618 = scalar_lea.vmem %s500, 38
        %v5619 = vld [vmem:[%s5618] ss:$2 sm:$0xff]
        %v5620 = vadd.f32 %v5617, %v5619
        %v5621 = vmul.f32 %v5620, 0.25
        %5622 = vst [vmem:[#allocation4 + $0xb] sm:$0xff] %v5621
        %s5623 = scalar_lea.vmem %s500, 55
        %v5624 = vld [vmem:[%s5623] ss:$2 sm:$0xff]
        %s5625 = scalar_lea.vmem %s500, 56
        %v5626 = vld [vmem:[%s5625] ss:$2 sm:$0xff]
        %v5627 = vadd.f32 %v5624, %v5626
        %s5628 = scalar_lea.vmem %s500, 73
        %v5629 = vld [vmem:[%s5628] ss:$2 sm:$0xff]
        %v5630 = vadd.f32 %v5627, %v5629
        %s5631 = scalar_lea.vmem %s500, 74
        %v5632 = vld [vmem:[%s5631] ss:$2 sm:$0xff]
        %v5633 = vadd.f32 %v5630, %v5632
        %v5634 = vmul.f32 %v5633, 0.25
        %5635 = vst [vmem:[#allocation4 + $0x15] sm:$0xff] %v5634
        %s5636 = scalar_lea.vmem %s500, 91
        %v5637 = vld [vmem:[%s5636] ss:$2 sm:$0xff]
        %s5638 = scalar_lea.vmem %s500, 92
        %v5639 = vld [vmem:[%s5638] ss:$2 sm:$0xff]
        %v5640 = vadd.f32 %v5637, %v5639
        %s5641 = scalar_lea.vmem %s500, 109
        %v5642 = vld [vmem:[%s5641] ss:$2 sm:$0xff]
        %v5643 = vadd.f32 %v5640, %v5642
        %s5644 = scalar_lea.vmem %s500, 110
        %v5645 = vld [vmem:[%s5644] ss:$2 sm:$0xff]
        %v5646 = vadd.f32 %v5643, %v5645
        %v5647 = vmul.f32 %v5646, 0.25
        %5648 = vst [vmem:[#allocation4 + $0x1f] sm:$0xff] %v5647
        %s5649 = scalar_lea.vmem %s500, 127
        %v5650 = vld [vmem:[%s5649] ss:$2 sm:$0xff]
        %s5651 = scalar_lea.vmem %s500, 128
        %v5652 = vld [vmem:[%s5651] ss:$2 sm:$0xff]
        %v5653 = vadd.f32 %v5650, %v5652
        %s5654 = scalar_lea.vmem %s500, 145
        %v5655 = vld [vmem:[%s5654] ss:$2 sm:$0xff]
        %v5656 = vadd.f32 %v5653, %v5655
        %s5657 = scalar_lea.vmem %s500, 146
        %v5658 = vld [vmem:[%s5657] ss:$2 sm:$0xff]
        %v5659 = vadd.f32 %v5656, %v5658
        %v5660 = vmul.f32 %v5659, 0.25
        %5661 = vst [vmem:[#allocation4 + $0x29] sm:$0xff] %v5660
        %s5662 = scalar_lea.vmem %s500, 163
        %v5663 = vld [vmem:[%s5662] ss:$2 sm:$0xff]
        %s5664 = scalar_lea.vmem %s500, 164
        %v5665 = vld [vmem:[%s5664] ss:$2 sm:$0xff]
        %v5666 = vadd.f32 %v5663, %v5665
        %s5667 = scalar_lea.vmem %s500, 181
        %v5668 = vld [vmem:[%s5667] ss:$2 sm:$0xff]
        %v5669 = vadd.f32 %v5666, %v5668
        %s5670 = scalar_lea.vmem %s500, 182
        %v5671 = vld [vmem:[%s5670] ss:$2 sm:$0xff]
        %v5672 = vadd.f32 %v5669, %v5671
        %v5673 = vmul.f32 %v5672, 0.25
        %5674 = vst [vmem:[#allocation4 + $0x33] sm:$0xff] %v5673
        %s5675 = scalar_lea.vmem %s500, 199
        %v5676 = vld [vmem:[%s5675] ss:$2 sm:$0xff]
        %s5677 = scalar_lea.vmem %s500, 200
        %v5678 = vld [vmem:[%s5677] ss:$2 sm:$0xff]
        %v5679 = vadd.f32 %v5676, %v5678
        %s5680 = scalar_lea.vmem %s500, 217
        %v5681 = vld [vmem:[%s5680] ss:$2 sm:$0xff]
        %v5682 = vadd.f32 %v5679, %v5681
        %s5683 = scalar_lea.vmem %s500, 218
        %v5684 = vld [vmem:[%s5683] ss:$2 sm:$0xff]
        %v5685 = vadd.f32 %v5682, %v5684
        %v5686 = vmul.f32 %v5685, 0.25
        %5687 = vst [vmem:[#allocation4 + $0x3d] sm:$0xff] %v5686
        %s5688 = scalar_lea.vmem %s500, 235
        %v5689 = vld [vmem:[%s5688] ss:$2 sm:$0xff]
        %s5690 = scalar_lea.vmem %s500, 236
        %v5691 = vld [vmem:[%s5690] ss:$2 sm:$0xff]
        %v5692 = vadd.f32 %v5689, %v5691
        %s5693 = scalar_lea.vmem %s500, 253
        %v5694 = vld [vmem:[%s5693] ss:$2 sm:$0xff]
        %v5695 = vadd.f32 %v5692, %v5694
        %s5696 = scalar_lea.vmem %s500, 254
        %v5697 = vld [vmem:[%s5696] ss:$2 sm:$0xff]
        %v5698 = vadd.f32 %v5695, %v5697
        %v5699 = vmul.f32 %v5698, 0.25
        %5700 = vst [vmem:[#allocation4 + $0x47] sm:$0xff] %v5699
        %s5701 = scalar_lea.vmem %s500, 271
        %v5702 = vld [vmem:[%s5701] ss:$2 sm:$0xff]
        %s5703 = scalar_lea.vmem %s500, 272
        %v5704 = vld [vmem:[%s5703] ss:$2 sm:$0xff]
        %v5705 = vadd.f32 %v5702, %v5704
        %s5706 = scalar_lea.vmem %s500, 289
        %v5707 = vld [vmem:[%s5706] ss:$2 sm:$0xff]
        %v5708 = vadd.f32 %v5705, %v5707
        %s5709 = scalar_lea.vmem %s500, 290
        %v5710 = vld [vmem:[%s5709] ss:$2 sm:$0xff]
        %v5711 = vadd.f32 %v5708, %v5710
        %v5712 = vmul.f32 %v5711, 0.25
        %5713 = vst [vmem:[#allocation4 + $0x51] sm:$0xff] %v5712
        %v5714 = vld [vmem:[#allocation4 + $0xb] sm:$0xff]
        %v5715 = vld [vmem:[#allocation4 + $0x13] sm:$0xff]
        %v5716 = vld [vmem:[#allocation4 + $0x1b] sm:$0xff]
        %v5717 = vld [vmem:[#allocation4 + $0x23] sm:$0xff]
        %v5718 = vld [vmem:[#allocation4 + $0x2b] sm:$0xff]
        %v5719 = vld [vmem:[#allocation4 + $0x33] sm:$0xff]
        %v5720 = vld [vmem:[#allocation4 + $0x3b] sm:$0xff]
        %v5721 = vld [vmem:[#allocation4 + $0x43] sm:$0xff]
        %v5722 = vld [vmem:[#allocation4 + $0x4b] sm:$0xff]
        %v5723 = vld [vmem:[#allocation4 + $0x53] sm:$0x3f]
        %v5724 = vpack.c.bf16 %v5715, %v5714
        %v5725 = vpack.c.bf16 %v5717, %v5716
        %v5726 = vpack.c.bf16 %v5719, %v5718
        %v5727 = vpack.c.bf16 %v5721, %v5720
        %v5728 = vpack.c.bf16 %v5723, %v5722
        %v5729 = vld [vmem:[%s8] sm:$0xf]
        %v5730 = vld [vmem:[%s8 + $0x4] sm:$0xf]
        %v5731 = vld [vmem:[%s8 + $0x8] sm:$0xf]
        %v5732 = vld [vmem:[%s8 + $0xc] sm:$0xf]
        %v5733 = vld [vmem:[%s8 + $0x10] sm:$0xf]
        %v5734 = vld [vmem:[%s8 + $0x14] sm:$0xf]
        %v5735 = vld [vmem:[%s8 + $0x18] sm:$0xf]
        %v5736 = vld [vmem:[%s8 + $0x1c] sm:$0xf]
        %v5737 = vld [vmem:[%s8 + $0x20] sm:$0xf]
        %v5738 = vld [vmem:[%s8 + $0x24] sm:$0xf]
        %v5739 = vld [vmem:[%s8 + $0x28] sm:$0xf]
        %v5740 = vld [vmem:[%s8 + $0x2c] sm:$0xf]
        %v5741 = vld [vmem:[%s8 + $0x30] sm:$0xf]
        %v5742 = vld [vmem:[%s8 + $0x34] sm:$0xf]
        %v5743 = vld [vmem:[%s8 + $0x38] sm:$0xf]
        %v5744 = vld [vmem:[%s8 + $0x3c] sm:$0xf]
        %v5745 = vld [vmem:[%s9] sm:$0x1]
        %v5747 = vperm.slane %v5745, 0
        %v5765 = vunpack.c.l.b16 %v5729
        %v5766 = vunpack.c.l.b16 %v5730
        %v5767 = vunpack.c.l.b16 %v5731
        %v5768 = vunpack.c.l.b16 %v5732
        %v5769 = vunpack.c.l.b16 %v5733
        %v5770 = vunpack.c.l.b16 %v5734
        %v5771 = vunpack.c.l.b16 %v5735
        %v5772 = vunpack.c.l.b16 %v5736
        %v5773 = vunpack.c.l.b16 %v5737
        %v5774 = vunpack.c.l.b16 %v5738
        %v5775 = vunpack.c.l.b16 %v5739
        %v5776 = vunpack.c.l.b16 %v5740
        %v5777 = vunpack.c.l.b16 %v5741
        %v5778 = vunpack.c.l.b16 %v5742
        %v5779 = vunpack.c.l.b16 %v5743
        %v5780 = vunpack.c.l.b16 %v5744
        %v5781 = vpack.c.b16 %v5766, %v5765
        %v5782 = vpack.c.b16 %v5768, %v5767
        %v5783 = vpack.c.b16 %v5770, %v5769
        %v5784 = vpack.c.b16 %v5772, %v5771
        %v5785 = vpack.c.b16 %v5774, %v5773
        %v5786 = vpack.c.b16 %v5776, %v5775
        %v5787 = vpack.c.b16 %v5778, %v5777
        %v5788 = vpack.c.b16 %v5780, %v5779
        %5797 = vmatpush.bf16.msra.mxu0 %v5788
        %5798 = vmatpush.bf16.msra.mxu0 %v5787
        %5799 = vmatpush.bf16.msra.mxu0 %v5786
        %5800 = vmatpush.bf16.msra.mxu0 %v5785
        %5801 = vmatpush.bf16.msra.mxu0 %v5784
        %5802 = vmatpush.bf16.msra.mxu0 %v5783
        %5803 = vmatpush.bf16.msra.mxu0 %v5782
        %5804 = vmatpush.bf16.msra.mxu0 %v5781
        %5805 = vmatmul.bf16.gmra.mxu0 %v5724
        %v5806 = vpop.f32.mrf.mxu0
        %v5807 = vadd.f32 %v5747, %v5806
        %v5808 = vpop.f32.mrf.mxu0
        %v5809 = vadd.f32 %v5747, %v5808
        %5810 = vmatmul.bf16.gmra.mxu0 %v5725
        %v5811 = vpop.f32.mrf.mxu0
        %v5812 = vadd.f32 %v5747, %v5811
        %v5813 = vpop.f32.mrf.mxu0
        %v5814 = vadd.f32 %v5747, %v5813
        %5815 = vmatmul.bf16.gmra.mxu0 %v5726
        %v5816 = vpop.f32.mrf.mxu0
        %v5817 = vadd.f32 %v5747, %v5816
        %v5818 = vpop.f32.mrf.mxu0
        %v5819 = vadd.f32 %v5747, %v5818
        %5820 = vmatmul.bf16.gmra.mxu0 %v5727
        %v5821 = vpop.f32.mrf.mxu0
        %v5822 = vadd.f32 %v5747, %v5821
        %v5823 = vpop.f32.mrf.mxu0
        %v5824 = vadd.f32 %v5747, %v5823
        %5825 = vmatmul.bf16.gmra.mxu0 %v5728
        %v5826 = vpop.f32.mrf.mxu0
        %v5827 = vadd.f32 %v5747, %v5826
        %v5828 = vpop.f32.mrf.mxu0
        %v5829 = vadd.f32 %v5747, %v5828
        %5830 = vdwg.mxu0
        %5831 = vst [vmem:[#allocation2 + $0xb] sm:$0xff] %v5807
        %5832 = vst [vmem:[#allocation2 + $0x13] sm:$0xff] %v5809
        %5833 = vst [vmem:[#allocation2 + $0x1b] sm:$0xff] %v5812
        %5834 = vst [vmem:[#allocation2 + $0x23] sm:$0xff] %v5814
        %5835 = vst [vmem:[#allocation2 + $0x2b] sm:$0xff] %v5817
        %5836 = vst [vmem:[#allocation2 + $0x33] sm:$0xff] %v5819
        %5837 = vst [vmem:[#allocation2 + $0x3b] sm:$0xff] %v5822
        %5838 = vst [vmem:[#allocation2 + $0x43] sm:$0xff] %v5824
        %5839 = vst [vmem:[#allocation2 + $0x4b] sm:$0xff] %v5827
        %5840 = vst [vmem:[#allocation2 + $0x53] sm:$0x3f] %v5829
        %s5841 = sld [smem:[#allocation5]]
        %v5842 = vld [vmem:[#allocation3 + $0xb] sm:$0xff]
        %v5843 = vld [vmem:[#allocation3 + $0x13] sm:$0xff]
        %v5844 = vld [vmem:[#allocation3 + $0x1b] sm:$0xff]
        %v5845 = vld [vmem:[#allocation3 + $0x23] sm:$0xff]
        %v5846 = vld [vmem:[#allocation3 + $0x2b] sm:$0xff]
        %v5847 = vld [vmem:[#allocation3 + $0x33] sm:$0xff]
        %v5848 = vld [vmem:[#allocation3 + $0x3b] sm:$0xff]
        %v5849 = vld [vmem:[#allocation3 + $0x43] sm:$0xff]
        %v5850 = vld [vmem:[#allocation3 + $0x4b] sm:$0xff]
        %v5851 = vld [vmem:[#allocation3 + $0x53] sm:$0x3f]
        %v5852 = vstv %s5841
        %v5853 = vmul.f32 %v5852, %v5842
        %v5854 = vmul.f32 %v5852, %v5843
        %v5855 = vmul.f32 %v5852, %v5844
        %v5856 = vmul.f32 %v5852, %v5845
        %v5857 = vmul.f32 %v5852, %v5846
        %v5858 = vmul.f32 %v5852, %v5847
        %v5859 = vmul.f32 %v5852, %v5848
        %v5860 = vmul.f32 %v5852, %v5849
        %v5861 = vmul.f32 %v5852, %v5850
        %v5862 = vmul.f32 %v5852, %v5851
        %s5863 = ssub.f32 1.0, %s5841
        %v5864 = vld [vmem:[#allocation2 + $0xb] sm:$0xff]
        %v5865 = vld [vmem:[#allocation2 + $0x13] sm:$0xff]
        %v5866 = vld [vmem:[#allocation2 + $0x1b] sm:$0xff]
        %v5867 = vld [vmem:[#allocation2 + $0x23] sm:$0xff]
        %v5868 = vld [vmem:[#allocation2 + $0x2b] sm:$0xff]
        %v5869 = vld [vmem:[#allocation2 + $0x33] sm:$0xff]
        %v5870 = vld [vmem:[#allocation2 + $0x3b] sm:$0xff]
        %v5871 = vld [vmem:[#allocation2 + $0x43] sm:$0xff]
        %v5872 = vld [vmem:[#allocation2 + $0x4b] sm:$0xff]
        %v5873 = vld [vmem:[#allocation2 + $0x53] sm:$0x3f]
        %v5874 = vstv %s5863
        %v5875 = vmul.f32 %v5874, %v5864
        %v5876 = vmul.f32 %v5874, %v5865
        %v5877 = vmul.f32 %v5874, %v5866
        %v5878 = vmul.f32 %v5874, %v5867
        %v5879 = vmul.f32 %v5874, %v5868
        %v5880 = vmul.f32 %v5874, %v5869
        %v5881 = vmul.f32 %v5874, %v5870
        %v5882 = vmul.f32 %v5874, %v5871
        %v5883 = vmul.f32 %v5874, %v5872
        %v5884 = vmul.f32 %v5874, %v5873
        %v5885 = vadd.f32 %v5853, %v5875
        %v5886 = vadd.f32 %v5854, %v5876
        %v5887 = vadd.f32 %v5855, %v5877
        %v5888 = vadd.f32 %v5856, %v5878
        %v5889 = vadd.f32 %v5857, %v5879
        %v5890 = vadd.f32 %v5858, %v5880
        %v5891 = vadd.f32 %v5859, %v5881
        %v5892 = vadd.f32 %v5860, %v5882
        %v5893 = vadd.f32 %v5861, %v5883
        %v5894 = vadd.f32 %v5862, %v5884
        %v5895 = vtanh.pop %v5885
        %v5896 = vtanh.pop %v5886
        %v5897 = vtanh.pop %v5887
        %v5898 = vtanh.pop %v5888
        %v5899 = vtanh.pop %v5889
        %v5900 = vtanh.pop %v5890
        %v5901 = vtanh.pop %v5891
        %v5902 = vtanh.pop %v5892
        %v5903 = vtanh.pop %v5893
        %v5904 = vtanh.pop %v5894
        %5905 = vst [vmem:[#allocation2 + $0xb] sm:$0xff] %v5895
        %5906 = vst [vmem:[#allocation2 + $0x13] sm:$0xff] %v5896
        %5907 = vst [vmem:[#allocation2 + $0x1b] sm:$0xff] %v5897
        %5908 = vst [vmem:[#allocation2 + $0x23] sm:$0xff] %v5898
        %5909 = vst [vmem:[#allocation2 + $0x2b] sm:$0xff] %v5899
        %5910 = vst [vmem:[#allocation2 + $0x33] sm:$0xff] %v5900
        %5911 = vst [vmem:[#allocation2 + $0x3b] sm:$0xff] %v5901
        %5912 = vst [vmem:[#allocation2 + $0x43] sm:$0xff] %v5902
        %5913 = vst [vmem:[#allocation2 + $0x4b] sm:$0xff] %v5903
        %5914 = vst [vmem:[#allocation2 + $0x53] sm:$0x3f] %v5904
        %5915 = vst [vmem:[#allocation2] sm:$0xff] 0.0
        %5916 = vst [vmem:[#allocation2 + $0x8] sm:$0x7] 0.0
        %5917 = vst [vmem:[#allocation2 + $0x59] sm:$0xff] 0.0
        %5918 = vst [vmem:[#allocation2 + $0x61] sm:$0x7] 0.0
        %5919 = vst [vmem:[#allocation2 + $0x13] sm:$0x3] 0.0
        %5920 = vst [vmem:[#allocation2 + $0x1d] sm:$0x3] 0.0
        %5921 = vst [vmem:[#allocation2 + $0x27] sm:$0x3] 0.0
        %5922 = vst [vmem:[#allocation2 + $0x31] sm:$0x3] 0.0
        %5923 = vst [vmem:[#allocation2 + $0x3b] sm:$0x3] 0.0
        %5924 = vst [vmem:[#allocation2 + $0x45] sm:$0x3] 0.0
        %5925 = vst [vmem:[#allocation2 + $0x4f] sm:$0x3] 0.0
        %v5926 = vld [vmem:[#allocation2] sm:$0xff]
        %v5927 = vld [vmem:[#allocation2 + $0x8] sm:$0xff]
        %v5928 = vld [vmem:[#allocation2 + $0x10] sm:$0xff]
        %v5929 = vld [vmem:[#allocation2 + $0x18] sm:$0xff]
        %v5930 = vld [vmem:[#allocation2 + $0x20] sm:$0xff]
        %v5931 = vld [vmem:[#allocation2 + $0x28] sm:$0xff]
        %v5932 = vld [vmem:[#allocation2 + $0x30] sm:$0xff]
        %v5933 = vld [vmem:[#allocation2 + $0x38] sm:$0xff]
        %v5934 = vld [vmem:[#allocation2 + $0x40] sm:$0xff]
        %v5935 = vld [vmem:[#allocation2 + $0x48] sm:$0x3f]
        %v5936 = vpack.c.bf16 %v5927, %v5926
        %v5937 = vpack.c.bf16 %v5929, %v5928
        %v5938 = vpack.c.bf16 %v5931, %v5930
        %v5939 = vpack.c.bf16 %v5933, %v5932
        %v5940 = vpack.c.bf16 %v5935, %v5934
        %v5941 = vld [vmem:[#allocation6] sm:$0xf]
        %v5942 = vld [vmem:[#allocation6 + $0x4] sm:$0xf]
        %v5943 = vld [vmem:[#allocation6 + $0x8] sm:$0xf]
        %v5944 = vld [vmem:[#allocation6 + $0xc] sm:$0xf]
        %v5945 = vld [vmem:[#allocation6 + $0x10] sm:$0xf]
        %v5946 = vld [vmem:[#allocation6 + $0x14] sm:$0xf]
        %v5947 = vld [vmem:[#allocation6 + $0x18] sm:$0xf]
        %v5948 = vld [vmem:[#allocation6 + $0x1c] sm:$0xf]
        %v5949 = vld [vmem:[#allocation6 + $0x20] sm:$0xf]
        %v5950 = vld [vmem:[#allocation6 + $0x24] sm:$0xf]
        %v5951 = vld [vmem:[#allocation6 + $0x28] sm:$0xf]
        %v5952 = vld [vmem:[#allocation6 + $0x2c] sm:$0xf]
        %v5953 = vld [vmem:[#allocation6 + $0x30] sm:$0xf]
        %v5954 = vld [vmem:[#allocation6 + $0x34] sm:$0xf]
        %v5955 = vld [vmem:[#allocation6 + $0x38] sm:$0xf]
        %v5956 = vld [vmem:[#allocation6 + $0x3c] sm:$0xf]
        %v5957 = vld [vmem:[#allocation2 + $0x1] sm:$0xff]
        %v5958 = vld [vmem:[#allocation2 + $0x9] sm:$0xff]
        %v5959 = vld [vmem:[#allocation2 + $0x11] sm:$0xff]
        %v5960 = vld [vmem:[#allocation2 + $0x19] sm:$0xff]
        %v5961 = vld [vmem:[#allocation2 + $0x21] sm:$0xff]
        %v5962 = vld [vmem:[#allocation2 + $0x29] sm:$0xff]
        %v5963 = vld [vmem:[#allocation2 + $0x31] sm:$0xff]
        %v5964 = vld [vmem:[#allocation2 + $0x39] sm:$0xff]
        %v5965 = vld [vmem:[#allocation2 + $0x41] sm:$0xff]
        %v5966 = vld [vmem:[#allocation2 + $0x49] sm:$0x3f]
        %v5967 = vpack.c.bf16 %v5958, %v5957
        %v5968 = vpack.c.bf16 %v5960, %v5959
        %v5969 = vpack.c.bf16 %v5962, %v5961
        %v5970 = vpack.c.bf16 %v5964, %v5963
        %v5971 = vpack.c.bf16 %v5966, %v5965
        %v5972 = vld [vmem:[#allocation6 + $0x40] sm:$0xf]
        %v5973 = vld [vmem:[#allocation6 + $0x44] sm:$0xf]
        %v5974 = vld [vmem:[#allocation6 + $0x48] sm:$0xf]
        %v5975 = vld [vmem:[#allocation6 + $0x4c] sm:$0xf]
        %v5976 = vld [vmem:[#allocation6 + $0x50] sm:$0xf]
        %v5977 = vld [vmem:[#allocation6 + $0x54] sm:$0xf]
        %v5978 = vld [vmem:[#allocation6 + $0x58] sm:$0xf]
        %v5979 = vld [vmem:[#allocation6 + $0x5c] sm:$0xf]
        %v5980 = vld [vmem:[#allocation6 + $0x60] sm:$0xf]
        %v5981 = vld [vmem:[#allocation6 + $0x64] sm:$0xf]
        %v5982 = vld [vmem:[#allocation6 + $0x68] sm:$0xf]
        %v5983 = vld [vmem:[#allocation6 + $0x6c] sm:$0xf]
        %v5984 = vld [vmem:[#allocation6 + $0x70] sm:$0xf]
        %v5985 = vld [vmem:[#allocation6 + $0x74] sm:$0xf]
        %v5986 = vld [vmem:[#allocation6 + $0x78] sm:$0xf]
        %v5987 = vld [vmem:[#allocation6 + $0x7c] sm:$0xf]
        %v6004 = vunpack.c.l.b16 %v5972
        %v6005 = vunpack.c.l.b16 %v5973
        %v6006 = vunpack.c.l.b16 %v5974
        %v6007 = vunpack.c.l.b16 %v5975
        %v6008 = vunpack.c.l.b16 %v5976
        %v6009 = vunpack.c.l.b16 %v5977
        %v6010 = vunpack.c.l.b16 %v5978
        %v6011 = vunpack.c.l.b16 %v5979
        %v6012 = vunpack.c.l.b16 %v5980
        %v6013 = vunpack.c.l.b16 %v5981
        %v6014 = vunpack.c.l.b16 %v5982
        %v6015 = vunpack.c.l.b16 %v5983
        %v6016 = vunpack.c.l.b16 %v5984
        %v6017 = vunpack.c.l.b16 %v5985
        %v6018 = vunpack.c.l.b16 %v5986
        %v6019 = vunpack.c.l.b16 %v5987
        %v6020 = vpack.c.b16 %v6005, %v6004
        %v6021 = vpack.c.b16 %v6007, %v6006
        %v6022 = vpack.c.b16 %v6009, %v6008
        %v6023 = vpack.c.b16 %v6011, %v6010
        %v6024 = vpack.c.b16 %v6013, %v6012
        %v6025 = vpack.c.b16 %v6015, %v6014
        %v6026 = vpack.c.b16 %v6017, %v6016
        %v6027 = vpack.c.b16 %v6019, %v6018
        %6036 = vmatpush.bf16.msra.mxu0 %v6027
        %6037 = vmatpush.bf16.msra.mxu0 %v6026
        %6038 = vmatpush.bf16.msra.mxu0 %v6025
        %6039 = vmatpush.bf16.msra.mxu0 %v6024
        %6040 = vmatpush.bf16.msra.mxu0 %v6023
        %6041 = vmatpush.bf16.msra.mxu0 %v6022
        %6042 = vmatpush.bf16.msra.mxu0 %v6021
        %6043 = vmatpush.bf16.msra.mxu0 %v6020
        %6044 = vmatmul.bf16.gmra.mxu0 %v5967
        %v6045 = vpop.f32.mrf.mxu0
        %v6046 = vadd.f32 0.0, %v6045
        %v6047 = vpop.f32.mrf.mxu0
        %v6048 = vadd.f32 0.0, %v6047
        %6049 = vmatmul.bf16.gmra.mxu0 %v5968
        %v6050 = vpop.f32.mrf.mxu0
        %v6051 = vadd.f32 0.0, %v6050
        %v6052 = vpop.f32.mrf.mxu0
        %v6053 = vadd.f32 0.0, %v6052
        %6054 = vmatmul.bf16.gmra.mxu0 %v5969
        %v6055 = vpop.f32.mrf.mxu0
        %v6056 = vadd.f32 0.0, %v6055
        %v6057 = vpop.f32.mrf.mxu0
        %v6058 = vadd.f32 0.0, %v6057
        %6059 = vmatmul.bf16.gmra.mxu0 %v5970
        %v6060 = vpop.f32.mrf.mxu0
        %v6061 = vadd.f32 0.0, %v6060
        %v6062 = vpop.f32.mrf.mxu0
        %v6063 = vadd.f32 0.0, %v6062
        %6064 = vmatmul.bf16.gmra.mxu0 %v5971
        %v6065 = vpop.f32.mrf.mxu0
        %v6066 = vadd.f32 0.0, %v6065
        %v6067 = vpop.f32.mrf.mxu0
        %v6068 = vadd.f32 0.0, %v6067
        %6069 = vdwg.mxu0
        %v6086 = vunpack.c.l.b16 %v5941
        %v6087 = vunpack.c.l.b16 %v5942
        %v6088 = vunpack.c.l.b16 %v5943
        %v6089 = vunpack.c.l.b16 %v5944
        %v6090 = vunpack.c.l.b16 %v5945
        %v6091 = vunpack.c.l.b16 %v5946
        %v6092 = vunpack.c.l.b16 %v5947
        %v6093 = vunpack.c.l.b16 %v5948
        %v6094 = vunpack.c.l.b16 %v5949
        %v6095 = vunpack.c.l.b16 %v5950
        %v6096 = vunpack.c.l.b16 %v5951
        %v6097 = vunpack.c.l.b16 %v5952
        %v6098 = vunpack.c.l.b16 %v5953
        %v6099 = vunpack.c.l.b16 %v5954
        %v6100 = vunpack.c.l.b16 %v5955
        %v6101 = vunpack.c.l.b16 %v5956
        %v6102 = vpack.c.b16 %v6087, %v6086
        %v6103 = vpack.c.b16 %v6089, %v6088
        %v6104 = vpack.c.b16 %v6091, %v6090
        %v6105 = vpack.c.b16 %v6093, %v6092
        %v6106 = vpack.c.b16 %v6095, %v6094
        %v6107 = vpack.c.b16 %v6097, %v6096
        %v6108 = vpack.c.b16 %v6099, %v6098
        %v6109 = vpack.c.b16 %v6101, %v6100
        %6118 = vmatpush.bf16.msra.mxu0 %v6109
        %6119 = vmatpush.bf16.msra.mxu0 %v6108
        %6120 = vmatpush.bf16.msra.mxu0 %v6107
        %6121 = vmatpush.bf16.msra.mxu0 %v6106
        %6122 = vmatpush.bf16.msra.mxu0 %v6105
        %6123 = vmatpush.bf16.msra.mxu0 %v6104
        %6124 = vmatpush.bf16.msra.mxu0 %v6103
        %6125 = vmatpush.bf16.msra.mxu0 %v6102
        %6126 = vmatmul.bf16.gmra.mxu0 %v5936
        %v6127 = vpop.f32.mrf.mxu0
        %v6128 = vadd.f32 %v6046, %v6127
        %v6129 = vpop.f32.mrf.mxu0
        %v6130 = vadd.f32 %v6048, %v6129
        %6131 = vmatmul.bf16.gmra.mxu0 %v5937
        %v6132 = vpop.f32.mrf.mxu0
        %v6133 = vadd.f32 %v6051, %v6132
        %v6134 = vpop.f32.mrf.mxu0
        %v6135 = vadd.f32 %v6053, %v6134
        %6136 = vmatmul.bf16.gmra.mxu0 %v5938
        %v6137 = vpop.f32.mrf.mxu0
        %v6138 = vadd.f32 %v6056, %v6137
        %v6139 = vpop.f32.mrf.mxu0
        %v6140 = vadd.f32 %v6058, %v6139
        %6141 = vmatmul.bf16.gmra.mxu0 %v5939
        %v6142 = vpop.f32.mrf.mxu0
        %v6143 = vadd.f32 %v6061, %v6142
        %v6144 = vpop.f32.mrf.mxu0
        %v6145 = vadd.f32 %v6063, %v6144
        %6146 = vmatmul.bf16.gmra.mxu0 %v5940
        %v6147 = vpop.f32.mrf.mxu0
        %v6148 = vadd.f32 %v6066, %v6147
        %v6149 = vpop.f32.mrf.mxu0
        %v6150 = vadd.f32 %v6068, %v6149
        %6151 = vdwg.mxu0
        %v6152 = vld [vmem:[#allocation2 + $0x2] sm:$0xff]
        %v6153 = vld [vmem:[#allocation2 + $0xa] sm:$0xff]
        %v6154 = vld [vmem:[#allocation2 + $0x12] sm:$0xff]
        %v6155 = vld [vmem:[#allocation2 + $0x1a] sm:$0xff]
        %v6156 = vld [vmem:[#allocation2 + $0x22] sm:$0xff]
        %v6157 = vld [vmem:[#allocation2 + $0x2a] sm:$0xff]
        %v6158 = vld [vmem:[#allocation2 + $0x32] sm:$0xff]
        %v6159 = vld [vmem:[#allocation2 + $0x3a] sm:$0xff]
        %v6160 = vld [vmem:[#allocation2 + $0x42] sm:$0xff]
        %v6161 = vld [vmem:[#allocation2 + $0x4a] sm:$0x3f]
        %v6162 = vpack.c.bf16 %v6153, %v6152
        %v6163 = vpack.c.bf16 %v6155, %v6154
        %v6164 = vpack.c.bf16 %v6157, %v6156
        %v6165 = vpack.c.bf16 %v6159, %v6158
        %v6166 = vpack.c.bf16 %v6161, %v6160
        %v6167 = vld [vmem:[#allocation6 + $0x80] sm:$0xf]
        %v6168 = vld [vmem:[#allocation6 + $0x84] sm:$0xf]
        %v6169 = vld [vmem:[#allocation6 + $0x88] sm:$0xf]
        %v6170 = vld [vmem:[#allocation6 + $0x8c] sm:$0xf]
        %v6171 = vld [vmem:[#allocation6 + $0x90] sm:$0xf]
        %v6172 = vld [vmem:[#allocation6 + $0x94] sm:$0xf]
        %v6173 = vld [vmem:[#allocation6 + $0x98] sm:$0xf]
        %v6174 = vld [vmem:[#allocation6 + $0x9c] sm:$0xf]
        %v6175 = vld [vmem:[#allocation6 + $0xa0] sm:$0xf]
        %v6176 = vld [vmem:[#allocation6 + $0xa4] sm:$0xf]
        %v6177 = vld [vmem:[#allocation6 + $0xa8] sm:$0xf]
        %v6178 = vld [vmem:[#allocation6 + $0xac] sm:$0xf]
        %v6179 = vld [vmem:[#allocation6 + $0xb0] sm:$0xf]
        %v6180 = vld [vmem:[#allocation6 + $0xb4] sm:$0xf]
        %v6181 = vld [vmem:[#allocation6 + $0xb8] sm:$0xf]
        %v6182 = vld [vmem:[#allocation6 + $0xbc] sm:$0xf]
        %v6199 = vunpack.c.l.b16 %v6167
        %v6200 = vunpack.c.l.b16 %v6168
        %v6201 = vunpack.c.l.b16 %v6169
        %v6202 = vunpack.c.l.b16 %v6170
        %v6203 = vunpack.c.l.b16 %v6171
        %v6204 = vunpack.c.l.b16 %v6172
        %v6205 = vunpack.c.l.b16 %v6173
        %v6206 = vunpack.c.l.b16 %v6174
        %v6207 = vunpack.c.l.b16 %v6175
        %v6208 = vunpack.c.l.b16 %v6176
        %v6209 = vunpack.c.l.b16 %v6177
        %v6210 = vunpack.c.l.b16 %v6178
        %v6211 = vunpack.c.l.b16 %v6179
        %v6212 = vunpack.c.l.b16 %v6180
        %v6213 = vunpack.c.l.b16 %v6181
        %v6214 = vunpack.c.l.b16 %v6182
        %v6215 = vpack.c.b16 %v6200, %v6199
        %v6216 = vpack.c.b16 %v6202, %v6201
        %v6217 = vpack.c.b16 %v6204, %v6203
        %v6218 = vpack.c.b16 %v6206, %v6205
        %v6219 = vpack.c.b16 %v6208, %v6207
        %v6220 = vpack.c.b16 %v6210, %v6209
        %v6221 = vpack.c.b16 %v6212, %v6211
        %v6222 = vpack.c.b16 %v6214, %v6213
        %6231 = vmatpush.bf16.msra.mxu0 %v6222
        %6232 = vmatpush.bf16.msra.mxu0 %v6221
        %6233 = vmatpush.bf16.msra.mxu0 %v6220
        %6234 = vmatpush.bf16.msra.mxu0 %v6219
        %6235 = vmatpush.bf16.msra.mxu0 %v6218
        %6236 = vmatpush.bf16.msra.mxu0 %v6217
        %6237 = vmatpush.bf16.msra.mxu0 %v6216
        %6238 = vmatpush.bf16.msra.mxu0 %v6215
        %6239 = vmatmul.bf16.gmra.mxu0 %v6162
        %v6240 = vpop.f32.mrf.mxu0
        %v6241 = vadd.f32 0.0, %v6240
        %v6242 = vpop.f32.mrf.mxu0
        %v6243 = vadd.f32 0.0, %v6242
        %6244 = vmatmul.bf16.gmra.mxu0 %v6163
        %v6245 = vpop.f32.mrf.mxu0
        %v6246 = vadd.f32 0.0, %v6245
        %v6247 = vpop.f32.mrf.mxu0
        %v6248 = vadd.f32 0.0, %v6247
        %6249 = vmatmul.bf16.gmra.mxu0 %v6164
        %v6250 = vpop.f32.mrf.mxu0
        %v6251 = vadd.f32 0.0, %v6250
        %v6252 = vpop.f32.mrf.mxu0
        %v6253 = vadd.f32 0.0, %v6252
        %6254 = vmatmul.bf16.gmra.mxu0 %v6165
        %v6255 = vpop.f32.mrf.mxu0
        %v6256 = vadd.f32 0.0, %v6255
        %v6257 = vpop.f32.mrf.mxu0
        %v6258 = vadd.f32 0.0, %v6257
        %6259 = vmatmul.bf16.gmra.mxu0 %v6166
        %v6260 = vpop.f32.mrf.mxu0
        %v6261 = vadd.f32 0.0, %v6260
        %v6262 = vpop.f32.mrf.mxu0
        %v6263 = vadd.f32 0.0, %v6262
        %6264 = vdwg.mxu0
        %v6265 = vadd.f32 %v6128, %v6241
        %v6266 = vadd.f32 %v6130, %v6243
        %v6267 = vadd.f32 %v6133, %v6246
        %v6268 = vadd.f32 %v6135, %v6248
        %v6269 = vadd.f32 %v6138, %v6251
        %v6270 = vadd.f32 %v6140, %v6253
        %v6271 = vadd.f32 %v6143, %v6256
        %v6272 = vadd.f32 %v6145, %v6258
        %v6273 = vadd.f32 %v6148, %v6261
        %v6274 = vadd.f32 %v6150, %v6263
        %v6275 = vld [vmem:[#allocation2 + $0xa] sm:$0xff]
        %v6276 = vld [vmem:[#allocation2 + $0x12] sm:$0xff]
        %v6277 = vld [vmem:[#allocation2 + $0x1a] sm:$0xff]
        %v6278 = vld [vmem:[#allocation2 + $0x22] sm:$0xff]
        %v6279 = vld [vmem:[#allocation2 + $0x2a] sm:$0xff]
        %v6280 = vld [vmem:[#allocation2 + $0x32] sm:$0xff]
        %v6281 = vld [vmem:[#allocation2 + $0x3a] sm:$0xff]
        %v6282 = vld [vmem:[#allocation2 + $0x42] sm:$0xff]
        %v6283 = vld [vmem:[#allocation2 + $0x4a] sm:$0xff]
        %v6284 = vld [vmem:[#allocation2 + $0x52] sm:$0x3f]
        %v6285 = vpack.c.bf16 %v6276, %v6275
        %v6286 = vpack.c.bf16 %v6278, %v6277
        %v6287 = vpack.c.bf16 %v6280, %v6279
        %v6288 = vpack.c.bf16 %v6282, %v6281
        %v6289 = vpack.c.bf16 %v6284, %v6283
        %v6290 = vld [vmem:[#allocation6 + $0xc0] sm:$0xf]
        %v6291 = vld [vmem:[#allocation6 + $0xc4] sm:$0xf]
        %v6292 = vld [vmem:[#allocation6 + $0xc8] sm:$0xf]
        %v6293 = vld [vmem:[#allocation6 + $0xcc] sm:$0xf]
        %v6294 = vld [vmem:[#allocation6 + $0xd0] sm:$0xf]
        %v6295 = vld [vmem:[#allocation6 + $0xd4] sm:$0xf]
        %v6296 = vld [vmem:[#allocation6 + $0xd8] sm:$0xf]
        %v6297 = vld [vmem:[#allocation6 + $0xdc] sm:$0xf]
        %v6298 = vld [vmem:[#allocation6 + $0xe0] sm:$0xf]
        %v6299 = vld [vmem:[#allocation6 + $0xe4] sm:$0xf]
        %v6300 = vld [vmem:[#allocation6 + $0xe8] sm:$0xf]
        %v6301 = vld [vmem:[#allocation6 + $0xec] sm:$0xf]
        %v6302 = vld [vmem:[#allocation6 + $0xf0] sm:$0xf]
        %v6303 = vld [vmem:[#allocation6 + $0xf4] sm:$0xf]
        %v6304 = vld [vmem:[#allocation6 + $0xf8] sm:$0xf]
        %v6305 = vld [vmem:[#allocation6 + $0xfc] sm:$0xf]
        %v6322 = vunpack.c.l.b16 %v6290
        %v6323 = vunpack.c.l.b16 %v6291
        %v6324 = vunpack.c.l.b16 %v6292
        %v6325 = vunpack.c.l.b16 %v6293
        %v6326 = vunpack.c.l.b16 %v6294
        %v6327 = vunpack.c.l.b16 %v6295
        %v6328 = vunpack.c.l.b16 %v6296
        %v6329 = vunpack.c.l.b16 %v6297
        %v6330 = vunpack.c.l.b16 %v6298
        %v6331 = vunpack.c.l.b16 %v6299
        %v6332 = vunpack.c.l.b16 %v6300
        %v6333 = vunpack.c.l.b16 %v6301
        %v6334 = vunpack.c.l.b16 %v6302
        %v6335 = vunpack.c.l.b16 %v6303
        %v6336 = vunpack.c.l.b16 %v6304
        %v6337 = vunpack.c.l.b16 %v6305
        %v6338 = vpack.c.b16 %v6323, %v6322
        %v6339 = vpack.c.b16 %v6325, %v6324
        %v6340 = vpack.c.b16 %v6327, %v6326
        %v6341 = vpack.c.b16 %v6329, %v6328
        %v6342 = vpack.c.b16 %v6331, %v6330
        %v6343 = vpack.c.b16 %v6333, %v6332
        %v6344 = vpack.c.b16 %v6335, %v6334
        %v6345 = vpack.c.b16 %v6337, %v6336
        %6354 = vmatpush.bf16.msra.mxu0 %v6345
        %6355 = vmatpush.bf16.msra.mxu0 %v6344
        %6356 = vmatpush.bf16.msra.mxu0 %v6343
        %6357 = vmatpush.bf16.msra.mxu0 %v6342
        %6358 = vmatpush.bf16.msra.mxu0 %v6341
        %6359 = vmatpush.bf16.msra.mxu0 %v6340
        %6360 = vmatpush.bf16.msra.mxu0 %v6339
        %6361 = vmatpush.bf16.msra.mxu0 %v6338
        %6362 = vmatmul.bf16.gmra.mxu0 %v6285
        %v6363 = vpop.f32.mrf.mxu0
        %v6364 = vadd.f32 0.0, %v6363
        %v6365 = vpop.f32.mrf.mxu0
        %v6366 = vadd.f32 0.0, %v6365
        %6367 = vmatmul.bf16.gmra.mxu0 %v6286
        %v6368 = vpop.f32.mrf.mxu0
        %v6369 = vadd.f32 0.0, %v6368
        %v6370 = vpop.f32.mrf.mxu0
        %v6371 = vadd.f32 0.0, %v6370
        %6372 = vmatmul.bf16.gmra.mxu0 %v6287
        %v6373 = vpop.f32.mrf.mxu0
        %v6374 = vadd.f32 0.0, %v6373
        %v6375 = vpop.f32.mrf.mxu0
        %v6376 = vadd.f32 0.0, %v6375
        %6377 = vmatmul.bf16.gmra.mxu0 %v6288
        %v6378 = vpop.f32.mrf.mxu0
        %v6379 = vadd.f32 0.0, %v6378
        %v6380 = vpop.f32.mrf.mxu0
        %v6381 = vadd.f32 0.0, %v6380
        %6382 = vmatmul.bf16.gmra.mxu0 %v6289
        %v6383 = vpop.f32.mrf.mxu0
        %v6384 = vadd.f32 0.0, %v6383
        %v6385 = vpop.f32.mrf.mxu0
        %v6386 = vadd.f32 0.0, %v6385
        %6387 = vdwg.mxu0
        %v6388 = vadd.f32 %v6265, %v6364
        %v6389 = vadd.f32 %v6266, %v6366
        %v6390 = vadd.f32 %v6267, %v6369
        %v6391 = vadd.f32 %v6268, %v6371
        %v6392 = vadd.f32 %v6269, %v6374
        %v6393 = vadd.f32 %v6270, %v6376
        %v6394 = vadd.f32 %v6271, %v6379
        %v6395 = vadd.f32 %v6272, %v6381
        %v6396 = vadd.f32 %v6273, %v6384
        %v6397 = vadd.f32 %v6274, %v6386
        %v6398 = vld [vmem:[#allocation2 + $0xb] sm:$0xff]
        %v6399 = vld [vmem:[#allocation2 + $0x13] sm:$0xff]
        %v6400 = vld [vmem:[#allocation2 + $0x1b] sm:$0xff]
        %v6401 = vld [vmem:[#allocation2 + $0x23] sm:$0xff]
        %v6402 = vld [vmem:[#allocation2 + $0x2b] sm:$0xff]
        %v6403 = vld [vmem:[#allocation2 + $0x33] sm:$0xff]
        %v6404 = vld [vmem:[#allocation2 + $0x3b] sm:$0xff]
        %v6405 = vld [vmem:[#allocation2 + $0x43] sm:$0xff]
        %v6406 = vld [vmem:[#allocation2 + $0x4b] sm:$0xff]
        %v6407 = vld [vmem:[#allocation2 + $0x53] sm:$0x3f]
        %v6408 = vpack.c.bf16 %v6399, %v6398
        %v6409 = vpack.c.bf16 %v6401, %v6400
        %v6410 = vpack.c.bf16 %v6403, %v6402
        %v6411 = vpack.c.bf16 %v6405, %v6404
        %v6412 = vpack.c.bf16 %v6407, %v6406
        %v6413 = vld [vmem:[#allocation6 + $0x100] sm:$0xf]
        %v6414 = vld [vmem:[#allocation6 + $0x104] sm:$0xf]
        %v6415 = vld [vmem:[#allocation6 + $0x108] sm:$0xf]
        %v6416 = vld [vmem:[#allocation6 + $0x10c] sm:$0xf]
        %v6417 = vld [vmem:[#allocation6 + $0x110] sm:$0xf]
        %v6418 = vld [vmem:[#allocation6 + $0x114] sm:$0xf]
        %v6419 = vld [vmem:[#allocation6 + $0x118] sm:$0xf]
        %v6420 = vld [vmem:[#allocation6 + $0x11c] sm:$0xf]
        %v6421 = vld [vmem:[#allocation6 + $0x120] sm:$0xf]
        %v6422 = vld [vmem:[#allocation6 + $0x124] sm:$0xf]
        %v6423 = vld [vmem:[#allocation6 + $0x128] sm:$0xf]
        %v6424 = vld [vmem:[#allocation6 + $0x12c] sm:$0xf]
        %v6425 = vld [vmem:[#allocation6 + $0x130] sm:$0xf]
        %v6426 = vld [vmem:[#allocation6 + $0x134] sm:$0xf]
        %v6427 = vld [vmem:[#allocation6 + $0x138] sm:$0xf]
        %v6428 = vld [vmem:[#allocation6 + $0x13c] sm:$0xf]
        %v6445 = vunpack.c.l.b16 %v6413
        %v6446 = vunpack.c.l.b16 %v6414
        %v6447 = vunpack.c.l.b16 %v6415
        %v6448 = vunpack.c.l.b16 %v6416
        %v6449 = vunpack.c.l.b16 %v6417
        %v6450 = vunpack.c.l.b16 %v6418
        %v6451 = vunpack.c.l.b16 %v6419
        %v6452 = vunpack.c.l.b16 %v6420
        %v6453 = vunpack.c.l.b16 %v6421
        %v6454 = vunpack.c.l.b16 %v6422
        %v6455 = vunpack.c.l.b16 %v6423
        %v6456 = vunpack.c.l.b16 %v6424
        %v6457 = vunpack.c.l.b16 %v6425
        %v6458 = vunpack.c.l.b16 %v6426
        %v6459 = vunpack.c.l.b16 %v6427
        %v6460 = vunpack.c.l.b16 %v6428
        %v6461 = vpack.c.b16 %v6446, %v6445
        %v6462 = vpack.c.b16 %v6448, %v6447
        %v6463 = vpack.c.b16 %v6450, %v6449
        %v6464 = vpack.c.b16 %v6452, %v6451
        %v6465 = vpack.c.b16 %v6454, %v6453
        %v6466 = vpack.c.b16 %v6456, %v6455
        %v6467 = vpack.c.b16 %v6458, %v6457
        %v6468 = vpack.c.b16 %v6460, %v6459
        %6477 = vmatpush.bf16.msra.mxu0 %v6468
        %6478 = vmatpush.bf16.msra.mxu0 %v6467
        %6479 = vmatpush.bf16.msra.mxu0 %v6466
        %6480 = vmatpush.bf16.msra.mxu0 %v6465
        %6481 = vmatpush.bf16.msra.mxu0 %v6464
        %6482 = vmatpush.bf16.msra.mxu0 %v6463
        %6483 = vmatpush.bf16.msra.mxu0 %v6462
        %6484 = vmatpush.bf16.msra.mxu0 %v6461
        %6485 = vmatmul.bf16.gmra.mxu0 %v6408
        %v6486 = vpop.f32.mrf.mxu0
        %v6487 = vadd.f32 0.0, %v6486
        %v6488 = vpop.f32.mrf.mxu0
        %v6489 = vadd.f32 0.0, %v6488
        %6490 = vmatmul.bf16.gmra.mxu0 %v6409
        %v6491 = vpop.f32.mrf.mxu0
        %v6492 = vadd.f32 0.0, %v6491
        %v6493 = vpop.f32.mrf.mxu0
        %v6494 = vadd.f32 0.0, %v6493
        %6495 = vmatmul.bf16.gmra.mxu0 %v6410
        %v6496 = vpop.f32.mrf.mxu0
        %v6497 = vadd.f32 0.0, %v6496
        %v6498 = vpop.f32.mrf.mxu0
        %v6499 = vadd.f32 0.0, %v6498
        %6500 = vmatmul.bf16.gmra.mxu0 %v6411
        %v6501 = vpop.f32.mrf.mxu0
        %v6502 = vadd.f32 0.0, %v6501
        %v6503 = vpop.f32.mrf.mxu0
        %v6504 = vadd.f32 0.0, %v6503
        %6505 = vmatmul.bf16.gmra.mxu0 %v6412
        %v6506 = vpop.f32.mrf.mxu0
        %v6507 = vadd.f32 0.0, %v6506
        %v6508 = vpop.f32.mrf.mxu0
        %v6509 = vadd.f32 0.0, %v6508
        %6510 = vdwg.mxu0
        %v6511 = vadd.f32 %v6388, %v6487
        %v6512 = vadd.f32 %v6389, %v6489
        %v6513 = vadd.f32 %v6390, %v6492
        %v6514 = vadd.f32 %v6391, %v6494
        %v6515 = vadd.f32 %v6392, %v6497
        %v6516 = vadd.f32 %v6393, %v6499
        %v6517 = vadd.f32 %v6394, %v6502
        %v6518 = vadd.f32 %v6395, %v6504
        %v6519 = vadd.f32 %v6396, %v6507
        %v6520 = vadd.f32 %v6397, %v6509
        %v6521 = vld [vmem:[#allocation2 + $0xc] sm:$0xff]
        %v6522 = vld [vmem:[#allocation2 + $0x14] sm:$0xff]
        %v6523 = vld [vmem:[#allocation2 + $0x1c] sm:$0xff]
        %v6524 = vld [vmem:[#allocation2 + $0x24] sm:$0xff]
        %v6525 = vld [vmem:[#allocation2 + $0x2c] sm:$0xff]
        %v6526 = vld [vmem:[#allocation2 + $0x34] sm:$0xff]
        %v6527 = vld [vmem:[#allocation2 + $0x3c] sm:$0xff]
        %v6528 = vld [vmem:[#allocation2 + $0x44] sm:$0xff]
        %v6529 = vld [vmem:[#allocation2 + $0x4c] sm:$0xff]
        %v6530 = vld [vmem:[#allocation2 + $0x54] sm:$0x3f]
        %v6531 = vpack.c.bf16 %v6522, %v6521
        %v6532 = vpack.c.bf16 %v6524, %v6523
        %v6533 = vpack.c.bf16 %v6526, %v6525
        %v6534 = vpack.c.bf16 %v6528, %v6527
        %v6535 = vpack.c.bf16 %v6530, %v6529
        %v6536 = vld [vmem:[#allocation6 + $0x140] sm:$0xf]
        %v6537 = vld [vmem:[#allocation6 + $0x144] sm:$0xf]
        %v6538 = vld [vmem:[#allocation6 + $0x148] sm:$0xf]
        %v6539 = vld [vmem:[#allocation6 + $0x14c] sm:$0xf]
        %v6540 = vld [vmem:[#allocation6 + $0x150] sm:$0xf]
        %v6541 = vld [vmem:[#allocation6 + $0x154] sm:$0xf]
        %v6542 = vld [vmem:[#allocation6 + $0x158] sm:$0xf]
        %v6543 = vld [vmem:[#allocation6 + $0x15c] sm:$0xf]
        %v6544 = vld [vmem:[#allocation6 + $0x160] sm:$0xf]
        %v6545 = vld [vmem:[#allocation6 + $0x164] sm:$0xf]
        %v6546 = vld [vmem:[#allocation6 + $0x168] sm:$0xf]
        %v6547 = vld [vmem:[#allocation6 + $0x16c] sm:$0xf]
        %v6548 = vld [vmem:[#allocation6 + $0x170] sm:$0xf]
        %v6549 = vld [vmem:[#allocation6 + $0x174] sm:$0xf]
        %v6550 = vld [vmem:[#allocation6 + $0x178] sm:$0xf]
        %v6551 = vld [vmem:[#allocation6 + $0x17c] sm:$0xf]
        %v6568 = vunpack.c.l.b16 %v6536
        %v6569 = vunpack.c.l.b16 %v6537
        %v6570 = vunpack.c.l.b16 %v6538
        %v6571 = vunpack.c.l.b16 %v6539
        %v6572 = vunpack.c.l.b16 %v6540
        %v6573 = vunpack.c.l.b16 %v6541
        %v6574 = vunpack.c.l.b16 %v6542
        %v6575 = vunpack.c.l.b16 %v6543
        %v6576 = vunpack.c.l.b16 %v6544
        %v6577 = vunpack.c.l.b16 %v6545
        %v6578 = vunpack.c.l.b16 %v6546
        %v6579 = vunpack.c.l.b16 %v6547
        %v6580 = vunpack.c.l.b16 %v6548
        %v6581 = vunpack.c.l.b16 %v6549
        %v6582 = vunpack.c.l.b16 %v6550
        %v6583 = vunpack.c.l.b16 %v6551
        %v6584 = vpack.c.b16 %v6569, %v6568
        %v6585 = vpack.c.b16 %v6571, %v6570
        %v6586 = vpack.c.b16 %v6573, %v6572
        %v6587 = vpack.c.b16 %v6575, %v6574
        %v6588 = vpack.c.b16 %v6577, %v6576
        %v6589 = vpack.c.b16 %v6579, %v6578
        %v6590 = vpack.c.b16 %v6581, %v6580
        %v6591 = vpack.c.b16 %v6583, %v6582
        %6600 = vmatpush.bf16.msra.mxu0 %v6591
        %6601 = vmatpush.bf16.msra.mxu0 %v6590
        %6602 = vmatpush.bf16.msra.mxu0 %v6589
        %6603 = vmatpush.bf16.msra.mxu0 %v6588
        %6604 = vmatpush.bf16.msra.mxu0 %v6587
        %6605 = vmatpush.bf16.msra.mxu0 %v6586
        %6606 = vmatpush.bf16.msra.mxu0 %v6585
        %6607 = vmatpush.bf16.msra.mxu0 %v6584
        %6608 = vmatmul.bf16.gmra.mxu0 %v6531
        %v6609 = vpop.f32.mrf.mxu0
        %v6610 = vadd.f32 0.0, %v6609
        %v6611 = vpop.f32.mrf.mxu0
        %v6612 = vadd.f32 0.0, %v6611
        %6613 = vmatmul.bf16.gmra.mxu0 %v6532
        %v6614 = vpop.f32.mrf.mxu0
        %v6615 = vadd.f32 0.0, %v6614
        %v6616 = vpop.f32.mrf.mxu0
        %v6617 = vadd.f32 0.0, %v6616
        %6618 = vmatmul.bf16.gmra.mxu0 %v6533
        %v6619 = vpop.f32.mrf.mxu0
        %v6620 = vadd.f32 0.0, %v6619
        %v6621 = vpop.f32.mrf.mxu0
        %v6622 = vadd.f32 0.0, %v6621
        %6623 = vmatmul.bf16.gmra.mxu0 %v6534
        %v6624 = vpop.f32.mrf.mxu0
        %v6625 = vadd.f32 0.0, %v6624
        %v6626 = vpop.f32.mrf.mxu0
        %v6627 = vadd.f32 0.0, %v6626
        %6628 = vmatmul.bf16.gmra.mxu0 %v6535
        %v6629 = vpop.f32.mrf.mxu0
        %v6630 = vadd.f32 0.0, %v6629
        %v6631 = vpop.f32.mrf.mxu0
        %v6632 = vadd.f32 0.0, %v6631
        %6633 = vdwg.mxu0
        %v6634 = vadd.f32 %v6511, %v6610
        %v6635 = vadd.f32 %v6512, %v6612
        %v6636 = vadd.f32 %v6513, %v6615
        %v6637 = vadd.f32 %v6514, %v6617
        %v6638 = vadd.f32 %v6515, %v6620
        %v6639 = vadd.f32 %v6516, %v6622
        %v6640 = vadd.f32 %v6517, %v6625
        %v6641 = vadd.f32 %v6518, %v6627
        %v6642 = vadd.f32 %v6519, %v6630
        %v6643 = vadd.f32 %v6520, %v6632
        %v6644 = vld [vmem:[#allocation2 + $0x14] sm:$0xff]
        %v6645 = vld [vmem:[#allocation2 + $0x1c] sm:$0xff]
        %v6646 = vld [vmem:[#allocation2 + $0x24] sm:$0xff]
        %v6647 = vld [vmem:[#allocation2 + $0x2c] sm:$0xff]
        %v6648 = vld [vmem:[#allocation2 + $0x34] sm:$0xff]
        %v6649 = vld [vmem:[#allocation2 + $0x3c] sm:$0xff]
        %v6650 = vld [vmem:[#allocation2 + $0x44] sm:$0xff]
        %v6651 = vld [vmem:[#allocation2 + $0x4c] sm:$0xff]
        %v6652 = vld [vmem:[#allocation2 + $0x54] sm:$0xff]
        %v6653 = vld [vmem:[#allocation2 + $0x5c] sm:$0x3f]
        %v6654 = vpack.c.bf16 %v6645, %v6644
        %v6655 = vpack.c.bf16 %v6647, %v6646
        %v6656 = vpack.c.bf16 %v6649, %v6648
        %v6657 = vpack.c.bf16 %v6651, %v6650
        %v6658 = vpack.c.bf16 %v6653, %v6652
        %v6659 = vld [vmem:[#allocation6 + $0x180] sm:$0xf]
        %v6660 = vld [vmem:[#allocation6 + $0x184] sm:$0xf]
        %v6661 = vld [vmem:[#allocation6 + $0x188] sm:$0xf]
        %v6662 = vld [vmem:[#allocation6 + $0x18c] sm:$0xf]
        %v6663 = vld [vmem:[#allocation6 + $0x190] sm:$0xf]
        %v6664 = vld [vmem:[#allocation6 + $0x194] sm:$0xf]
        %v6665 = vld [vmem:[#allocation6 + $0x198] sm:$0xf]
        %v6666 = vld [vmem:[#allocation6 + $0x19c] sm:$0xf]
        %v6667 = vld [vmem:[#allocation6 + $0x1a0] sm:$0xf]
        %v6668 = vld [vmem:[#allocation6 + $0x1a4] sm:$0xf]
        %v6669 = vld [vmem:[#allocation6 + $0x1a8] sm:$0xf]
        %v6670 = vld [vmem:[#allocation6 + $0x1ac] sm:$0xf]
        %v6671 = vld [vmem:[#allocation6 + $0x1b0] sm:$0xf]
        %v6672 = vld [vmem:[#allocation6 + $0x1b4] sm:$0xf]
        %v6673 = vld [vmem:[#allocation6 + $0x1b8] sm:$0xf]
        %v6674 = vld [vmem:[#allocation6 + $0x1bc] sm:$0xf]
        %v6691 = vunpack.c.l.b16 %v6659
        %v6692 = vunpack.c.l.b16 %v6660
        %v6693 = vunpack.c.l.b16 %v6661
        %v6694 = vunpack.c.l.b16 %v6662
        %v6695 = vunpack.c.l.b16 %v6663
        %v6696 = vunpack.c.l.b16 %v6664
        %v6697 = vunpack.c.l.b16 %v6665
        %v6698 = vunpack.c.l.b16 %v6666
        %v6699 = vunpack.c.l.b16 %v6667
        %v6700 = vunpack.c.l.b16 %v6668
        %v6701 = vunpack.c.l.b16 %v6669
        %v6702 = vunpack.c.l.b16 %v6670
        %v6703 = vunpack.c.l.b16 %v6671
        %v6704 = vunpack.c.l.b16 %v6672
        %v6705 = vunpack.c.l.b16 %v6673
        %v6706 = vunpack.c.l.b16 %v6674
        %v6707 = vpack.c.b16 %v6692, %v6691
        %v6708 = vpack.c.b16 %v6694, %v6693
        %v6709 = vpack.c.b16 %v6696, %v6695
        %v6710 = vpack.c.b16 %v6698, %v6697
        %v6711 = vpack.c.b16 %v6700, %v6699
        %v6712 = vpack.c.b16 %v6702, %v6701
        %v6713 = vpack.c.b16 %v6704, %v6703
        %v6714 = vpack.c.b16 %v6706, %v6705
        %6723 = vmatpush.bf16.msra.mxu0 %v6714
        %6724 = vmatpush.bf16.msra.mxu0 %v6713
        %6725 = vmatpush.bf16.msra.mxu0 %v6712
        %6726 = vmatpush.bf16.msra.mxu0 %v6711
        %6727 = vmatpush.bf16.msra.mxu0 %v6710
        %6728 = vmatpush.bf16.msra.mxu0 %v6709
        %6729 = vmatpush.bf16.msra.mxu0 %v6708
        %6730 = vmatpush.bf16.msra.mxu0 %v6707
        %6731 = vmatmul.bf16.gmra.mxu0 %v6654
        %v6732 = vpop.f32.mrf.mxu0
        %v6733 = vadd.f32 0.0, %v6732
        %v6734 = vpop.f32.mrf.mxu0
        %v6735 = vadd.f32 0.0, %v6734
        %6736 = vmatmul.bf16.gmra.mxu0 %v6655
        %v6737 = vpop.f32.mrf.mxu0
        %v6738 = vadd.f32 0.0, %v6737
        %v6739 = vpop.f32.mrf.mxu0
        %v6740 = vadd.f32 0.0, %v6739
        %6741 = vmatmul.bf16.gmra.mxu0 %v6656
        %v6742 = vpop.f32.mrf.mxu0
        %v6743 = vadd.f32 0.0, %v6742
        %v6744 = vpop.f32.mrf.mxu0
        %v6745 = vadd.f32 0.0, %v6744
        %6746 = vmatmul.bf16.gmra.mxu0 %v6657
        %v6747 = vpop.f32.mrf.mxu0
        %v6748 = vadd.f32 0.0, %v6747
        %v6749 = vpop.f32.mrf.mxu0
        %v6750 = vadd.f32 0.0, %v6749
        %6751 = vmatmul.bf16.gmra.mxu0 %v6658
        %v6752 = vpop.f32.mrf.mxu0
        %v6753 = vadd.f32 0.0, %v6752
        %v6754 = vpop.f32.mrf.mxu0
        %v6755 = vadd.f32 0.0, %v6754
        %6756 = vdwg.mxu0
        %v6757 = vadd.f32 %v6634, %v6733
        %v6758 = vadd.f32 %v6635, %v6735
        %v6759 = vadd.f32 %v6636, %v6738
        %v6760 = vadd.f32 %v6637, %v6740
        %v6761 = vadd.f32 %v6638, %v6743
        %v6762 = vadd.f32 %v6639, %v6745
        %v6763 = vadd.f32 %v6640, %v6748
        %v6764 = vadd.f32 %v6641, %v6750
        %v6765 = vadd.f32 %v6642, %v6753
        %v6766 = vadd.f32 %v6643, %v6755
        %v6767 = vld [vmem:[#allocation2 + $0x15] sm:$0xff]
        %v6768 = vld [vmem:[#allocation2 + $0x1d] sm:$0xff]
        %v6769 = vld [vmem:[#allocation2 + $0x25] sm:$0xff]
        %v6770 = vld [vmem:[#allocation2 + $0x2d] sm:$0xff]
        %v6771 = vld [vmem:[#allocation2 + $0x35] sm:$0xff]
        %v6772 = vld [vmem:[#allocation2 + $0x3d] sm:$0xff]
        %v6773 = vld [vmem:[#allocation2 + $0x45] sm:$0xff]
        %v6774 = vld [vmem:[#allocation2 + $0x4d] sm:$0xff]
        %v6775 = vld [vmem:[#allocation2 + $0x55] sm:$0xff]
        %v6776 = vld [vmem:[#allocation2 + $0x5d] sm:$0x3f]
        %v6777 = vpack.c.bf16 %v6768, %v6767
        %v6778 = vpack.c.bf16 %v6770, %v6769
        %v6779 = vpack.c.bf16 %v6772, %v6771
        %v6780 = vpack.c.bf16 %v6774, %v6773
        %v6781 = vpack.c.bf16 %v6776, %v6775
        %v6782 = vld [vmem:[#allocation6 + $0x1c0] sm:$0xf]
        %v6783 = vld [vmem:[#allocation6 + $0x1c4] sm:$0xf]
        %v6784 = vld [vmem:[#allocation6 + $0x1c8] sm:$0xf]
        %v6785 = vld [vmem:[#allocation6 + $0x1cc] sm:$0xf]
        %v6786 = vld [vmem:[#allocation6 + $0x1d0] sm:$0xf]
        %v6787 = vld [vmem:[#allocation6 + $0x1d4] sm:$0xf]
        %v6788 = vld [vmem:[#allocation6 + $0x1d8] sm:$0xf]
        %v6789 = vld [vmem:[#allocation6 + $0x1dc] sm:$0xf]
        %v6790 = vld [vmem:[#allocation6 + $0x1e0] sm:$0xf]
        %v6791 = vld [vmem:[#allocation6 + $0x1e4] sm:$0xf]
        %v6792 = vld [vmem:[#allocation6 + $0x1e8] sm:$0xf]
        %v6793 = vld [vmem:[#allocation6 + $0x1ec] sm:$0xf]
        %v6794 = vld [vmem:[#allocation6 + $0x1f0] sm:$0xf]
        %v6795 = vld [vmem:[#allocation6 + $0x1f4] sm:$0xf]
        %v6796 = vld [vmem:[#allocation6 + $0x1f8] sm:$0xf]
        %v6797 = vld [vmem:[#allocation6 + $0x1fc] sm:$0xf]
        %v6814 = vunpack.c.l.b16 %v6782
        %v6815 = vunpack.c.l.b16 %v6783
        %v6816 = vunpack.c.l.b16 %v6784
        %v6817 = vunpack.c.l.b16 %v6785
        %v6818 = vunpack.c.l.b16 %v6786
        %v6819 = vunpack.c.l.b16 %v6787
        %v6820 = vunpack.c.l.b16 %v6788
        %v6821 = vunpack.c.l.b16 %v6789
        %v6822 = vunpack.c.l.b16 %v6790
        %v6823 = vunpack.c.l.b16 %v6791
        %v6824 = vunpack.c.l.b16 %v6792
        %v6825 = vunpack.c.l.b16 %v6793
        %v6826 = vunpack.c.l.b16 %v6794
        %v6827 = vunpack.c.l.b16 %v6795
        %v6828 = vunpack.c.l.b16 %v6796
        %v6829 = vunpack.c.l.b16 %v6797
        %v6830 = vpack.c.b16 %v6815, %v6814
        %v6831 = vpack.c.b16 %v6817, %v6816
        %v6832 = vpack.c.b16 %v6819, %v6818
        %v6833 = vpack.c.b16 %v6821, %v6820
        %v6834 = vpack.c.b16 %v6823, %v6822
        %v6835 = vpack.c.b16 %v6825, %v6824
        %v6836 = vpack.c.b16 %v6827, %v6826
        %v6837 = vpack.c.b16 %v6829, %v6828
        %6846 = vmatpush.bf16.msra.mxu0 %v6837
        %6847 = vmatpush.bf16.msra.mxu0 %v6836
        %6848 = vmatpush.bf16.msra.mxu0 %v6835
        %6849 = vmatpush.bf16.msra.mxu0 %v6834
        %6850 = vmatpush.bf16.msra.mxu0 %v6833
        %6851 = vmatpush.bf16.msra.mxu0 %v6832
        %6852 = vmatpush.bf16.msra.mxu0 %v6831
        %6853 = vmatpush.bf16.msra.mxu0 %v6830
        %6854 = vmatmul.bf16.gmra.mxu0 %v6777
        %v6855 = vpop.f32.mrf.mxu0
        %v6856 = vadd.f32 0.0, %v6855
        %v6857 = vpop.f32.mrf.mxu0
        %v6858 = vadd.f32 0.0, %v6857
        %6859 = vmatmul.bf16.gmra.mxu0 %v6778
        %v6860 = vpop.f32.mrf.mxu0
        %v6861 = vadd.f32 0.0, %v6860
        %v6862 = vpop.f32.mrf.mxu0
        %v6863 = vadd.f32 0.0, %v6862
        %6864 = vmatmul.bf16.gmra.mxu0 %v6779
        %v6865 = vpop.f32.mrf.mxu0
        %v6866 = vadd.f32 0.0, %v6865
        %v6867 = vpop.f32.mrf.mxu0
        %v6868 = vadd.f32 0.0, %v6867
        %6869 = vmatmul.bf16.gmra.mxu0 %v6780
        %v6870 = vpop.f32.mrf.mxu0
        %v6871 = vadd.f32 0.0, %v6870
        %v6872 = vpop.f32.mrf.mxu0
        %v6873 = vadd.f32 0.0, %v6872
        %6874 = vmatmul.bf16.gmra.mxu0 %v6781
        %v6875 = vpop.f32.mrf.mxu0
        %v6876 = vadd.f32 0.0, %v6875
        %v6877 = vpop.f32.mrf.mxu0
        %v6878 = vadd.f32 0.0, %v6877
        %6879 = vdwg.mxu0
        %v6880 = vadd.f32 %v6757, %v6856
        %v6881 = vadd.f32 %v6758, %v6858
        %v6882 = vadd.f32 %v6759, %v6861
        %v6883 = vadd.f32 %v6760, %v6863
        %v6884 = vadd.f32 %v6761, %v6866
        %v6885 = vadd.f32 %v6762, %v6868
        %v6886 = vadd.f32 %v6763, %v6871
        %v6887 = vadd.f32 %v6764, %v6873
        %v6888 = vadd.f32 %v6765, %v6876
        %v6889 = vadd.f32 %v6766, %v6878
        %v6890 = vld [vmem:[#allocation2 + $0x16] sm:$0xff]
        %v6891 = vld [vmem:[#allocation2 + $0x1e] sm:$0xff]
        %v6892 = vld [vmem:[#allocation2 + $0x26] sm:$0xff]
        %v6893 = vld [vmem:[#allocation2 + $0x2e] sm:$0xff]
        %v6894 = vld [vmem:[#allocation2 + $0x36] sm:$0xff]
        %v6895 = vld [vmem:[#allocation2 + $0x3e] sm:$0xff]
        %v6896 = vld [vmem:[#allocation2 + $0x46] sm:$0xff]
        %v6897 = vld [vmem:[#allocation2 + $0x4e] sm:$0xff]
        %v6898 = vld [vmem:[#allocation2 + $0x56] sm:$0xff]
        %v6899 = vld [vmem:[#allocation2 + $0x5e] sm:$0x3f]
        %v6900 = vpack.c.bf16 %v6891, %v6890
        %v6901 = vpack.c.bf16 %v6893, %v6892
        %v6902 = vpack.c.bf16 %v6895, %v6894
        %v6903 = vpack.c.bf16 %v6897, %v6896
        %v6904 = vpack.c.bf16 %v6899, %v6898
        %v6905 = vld [vmem:[#allocation6 + $0x200] sm:$0xf]
        %v6906 = vld [vmem:[#allocation6 + $0x204] sm:$0xf]
        %v6907 = vld [vmem:[#allocation6 + $0x208] sm:$0xf]
        %v6908 = vld [vmem:[#allocation6 + $0x20c] sm:$0xf]
        %v6909 = vld [vmem:[#allocation6 + $0x210] sm:$0xf]
        %v6910 = vld [vmem:[#allocation6 + $0x214] sm:$0xf]
        %v6911 = vld [vmem:[#allocation6 + $0x218] sm:$0xf]
        %v6912 = vld [vmem:[#allocation6 + $0x21c] sm:$0xf]
        %v6913 = vld [vmem:[#allocation6 + $0x220] sm:$0xf]
        %v6914 = vld [vmem:[#allocation6 + $0x224] sm:$0xf]
        %v6915 = vld [vmem:[#allocation6 + $0x228] sm:$0xf]
        %v6916 = vld [vmem:[#allocation6 + $0x22c] sm:$0xf]
        %v6917 = vld [vmem:[#allocation6 + $0x230] sm:$0xf]
        %v6918 = vld [vmem:[#allocation6 + $0x234] sm:$0xf]
        %v6919 = vld [vmem:[#allocation6 + $0x238] sm:$0xf]
        %v6920 = vld [vmem:[#allocation6 + $0x23c] sm:$0xf]
        %v6937 = vunpack.c.l.b16 %v6905
        %v6938 = vunpack.c.l.b16 %v6906
        %v6939 = vunpack.c.l.b16 %v6907
        %v6940 = vunpack.c.l.b16 %v6908
        %v6941 = vunpack.c.l.b16 %v6909
        %v6942 = vunpack.c.l.b16 %v6910
        %v6943 = vunpack.c.l.b16 %v6911
        %v6944 = vunpack.c.l.b16 %v6912
        %v6945 = vunpack.c.l.b16 %v6913
        %v6946 = vunpack.c.l.b16 %v6914
        %v6947 = vunpack.c.l.b16 %v6915
        %v6948 = vunpack.c.l.b16 %v6916
        %v6949 = vunpack.c.l.b16 %v6917
        %v6950 = vunpack.c.l.b16 %v6918
        %v6951 = vunpack.c.l.b16 %v6919
        %v6952 = vunpack.c.l.b16 %v6920
        %v6953 = vpack.c.b16 %v6938, %v6937
        %v6954 = vpack.c.b16 %v6940, %v6939
        %v6955 = vpack.c.b16 %v6942, %v6941
        %v6956 = vpack.c.b16 %v6944, %v6943
        %v6957 = vpack.c.b16 %v6946, %v6945
        %v6958 = vpack.c.b16 %v6948, %v6947
        %v6959 = vpack.c.b16 %v6950, %v6949
        %v6960 = vpack.c.b16 %v6952, %v6951
        %6969 = vmatpush.bf16.msra.mxu0 %v6960
        %6970 = vmatpush.bf16.msra.mxu0 %v6959
        %6971 = vmatpush.bf16.msra.mxu0 %v6958
        %6972 = vmatpush.bf16.msra.mxu0 %v6957
        %6973 = vmatpush.bf16.msra.mxu0 %v6956
        %6974 = vmatpush.bf16.msra.mxu0 %v6955
        %6975 = vmatpush.bf16.msra.mxu0 %v6954
        %6976 = vmatpush.bf16.msra.mxu0 %v6953
        %6977 = vmatmul.bf16.gmra.mxu0 %v6900
        %v6978 = vpop.f32.mrf.mxu0
        %v6979 = vadd.f32 0.0, %v6978
        %v6980 = vpop.f32.mrf.mxu0
        %v6981 = vadd.f32 0.0, %v6980
        %6982 = vmatmul.bf16.gmra.mxu0 %v6901
        %v6983 = vpop.f32.mrf.mxu0
        %v6984 = vadd.f32 0.0, %v6983
        %v6985 = vpop.f32.mrf.mxu0
        %v6986 = vadd.f32 0.0, %v6985
        %6987 = vmatmul.bf16.gmra.mxu0 %v6902
        %v6988 = vpop.f32.mrf.mxu0
        %v6989 = vadd.f32 0.0, %v6988
        %v6990 = vpop.f32.mrf.mxu0
        %v6991 = vadd.f32 0.0, %v6990
        %6992 = vmatmul.bf16.gmra.mxu0 %v6903
        %v6993 = vpop.f32.mrf.mxu0
        %v6994 = vadd.f32 0.0, %v6993
        %v6995 = vpop.f32.mrf.mxu0
        %v6996 = vadd.f32 0.0, %v6995
        %6997 = vmatmul.bf16.gmra.mxu0 %v6904
        %v6998 = vpop.f32.mrf.mxu0
        %v6999 = vadd.f32 0.0, %v6998
        %v7000 = vpop.f32.mrf.mxu0
        %v7001 = vadd.f32 0.0, %v7000
        %7002 = vdwg.mxu0
        %v7003 = vadd.f32 %v6880, %v6979
        %v7004 = vadd.f32 %v6881, %v6981
        %v7005 = vadd.f32 %v6882, %v6984
        %v7006 = vadd.f32 %v6883, %v6986
        %v7007 = vadd.f32 %v6884, %v6989
        %v7008 = vadd.f32 %v6885, %v6991
        %v7009 = vadd.f32 %v6886, %v6994
        %v7010 = vadd.f32 %v6887, %v6996
        %v7011 = vadd.f32 %v6888, %v6999
        %v7012 = vadd.f32 %v6889, %v7001
        %v7013 = vld [vmem:[%s11] sm:$0x1]
        %v7015 = vperm.slane %v7013, 0
        %v7017 = vadd.f32 %v7003, %v7015
        %v7018 = vadd.f32 %v7004, %v7015
        %v7019 = vadd.f32 %v7005, %v7015
        %v7020 = vadd.f32 %v7006, %v7015
        %v7021 = vadd.f32 %v7007, %v7015
        %v7022 = vadd.f32 %v7008, %v7015
        %v7023 = vadd.f32 %v7009, %v7015
        %v7024 = vadd.f32 %v7010, %v7015
        %v7025 = vadd.f32 %v7011, %v7015
        %v7026 = vadd.f32 %v7012, %v7015
        %v7027 = vmul.f32 %v7017, 0.2
        %v7028 = vmul.f32 %v7018, 0.2
        %v7029 = vmul.f32 %v7019, 0.2
        %v7030 = vmul.f32 %v7020, 0.2
        %v7031 = vmul.f32 %v7021, 0.2
        %v7032 = vmul.f32 %v7022, 0.2
        %v7033 = vmul.f32 %v7023, 0.2
        %v7034 = vmul.f32 %v7024, 0.2
        %v7035 = vmul.f32 %v7025, 0.2
        %v7036 = vmul.f32 %v7026, 0.2
        %v7037 = vmax.f32 %v7017, %v7027
        %v7038 = vmax.f32 %v7018, %v7028
        %v7039 = vmax.f32 %v7019, %v7029
        %v7040 = vmax.f32 %v7020, %v7030
        %v7041 = vmax.f32 %v7021, %v7031
        %v7042 = vmax.f32 %v7022, %v7032
        %v7043 = vmax.f32 %v7023, %v7033
        %v7044 = vmax.f32 %v7024, %v7034
        %v7045 = vmax.f32 %v7025, %v7035
        %v7046 = vmax.f32 %v7026, %v7036
        %7047 = vst [vmem:[#allocation3 + $0xb] sm:$0xff] %v7037
        %7048 = vst [vmem:[#allocation3 + $0x13] sm:$0xff] %v7038
        %7049 = vst [vmem:[#allocation3 + $0x1b] sm:$0xff] %v7039
        %7050 = vst [vmem:[#allocation3 + $0x23] sm:$0xff] %v7040
        %7051 = vst [vmem:[#allocation3 + $0x2b] sm:$0xff] %v7041
        %7052 = vst [vmem:[#allocation3 + $0x33] sm:$0xff] %v7042
        %7053 = vst [vmem:[#allocation3 + $0x3b] sm:$0xff] %v7043
        %7054 = vst [vmem:[#allocation3 + $0x43] sm:$0xff] %v7044
        %7055 = vst [vmem:[#allocation3 + $0x4b] sm:$0xff] %v7045
        %7056 = vst [vmem:[#allocation3 + $0x53] sm:$0x3f] %v7046
        %7057 = vst [vmem:[#allocation3] sm:$0xff] 0.0
        %7058 = vst [vmem:[#allocation3 + $0x8] sm:$0x7] 0.0
        %7059 = vst [vmem:[#allocation3 + $0x59] sm:$0xff] 0.0
        %7060 = vst [vmem:[#allocation3 + $0x61] sm:$0x7] 0.0
        %7061 = vst [vmem:[#allocation3 + $0x13] sm:$0x3] 0.0
        %7062 = vst [vmem:[#allocation3 + $0x1d] sm:$0x3] 0.0
        %7063 = vst [vmem:[#allocation3 + $0x27] sm:$0x3] 0.0
        %7064 = vst [vmem:[#allocation3 + $0x31] sm:$0x3] 0.0
        %7065 = vst [vmem:[#allocation3 + $0x3b] sm:$0x3] 0.0
        %7066 = vst [vmem:[#allocation3 + $0x45] sm:$0x3] 0.0
        %7067 = vst [vmem:[#allocation3 + $0x4f] sm:$0x3] 0.0
        %v7068 = vld [vmem:[#allocation3] sm:$0xff]
        %v7069 = vld [vmem:[#allocation3 + $0x8] sm:$0xff]
        %v7070 = vld [vmem:[#allocation3 + $0x10] sm:$0xff]
        %v7071 = vld [vmem:[#allocation3 + $0x18] sm:$0xff]
        %v7072 = vld [vmem:[#allocation3 + $0x20] sm:$0xff]
        %v7073 = vld [vmem:[#allocation3 + $0x28] sm:$0xff]
        %v7074 = vld [vmem:[#allocation3 + $0x30] sm:$0xff]
        %v7075 = vld [vmem:[#allocation3 + $0x38] sm:$0xff]
        %v7076 = vld [vmem:[#allocation3 + $0x40] sm:$0xff]
        %v7077 = vld [vmem:[#allocation3 + $0x48] sm:$0x3f]
        %v7078 = vpack.c.bf16 %v7069, %v7068
        %v7079 = vpack.c.bf16 %v7071, %v7070
        %v7080 = vpack.c.bf16 %v7073, %v7072
        %v7081 = vpack.c.bf16 %v7075, %v7074
        %v7082 = vpack.c.bf16 %v7077, %v7076
        %v7083 = vld [vmem:[#allocation9] sm:$0xf]
        %v7084 = vld [vmem:[#allocation9 + $0x4] sm:$0xf]
        %v7085 = vld [vmem:[#allocation9 + $0x8] sm:$0xf]
        %v7086 = vld [vmem:[#allocation9 + $0xc] sm:$0xf]
        %v7087 = vld [vmem:[#allocation9 + $0x10] sm:$0xf]
        %v7088 = vld [vmem:[#allocation9 + $0x14] sm:$0xf]
        %v7089 = vld [vmem:[#allocation9 + $0x18] sm:$0xf]
        %v7090 = vld [vmem:[#allocation9 + $0x1c] sm:$0xf]
        %v7091 = vld [vmem:[#allocation9 + $0x20] sm:$0xf]
        %v7092 = vld [vmem:[#allocation9 + $0x24] sm:$0xf]
        %v7093 = vld [vmem:[#allocation9 + $0x28] sm:$0xf]
        %v7094 = vld [vmem:[#allocation9 + $0x2c] sm:$0xf]
        %v7095 = vld [vmem:[#allocation9 + $0x30] sm:$0xf]
        %v7096 = vld [vmem:[#allocation9 + $0x34] sm:$0xf]
        %v7097 = vld [vmem:[#allocation9 + $0x38] sm:$0xf]
        %v7098 = vld [vmem:[#allocation9 + $0x3c] sm:$0xf]
        %v7099 = vld [vmem:[#allocation3 + $0x1] sm:$0xff]
        %v7100 = vld [vmem:[#allocation3 + $0x9] sm:$0xff]
        %v7101 = vld [vmem:[#allocation3 + $0x11] sm:$0xff]
        %v7102 = vld [vmem:[#allocation3 + $0x19] sm:$0xff]
        %v7103 = vld [vmem:[#allocation3 + $0x21] sm:$0xff]
        %v7104 = vld [vmem:[#allocation3 + $0x29] sm:$0xff]
        %v7105 = vld [vmem:[#allocation3 + $0x31] sm:$0xff]
        %v7106 = vld [vmem:[#allocation3 + $0x39] sm:$0xff]
        %v7107 = vld [vmem:[#allocation3 + $0x41] sm:$0xff]
        %v7108 = vld [vmem:[#allocation3 + $0x49] sm:$0x3f]
        %v7109 = vpack.c.bf16 %v7100, %v7099
        %v7110 = vpack.c.bf16 %v7102, %v7101
        %v7111 = vpack.c.bf16 %v7104, %v7103
        %v7112 = vpack.c.bf16 %v7106, %v7105
        %v7113 = vpack.c.bf16 %v7108, %v7107
        %v7114 = vld [vmem:[#allocation9 + $0x40] sm:$0xf]
        %v7115 = vld [vmem:[#allocation9 + $0x44] sm:$0xf]
        %v7116 = vld [vmem:[#allocation9 + $0x48] sm:$0xf]
        %v7117 = vld [vmem:[#allocation9 + $0x4c] sm:$0xf]
        %v7118 = vld [vmem:[#allocation9 + $0x50] sm:$0xf]
        %v7119 = vld [vmem:[#allocation9 + $0x54] sm:$0xf]
        %v7120 = vld [vmem:[#allocation9 + $0x58] sm:$0xf]
        %v7121 = vld [vmem:[#allocation9 + $0x5c] sm:$0xf]
        %v7122 = vld [vmem:[#allocation9 + $0x60] sm:$0xf]
        %v7123 = vld [vmem:[#allocation9 + $0x64] sm:$0xf]
        %v7124 = vld [vmem:[#allocation9 + $0x68] sm:$0xf]
        %v7125 = vld [vmem:[#allocation9 + $0x6c] sm:$0xf]
        %v7126 = vld [vmem:[#allocation9 + $0x70] sm:$0xf]
        %v7127 = vld [vmem:[#allocation9 + $0x74] sm:$0xf]
        %v7128 = vld [vmem:[#allocation9 + $0x78] sm:$0xf]
        %v7129 = vld [vmem:[#allocation9 + $0x7c] sm:$0xf]
        %v7146 = vunpack.c.l.b16 %v7114
        %v7147 = vunpack.c.l.b16 %v7115
        %v7148 = vunpack.c.l.b16 %v7116
        %v7149 = vunpack.c.l.b16 %v7117
        %v7150 = vunpack.c.l.b16 %v7118
        %v7151 = vunpack.c.l.b16 %v7119
        %v7152 = vunpack.c.l.b16 %v7120
        %v7153 = vunpack.c.l.b16 %v7121
        %v7154 = vunpack.c.l.b16 %v7122
        %v7155 = vunpack.c.l.b16 %v7123
        %v7156 = vunpack.c.l.b16 %v7124
        %v7157 = vunpack.c.l.b16 %v7125
        %v7158 = vunpack.c.l.b16 %v7126
        %v7159 = vunpack.c.l.b16 %v7127
        %v7160 = vunpack.c.l.b16 %v7128
        %v7161 = vunpack.c.l.b16 %v7129
        %v7162 = vpack.c.b16 %v7147, %v7146
        %v7163 = vpack.c.b16 %v7149, %v7148
        %v7164 = vpack.c.b16 %v7151, %v7150
        %v7165 = vpack.c.b16 %v7153, %v7152
        %v7166 = vpack.c.b16 %v7155, %v7154
        %v7167 = vpack.c.b16 %v7157, %v7156
        %v7168 = vpack.c.b16 %v7159, %v7158
        %v7169 = vpack.c.b16 %v7161, %v7160
        %7178 = vmatpush.bf16.msra.mxu0 %v7169
        %7179 = vmatpush.bf16.msra.mxu0 %v7168
        %7180 = vmatpush.bf16.msra.mxu0 %v7167
        %7181 = vmatpush.bf16.msra.mxu0 %v7166
        %7182 = vmatpush.bf16.msra.mxu0 %v7165
        %7183 = vmatpush.bf16.msra.mxu0 %v7164
        %7184 = vmatpush.bf16.msra.mxu0 %v7163
        %7185 = vmatpush.bf16.msra.mxu0 %v7162
        %7186 = vmatmul.bf16.gmra.mxu0 %v7109
        %v7187 = vpop.f32.mrf.mxu0
        %v7188 = vadd.f32 0.0, %v7187
        %v7189 = vpop.f32.mrf.mxu0
        %v7190 = vadd.f32 0.0, %v7189
        %7191 = vmatmul.bf16.gmra.mxu0 %v7110
        %v7192 = vpop.f32.mrf.mxu0
        %v7193 = vadd.f32 0.0, %v7192
        %v7194 = vpop.f32.mrf.mxu0
        %v7195 = vadd.f32 0.0, %v7194
        %7196 = vmatmul.bf16.gmra.mxu0 %v7111
        %v7197 = vpop.f32.mrf.mxu0
        %v7198 = vadd.f32 0.0, %v7197
        %v7199 = vpop.f32.mrf.mxu0
        %v7200 = vadd.f32 0.0, %v7199
        %7201 = vmatmul.bf16.gmra.mxu0 %v7112
        %v7202 = vpop.f32.mrf.mxu0
        %v7203 = vadd.f32 0.0, %v7202
        %v7204 = vpop.f32.mrf.mxu0
        %v7205 = vadd.f32 0.0, %v7204
        %7206 = vmatmul.bf16.gmra.mxu0 %v7113
        %v7207 = vpop.f32.mrf.mxu0
        %v7208 = vadd.f32 0.0, %v7207
        %v7209 = vpop.f32.mrf.mxu0
        %v7210 = vadd.f32 0.0, %v7209
        %7211 = vdwg.mxu0
        %v7228 = vunpack.c.l.b16 %v7083
        %v7229 = vunpack.c.l.b16 %v7084
        %v7230 = vunpack.c.l.b16 %v7085
        %v7231 = vunpack.c.l.b16 %v7086
        %v7232 = vunpack.c.l.b16 %v7087
        %v7233 = vunpack.c.l.b16 %v7088
        %v7234 = vunpack.c.l.b16 %v7089
        %v7235 = vunpack.c.l.b16 %v7090
        %v7236 = vunpack.c.l.b16 %v7091
        %v7237 = vunpack.c.l.b16 %v7092
        %v7238 = vunpack.c.l.b16 %v7093
        %v7239 = vunpack.c.l.b16 %v7094
        %v7240 = vunpack.c.l.b16 %v7095
        %v7241 = vunpack.c.l.b16 %v7096
        %v7242 = vunpack.c.l.b16 %v7097
        %v7243 = vunpack.c.l.b16 %v7098
        %v7244 = vpack.c.b16 %v7229, %v7228
        %v7245 = vpack.c.b16 %v7231, %v7230
        %v7246 = vpack.c.b16 %v7233, %v7232
        %v7247 = vpack.c.b16 %v7235, %v7234
        %v7248 = vpack.c.b16 %v7237, %v7236
        %v7249 = vpack.c.b16 %v7239, %v7238
        %v7250 = vpack.c.b16 %v7241, %v7240
        %v7251 = vpack.c.b16 %v7243, %v7242
        %7260 = vmatpush.bf16.msra.mxu0 %v7251
        %7261 = vmatpush.bf16.msra.mxu0 %v7250
        %7262 = vmatpush.bf16.msra.mxu0 %v7249
        %7263 = vmatpush.bf16.msra.mxu0 %v7248
        %7264 = vmatpush.bf16.msra.mxu0 %v7247
        %7265 = vmatpush.bf16.msra.mxu0 %v7246
        %7266 = vmatpush.bf16.msra.mxu0 %v7245
        %7267 = vmatpush.bf16.msra.mxu0 %v7244
        %7268 = vmatmul.bf16.gmra.mxu0 %v7078
        %v7269 = vpop.f32.mrf.mxu0
        %v7270 = vadd.f32 %v7188, %v7269
        %v7271 = vpop.f32.mrf.mxu0
        %v7272 = vadd.f32 %v7190, %v7271
        %7273 = vmatmul.bf16.gmra.mxu0 %v7079
        %v7274 = vpop.f32.mrf.mxu0
        %v7275 = vadd.f32 %v7193, %v7274
        %v7276 = vpop.f32.mrf.mxu0
        %v7277 = vadd.f32 %v7195, %v7276
        %7278 = vmatmul.bf16.gmra.mxu0 %v7080
        %v7279 = vpop.f32.mrf.mxu0
        %v7280 = vadd.f32 %v7198, %v7279
        %v7281 = vpop.f32.mrf.mxu0
        %v7282 = vadd.f32 %v7200, %v7281
        %7283 = vmatmul.bf16.gmra.mxu0 %v7081
        %v7284 = vpop.f32.mrf.mxu0
        %v7285 = vadd.f32 %v7203, %v7284
        %v7286 = vpop.f32.mrf.mxu0
        %v7287 = vadd.f32 %v7205, %v7286
        %7288 = vmatmul.bf16.gmra.mxu0 %v7082
        %v7289 = vpop.f32.mrf.mxu0
        %v7290 = vadd.f32 %v7208, %v7289
        %v7291 = vpop.f32.mrf.mxu0
        %v7292 = vadd.f32 %v7210, %v7291
        %7293 = vdwg.mxu0
        %v7294 = vld [vmem:[#allocation3 + $0x2] sm:$0xff]
        %v7295 = vld [vmem:[#allocation3 + $0xa] sm:$0xff]
        %v7296 = vld [vmem:[#allocation3 + $0x12] sm:$0xff]
        %v7297 = vld [vmem:[#allocation3 + $0x1a] sm:$0xff]
        %v7298 = vld [vmem:[#allocation3 + $0x22] sm:$0xff]
        %v7299 = vld [vmem:[#allocation3 + $0x2a] sm:$0xff]
        %v7300 = vld [vmem:[#allocation3 + $0x32] sm:$0xff]
        %v7301 = vld [vmem:[#allocation3 + $0x3a] sm:$0xff]
        %v7302 = vld [vmem:[#allocation3 + $0x42] sm:$0xff]
        %v7303 = vld [vmem:[#allocation3 + $0x4a] sm:$0x3f]
        %v7304 = vpack.c.bf16 %v7295, %v7294
        %v7305 = vpack.c.bf16 %v7297, %v7296
        %v7306 = vpack.c.bf16 %v7299, %v7298
        %v7307 = vpack.c.bf16 %v7301, %v7300
        %v7308 = vpack.c.bf16 %v7303, %v7302
        %v7309 = vld [vmem:[#allocation9 + $0x80] sm:$0xf]
        %v7310 = vld [vmem:[#allocation9 + $0x84] sm:$0xf]
        %v7311 = vld [vmem:[#allocation9 + $0x88] sm:$0xf]
        %v7312 = vld [vmem:[#allocation9 + $0x8c] sm:$0xf]
        %v7313 = vld [vmem:[#allocation9 + $0x90] sm:$0xf]
        %v7314 = vld [vmem:[#allocation9 + $0x94] sm:$0xf]
        %v7315 = vld [vmem:[#allocation9 + $0x98] sm:$0xf]
        %v7316 = vld [vmem:[#allocation9 + $0x9c] sm:$0xf]
        %v7317 = vld [vmem:[#allocation9 + $0xa0] sm:$0xf]
        %v7318 = vld [vmem:[#allocation9 + $0xa4] sm:$0xf]
        %v7319 = vld [vmem:[#allocation9 + $0xa8] sm:$0xf]
        %v7320 = vld [vmem:[#allocation9 + $0xac] sm:$0xf]
        %v7321 = vld [vmem:[#allocation9 + $0xb0] sm:$0xf]
        %v7322 = vld [vmem:[#allocation9 + $0xb4] sm:$0xf]
        %v7323 = vld [vmem:[#allocation9 + $0xb8] sm:$0xf]
        %v7324 = vld [vmem:[#allocation9 + $0xbc] sm:$0xf]
        %v7341 = vunpack.c.l.b16 %v7309
        %v7342 = vunpack.c.l.b16 %v7310
        %v7343 = vunpack.c.l.b16 %v7311
        %v7344 = vunpack.c.l.b16 %v7312
        %v7345 = vunpack.c.l.b16 %v7313
        %v7346 = vunpack.c.l.b16 %v7314
        %v7347 = vunpack.c.l.b16 %v7315
        %v7348 = vunpack.c.l.b16 %v7316
        %v7349 = vunpack.c.l.b16 %v7317
        %v7350 = vunpack.c.l.b16 %v7318
        %v7351 = vunpack.c.l.b16 %v7319
        %v7352 = vunpack.c.l.b16 %v7320
        %v7353 = vunpack.c.l.b16 %v7321
        %v7354 = vunpack.c.l.b16 %v7322
        %v7355 = vunpack.c.l.b16 %v7323
        %v7356 = vunpack.c.l.b16 %v7324
        %v7357 = vpack.c.b16 %v7342, %v7341
        %v7358 = vpack.c.b16 %v7344, %v7343
        %v7359 = vpack.c.b16 %v7346, %v7345
        %v7360 = vpack.c.b16 %v7348, %v7347
        %v7361 = vpack.c.b16 %v7350, %v7349
        %v7362 = vpack.c.b16 %v7352, %v7351
        %v7363 = vpack.c.b16 %v7354, %v7353
        %v7364 = vpack.c.b16 %v7356, %v7355
        %7373 = vmatpush.bf16.msra.mxu0 %v7364
        %7374 = vmatpush.bf16.msra.mxu0 %v7363
        %7375 = vmatpush.bf16.msra.mxu0 %v7362
        %7376 = vmatpush.bf16.msra.mxu0 %v7361
        %7377 = vmatpush.bf16.msra.mxu0 %v7360
        %7378 = vmatpush.bf16.msra.mxu0 %v7359
        %7379 = vmatpush.bf16.msra.mxu0 %v7358
        %7380 = vmatpush.bf16.msra.mxu0 %v7357
        %7381 = vmatmul.bf16.gmra.mxu0 %v7304
        %v7382 = vpop.f32.mrf.mxu0
        %v7383 = vadd.f32 0.0, %v7382
        %v7384 = vpop.f32.mrf.mxu0
        %v7385 = vadd.f32 0.0, %v7384
        %7386 = vmatmul.bf16.gmra.mxu0 %v7305
        %v7387 = vpop.f32.mrf.mxu0
        %v7388 = vadd.f32 0.0, %v7387
        %v7389 = vpop.f32.mrf.mxu0
        %v7390 = vadd.f32 0.0, %v7389
        %7391 = vmatmul.bf16.gmra.mxu0 %v7306
        %v7392 = vpop.f32.mrf.mxu0
        %v7393 = vadd.f32 0.0, %v7392
        %v7394 = vpop.f32.mrf.mxu0
        %v7395 = vadd.f32 0.0, %v7394
        %7396 = vmatmul.bf16.gmra.mxu0 %v7307
        %v7397 = vpop.f32.mrf.mxu0
        %v7398 = vadd.f32 0.0, %v7397
        %v7399 = vpop.f32.mrf.mxu0
        %v7400 = vadd.f32 0.0, %v7399
        %7401 = vmatmul.bf16.gmra.mxu0 %v7308
        %v7402 = vpop.f32.mrf.mxu0
        %v7403 = vadd.f32 0.0, %v7402
        %v7404 = vpop.f32.mrf.mxu0
        %v7405 = vadd.f32 0.0, %v7404
        %7406 = vdwg.mxu0
        %v7407 = vadd.f32 %v7270, %v7383
        %v7408 = vadd.f32 %v7272, %v7385
        %v7409 = vadd.f32 %v7275, %v7388
        %v7410 = vadd.f32 %v7277, %v7390
        %v7411 = vadd.f32 %v7280, %v7393
        %v7412 = vadd.f32 %v7282, %v7395
        %v7413 = vadd.f32 %v7285, %v7398
        %v7414 = vadd.f32 %v7287, %v7400
        %v7415 = vadd.f32 %v7290, %v7403
        %v7416 = vadd.f32 %v7292, %v7405
        %v7417 = vld [vmem:[#allocation3 + $0xa] sm:$0xff]
        %v7418 = vld [vmem:[#allocation3 + $0x12] sm:$0xff]
        %v7419 = vld [vmem:[#allocation3 + $0x1a] sm:$0xff]
        %v7420 = vld [vmem:[#allocation3 + $0x22] sm:$0xff]
        %v7421 = vld [vmem:[#allocation3 + $0x2a] sm:$0xff]
        %v7422 = vld [vmem:[#allocation3 + $0x32] sm:$0xff]
        %v7423 = vld [vmem:[#allocation3 + $0x3a] sm:$0xff]
        %v7424 = vld [vmem:[#allocation3 + $0x42] sm:$0xff]
        %v7425 = vld [vmem:[#allocation3 + $0x4a] sm:$0xff]
        %v7426 = vld [vmem:[#allocation3 + $0x52] sm:$0x3f]
        %v7427 = vpack.c.bf16 %v7418, %v7417
        %v7428 = vpack.c.bf16 %v7420, %v7419
        %v7429 = vpack.c.bf16 %v7422, %v7421
        %v7430 = vpack.c.bf16 %v7424, %v7423
        %v7431 = vpack.c.bf16 %v7426, %v7425
        %v7432 = vld [vmem:[#allocation9 + $0xc0] sm:$0xf]
        %v7433 = vld [vmem:[#allocation9 + $0xc4] sm:$0xf]
        %v7434 = vld [vmem:[#allocation9 + $0xc8] sm:$0xf]
        %v7435 = vld [vmem:[#allocation9 + $0xcc] sm:$0xf]
        %v7436 = vld [vmem:[#allocation9 + $0xd0] sm:$0xf]
        %v7437 = vld [vmem:[#allocation9 + $0xd4] sm:$0xf]
        %v7438 = vld [vmem:[#allocation9 + $0xd8] sm:$0xf]
        %v7439 = vld [vmem:[#allocation9 + $0xdc] sm:$0xf]
        %v7440 = vld [vmem:[#allocation9 + $0xe0] sm:$0xf]
        %v7441 = vld [vmem:[#allocation9 + $0xe4] sm:$0xf]
        %v7442 = vld [vmem:[#allocation9 + $0xe8] sm:$0xf]
        %v7443 = vld [vmem:[#allocation9 + $0xec] sm:$0xf]
        %v7444 = vld [vmem:[#allocation9 + $0xf0] sm:$0xf]
        %v7445 = vld [vmem:[#allocation9 + $0xf4] sm:$0xf]
        %v7446 = vld [vmem:[#allocation9 + $0xf8] sm:$0xf]
        %v7447 = vld [vmem:[#allocation9 + $0xfc] sm:$0xf]
        %v7464 = vunpack.c.l.b16 %v7432
        %v7465 = vunpack.c.l.b16 %v7433
        %v7466 = vunpack.c.l.b16 %v7434
        %v7467 = vunpack.c.l.b16 %v7435
        %v7468 = vunpack.c.l.b16 %v7436
        %v7469 = vunpack.c.l.b16 %v7437
        %v7470 = vunpack.c.l.b16 %v7438
        %v7471 = vunpack.c.l.b16 %v7439
        %v7472 = vunpack.c.l.b16 %v7440
        %v7473 = vunpack.c.l.b16 %v7441
        %v7474 = vunpack.c.l.b16 %v7442
        %v7475 = vunpack.c.l.b16 %v7443
        %v7476 = vunpack.c.l.b16 %v7444
        %v7477 = vunpack.c.l.b16 %v7445
        %v7478 = vunpack.c.l.b16 %v7446
        %v7479 = vunpack.c.l.b16 %v7447
        %v7480 = vpack.c.b16 %v7465, %v7464
        %v7481 = vpack.c.b16 %v7467, %v7466
        %v7482 = vpack.c.b16 %v7469, %v7468
        %v7483 = vpack.c.b16 %v7471, %v7470
        %v7484 = vpack.c.b16 %v7473, %v7472
        %v7485 = vpack.c.b16 %v7475, %v7474
        %v7486 = vpack.c.b16 %v7477, %v7476
        %v7487 = vpack.c.b16 %v7479, %v7478
        %7496 = vmatpush.bf16.msra.mxu0 %v7487
        %7497 = vmatpush.bf16.msra.mxu0 %v7486
        %7498 = vmatpush.bf16.msra.mxu0 %v7485
        %7499 = vmatpush.bf16.msra.mxu0 %v7484
        %7500 = vmatpush.bf16.msra.mxu0 %v7483
        %7501 = vmatpush.bf16.msra.mxu0 %v7482
        %7502 = vmatpush.bf16.msra.mxu0 %v7481
        %7503 = vmatpush.bf16.msra.mxu0 %v7480
        %7504 = vmatmul.bf16.gmra.mxu0 %v7427
        %v7505 = vpop.f32.mrf.mxu0
        %v7506 = vadd.f32 0.0, %v7505
        %v7507 = vpop.f32.mrf.mxu0
        %v7508 = vadd.f32 0.0, %v7507
        %7509 = vmatmul.bf16.gmra.mxu0 %v7428
        %v7510 = vpop.f32.mrf.mxu0
        %v7511 = vadd.f32 0.0, %v7510
        %v7512 = vpop.f32.mrf.mxu0
        %v7513 = vadd.f32 0.0, %v7512
        %7514 = vmatmul.bf16.gmra.mxu0 %v7429
        %v7515 = vpop.f32.mrf.mxu0
        %v7516 = vadd.f32 0.0, %v7515
        %v7517 = vpop.f32.mrf.mxu0
        %v7518 = vadd.f32 0.0, %v7517
        %7519 = vmatmul.bf16.gmra.mxu0 %v7430
        %v7520 = vpop.f32.mrf.mxu0
        %v7521 = vadd.f32 0.0, %v7520
        %v7522 = vpop.f32.mrf.mxu0
        %v7523 = vadd.f32 0.0, %v7522
        %7524 = vmatmul.bf16.gmra.mxu0 %v7431
        %v7525 = vpop.f32.mrf.mxu0
        %v7526 = vadd.f32 0.0, %v7525
        %v7527 = vpop.f32.mrf.mxu0
        %v7528 = vadd.f32 0.0, %v7527
        %7529 = vdwg.mxu0
        %v7530 = vadd.f32 %v7407, %v7506
        %v7531 = vadd.f32 %v7408, %v7508
        %v7532 = vadd.f32 %v7409, %v7511
        %v7533 = vadd.f32 %v7410, %v7513
        %v7534 = vadd.f32 %v7411, %v7516
        %v7535 = vadd.f32 %v7412, %v7518
        %v7536 = vadd.f32 %v7413, %v7521
        %v7537 = vadd.f32 %v7414, %v7523
        %v7538 = vadd.f32 %v7415, %v7526
        %v7539 = vadd.f32 %v7416, %v7528
        %v7540 = vld [vmem:[#allocation3 + $0xb] sm:$0xff]
        %v7541 = vld [vmem:[#allocation3 + $0x13] sm:$0xff]
        %v7542 = vld [vmem:[#allocation3 + $0x1b] sm:$0xff]
        %v7543 = vld [vmem:[#allocation3 + $0x23] sm:$0xff]
        %v7544 = vld [vmem:[#allocation3 + $0x2b] sm:$0xff]
        %v7545 = vld [vmem:[#allocation3 + $0x33] sm:$0xff]
        %v7546 = vld [vmem:[#allocation3 + $0x3b] sm:$0xff]
        %v7547 = vld [vmem:[#allocation3 + $0x43] sm:$0xff]
        %v7548 = vld [vmem:[#allocation3 + $0x4b] sm:$0xff]
        %v7549 = vld [vmem:[#allocation3 + $0x53] sm:$0x3f]
        %v7550 = vpack.c.bf16 %v7541, %v7540
        %v7551 = vpack.c.bf16 %v7543, %v7542
        %v7552 = vpack.c.bf16 %v7545, %v7544
        %v7553 = vpack.c.bf16 %v7547, %v7546
        %v7554 = vpack.c.bf16 %v7549, %v7548
        %v7555 = vld [vmem:[#allocation9 + $0x100] sm:$0xf]
        %v7556 = vld [vmem:[#allocation9 + $0x104] sm:$0xf]
        %v7557 = vld [vmem:[#allocation9 + $0x108] sm:$0xf]
        %v7558 = vld [vmem:[#allocation9 + $0x10c] sm:$0xf]
        %v7559 = vld [vmem:[#allocation9 + $0x110] sm:$0xf]
        %v7560 = vld [vmem:[#allocation9 + $0x114] sm:$0xf]
        %v7561 = vld [vmem:[#allocation9 + $0x118] sm:$0xf]
        %v7562 = vld [vmem:[#allocation9 + $0x11c] sm:$0xf]
        %v7563 = vld [vmem:[#allocation9 + $0x120] sm:$0xf]
        %v7564 = vld [vmem:[#allocation9 + $0x124] sm:$0xf]
        %v7565 = vld [vmem:[#allocation9 + $0x128] sm:$0xf]
        %v7566 = vld [vmem:[#allocation9 + $0x12c] sm:$0xf]
        %v7567 = vld [vmem:[#allocation9 + $0x130] sm:$0xf]
        %v7568 = vld [vmem:[#allocation9 + $0x134] sm:$0xf]
        %v7569 = vld [vmem:[#allocation9 + $0x138] sm:$0xf]
        %v7570 = vld [vmem:[#allocation9 + $0x13c] sm:$0xf]
        %v7587 = vunpack.c.l.b16 %v7555
        %v7588 = vunpack.c.l.b16 %v7556
        %v7589 = vunpack.c.l.b16 %v7557
        %v7590 = vunpack.c.l.b16 %v7558
        %v7591 = vunpack.c.l.b16 %v7559
        %v7592 = vunpack.c.l.b16 %v7560
        %v7593 = vunpack.c.l.b16 %v7561
        %v7594 = vunpack.c.l.b16 %v7562
        %v7595 = vunpack.c.l.b16 %v7563
        %v7596 = vunpack.c.l.b16 %v7564
        %v7597 = vunpack.c.l.b16 %v7565
        %v7598 = vunpack.c.l.b16 %v7566
        %v7599 = vunpack.c.l.b16 %v7567
        %v7600 = vunpack.c.l.b16 %v7568
        %v7601 = vunpack.c.l.b16 %v7569
        %v7602 = vunpack.c.l.b16 %v7570
        %v7603 = vpack.c.b16 %v7588, %v7587
        %v7604 = vpack.c.b16 %v7590, %v7589
        %v7605 = vpack.c.b16 %v7592, %v7591
        %v7606 = vpack.c.b16 %v7594, %v7593
        %v7607 = vpack.c.b16 %v7596, %v7595
        %v7608 = vpack.c.b16 %v7598, %v7597
        %v7609 = vpack.c.b16 %v7600, %v7599
        %v7610 = vpack.c.b16 %v7602, %v7601
        %7619 = vmatpush.bf16.msra.mxu0 %v7610
        %7620 = vmatpush.bf16.msra.mxu0 %v7609
        %7621 = vmatpush.bf16.msra.mxu0 %v7608
        %7622 = vmatpush.bf16.msra.mxu0 %v7607
        %7623 = vmatpush.bf16.msra.mxu0 %v7606
        %7624 = vmatpush.bf16.msra.mxu0 %v7605
        %7625 = vmatpush.bf16.msra.mxu0 %v7604
        %7626 = vmatpush.bf16.msra.mxu0 %v7603
        %7627 = vmatmul.bf16.gmra.mxu0 %v7550
        %v7628 = vpop.f32.mrf.mxu0
        %v7629 = vadd.f32 0.0, %v7628
        %v7630 = vpop.f32.mrf.mxu0
        %v7631 = vadd.f32 0.0, %v7630
        %7632 = vmatmul.bf16.gmra.mxu0 %v7551
        %v7633 = vpop.f32.mrf.mxu0
        %v7634 = vadd.f32 0.0, %v7633
        %v7635 = vpop.f32.mrf.mxu0
        %v7636 = vadd.f32 0.0, %v7635
        %7637 = vmatmul.bf16.gmra.mxu0 %v7552
        %v7638 = vpop.f32.mrf.mxu0
        %v7639 = vadd.f32 0.0, %v7638
        %v7640 = vpop.f32.mrf.mxu0
        %v7641 = vadd.f32 0.0, %v7640
        %7642 = vmatmul.bf16.gmra.mxu0 %v7553
        %v7643 = vpop.f32.mrf.mxu0
        %v7644 = vadd.f32 0.0, %v7643
        %v7645 = vpop.f32.mrf.mxu0
        %v7646 = vadd.f32 0.0, %v7645
        %7647 = vmatmul.bf16.gmra.mxu0 %v7554
        %v7648 = vpop.f32.mrf.mxu0
        %v7649 = vadd.f32 0.0, %v7648
        %v7650 = vpop.f32.mrf.mxu0
        %v7651 = vadd.f32 0.0, %v7650
        %7652 = vdwg.mxu0
        %v7653 = vadd.f32 %v7530, %v7629
        %v7654 = vadd.f32 %v7531, %v7631
        %v7655 = vadd.f32 %v7532, %v7634
        %v7656 = vadd.f32 %v7533, %v7636
        %v7657 = vadd.f32 %v7534, %v7639
        %v7658 = vadd.f32 %v7535, %v7641
        %v7659 = vadd.f32 %v7536, %v7644
        %v7660 = vadd.f32 %v7537, %v7646
        %v7661 = vadd.f32 %v7538, %v7649
        %v7662 = vadd.f32 %v7539, %v7651
        %v7663 = vld [vmem:[#allocation3 + $0xc] sm:$0xff]
        %v7664 = vld [vmem:[#allocation3 + $0x14] sm:$0xff]
        %v7665 = vld [vmem:[#allocation3 + $0x1c] sm:$0xff]
        %v7666 = vld [vmem:[#allocation3 + $0x24] sm:$0xff]
        %v7667 = vld [vmem:[#allocation3 + $0x2c] sm:$0xff]
        %v7668 = vld [vmem:[#allocation3 + $0x34] sm:$0xff]
        %v7669 = vld [vmem:[#allocation3 + $0x3c] sm:$0xff]
        %v7670 = vld [vmem:[#allocation3 + $0x44] sm:$0xff]
        %v7671 = vld [vmem:[#allocation3 + $0x4c] sm:$0xff]
        %v7672 = vld [vmem:[#allocation3 + $0x54] sm:$0x3f]
        %v7673 = vpack.c.bf16 %v7664, %v7663
        %v7674 = vpack.c.bf16 %v7666, %v7665
        %v7675 = vpack.c.bf16 %v7668, %v7667
        %v7676 = vpack.c.bf16 %v7670, %v7669
        %v7677 = vpack.c.bf16 %v7672, %v7671
        %v7678 = vld [vmem:[#allocation9 + $0x140] sm:$0xf]
        %v7679 = vld [vmem:[#allocation9 + $0x144] sm:$0xf]
        %v7680 = vld [vmem:[#allocation9 + $0x148] sm:$0xf]
        %v7681 = vld [vmem:[#allocation9 + $0x14c] sm:$0xf]
        %v7682 = vld [vmem:[#allocation9 + $0x150] sm:$0xf]
        %v7683 = vld [vmem:[#allocation9 + $0x154] sm:$0xf]
        %v7684 = vld [vmem:[#allocation9 + $0x158] sm:$0xf]
        %v7685 = vld [vmem:[#allocation9 + $0x15c] sm:$0xf]
        %v7686 = vld [vmem:[#allocation9 + $0x160] sm:$0xf]
        %v7687 = vld [vmem:[#allocation9 + $0x164] sm:$0xf]
        %v7688 = vld [vmem:[#allocation9 + $0x168] sm:$0xf]
        %v7689 = vld [vmem:[#allocation9 + $0x16c] sm:$0xf]
        %v7690 = vld [vmem:[#allocation9 + $0x170] sm:$0xf]
        %v7691 = vld [vmem:[#allocation9 + $0x174] sm:$0xf]
        %v7692 = vld [vmem:[#allocation9 + $0x178] sm:$0xf]
        %v7693 = vld [vmem:[#allocation9 + $0x17c] sm:$0xf]
        %v7710 = vunpack.c.l.b16 %v7678
        %v7711 = vunpack.c.l.b16 %v7679
        %v7712 = vunpack.c.l.b16 %v7680
        %v7713 = vunpack.c.l.b16 %v7681
        %v7714 = vunpack.c.l.b16 %v7682
        %v7715 = vunpack.c.l.b16 %v7683
        %v7716 = vunpack.c.l.b16 %v7684
        %v7717 = vunpack.c.l.b16 %v7685
        %v7718 = vunpack.c.l.b16 %v7686
        %v7719 = vunpack.c.l.b16 %v7687
        %v7720 = vunpack.c.l.b16 %v7688
        %v7721 = vunpack.c.l.b16 %v7689
        %v7722 = vunpack.c.l.b16 %v7690
        %v7723 = vunpack.c.l.b16 %v7691
        %v7724 = vunpack.c.l.b16 %v7692
        %v7725 = vunpack.c.l.b16 %v7693
        %v7726 = vpack.c.b16 %v7711, %v7710
        %v7727 = vpack.c.b16 %v7713, %v7712
        %v7728 = vpack.c.b16 %v7715, %v7714
        %v7729 = vpack.c.b16 %v7717, %v7716
        %v7730 = vpack.c.b16 %v7719, %v7718
        %v7731 = vpack.c.b16 %v7721, %v7720
        %v7732 = vpack.c.b16 %v7723, %v7722
        %v7733 = vpack.c.b16 %v7725, %v7724
        %7742 = vmatpush.bf16.msra.mxu0 %v7733
        %7743 = vmatpush.bf16.msra.mxu0 %v7732
        %7744 = vmatpush.bf16.msra.mxu0 %v7731
        %7745 = vmatpush.bf16.msra.mxu0 %v7730
        %7746 = vmatpush.bf16.msra.mxu0 %v7729
        %7747 = vmatpush.bf16.msra.mxu0 %v7728
        %7748 = vmatpush.bf16.msra.mxu0 %v7727
        %7749 = vmatpush.bf16.msra.mxu0 %v7726
        %7750 = vmatmul.bf16.gmra.mxu0 %v7673
        %v7751 = vpop.f32.mrf.mxu0
        %v7752 = vadd.f32 0.0, %v7751
        %v7753 = vpop.f32.mrf.mxu0
        %v7754 = vadd.f32 0.0, %v7753
        %7755 = vmatmul.bf16.gmra.mxu0 %v7674
        %v7756 = vpop.f32.mrf.mxu0
        %v7757 = vadd.f32 0.0, %v7756
        %v7758 = vpop.f32.mrf.mxu0
        %v7759 = vadd.f32 0.0, %v7758
        %7760 = vmatmul.bf16.gmra.mxu0 %v7675
        %v7761 = vpop.f32.mrf.mxu0
        %v7762 = vadd.f32 0.0, %v7761
        %v7763 = vpop.f32.mrf.mxu0
        %v7764 = vadd.f32 0.0, %v7763
        %7765 = vmatmul.bf16.gmra.mxu0 %v7676
        %v7766 = vpop.f32.mrf.mxu0
        %v7767 = vadd.f32 0.0, %v7766
        %v7768 = vpop.f32.mrf.mxu0
        %v7769 = vadd.f32 0.0, %v7768
        %7770 = vmatmul.bf16.gmra.mxu0 %v7677
        %v7771 = vpop.f32.mrf.mxu0
        %v7772 = vadd.f32 0.0, %v7771
        %v7773 = vpop.f32.mrf.mxu0
        %v7774 = vadd.f32 0.0, %v7773
        %7775 = vdwg.mxu0
        %v7776 = vadd.f32 %v7653, %v7752
        %v7777 = vadd.f32 %v7654, %v7754
        %v7778 = vadd.f32 %v7655, %v7757
        %v7779 = vadd.f32 %v7656, %v7759
        %v7780 = vadd.f32 %v7657, %v7762
        %v7781 = vadd.f32 %v7658, %v7764
        %v7782 = vadd.f32 %v7659, %v7767
        %v7783 = vadd.f32 %v7660, %v7769
        %v7784 = vadd.f32 %v7661, %v7772
        %v7785 = vadd.f32 %v7662, %v7774
        %v7786 = vld [vmem:[#allocation3 + $0x14] sm:$0xff]
        %v7787 = vld [vmem:[#allocation3 + $0x1c] sm:$0xff]
        %v7788 = vld [vmem:[#allocation3 + $0x24] sm:$0xff]
        %v7789 = vld [vmem:[#allocation3 + $0x2c] sm:$0xff]
        %v7790 = vld [vmem:[#allocation3 + $0x34] sm:$0xff]
        %v7791 = vld [vmem:[#allocation3 + $0x3c] sm:$0xff]
        %v7792 = vld [vmem:[#allocation3 + $0x44] sm:$0xff]
        %v7793 = vld [vmem:[#allocation3 + $0x4c] sm:$0xff]
        %v7794 = vld [vmem:[#allocation3 + $0x54] sm:$0xff]
        %v7795 = vld [vmem:[#allocation3 + $0x5c] sm:$0x3f]
        %v7796 = vpack.c.bf16 %v7787, %v7786
        %v7797 = vpack.c.bf16 %v7789, %v7788
        %v7798 = vpack.c.bf16 %v7791, %v7790
        %v7799 = vpack.c.bf16 %v7793, %v7792
        %v7800 = vpack.c.bf16 %v7795, %v7794
        %v7801 = vld [vmem:[#allocation9 + $0x180] sm:$0xf]
        %v7802 = vld [vmem:[#allocation9 + $0x184] sm:$0xf]
        %v7803 = vld [vmem:[#allocation9 + $0x188] sm:$0xf]
        %v7804 = vld [vmem:[#allocation9 + $0x18c] sm:$0xf]
        %v7805 = vld [vmem:[#allocation9 + $0x190] sm:$0xf]
        %v7806 = vld [vmem:[#allocation9 + $0x194] sm:$0xf]
        %v7807 = vld [vmem:[#allocation9 + $0x198] sm:$0xf]
        %v7808 = vld [vmem:[#allocation9 + $0x19c] sm:$0xf]
        %v7809 = vld [vmem:[#allocation9 + $0x1a0] sm:$0xf]
        %v7810 = vld [vmem:[#allocation9 + $0x1a4] sm:$0xf]
        %v7811 = vld [vmem:[#allocation9 + $0x1a8] sm:$0xf]
        %v7812 = vld [vmem:[#allocation9 + $0x1ac] sm:$0xf]
        %v7813 = vld [vmem:[#allocation9 + $0x1b0] sm:$0xf]
        %v7814 = vld [vmem:[#allocation9 + $0x1b4] sm:$0xf]
        %v7815 = vld [vmem:[#allocation9 + $0x1b8] sm:$0xf]
        %v7816 = vld [vmem:[#allocation9 + $0x1bc] sm:$0xf]
        %v7833 = vunpack.c.l.b16 %v7801
        %v7834 = vunpack.c.l.b16 %v7802
        %v7835 = vunpack.c.l.b16 %v7803
        %v7836 = vunpack.c.l.b16 %v7804
        %v7837 = vunpack.c.l.b16 %v7805
        %v7838 = vunpack.c.l.b16 %v7806
        %v7839 = vunpack.c.l.b16 %v7807
        %v7840 = vunpack.c.l.b16 %v7808
        %v7841 = vunpack.c.l.b16 %v7809
        %v7842 = vunpack.c.l.b16 %v7810
        %v7843 = vunpack.c.l.b16 %v7811
        %v7844 = vunpack.c.l.b16 %v7812
        %v7845 = vunpack.c.l.b16 %v7813
        %v7846 = vunpack.c.l.b16 %v7814
        %v7847 = vunpack.c.l.b16 %v7815
        %v7848 = vunpack.c.l.b16 %v7816
        %v7849 = vpack.c.b16 %v7834, %v7833
        %v7850 = vpack.c.b16 %v7836, %v7835
        %v7851 = vpack.c.b16 %v7838, %v7837
        %v7852 = vpack.c.b16 %v7840, %v7839
        %v7853 = vpack.c.b16 %v7842, %v7841
        %v7854 = vpack.c.b16 %v7844, %v7843
        %v7855 = vpack.c.b16 %v7846, %v7845
        %v7856 = vpack.c.b16 %v7848, %v7847
        %7865 = vmatpush.bf16.msra.mxu0 %v7856
        %7866 = vmatpush.bf16.msra.mxu0 %v7855
        %7867 = vmatpush.bf16.msra.mxu0 %v7854
        %7868 = vmatpush.bf16.msra.mxu0 %v7853
        %7869 = vmatpush.bf16.msra.mxu0 %v7852
        %7870 = vmatpush.bf16.msra.mxu0 %v7851
        %7871 = vmatpush.bf16.msra.mxu0 %v7850
        %7872 = vmatpush.bf16.msra.mxu0 %v7849
        %7873 = vmatmul.bf16.gmra.mxu0 %v7796
        %v7874 = vpop.f32.mrf.mxu0
        %v7875 = vadd.f32 0.0, %v7874
        %v7876 = vpop.f32.mrf.mxu0
        %v7877 = vadd.f32 0.0, %v7876
        %7878 = vmatmul.bf16.gmra.mxu0 %v7797
        %v7879 = vpop.f32.mrf.mxu0
        %v7880 = vadd.f32 0.0, %v7879
        %v7881 = vpop.f32.mrf.mxu0
        %v7882 = vadd.f32 0.0, %v7881
        %7883 = vmatmul.bf16.gmra.mxu0 %v7798
        %v7884 = vpop.f32.mrf.mxu0
        %v7885 = vadd.f32 0.0, %v7884
        %v7886 = vpop.f32.mrf.mxu0
        %v7887 = vadd.f32 0.0, %v7886
        %7888 = vmatmul.bf16.gmra.mxu0 %v7799
        %v7889 = vpop.f32.mrf.mxu0
        %v7890 = vadd.f32 0.0, %v7889
        %v7891 = vpop.f32.mrf.mxu0
        %v7892 = vadd.f32 0.0, %v7891
        %7893 = vmatmul.bf16.gmra.mxu0 %v7800
        %v7894 = vpop.f32.mrf.mxu0
        %v7895 = vadd.f32 0.0, %v7894
        %v7896 = vpop.f32.mrf.mxu0
        %v7897 = vadd.f32 0.0, %v7896
        %7898 = vdwg.mxu0
        %v7899 = vadd.f32 %v7776, %v7875
        %v7900 = vadd.f32 %v7777, %v7877
        %v7901 = vadd.f32 %v7778, %v7880
        %v7902 = vadd.f32 %v7779, %v7882
        %v7903 = vadd.f32 %v7780, %v7885
        %v7904 = vadd.f32 %v7781, %v7887
        %v7905 = vadd.f32 %v7782, %v7890
        %v7906 = vadd.f32 %v7783, %v7892
        %v7907 = vadd.f32 %v7784, %v7895
        %v7908 = vadd.f32 %v7785, %v7897
        %v7909 = vld [vmem:[#allocation3 + $0x15] sm:$0xff]
        %v7910 = vld [vmem:[#allocation3 + $0x1d] sm:$0xff]
        %v7911 = vld [vmem:[#allocation3 + $0x25] sm:$0xff]
        %v7912 = vld [vmem:[#allocation3 + $0x2d] sm:$0xff]
        %v7913 = vld [vmem:[#allocation3 + $0x35] sm:$0xff]
        %v7914 = vld [vmem:[#allocation3 + $0x3d] sm:$0xff]
        %v7915 = vld [vmem:[#allocation3 + $0x45] sm:$0xff]
        %v7916 = vld [vmem:[#allocation3 + $0x4d] sm:$0xff]
        %v7917 = vld [vmem:[#allocation3 + $0x55] sm:$0xff]
        %v7918 = vld [vmem:[#allocation3 + $0x5d] sm:$0x3f]
        %v7919 = vpack.c.bf16 %v7910, %v7909
        %v7920 = vpack.c.bf16 %v7912, %v7911
        %v7921 = vpack.c.bf16 %v7914, %v7913
        %v7922 = vpack.c.bf16 %v7916, %v7915
        %v7923 = vpack.c.bf16 %v7918, %v7917
        %v7924 = vld [vmem:[#allocation9 + $0x1c0] sm:$0xf]
        %v7925 = vld [vmem:[#allocation9 + $0x1c4] sm:$0xf]
        %v7926 = vld [vmem:[#allocation9 + $0x1c8] sm:$0xf]
        %v7927 = vld [vmem:[#allocation9 + $0x1cc] sm:$0xf]
        %v7928 = vld [vmem:[#allocation9 + $0x1d0] sm:$0xf]
        %v7929 = vld [vmem:[#allocation9 + $0x1d4] sm:$0xf]
        %v7930 = vld [vmem:[#allocation9 + $0x1d8] sm:$0xf]
        %v7931 = vld [vmem:[#allocation9 + $0x1dc] sm:$0xf]
        %v7932 = vld [vmem:[#allocation9 + $0x1e0] sm:$0xf]
        %v7933 = vld [vmem:[#allocation9 + $0x1e4] sm:$0xf]
        %v7934 = vld [vmem:[#allocation9 + $0x1e8] sm:$0xf]
        %v7935 = vld [vmem:[#allocation9 + $0x1ec] sm:$0xf]
        %v7936 = vld [vmem:[#allocation9 + $0x1f0] sm:$0xf]
        %v7937 = vld [vmem:[#allocation9 + $0x1f4] sm:$0xf]
        %v7938 = vld [vmem:[#allocation9 + $0x1f8] sm:$0xf]
        %v7939 = vld [vmem:[#allocation9 + $0x1fc] sm:$0xf]
        %v7956 = vunpack.c.l.b16 %v7924
        %v7957 = vunpack.c.l.b16 %v7925
        %v7958 = vunpack.c.l.b16 %v7926
        %v7959 = vunpack.c.l.b16 %v7927
        %v7960 = vunpack.c.l.b16 %v7928
        %v7961 = vunpack.c.l.b16 %v7929
        %v7962 = vunpack.c.l.b16 %v7930
        %v7963 = vunpack.c.l.b16 %v7931
        %v7964 = vunpack.c.l.b16 %v7932
        %v7965 = vunpack.c.l.b16 %v7933
        %v7966 = vunpack.c.l.b16 %v7934
        %v7967 = vunpack.c.l.b16 %v7935
        %v7968 = vunpack.c.l.b16 %v7936
        %v7969 = vunpack.c.l.b16 %v7937
        %v7970 = vunpack.c.l.b16 %v7938
        %v7971 = vunpack.c.l.b16 %v7939
        %v7972 = vpack.c.b16 %v7957, %v7956
        %v7973 = vpack.c.b16 %v7959, %v7958
        %v7974 = vpack.c.b16 %v7961, %v7960
        %v7975 = vpack.c.b16 %v7963, %v7962
        %v7976 = vpack.c.b16 %v7965, %v7964
        %v7977 = vpack.c.b16 %v7967, %v7966
        %v7978 = vpack.c.b16 %v7969, %v7968
        %v7979 = vpack.c.b16 %v7971, %v7970
        %7988 = vmatpush.bf16.msra.mxu0 %v7979
        %7989 = vmatpush.bf16.msra.mxu0 %v7978
        %7990 = vmatpush.bf16.msra.mxu0 %v7977
        %7991 = vmatpush.bf16.msra.mxu0 %v7976
        %7992 = vmatpush.bf16.msra.mxu0 %v7975
        %7993 = vmatpush.bf16.msra.mxu0 %v7974
        %7994 = vmatpush.bf16.msra.mxu0 %v7973
        %7995 = vmatpush.bf16.msra.mxu0 %v7972
        %7996 = vmatmul.bf16.gmra.mxu0 %v7919
        %v7997 = vpop.f32.mrf.mxu0
        %v7998 = vadd.f32 0.0, %v7997
        %v7999 = vpop.f32.mrf.mxu0
        %v8000 = vadd.f32 0.0, %v7999
        %8001 = vmatmul.bf16.gmra.mxu0 %v7920
        %v8002 = vpop.f32.mrf.mxu0
        %v8003 = vadd.f32 0.0, %v8002
        %v8004 = vpop.f32.mrf.mxu0
        %v8005 = vadd.f32 0.0, %v8004
        %8006 = vmatmul.bf16.gmra.mxu0 %v7921
        %v8007 = vpop.f32.mrf.mxu0
        %v8008 = vadd.f32 0.0, %v8007
        %v8009 = vpop.f32.mrf.mxu0
        %v8010 = vadd.f32 0.0, %v8009
        %8011 = vmatmul.bf16.gmra.mxu0 %v7922
        %v8012 = vpop.f32.mrf.mxu0
        %v8013 = vadd.f32 0.0, %v8012
        %v8014 = vpop.f32.mrf.mxu0
        %v8015 = vadd.f32 0.0, %v8014
        %8016 = vmatmul.bf16.gmra.mxu0 %v7923
        %v8017 = vpop.f32.mrf.mxu0
        %v8018 = vadd.f32 0.0, %v8017
        %v8019 = vpop.f32.mrf.mxu0
        %v8020 = vadd.f32 0.0, %v8019
        %8021 = vdwg.mxu0
        %v8022 = vadd.f32 %v7899, %v7998
        %v8023 = vadd.f32 %v7900, %v8000
        %v8024 = vadd.f32 %v7901, %v8003
        %v8025 = vadd.f32 %v7902, %v8005
        %v8026 = vadd.f32 %v7903, %v8008
        %v8027 = vadd.f32 %v7904, %v8010
        %v8028 = vadd.f32 %v7905, %v8013
        %v8029 = vadd.f32 %v7906, %v8015
        %v8030 = vadd.f32 %v7907, %v8018
        %v8031 = vadd.f32 %v7908, %v8020
        %v8032 = vld [vmem:[#allocation3 + $0x16] sm:$0xff]
        %v8033 = vld [vmem:[#allocation3 + $0x1e] sm:$0xff]
        %v8034 = vld [vmem:[#allocation3 + $0x26] sm:$0xff]
        %v8035 = vld [vmem:[#allocation3 + $0x2e] sm:$0xff]
        %v8036 = vld [vmem:[#allocation3 + $0x36] sm:$0xff]
        %v8037 = vld [vmem:[#allocation3 + $0x3e] sm:$0xff]
        %v8038 = vld [vmem:[#allocation3 + $0x46] sm:$0xff]
        %v8039 = vld [vmem:[#allocation3 + $0x4e] sm:$0xff]
        %v8040 = vld [vmem:[#allocation3 + $0x56] sm:$0xff]
        %v8041 = vld [vmem:[#allocation3 + $0x5e] sm:$0x3f]
        %v8042 = vpack.c.bf16 %v8033, %v8032
        %v8043 = vpack.c.bf16 %v8035, %v8034
        %v8044 = vpack.c.bf16 %v8037, %v8036
        %v8045 = vpack.c.bf16 %v8039, %v8038
        %v8046 = vpack.c.bf16 %v8041, %v8040
        %v8047 = vld [vmem:[#allocation9 + $0x200] sm:$0xf]
        %v8048 = vld [vmem:[#allocation9 + $0x204] sm:$0xf]
        %v8049 = vld [vmem:[#allocation9 + $0x208] sm:$0xf]
        %v8050 = vld [vmem:[#allocation9 + $0x20c] sm:$0xf]
        %v8051 = vld [vmem:[#allocation9 + $0x210] sm:$0xf]
        %v8052 = vld [vmem:[#allocation9 + $0x214] sm:$0xf]
        %v8053 = vld [vmem:[#allocation9 + $0x218] sm:$0xf]
        %v8054 = vld [vmem:[#allocation9 + $0x21c] sm:$0xf]
        %v8055 = vld [vmem:[#allocation9 + $0x220] sm:$0xf]
        %v8056 = vld [vmem:[#allocation9 + $0x224] sm:$0xf]
        %v8057 = vld [vmem:[#allocation9 + $0x228] sm:$0xf]
        %v8058 = vld [vmem:[#allocation9 + $0x22c] sm:$0xf]
        %v8059 = vld [vmem:[#allocation9 + $0x230] sm:$0xf]
        %v8060 = vld [vmem:[#allocation9 + $0x234] sm:$0xf]
        %v8061 = vld [vmem:[#allocation9 + $0x238] sm:$0xf]
        %v8062 = vld [vmem:[#allocation9 + $0x23c] sm:$0xf]
        %v8079 = vunpack.c.l.b16 %v8047
        %v8080 = vunpack.c.l.b16 %v8048
        %v8081 = vunpack.c.l.b16 %v8049
        %v8082 = vunpack.c.l.b16 %v8050
        %v8083 = vunpack.c.l.b16 %v8051
        %v8084 = vunpack.c.l.b16 %v8052
        %v8085 = vunpack.c.l.b16 %v8053
        %v8086 = vunpack.c.l.b16 %v8054
        %v8087 = vunpack.c.l.b16 %v8055
        %v8088 = vunpack.c.l.b16 %v8056
        %v8089 = vunpack.c.l.b16 %v8057
        %v8090 = vunpack.c.l.b16 %v8058
        %v8091 = vunpack.c.l.b16 %v8059
        %v8092 = vunpack.c.l.b16 %v8060
        %v8093 = vunpack.c.l.b16 %v8061
        %v8094 = vunpack.c.l.b16 %v8062
        %v8095 = vpack.c.b16 %v8080, %v8079
        %v8096 = vpack.c.b16 %v8082, %v8081
        %v8097 = vpack.c.b16 %v8084, %v8083
        %v8098 = vpack.c.b16 %v8086, %v8085
        %v8099 = vpack.c.b16 %v8088, %v8087
        %v8100 = vpack.c.b16 %v8090, %v8089
        %v8101 = vpack.c.b16 %v8092, %v8091
        %v8102 = vpack.c.b16 %v8094, %v8093
        %8111 = vmatpush.bf16.msra.mxu0 %v8102
        %8112 = vmatpush.bf16.msra.mxu0 %v8101
        %8113 = vmatpush.bf16.msra.mxu0 %v8100
        %8114 = vmatpush.bf16.msra.mxu0 %v8099
        %8115 = vmatpush.bf16.msra.mxu0 %v8098
        %8116 = vmatpush.bf16.msra.mxu0 %v8097
        %8117 = vmatpush.bf16.msra.mxu0 %v8096
        %8118 = vmatpush.bf16.msra.mxu0 %v8095
        %8119 = vmatmul.bf16.gmra.mxu0 %v8042
        %v8120 = vpop.f32.mrf.mxu0
        %v8121 = vadd.f32 0.0, %v8120
        %v8122 = vpop.f32.mrf.mxu0
        %v8123 = vadd.f32 0.0, %v8122
        %8124 = vmatmul.bf16.gmra.mxu0 %v8043
        %v8125 = vpop.f32.mrf.mxu0
        %v8126 = vadd.f32 0.0, %v8125
        %v8127 = vpop.f32.mrf.mxu0
        %v8128 = vadd.f32 0.0, %v8127
        %8129 = vmatmul.bf16.gmra.mxu0 %v8044
        %v8130 = vpop.f32.mrf.mxu0
        %v8131 = vadd.f32 0.0, %v8130
        %v8132 = vpop.f32.mrf.mxu0
        %v8133 = vadd.f32 0.0, %v8132
        %8134 = vmatmul.bf16.gmra.mxu0 %v8045
        %v8135 = vpop.f32.mrf.mxu0
        %v8136 = vadd.f32 0.0, %v8135
        %v8137 = vpop.f32.mrf.mxu0
        %v8138 = vadd.f32 0.0, %v8137
        %8139 = vmatmul.bf16.gmra.mxu0 %v8046
        %v8140 = vpop.f32.mrf.mxu0
        %v8141 = vadd.f32 0.0, %v8140
        %v8142 = vpop.f32.mrf.mxu0
        %v8143 = vadd.f32 0.0, %v8142
        %8144 = vdwg.mxu0
        %v8145 = vadd.f32 %v8022, %v8121
        %v8146 = vadd.f32 %v8023, %v8123
        %v8147 = vadd.f32 %v8024, %v8126
        %v8148 = vadd.f32 %v8025, %v8128
        %v8149 = vadd.f32 %v8026, %v8131
        %v8150 = vadd.f32 %v8027, %v8133
        %v8151 = vadd.f32 %v8028, %v8136
        %v8152 = vadd.f32 %v8029, %v8138
        %v8153 = vadd.f32 %v8030, %v8141
        %v8154 = vadd.f32 %v8031, %v8143
        %v8155 = vld [vmem:[%s13] sm:$0x1]
        %v8157 = vperm.slane %v8155, 0
        %v8159 = vadd.f32 %v8145, %v8157
        %v8160 = vadd.f32 %v8146, %v8157
        %v8161 = vadd.f32 %v8147, %v8157
        %v8162 = vadd.f32 %v8148, %v8157
        %v8163 = vadd.f32 %v8149, %v8157
        %v8164 = vadd.f32 %v8150, %v8157
        %v8165 = vadd.f32 %v8151, %v8157
        %v8166 = vadd.f32 %v8152, %v8157
        %v8167 = vadd.f32 %v8153, %v8157
        %v8168 = vadd.f32 %v8154, %v8157
        %v8169 = vmul.f32 %v8159, 0.2
        %v8170 = vmul.f32 %v8160, 0.2
        %v8171 = vmul.f32 %v8161, 0.2
        %v8172 = vmul.f32 %v8162, 0.2
        %v8173 = vmul.f32 %v8163, 0.2
        %v8174 = vmul.f32 %v8164, 0.2
        %v8175 = vmul.f32 %v8165, 0.2
        %v8176 = vmul.f32 %v8166, 0.2
        %v8177 = vmul.f32 %v8167, 0.2
        %v8178 = vmul.f32 %v8168, 0.2
        %v8179 = vmax.f32 %v8159, %v8169
        %v8180 = vmax.f32 %v8160, %v8170
        %v8181 = vmax.f32 %v8161, %v8171
        %v8182 = vmax.f32 %v8162, %v8172
        %v8183 = vmax.f32 %v8163, %v8173
        %v8184 = vmax.f32 %v8164, %v8174
        %v8185 = vmax.f32 %v8165, %v8175
        %v8186 = vmax.f32 %v8166, %v8176
        %v8187 = vmax.f32 %v8167, %v8177
        %v8188 = vmax.f32 %v8168, %v8178
        %8189 = vst [vmem:[#allocation2 + $0xb] sm:$0xff] %v8179
        %8190 = vst [vmem:[#allocation2 + $0x13] sm:$0xff] %v8180
        %8191 = vst [vmem:[#allocation2 + $0x1b] sm:$0xff] %v8181
        %8192 = vst [vmem:[#allocation2 + $0x23] sm:$0xff] %v8182
        %8193 = vst [vmem:[#allocation2 + $0x2b] sm:$0xff] %v8183
        %8194 = vst [vmem:[#allocation2 + $0x33] sm:$0xff] %v8184
        %8195 = vst [vmem:[#allocation2 + $0x3b] sm:$0xff] %v8185
        %8196 = vst [vmem:[#allocation2 + $0x43] sm:$0xff] %v8186
        %8197 = vst [vmem:[#allocation2 + $0x4b] sm:$0xff] %v8187
        %8198 = vst [vmem:[#allocation2 + $0x53] sm:$0x3f] %v8188
        %s8199 = scalar_lea.vmem [#allocation2], 11
        %v8200 = vld [vmem:[%s8199] ss:$2 sm:$0xf]
        %s8201 = scalar_lea.vmem [#allocation2], 12
        %v8202 = vld [vmem:[%s8201] ss:$2 sm:$0xf]
        %v8203 = vadd.f32 %v8200, %v8202
        %s8204 = scalar_lea.vmem [#allocation2], 21
        %v8205 = vld [vmem:[%s8204] ss:$2 sm:$0xf]
        %v8206 = vadd.f32 %v8203, %v8205
        %s8207 = scalar_lea.vmem [#allocation2], 22
        %v8208 = vld [vmem:[%s8207] ss:$2 sm:$0xf]
        %v8209 = vadd.f32 %v8206, %v8208
        %v8210 = vmul.f32 %v8209, 0.25
        %8211 = vst [vmem:[#allocation3 + $0x7] sm:$0xf] %v8210
        %s8212 = scalar_lea.vmem [#allocation2], 31
        %v8213 = vld [vmem:[%s8212] ss:$2 sm:$0xf]
        %s8214 = scalar_lea.vmem [#allocation2], 32
        %v8215 = vld [vmem:[%s8214] ss:$2 sm:$0xf]
        %v8216 = vadd.f32 %v8213, %v8215
        %s8217 = scalar_lea.vmem [#allocation2], 41
        %v8218 = vld [vmem:[%s8217] ss:$2 sm:$0xf]
        %v8219 = vadd.f32 %v8216, %v8218
        %s8220 = scalar_lea.vmem [#allocation2], 42
        %v8221 = vld [vmem:[%s8220] ss:$2 sm:$0xf]
        %v8222 = vadd.f32 %v8219, %v8221
        %v8223 = vmul.f32 %v8222, 0.25
        %8224 = vst [vmem:[#allocation3 + $0xd] sm:$0xf] %v8223
        %s8225 = scalar_lea.vmem [#allocation2], 51
        %v8226 = vld [vmem:[%s8225] ss:$2 sm:$0xf]
        %s8227 = scalar_lea.vmem [#allocation2], 52
        %v8228 = vld [vmem:[%s8227] ss:$2 sm:$0xf]
        %v8229 = vadd.f32 %v8226, %v8228
        %s8230 = scalar_lea.vmem [#allocation2], 61
        %v8231 = vld [vmem:[%s8230] ss:$2 sm:$0xf]
        %v8232 = vadd.f32 %v8229, %v8231
        %s8233 = scalar_lea.vmem [#allocation2], 62
        %v8234 = vld [vmem:[%s8233] ss:$2 sm:$0xf]
        %v8235 = vadd.f32 %v8232, %v8234
        %v8236 = vmul.f32 %v8235, 0.25
        %8237 = vst [vmem:[#allocation3 + $0x13] sm:$0xf] %v8236
        %s8238 = scalar_lea.vmem [#allocation2], 71
        %v8239 = vld [vmem:[%s8238] ss:$2 sm:$0xf]
        %s8240 = scalar_lea.vmem [#allocation2], 72
        %v8241 = vld [vmem:[%s8240] ss:$2 sm:$0xf]
        %v8242 = vadd.f32 %v8239, %v8241
        %s8243 = scalar_lea.vmem [#allocation2], 81
        %v8244 = vld [vmem:[%s8243] ss:$2 sm:$0xf]
        %v8245 = vadd.f32 %v8242, %v8244
        %s8246 = scalar_lea.vmem [#allocation2], 82
        %v8247 = vld [vmem:[%s8246] ss:$2 sm:$0xf]
        %v8248 = vadd.f32 %v8245, %v8247
        %v8249 = vmul.f32 %v8248, 0.25
        %8250 = vst [vmem:[#allocation3 + $0x19] sm:$0xf] %v8249
        %v8251 = vld [vmem:[#allocation3 + $0x7] sm:$0xf]
        %8252 = vst [vmem:[%s495] sm:$0xf] %v8251
        %v8253 = vld [vmem:[#allocation3 + $0xd] sm:$0xf]
        %8254 = vst [vmem:[%s495 + $0x4] sm:$0xf] %v8253
        %v8255 = vld [vmem:[#allocation3 + $0x13] sm:$0xf]
        %8256 = vst [vmem:[%s495 + $0x8] sm:$0xf] %v8255
        %v8257 = vld [vmem:[#allocation3 + $0x19] sm:$0xf]
        %8258 = vst [vmem:[%s495 + $0xc] sm:$0xf] %v8257
        %s8259 = sand.u32 %s338, 1
        %s8260 = scalar_lea.sflag [#allocation8], %s8259
        %s8261 = sand.u32 %s338, 1
        %s8262 = smul.addr %s8261, 16
        %s8263 = scalar_lea.vmem [#allocation11], %s8262
        // Predicated region
        $region85: #{tpu_custom_call.1} parent=75 // pred_check
          %p8264 = pneg %p348
        $region86: #{tpu_custom_call.1} parent=75 // pred_check_branch
          %8266 = sbr.rel (%p8264) target = $region88
        $region87: #{tpu_custom_call.1} parent=75 // pred_region
          %8268 = vsyncadd %s8260, 0
          %s8269 = smul.addr %s31, 2
          %s8270 = smul.addr %s8269, 8
          %s8271 = scalar_lea.hbm %s14, %s8270
          %s8272 = sshll.u32 %s8263, 4
          %s8273 = int_to_ptr.vmem [resolvable:$true] %s8272
          %s8274 = sshll.u32 %s8271, 4
          %s8275 = int_to_ptr.hbm [resolvable:$true] %s8274
          %8280 = dma.vmem_to_hbm [thread:$0]  %s8273, 256, %s8275, %s8260, 128, 128, 8
        $region88: #{tpu_custom_call.1} parent=75 // pred_fallthru
          _
      $region76: #{tpu_custom_call.1} parent=5 // pred_fallthru
        _
      %p8281 = scmp.le.s32.totalorder 2, %s26
      // Predicated region
      $region89: #{tpu_custom_call.1} parent=5 // pred_check
        %p8282 = pneg %p8281
      $region90: #{tpu_custom_call.1} parent=5 // pred_check_branch
        %8284 = sbr.rel (%p8282) target = $region92
      $region91: #{tpu_custom_call.1} parent=5 // pred_region
        %s8285 = ssub.s32 %s26, 2
        // Predicated region
        $region93: #{tpu_custom_call.1} parent=91 // pred_check
          %p8286 = pneg %p354
        $region94: #{tpu_custom_call.1} parent=91 // pred_check_branch
          %8288 = sbr.rel (%p8286) target = $region96
        $region95: #{tpu_custom_call.1} parent=91 // pred_region
          %s8289 = sand.u32 %s339, 1
          %s8290 = scalar_lea.sflag [#allocation8], %s8289
          %s8291 = sand.u32 %s339, 1
          %s8292 = smul.addr %s8291, 16
          %s8293 = scalar_lea.vmem [#allocation11], %s8292
          %8295 = dma.done %s8290, 256
        $region96: #{tpu_custom_call.1} parent=91 // pred_fallthru
          _
      $region92: #{tpu_custom_call.1} parent=5 // pred_fallthru
        _
    $region6: #{tpu_custom_call.1} parent=1 // loop_footer
      %s30 = sadd.s32 1, %s26
    $region7: #{tpu_custom_call.1} parent=1 // loop_footer_branch
      %25 = sbr.rel target = $region3
    $region8: #{tpu_custom_call.1} parent=1 // loop_exit
      _
    %8296 = vsyncpa [#allocation7], 1
    %s8297 = scalar_lea.sflag [#allocation7], 1
    %8298 = vsyncpa %s8297, 1
    %8299 = vsyncpa [#allocation10], 1
    %8300 = vsyncpa [#allocation8], 1
    %s8301 = scalar_lea.sflag [#allocation8], 1
    %8302 = vsyncpa %s8301, 1

</llo_original>
